<compile_context>
chip_gen: v7x
topology: tpu7x:2x2x1
jax: 0.10.0
libtpu: 0.0.40
codegen_flags: <defaults>
</compile_context>

<pallas_src>
import functools

import numpy as np
import jax
import jax.numpy as jnp
from jax import lax
from jax.experimental import pallas as pl
from jax.experimental.pallas import tpu as pltpu


def _round_up(x, m):
    return ((x + m - 1) // m) * m


# ----------------------------------------------------------------------------
# Fused kernel: conv3d + ReLU + GAP + encoder FC + decoder stack
# ----------------------------------------------------------------------------
def _cnn3d_gcn_kernel(*refs, acts, inv_n):
    # refs = (xp, taps, bias_row, pool, sel, w0, b0, w1, b1, ..., out)
    xp_ref, taps_ref, bias_ref, pool_ref, sel_ref = refs[:5]
    wb_refs = refs[5:-1]
    o_ref = refs[-1]

    B, Dp, Hp, CW = xp_ref.shape
    D, H = Dp - 2, Hp - 2
    M = B * D * H

    # ---- conv3d as 9 tap matmuls, B and D folded into the M dimension ----
    acc = None
    for kd in range(3):
        for kh in range(3):
            xs = xp_ref[:, kd:kd + D, kh:kh + H, :]        # (B, D, H, CW) bf16
            xs = xs.reshape(M, CW)                          # (M, CW)
            t = jnp.dot(xs, taps_ref[kd * 3 + kh],
                        preferred_element_type=jnp.float32)
            acc = t if acc is None else acc + t             # (M, WCo_pad) f32

    # ---- bias + ReLU (once), then pooling hoisted out of any loop ----
    y = jnp.maximum(acc + bias_ref[...], 0.0)               # (M, WCo_pad) f32
    # sum over W per channel (0/1 bf16 pool matrix -> MXU, exact weights)
    part = jnp.dot(y.astype(jnp.bfloat16), pool_ref[...],
                   preferred_element_type=jnp.float32)      # (M, Cpad)
    # per-batch sum over the D*H rows (0/1 bf16 selection matrix)
    pooled = jnp.dot(sel_ref[...], part.astype(jnp.bfloat16),
                     preferred_element_type=jnp.float32)    # (Bpad, Cpad)
    pooled = pooled * inv_n                                 # GAP mean

    # ---- encoder FC + dec0 Linear + SpiralConv stack (dense matmul chain) --
    h = pooled.astype(jnp.bfloat16)
    n_layers = len(acts)
    for li in range(n_layers):
        w = wb_refs[2 * li][...]                            # bf16 (K, N)
        b = wb_refs[2 * li + 1][...]                        # f32  (1, N)
        z = jnp.dot(h, w, preferred_element_type=jnp.float32) + b
        if acts[li] == "elu":
            # F.elu(alpha=1); exp on clamped value so the discarded
            # jnp.where branch cannot overflow.
            z = jnp.where(z > 0.0, z, jnp.exp(jnp.minimum(z, 0.0)) - 1.0)
        if li == n_layers - 1:
            o_ref[...] = z.astype(o_ref.dtype)
        else:
            h = z.astype(jnp.bfloat16)


def cnn3d_gcn_pallas(xp, taps, bias_row, pool, sel, layers, acts, *, inv_n):
    """Single fused pallas_call.  xp: (B, Dp, Hp, CWp_pad) bf16."""
    out_pad = layers[-1][0].shape[1]
    bpad = sel.shape[0]

    operands = [xp, taps, bias_row, pool, sel]
    in_specs = [
        pl.BlockSpec(xp.shape, lambda i: (0, 0, 0, 0)),
        pl.BlockSpec(taps.shape, lambda i: (0, 0, 0)),
        pl.BlockSpec(bias_row.shape, lambda i: (0, 0)),
        pl.BlockSpec(pool.shape, lambda i: (0, 0)),
        pl.BlockSpec(sel.shape, lambda i: (0, 0)),
    ]
    for w, b in layers:
        operands.append(w)
        operands.append(b)
        in_specs.append(pl.BlockSpec(w.shape, lambda i: (0, 0)))
        in_specs.append(pl.BlockSpec(b.shape, lambda i: (0, 0)))

    kernel = functools.partial(_cnn3d_gcn_kernel, acts=tuple(acts), inv_n=inv_n)
    return pl.pallas_call(
        kernel,
        out_shape=jax.ShapeDtypeStruct((bpad, out_pad), jnp.float32),
        grid=(1,),
        in_specs=in_specs,
        out_specs=pl.BlockSpec((bpad, out_pad), lambda i: (0, 0)),
        compiler_params=pltpu.CompilerParams(
            dimension_semantics=("arbitrary",)),
    )(*operands)


# ----------------------------------------------------------------------------
# Parameter construction (deterministic synthetic weights; exact adjacency)
# ----------------------------------------------------------------------------
def build_spiral_indices(num_kpts, num_tpts):
    adjacency = []
    for ii in range(num_kpts):
        row = list(range(num_kpts))
        row.insert(0, row.pop(ii))
        adjacency.append(row)
    adjacency = np.array(adjacency, dtype=np.int64)            # (K, K)
    indices = adjacency
    for t in range(1, num_tpts):
        indices = np.concatenate([indices, adjacency + num_kpts * t], axis=0)
    time_edges = np.roll(indices[:, 0], num_kpts)
    indices = np.concatenate([indices, time_edges[:, None]], axis=1)
    if num_tpts > 3:
        time_edges = np.roll(indices[:, 0], -num_kpts)
        indices = np.concatenate([indices, time_edges[:, None]], axis=1)
    return indices                                             # (K*T, seq_len)


def _dense_init(key, fan_in, fan_out):
    kw, kb = jax.random.split(key)
    scale = 1.0 / np.sqrt(fan_in)
    w = scale * jax.random.normal(kw, (fan_in, fan_out), jnp.float32)
    b = 0.01 * jax.random.normal(kb, (fan_out,), jnp.float32)
    return np.asarray(w), np.asarray(b)


def fold_spiral(w, b, indices, num_nodes, cin, cout):
    """Fold the static spiral gather into the linear weight.

    w: (seq_len*cin, cout) with row index = s*cin + c  (torch SpiralConv layout)
    Returns W_eff: (num_nodes*cin, num_nodes*cout), b_eff: (num_nodes*cout,)
    so that  out_flat = h_flat @ W_eff + b_eff  equals gather+reshape+Linear.
    """
    S = indices.shape[1]
    w_eff = np.zeros((num_nodes * cin, num_nodes * cout), np.float32)
    for n in range(num_nodes):
        for s in range(S):
            m = int(indices[n, s])
            w_eff[m * cin:(m + 1) * cin, n * cout:(n + 1) * cout] += \
                w[s * cin:(s + 1) * cin, :]
    b_eff = np.tile(b, num_nodes)
    return w_eff, b_eff


def init_params(key, *, batch_size, in_channels, conv_out, features_size,
                kpt_channels, gcn_channels, num_kpts, num_tpts, H, W, T):
    C = in_channels
    Wp = W + 2
    CWp = C * Wp
    CWp_pad = _round_up(CWp, 128)
    WCo = W * conv_out
    WCo_pad = _round_up(WCo, 128)
    Cpad = _round_up(conv_out, 128)
    Fpad = _round_up(features_size, 128)

    indices = build_spiral_indices(num_kpts, num_tpts)
    num_nodes = num_kpts * num_tpts
    seq_len = indices.shape[1]

    keys = jax.random.split(key, 4 + len(gcn_channels))

    # --- simplified video encoder: Conv3d(C->conv_out, k3, p1) weights ---
    kcw, kcb = jax.random.split(keys[0])
    w_conv = np.asarray(jax.random.normal(
        kcw, (conv_out, C, 3, 3, 3), jnp.float32)) / np.sqrt(C * 27.0)
    b_conv = 0.01 * np.asarray(jax.random.normal(kcb, (conv_out,), jnp.float32))

    # Toeplitz tap matrices: taps[kd*3+kh, c*Wp + (w+kw), w*Cout + co]
    taps = np.zeros((9, CWp_pad, WCo_pad), np.float32)
    for kd in range(3):
        for kh in range(3):
            t = kd * 3 + kh
            for c in range(C):
                for kw in range(3):
                    for w_i in range(W):
                        taps[t, c * Wp + (w_i + kw),
                             w_i * conv_out:(w_i + 1) * conv_out] += \
                            w_conv[:, c, kd, kh, kw]
    bias_row = np.zeros((1, WCo_pad), np.float32)
    bias_row[0, :WCo] = np.tile(b_conv, W)

    # Pool (sum over W per channel) — 0/1, exact in bf16.
    pool = np.zeros((WCo_pad, Cpad), np.float32)
    for w_i in range(W):
        for co in range(conv_out):
            pool[w_i * conv_out + co, co] = 1.0

    # Per-batch row-sum selection matrix (sum over the D*H rows of each batch).
    DH = T * H
    M = batch_size * DH
    Bpad = _round_up(batch_size, 8)
    sel = np.zeros((Bpad, M), np.float32)
    for b in range(batch_size):
        sel[b, b * DH:(b + 1) * DH] = 1.0

    # --- encoder FC: conv_out -> features_size (padded lane-dense) ---
    enc_w, enc_b = _dense_init(keys[1], conv_out, features_size)
    enc_w_p = np.zeros((Cpad, Fpad), np.float32)
    enc_w_p[:conv_out, :features_size] = enc_w
    enc_b_p = np.zeros((1, Fpad), np.float32)
    enc_b_p[0, :features_size] = enc_b

    # --- decoder layer 0: Linear(features_size, num_nodes * gcn[-1]) ---
    gcn_last = gcn_channels[-1]
    dec0_w, dec0_b = _dense_init(keys[2], features_size, num_nodes * gcn_last)
    dec0_w_p = np.zeros((Fpad, num_nodes * gcn_last), np.float32)
    dec0_w_p[:features_size, :] = dec0_w
    dec0_b_p = dec0_b.reshape(1, -1).astype(np.float32)

    layers = [(enc_w_p, enc_b_p), (dec0_w_p, dec0_b_p)]
    acts = ["none", "none"]

    # --- SpiralConv stack (gather folded into dense weights) ---
    for idx in range(len(gcn_channels)):
        cin = gcn_channels[-idx - 1] if idx == 0 else gcn_channels[-idx]
        cout = gcn_channels[-idx - 1]
        w, b = _dense_init(keys[3 + idx], seq_len * cin, cout)
        w_eff, b_eff = fold_spiral(w, b, indices, num_nodes, cin, cout)
        layers.append((w_eff, b_eff.reshape(1, -1).astype(np.float32)))
        acts.append("elu")

    # final SpiralConv: gcn[0] -> kpt_channels, output padded to 128 lanes
    w, b = _dense_init(keys[3 + len(gcn_channels)],
                       seq_len * gcn_channels[0], kpt_channels)
    w_eff, b_eff = fold_spiral(w, b, indices, num_nodes,
                               gcn_channels[0], kpt_channels)
    out_dim = num_nodes * kpt_channels
    out_pad = _round_up(out_dim, 128)
    w_fin = np.zeros((num_nodes * gcn_channels[0], out_pad), np.float32)
    w_fin[:, :out_dim] = w_eff
    b_fin = np.zeros((1, out_pad), np.float32)
    b_fin[0, :out_dim] = b_eff
    layers.append((w_fin, b_fin))
    acts.append("none")

    dec_layers = [(jnp.asarray(wl, jnp.bfloat16), jnp.asarray(bl, jnp.float32))
                  for (wl, bl) in layers]

    return {
        "taps": jnp.asarray(taps, jnp.bfloat16),
        "conv_bias_row": jnp.asarray(bias_row, jnp.float32),
        "pool": jnp.asarray(pool, jnp.bfloat16),
        "sel": jnp.asarray(sel, jnp.bfloat16),
        "dec_layers": dec_layers,
        "dec_acts": tuple(acts),
        "num_nodes": num_nodes,
        "kpt_channels": kpt_channels,
        "in_channels": C,
        "cwp_pad": CWp_pad,
    }


# ----------------------------------------------------------------------------
# Full forward
# ----------------------------------------------------------------------------
def cnn3d_gcn_forward(params, x):
    # x: (B, C, H, W, T); torch does permute(0,1,4,2,3) -> (B, C, T, H, W).
    # Collapsed layout glue: one transpose straight to (B, T, H, C, W),
    # cast to bf16 BEFORE padding (halves bytes moved by the pads).
    B, C, H, W, T = x.shape
    xt = jnp.transpose(x, (0, 4, 2, 1, 3)).astype(jnp.bfloat16)   # (B,T,H,C,W)
    xp = jnp.pad(xt, ((0, 0), (1, 1), (1, 1), (0, 0), (1, 1)))    # (B,Dp,Hp,C,Wp)
    xp = xp.reshape(B, T + 2, H + 2, C * (W + 2))
    pad_lanes = params["cwp_pad"] - C * (W + 2)
    xp = jnp.pad(xp, ((0, 0), (0, 0), (0, 0), (0, pad_lanes)))    # lane-dense

    inv_n = 1.0 / float(T * H * W)

    out = cnn3d_gcn_pallas(
        xp, params["taps"], params["conv_bias_row"], params["pool"],
        params["sel"], params["dec_layers"], params["dec_acts"], inv_n=inv_n)

    Nn, kc = params["num_nodes"], params["kpt_channels"]
    return out[:B, :Nn * kc].reshape(B, Nn, kc)


# ----------------------------------------------------------------------------
if __name__ == "__main__":
    B, C, H, W, T = 2, 3, 16, 16, 8
    kpt_channels = 2
    gcn_channels = [16, 32]
    num_kpts, num_tpts = 8, 2
    features_size = 64
    conv_out = 8

    root = jax.random.PRNGKey(0)
    k_param, k_in = jax.random.split(root)
    params = init_params(
        k_param,
        batch_size=B, in_channels=C, conv_out=conv_out,
        features_size=features_size, kpt_channels=kpt_channels,
        gcn_channels=gcn_channels, num_kpts=num_kpts, num_tpts=num_tpts,
        H=H, W=W, T=T,
    )

    x = jax.random.normal(k_in, (B, C, H, W, T), jnp.float32)

    fwd = jax.jit(lambda xx: cnn3d_gcn_forward(params, xx))
    out = fwd(x)
    out = jax.block_until_ready(out)

    assert out.shape == (B, num_kpts * num_tpts, kpt_channels), out.shape
    assert out.dtype == jnp.float32
    assert bool(jnp.all(jnp.isfinite(out)))
    print("KERNEL_OK")
</pallas_src>

<mosaic_0001>
module attributes {stable_mosaic.version = 11 : i64} {
  func.func @_cnn3d_gcn_kernel(%arg0: i32, %arg1: memref<2x10x18x128xbf16, #tpu.memory_space<vmem>>, %arg2: memref<9x128x128xbf16, #tpu.memory_space<vmem>>, %arg3: memref<1x128xf32, #tpu.memory_space<vmem>>, %arg4: memref<128x128xbf16, #tpu.memory_space<vmem>>, %arg5: memref<8x256xbf16, #tpu.memory_space<vmem>>, %arg6: memref<128x128xbf16, #tpu.memory_space<vmem>>, %arg7: memref<1x128xf32, #tpu.memory_space<vmem>>, %arg8: memref<128x512xbf16, #tpu.memory_space<vmem>>, %arg9: memref<1x512xf32, #tpu.memory_space<vmem>>, %arg10: memref<512x512xbf16, #tpu.memory_space<vmem>>, %arg11: memref<1x512xf32, #tpu.memory_space<vmem>>, %arg12: memref<512x256xbf16, #tpu.memory_space<vmem>>, %arg13: memref<1x256xf32, #tpu.memory_space<vmem>>, %arg14: memref<256x128xbf16, #tpu.memory_space<vmem>>, %arg15: memref<1x128xf32, #tpu.memory_space<vmem>>, %arg16: memref<8x128xf32, #tpu.memory_space<vmem>>) attributes {dimension_semantics = [#tpu.dimension_semantics<arbitrary>], iteration_bounds = array<i64: 1>, scalar_prefetch = 0 : i64, scratch_operands = 0 : i64, tpu.core_type = #tpu.core_type<tc>, window_params = [{pipeline_mode = #tpu.pipeline_mode<synchronous>, transform_indices = @transform_0, window_bounds = array<i64: 2, 10, 18, 128>}, {pipeline_mode = #tpu.pipeline_mode<synchronous>, transform_indices = @transform_1, window_bounds = array<i64: 9, 128, 128>}, {pipeline_mode = #tpu.pipeline_mode<synchronous>, transform_indices = @transform_2, window_bounds = array<i64: 1, 128>}, {pipeline_mode = #tpu.pipeline_mode<synchronous>, transform_indices = @transform_3, window_bounds = array<i64: 128, 128>}, {pipeline_mode = #tpu.pipeline_mode<synchronous>, transform_indices = @transform_4, window_bounds = array<i64: 8, 256>}, {pipeline_mode = #tpu.pipeline_mode<synchronous>, transform_indices = @transform_5, window_bounds = array<i64: 128, 128>}, {pipeline_mode = #tpu.pipeline_mode<synchronous>, transform_indices = @transform_6, window_bounds = array<i64: 1, 128>}, {pipeline_mode = #tpu.pipeline_mode<synchronous>, transform_indices = @transform_7, window_bounds = array<i64: 128, 512>}, {pipeline_mode = #tpu.pipeline_mode<synchronous>, transform_indices = @transform_8, window_bounds = array<i64: 1, 512>}, {pipeline_mode = #tpu.pipeline_mode<synchronous>, transform_indices = @transform_9, window_bounds = array<i64: 512, 512>}, {pipeline_mode = #tpu.pipeline_mode<synchronous>, transform_indices = @transform_10, window_bounds = array<i64: 1, 512>}, {pipeline_mode = #tpu.pipeline_mode<synchronous>, transform_indices = @transform_11, window_bounds = array<i64: 512, 256>}, {pipeline_mode = #tpu.pipeline_mode<synchronous>, transform_indices = @transform_12, window_bounds = array<i64: 1, 256>}, {pipeline_mode = #tpu.pipeline_mode<synchronous>, transform_indices = @transform_13, window_bounds = array<i64: 256, 128>}, {pipeline_mode = #tpu.pipeline_mode<synchronous>, transform_indices = @transform_14, window_bounds = array<i64: 1, 128>}, {pipeline_mode = #tpu.pipeline_mode<synchronous>, transform_indices = @transform_15, window_bounds = array<i64: 8, 128>}]} {
    %c0 = arith.constant 0 : index
    %c0_0 = arith.constant 0 : index
    %c0_1 = arith.constant 0 : index
    %c0_2 = arith.constant 0 : index
    %0 = vector.load %arg1[%c0, %c0_0, %c0_1, %c0_2] : memref<2x10x18x128xbf16, #tpu.memory_space<vmem>>, vector<2x8x16x128xbf16>
    %1 = vector.shape_cast %0 : vector<2x8x16x128xbf16> to vector<256x128xbf16>
    %c0_3 = arith.constant 0 : index
    %c0_4 = arith.constant 0 : index
    %c0_5 = arith.constant 0 : index
    %2 = vector.load %arg2[%c0_3, %c0_4, %c0_5] : memref<9x128x128xbf16, #tpu.memory_space<vmem>>, vector<1x128x128xbf16>
    %3 = vector.shape_cast %2 : vector<1x128x128xbf16> to vector<128x128xbf16>
    %cst = arith.constant dense<0.000000e+00> : vector<256x128xf32>
    %4 = tpu.matmul %1, %3, %cst {dimension_numbers = #tpu.dot_dimension_numbers<[1], [0], [0], [1], [0, 0, 1, 1], [], []>} : vector<256x128xbf16>, vector<128x128xbf16>, vector<256x128xf32> -> vector<256x128xf32>
    %c0_6 = arith.constant 0 : index
    %c0_7 = arith.constant 0 : index
    %c1 = arith.constant 1 : index
    %c0_8 = arith.constant 0 : index
    %5 = vector.load %arg1[%c0_6, %c0_7, %c1, %c0_8] : memref<2x10x18x128xbf16, #tpu.memory_space<vmem>>, vector<2x8x16x128xbf16>
    %6 = vector.shape_cast %5 : vector<2x8x16x128xbf16> to vector<256x128xbf16>
    %c1_9 = arith.constant 1 : index
    %c0_10 = arith.constant 0 : index
    %c0_11 = arith.constant 0 : index
    %7 = vector.load %arg2[%c1_9, %c0_10, %c0_11] : memref<9x128x128xbf16, #tpu.memory_space<vmem>>, vector<1x128x128xbf16>
    %8 = vector.shape_cast %7 : vector<1x128x128xbf16> to vector<128x128xbf16>
    %cst_12 = arith.constant dense<0.000000e+00> : vector<256x128xf32>
    %9 = tpu.matmul %6, %8, %cst_12 {dimension_numbers = #tpu.dot_dimension_numbers<[1], [0], [0], [1], [0, 0, 1, 1], [], []>} : vector<256x128xbf16>, vector<128x128xbf16>, vector<256x128xf32> -> vector<256x128xf32>
    %10 = arith.addf %4, %9 : vector<256x128xf32>
    %c0_13 = arith.constant 0 : index
    %c0_14 = arith.constant 0 : index
    %c2 = arith.constant 2 : index
    %c0_15 = arith.constant 0 : index
    %11 = vector.load %arg1[%c0_13, %c0_14, %c2, %c0_15] : memref<2x10x18x128xbf16, #tpu.memory_space<vmem>>, vector<2x8x16x128xbf16>
    %12 = vector.shape_cast %11 : vector<2x8x16x128xbf16> to vector<256x128xbf16>
    %c2_16 = arith.constant 2 : index
    %c0_17 = arith.constant 0 : index
    %c0_18 = arith.constant 0 : index
    %13 = vector.load %arg2[%c2_16, %c0_17, %c0_18] : memref<9x128x128xbf16, #tpu.memory_space<vmem>>, vector<1x128x128xbf16>
    %14 = vector.shape_cast %13 : vector<1x128x128xbf16> to vector<128x128xbf16>
    %cst_19 = arith.constant dense<0.000000e+00> : vector<256x128xf32>
    %15 = tpu.matmul %12, %14, %cst_19 {dimension_numbers = #tpu.dot_dimension_numbers<[1], [0], [0], [1], [0, 0, 1, 1], [], []>} : vector<256x128xbf16>, vector<128x128xbf16>, vector<256x128xf32> -> vector<256x128xf32>
    %16 = arith.addf %10, %15 : vector<256x128xf32>
    %c0_20 = arith.constant 0 : index
    %c1_21 = arith.constant 1 : index
    %c0_22 = arith.constant 0 : index
    %c0_23 = arith.constant 0 : index
    %17 = vector.load %arg1[%c0_20, %c1_21, %c0_22, %c0_23] : memref<2x10x18x128xbf16, #tpu.memory_space<vmem>>, vector<2x8x16x128xbf16>
    %18 = vector.shape_cast %17 : vector<2x8x16x128xbf16> to vector<256x128xbf16>
    %c3 = arith.constant 3 : index
    %c0_24 = arith.constant 0 : index
    %c0_25 = arith.constant 0 : index
    %19 = vector.load %arg2[%c3, %c0_24, %c0_25] : memref<9x128x128xbf16, #tpu.memory_space<vmem>>, vector<1x128x128xbf16>
    %20 = vector.shape_cast %19 : vector<1x128x128xbf16> to vector<128x128xbf16>
    %cst_26 = arith.constant dense<0.000000e+00> : vector<256x128xf32>
    %21 = tpu.matmul %18, %20, %cst_26 {dimension_numbers = #tpu.dot_dimension_numbers<[1], [0], [0], [1], [0, 0, 1, 1], [], []>} : vector<256x128xbf16>, vector<128x128xbf16>, vector<256x128xf32> -> vector<256x128xf32>
    %22 = arith.addf %16, %21 : vector<256x128xf32>
    %c0_27 = arith.constant 0 : index
    %c1_28 = arith.constant 1 : index
    %c1_29 = arith.constant 1 : index
    %c0_30 = arith.constant 0 : index
    %23 = vector.load %arg1[%c0_27, %c1_28, %c1_29, %c0_30] : memref<2x10x18x128xbf16, #tpu.memory_space<vmem>>, vector<2x8x16x128xbf16>
    %24 = vector.shape_cast %23 : vector<2x8x16x128xbf16> to vector<256x128xbf16>
    %c4 = arith.constant 4 : index
    %c0_31 = arith.constant 0 : index
    %c0_32 = arith.constant 0 : index
    %25 = vector.load %arg2[%c4, %c0_31, %c0_32] : memref<9x128x128xbf16, #tpu.memory_space<vmem>>, vector<1x128x128xbf16>
    %26 = vector.shape_cast %25 : vector<1x128x128xbf16> to vector<128x128xbf16>
    %cst_33 = arith.constant dense<0.000000e+00> : vector<256x128xf32>
    %27 = tpu.matmul %24, %26, %cst_33 {dimension_numbers = #tpu.dot_dimension_numbers<[1], [0], [0], [1], [0, 0, 1, 1], [], []>} : vector<256x128xbf16>, vector<128x128xbf16>, vector<256x128xf32> -> vector<256x128xf32>
    %28 = arith.addf %22, %27 : vector<256x128xf32>
    %c0_34 = arith.constant 0 : index
    %c1_35 = arith.constant 1 : index
    %c2_36 = arith.constant 2 : index
    %c0_37 = arith.constant 0 : index
    %29 = vector.load %arg1[%c0_34, %c1_35, %c2_36, %c0_37] : memref<2x10x18x128xbf16, #tpu.memory_space<vmem>>, vector<2x8x16x128xbf16>
    %30 = vector.shape_cast %29 : vector<2x8x16x128xbf16> to vector<256x128xbf16>
    %c5 = arith.constant 5 : index
    %c0_38 = arith.constant 0 : index
    %c0_39 = arith.constant 0 : index
    %31 = vector.load %arg2[%c5, %c0_38, %c0_39] : memref<9x128x128xbf16, #tpu.memory_space<vmem>>, vector<1x128x128xbf16>
    %32 = vector.shape_cast %31 : vector<1x128x128xbf16> to vector<128x128xbf16>
    %cst_40 = arith.constant dense<0.000000e+00> : vector<256x128xf32>
    %33 = tpu.matmul %30, %32, %cst_40 {dimension_numbers = #tpu.dot_dimension_numbers<[1], [0], [0], [1], [0, 0, 1, 1], [], []>} : vector<256x128xbf16>, vector<128x128xbf16>, vector<256x128xf32> -> vector<256x128xf32>
    %34 = arith.addf %28, %33 : vector<256x128xf32>
    %c0_41 = arith.constant 0 : index
    %c2_42 = arith.constant 2 : index
    %c0_43 = arith.constant 0 : index
    %c0_44 = arith.constant 0 : index
    %35 = vector.load %arg1[%c0_41, %c2_42, %c0_43, %c0_44] : memref<2x10x18x128xbf16, #tpu.memory_space<vmem>>, vector<2x8x16x128xbf16>
    %36 = vector.shape_cast %35 : vector<2x8x16x128xbf16> to vector<256x128xbf16>
    %c6 = arith.constant 6 : index
    %c0_45 = arith.constant 0 : index
    %c0_46 = arith.constant 0 : index
    %37 = vector.load %arg2[%c6, %c0_45, %c0_46] : memref<9x128x128xbf16, #tpu.memory_space<vmem>>, vector<1x128x128xbf16>
    %38 = vector.shape_cast %37 : vector<1x128x128xbf16> to vector<128x128xbf16>
    %cst_47 = arith.constant dense<0.000000e+00> : vector<256x128xf32>
    %39 = tpu.matmul %36, %38, %cst_47 {dimension_numbers = #tpu.dot_dimension_numbers<[1], [0], [0], [1], [0, 0, 1, 1], [], []>} : vector<256x128xbf16>, vector<128x128xbf16>, vector<256x128xf32> -> vector<256x128xf32>
    %40 = arith.addf %34, %39 : vector<256x128xf32>
    %c0_48 = arith.constant 0 : index
    %c2_49 = arith.constant 2 : index
    %c1_50 = arith.constant 1 : index
    %c0_51 = arith.constant 0 : index
    %41 = vector.load %arg1[%c0_48, %c2_49, %c1_50, %c0_51] : memref<2x10x18x128xbf16, #tpu.memory_space<vmem>>, vector<2x8x16x128xbf16>
    %42 = vector.shape_cast %41 : vector<2x8x16x128xbf16> to vector<256x128xbf16>
    %c7 = arith.constant 7 : index
    %c0_52 = arith.constant 0 : index
    %c0_53 = arith.constant 0 : index
    %43 = vector.load %arg2[%c7, %c0_52, %c0_53] : memref<9x128x128xbf16, #tpu.memory_space<vmem>>, vector<1x128x128xbf16>
    %44 = vector.shape_cast %43 : vector<1x128x128xbf16> to vector<128x128xbf16>
    %cst_54 = arith.constant dense<0.000000e+00> : vector<256x128xf32>
    %45 = tpu.matmul %42, %44, %cst_54 {dimension_numbers = #tpu.dot_dimension_numbers<[1], [0], [0], [1], [0, 0, 1, 1], [], []>} : vector<256x128xbf16>, vector<128x128xbf16>, vector<256x128xf32> -> vector<256x128xf32>
    %46 = arith.addf %40, %45 : vector<256x128xf32>
    %c0_55 = arith.constant 0 : index
    %c2_56 = arith.constant 2 : index
    %c2_57 = arith.constant 2 : index
    %c0_58 = arith.constant 0 : index
    %47 = vector.load %arg1[%c0_55, %c2_56, %c2_57, %c0_58] : memref<2x10x18x128xbf16, #tpu.memory_space<vmem>>, vector<2x8x16x128xbf16>
    %48 = vector.shape_cast %47 : vector<2x8x16x128xbf16> to vector<256x128xbf16>
    %c8 = arith.constant 8 : index
    %c0_59 = arith.constant 0 : index
    %c0_60 = arith.constant 0 : index
    %49 = vector.load %arg2[%c8, %c0_59, %c0_60] : memref<9x128x128xbf16, #tpu.memory_space<vmem>>, vector<1x128x128xbf16>
    %50 = vector.shape_cast %49 : vector<1x128x128xbf16> to vector<128x128xbf16>
    %cst_61 = arith.constant dense<0.000000e+00> : vector<256x128xf32>
    %51 = tpu.matmul %48, %50, %cst_61 {dimension_numbers = #tpu.dot_dimension_numbers<[1], [0], [0], [1], [0, 0, 1, 1], [], []>} : vector<256x128xbf16>, vector<128x128xbf16>, vector<256x128xf32> -> vector<256x128xf32>
    %52 = arith.addf %46, %51 : vector<256x128xf32>
    %c0_62 = arith.constant 0 : index
    %c0_63 = arith.constant 0 : index
    %53 = vector.load %arg3[%c0_62, %c0_63] : memref<1x128xf32, #tpu.memory_space<vmem>>, vector<1x128xf32>
    %54 = vector.broadcast %53 : vector<1x128xf32> to vector<256x128xf32>
    %55 = arith.addf %52, %54 : vector<256x128xf32>
    %cst_64 = arith.constant 0.000000e+00 : f32
    %56 = vector.broadcast %cst_64 : f32 to vector<256x128xf32>
    %57 = arith.maximumf %55, %56 : vector<256x128xf32>
    %58 = arith.truncf %57 : vector<256x128xf32> to vector<256x128xbf16>
    %c0_65 = arith.constant 0 : index
    %c0_66 = arith.constant 0 : index
    %59 = vector.load %arg4[%c0_65, %c0_66] : memref<128x128xbf16, #tpu.memory_space<vmem>>, vector<128x128xbf16>
    %cst_67 = arith.constant dense<0.000000e+00> : vector<256x128xf32>
    %60 = tpu.matmul %58, %59, %cst_67 {dimension_numbers = #tpu.dot_dimension_numbers<[1], [0], [0], [1], [0, 0, 1, 1], [], []>} : vector<256x128xbf16>, vector<128x128xbf16>, vector<256x128xf32> -> vector<256x128xf32>
    %c0_68 = arith.constant 0 : index
    %c0_69 = arith.constant 0 : index
    %61 = vector.load %arg5[%c0_68, %c0_69] : memref<8x256xbf16, #tpu.memory_space<vmem>>, vector<8x256xbf16>
    %62 = arith.truncf %60 : vector<256x128xf32> to vector<256x128xbf16>
    %cst_70 = arith.constant dense<0.000000e+00> : vector<8x128xf32>
    %63 = tpu.matmul %61, %62, %cst_70 {dimension_numbers = #tpu.dot_dimension_numbers<[1], [0], [0], [1], [0, 0, 1, 1], [], []>} : vector<8x256xbf16>, vector<256x128xbf16>, vector<8x128xf32> -> vector<8x128xf32>
    %cst_71 = arith.constant 4.8828125E-4 : f32
    %64 = vector.broadcast %cst_71 : f32 to vector<8x128xf32>
    %65 = arith.mulf %63, %64 : vector<8x128xf32>
    %66 = arith.truncf %65 : vector<8x128xf32> to vector<8x128xbf16>
    %c0_72 = arith.constant 0 : index
    %c0_73 = arith.constant 0 : index
    %67 = vector.load %arg6[%c0_72, %c0_73] : memref<128x128xbf16, #tpu.memory_space<vmem>>, vector<128x128xbf16>
    %c0_74 = arith.constant 0 : index
    %c0_75 = arith.constant 0 : index
    %68 = vector.load %arg7[%c0_74, %c0_75] : memref<1x128xf32, #tpu.memory_space<vmem>>, vector<1x128xf32>
    %cst_76 = arith.constant dense<0.000000e+00> : vector<8x128xf32>
    %69 = tpu.matmul %66, %67, %cst_76 {dimension_numbers = #tpu.dot_dimension_numbers<[1], [0], [0], [1], [0, 0, 1, 1], [], []>} : vector<8x128xbf16>, vector<128x128xbf16>, vector<8x128xf32> -> vector<8x128xf32>
    %70 = vector.broadcast %68 : vector<1x128xf32> to vector<8x128xf32>
    %71 = arith.addf %69, %70 : vector<8x128xf32>
    %72 = arith.truncf %71 : vector<8x128xf32> to vector<8x128xbf16>
    %c0_77 = arith.constant 0 : index
    %c0_78 = arith.constant 0 : index
    %73 = vector.load %arg8[%c0_77, %c0_78] : memref<128x512xbf16, #tpu.memory_space<vmem>>, vector<128x512xbf16>
    %c0_79 = arith.constant 0 : index
    %c0_80 = arith.constant 0 : index
    %74 = vector.load %arg9[%c0_79, %c0_80] : memref<1x512xf32, #tpu.memory_space<vmem>>, vector<1x512xf32>
    %cst_81 = arith.constant dense<0.000000e+00> : vector<8x512xf32>
    %75 = tpu.matmul %72, %73, %cst_81 {dimension_numbers = #tpu.dot_dimension_numbers<[1], [0], [0], [1], [0, 0, 1, 1], [], []>} : vector<8x128xbf16>, vector<128x512xbf16>, vector<8x512xf32> -> vector<8x512xf32>
    %76 = vector.broadcast %74 : vector<1x512xf32> to vector<8x512xf32>
    %77 = arith.addf %75, %76 : vector<8x512xf32>
    %78 = arith.truncf %77 : vector<8x512xf32> to vector<8x512xbf16>
    %c0_82 = arith.constant 0 : index
    %c0_83 = arith.constant 0 : index
    %79 = vector.load %arg10[%c0_82, %c0_83] : memref<512x512xbf16, #tpu.memory_space<vmem>>, vector<512x512xbf16>
    %c0_84 = arith.constant 0 : index
    %c0_85 = arith.constant 0 : index
    %80 = vector.load %arg11[%c0_84, %c0_85] : memref<1x512xf32, #tpu.memory_space<vmem>>, vector<1x512xf32>
    %cst_86 = arith.constant dense<0.000000e+00> : vector<8x512xf32>
    %81 = tpu.matmul %78, %79, %cst_86 {dimension_numbers = #tpu.dot_dimension_numbers<[1], [0], [0], [1], [0, 0, 1, 1], [], []>} : vector<8x512xbf16>, vector<512x512xbf16>, vector<8x512xf32> -> vector<8x512xf32>
    %82 = vector.broadcast %80 : vector<1x512xf32> to vector<8x512xf32>
    %83 = arith.addf %81, %82 : vector<8x512xf32>
    %cst_87 = arith.constant 0.000000e+00 : f32
    %84 = vector.broadcast %cst_87 : f32 to vector<8x512xf32>
    %85 = arith.cmpf ogt, %83, %84 : vector<8x512xf32>
    %cst_88 = arith.constant 0.000000e+00 : f32
    %86 = vector.broadcast %cst_88 : f32 to vector<8x512xf32>
    %87 = arith.minimumf %83, %86 : vector<8x512xf32>
    %88 = math.exp %87 : vector<8x512xf32>
    %cst_89 = arith.constant 1.000000e+00 : f32
    %89 = vector.broadcast %cst_89 : f32 to vector<8x512xf32>
    %90 = arith.subf %88, %89 : vector<8x512xf32>
    %91 = arith.select %85, %83, %90 : vector<8x512xi1>, vector<8x512xf32>
    %92 = arith.truncf %91 : vector<8x512xf32> to vector<8x512xbf16>
    %c0_90 = arith.constant 0 : index
    %c0_91 = arith.constant 0 : index
    %93 = vector.load %arg12[%c0_90, %c0_91] : memref<512x256xbf16, #tpu.memory_space<vmem>>, vector<512x256xbf16>
    %c0_92 = arith.constant 0 : index
    %c0_93 = arith.constant 0 : index
    %94 = vector.load %arg13[%c0_92, %c0_93] : memref<1x256xf32, #tpu.memory_space<vmem>>, vector<1x256xf32>
    %cst_94 = arith.constant dense<0.000000e+00> : vector<8x256xf32>
    %95 = tpu.matmul %92, %93, %cst_94 {dimension_numbers = #tpu.dot_dimension_numbers<[1], [0], [0], [1], [0, 0, 1, 1], [], []>} : vector<8x512xbf16>, vector<512x256xbf16>, vector<8x256xf32> -> vector<8x256xf32>
    %96 = vector.broadcast %94 : vector<1x256xf32> to vector<8x256xf32>
    %97 = arith.addf %95, %96 : vector<8x256xf32>
    %cst_95 = arith.constant 0.000000e+00 : f32
    %98 = vector.broadcast %cst_95 : f32 to vector<8x256xf32>
    %99 = arith.cmpf ogt, %97, %98 : vector<8x256xf32>
    %cst_96 = arith.constant 0.000000e+00 : f32
    %100 = vector.broadcast %cst_96 : f32 to vector<8x256xf32>
    %101 = arith.minimumf %97, %100 : vector<8x256xf32>
    %102 = math.exp %101 : vector<8x256xf32>
    %cst_97 = arith.constant 1.000000e+00 : f32
    %103 = vector.broadcast %cst_97 : f32 to vector<8x256xf32>
    %104 = arith.subf %102, %103 : vector<8x256xf32>
    %105 = arith.select %99, %97, %104 : vector<8x256xi1>, vector<8x256xf32>
    %106 = arith.truncf %105 : vector<8x256xf32> to vector<8x256xbf16>
    %c0_98 = arith.constant 0 : index
    %c0_99 = arith.constant 0 : index
    %107 = vector.load %arg14[%c0_98, %c0_99] : memref<256x128xbf16, #tpu.memory_space<vmem>>, vector<256x128xbf16>
    %c0_100 = arith.constant 0 : index
    %c0_101 = arith.constant 0 : index
    %108 = vector.load %arg15[%c0_100, %c0_101] : memref<1x128xf32, #tpu.memory_space<vmem>>, vector<1x128xf32>
    %cst_102 = arith.constant dense<0.000000e+00> : vector<8x128xf32>
    %109 = tpu.matmul %106, %107, %cst_102 {dimension_numbers = #tpu.dot_dimension_numbers<[1], [0], [0], [1], [0, 0, 1, 1], [], []>} : vector<8x256xbf16>, vector<256x128xbf16>, vector<8x128xf32> -> vector<8x128xf32>
    %110 = vector.broadcast %108 : vector<1x128xf32> to vector<8x128xf32>
    %111 = arith.addf %109, %110 : vector<8x128xf32>
    %c0_103 = arith.constant 0 : index
    %c0_104 = arith.constant 0 : index
    %112 = vector.load %arg16[%c0_103, %c0_104] : memref<8x128xf32, #tpu.memory_space<vmem>>, vector<8x128xf32>
    tpu.vector_store %arg16[%c0_103, %c0_104], %111 {strides = array<i32>} : memref<8x128xf32, #tpu.memory_space<vmem>>, vector<8x128xf32>,
    return
  }
  func.func @transform_0(%arg0: i32) -> (i32, i32, i32, i32) {
    %c0_i32 = arith.constant 0 : i32
    %c0_i32_0 = arith.constant 0 : i32
    %c0_i32_1 = arith.constant 0 : i32
    %c0_i32_2 = arith.constant 0 : i32
    %c0_i32_3 = arith.constant 0 : i32
    return %c0_i32, %c0_i32_0, %c0_i32_1, %c0_i32_2 : i32, i32, i32, i32
  }
  func.func @transform_1(%arg0: i32) -> (i32, i32, i32) {
    %c0_i32 = arith.constant 0 : i32
    %c0_i32_0 = arith.constant 0 : i32
    %c0_i32_1 = arith.constant 0 : i32
    %c0_i32_2 = arith.constant 0 : i32
    return %c0_i32, %c0_i32_0, %c0_i32_1 : i32, i32, i32
  }
  func.func @transform_2(%arg0: i32) -> (i32, i32) {
    %c0_i32 = arith.constant 0 : i32
    %c0_i32_0 = arith.constant 0 : i32
    %c0_i32_1 = arith.constant 0 : i32
    return %c0_i32, %c0_i32_0 : i32, i32
  }
  func.func @transform_3(%arg0: i32) -> (i32, i32) {
    %c0_i32 = arith.constant 0 : i32
    %c0_i32_0 = arith.constant 0 : i32
    %c0_i32_1 = arith.constant 0 : i32
    return %c0_i32, %c0_i32_0 : i32, i32
  }
  func.func @transform_4(%arg0: i32) -> (i32, i32) {
    %c0_i32 = arith.constant 0 : i32
    %c0_i32_0 = arith.constant 0 : i32
    %c0_i32_1 = arith.constant 0 : i32
    return %c0_i32, %c0_i32_0 : i32, i32
  }
  func.func @transform_5(%arg0: i32) -> (i32, i32) {
    %c0_i32 = arith.constant 0 : i32
    %c0_i32_0 = arith.constant 0 : i32
    %c0_i32_1 = arith.constant 0 : i32
    return %c0_i32, %c0_i32_0 : i32, i32
  }
  func.func @transform_6(%arg0: i32) -> (i32, i32) {
    %c0_i32 = arith.constant 0 : i32
    %c0_i32_0 = arith.constant 0 : i32
    %c0_i32_1 = arith.constant 0 : i32
    return %c0_i32, %c0_i32_0 : i32, i32
  }
  func.func @transform_7(%arg0: i32) -> (i32, i32) {
    %c0_i32 = arith.constant 0 : i32
    %c0_i32_0 = arith.constant 0 : i32
    %c0_i32_1 = arith.constant 0 : i32
    return %c0_i32, %c0_i32_0 : i32, i32
  }
  func.func @transform_8(%arg0: i32) -> (i32, i32) {
    %c0_i32 = arith.constant 0 : i32
    %c0_i32_0 = arith.constant 0 : i32
    %c0_i32_1 = arith.constant 0 : i32
    return %c0_i32, %c0_i32_0 : i32, i32
  }
  func.func @transform_9(%arg0: i32) -> (i32, i32) {
    %c0_i32 = arith.constant 0 : i32
    %c0_i32_0 = arith.constant 0 : i32
    %c0_i32_1 = arith.constant 0 : i32
    return %c0_i32, %c0_i32_0 : i32, i32
  }
  func.func @transform_10(%arg0: i32) -> (i32, i32) {
    %c0_i32 = arith.constant 0 : i32
    %c0_i32_0 = arith.constant 0 : i32
    %c0_i32_1 = arith.constant 0 : i32
    return %c0_i32, %c0_i32_0 : i32, i32
  }
  func.func @transform_11(%arg0: i32) -> (i32, i32) {
    %c0_i32 = arith.constant 0 : i32
    %c0_i32_0 = arith.constant 0 : i32
    %c0_i32_1 = arith.constant 0 : i32
    return %c0_i32, %c0_i32_0 : i32, i32
  }
  func.func @transform_12(%arg0: i32) -> (i32, i32) {
    %c0_i32 = arith.constant 0 : i32
    %c0_i32_0 = arith.constant 0 : i32
    %c0_i32_1 = arith.constant 0 : i32
    return %c0_i32, %c0_i32_0 : i32, i32
  }
  func.func @transform_13(%arg0: i32) -> (i32, i32) {
    %c0_i32 = arith.constant 0 : i32
    %c0_i32_0 = arith.constant 0 : i32
    %c0_i32_1 = arith.constant 0 : i32
    return %c0_i32, %c0_i32_0 : i32, i32
  }
  func.func @transform_14(%arg0: i32) -> (i32, i32) {
    %c0_i32 = arith.constant 0 : i32
    %c0_i32_0 = arith.constant 0 : i32
    %c0_i32_1 = arith.constant 0 : i32
    return %c0_i32, %c0_i32_0 : i32, i32
  }
  func.func @transform_15(%arg0: i32) -> (i32, i32) {
    %c0_i32 = arith.constant 0 : i32
    %c0_i32_0 = arith.constant 0 : i32
    %c0_i32_1 = arith.constant 0 : i32
    return %c0_i32, %c0_i32_0 : i32, i32
  }
}

</mosaic_0001>

<llo_original>
// kernel: _lambda_.1
$region0: #{_lambda_.1}
  #allocation0 [shape = 'u32[]', space=smem, size = 0x4, offset = 0x4, fixed_abs, tag = 'smem constant byte address 0x4 - core index']
  #allocation1 [shape = 'u32[144,128]{1,0:T(1,128)}', space=vmem, size = 0x12000, scoped, tag = 'internal scratch']
  %s0 = inlined_call_operand.vmem [shape: bf16[2,10,18,128], index: 0, kind: input, shape index: {}]
  %s1 = inlined_call_operand.vmem [shape: bf16[9,128,128], index: 1, kind: input, shape index: {}]
  %s2 = inlined_call_operand.vmem [shape: f32[1,128], index: 2, kind: input, shape index: {}]
  %s3 = inlined_call_operand.vmem [shape: bf16[128,128], index: 3, kind: input, shape index: {}]
  %s4 = inlined_call_operand.vmem [shape: bf16[8,256], index: 4, kind: input, shape index: {}]
  %s5 = inlined_call_operand.vmem [shape: bf16[128,128], index: 5, kind: input, shape index: {}]
  %s6 = inlined_call_operand.vmem [shape: f32[1,128], index: 6, kind: input, shape index: {}]
  %s7 = inlined_call_operand.vmem [shape: bf16[128,512], index: 7, kind: input, shape index: {}]
  %s8 = inlined_call_operand.vmem [shape: f32[1,512], index: 8, kind: input, shape index: {}]
  %s9 = inlined_call_operand.vmem [shape: bf16[512,512], index: 9, kind: input, shape index: {}]
  %s10 = inlined_call_operand.vmem [shape: f32[1,512], index: 10, kind: input, shape index: {}]
  %s11 = inlined_call_operand.vmem [shape: bf16[512,256], index: 11, kind: input, shape index: {}]
  %s12 = inlined_call_operand.vmem [shape: f32[1,256], index: 12, kind: input, shape index: {}]
  %s13 = inlined_call_operand.vmem [shape: bf16[256,128], index: 13, kind: input, shape index: {}]
  %s14 = inlined_call_operand.vmem [shape: f32[1,128], index: 14, kind: input, shape index: {}]
  %s15 = inlined_call_operand.vmem [shape: f32[8,128], index: 15, kind: output, shape index: {}]
  %s16 = sld [smem:[#allocation0]]
  $region70: #{_lambda_.1} parent=0
    _
  %s18 = ssub.s32 1, %s16
  %s19 = scalar_select 0, %s18, %s16
  // Predicated region
  $region2: #{_lambda_.1} parent=0 // pred_check
    _
  $region3: #{_lambda_.1} parent=0 // pred_check_branch
    %21 = sbr.rel (0) target = $region5
  $region4: #{_lambda_.1} parent=0 // pred_region
    _
  $region5: #{_lambda_.1} parent=0 // pred_fallthru
    _
  // Predicated region
  $region6: #{_lambda_.1} parent=0 // pred_check
    _
  $region7: #{_lambda_.1} parent=0 // pred_check_branch
    %23 = sbr.rel (0) target = $region9
  $region8: #{_lambda_.1} parent=0 // pred_region
    _
  $region9: #{_lambda_.1} parent=0 // pred_fallthru
    _
  // Predicated region
  $region10: #{_lambda_.1} parent=0 // pred_check
    _
  $region11: #{_lambda_.1} parent=0 // pred_check_branch
    %25 = sbr.rel (0) target = $region13
  $region12: #{_lambda_.1} parent=0 // pred_region
    _
  $region13: #{_lambda_.1} parent=0 // pred_fallthru
    _
  // Predicated region
  $region14: #{_lambda_.1} parent=0 // pred_check
    _
  $region15: #{_lambda_.1} parent=0 // pred_check_branch
    %27 = sbr.rel (0) target = $region17
  $region16: #{_lambda_.1} parent=0 // pred_region
    _
  $region17: #{_lambda_.1} parent=0 // pred_fallthru
    _
  // Predicated region
  $region18: #{_lambda_.1} parent=0 // pred_check
    _
  $region19: #{_lambda_.1} parent=0 // pred_check_branch
    %29 = sbr.rel (0) target = $region21
  $region20: #{_lambda_.1} parent=0 // pred_region
    _
  $region21: #{_lambda_.1} parent=0 // pred_fallthru
    _
  // Predicated region
  $region22: #{_lambda_.1} parent=0 // pred_check
    _
  $region23: #{_lambda_.1} parent=0 // pred_check_branch
    %31 = sbr.rel (0) target = $region25
  $region24: #{_lambda_.1} parent=0 // pred_region
    _
  $region25: #{_lambda_.1} parent=0 // pred_fallthru
    _
  // Predicated region
  $region26: #{_lambda_.1} parent=0 // pred_check
    _
  $region27: #{_lambda_.1} parent=0 // pred_check_branch
    %33 = sbr.rel (0) target = $region29
  $region28: #{_lambda_.1} parent=0 // pred_region
    _
  $region29: #{_lambda_.1} parent=0 // pred_fallthru
    _
  // Predicated region
  $region30: #{_lambda_.1} parent=0 // pred_check
    _
  $region31: #{_lambda_.1} parent=0 // pred_check_branch
    %35 = sbr.rel (0) target = $region33
  $region32: #{_lambda_.1} parent=0 // pred_region
    _
  $region33: #{_lambda_.1} parent=0 // pred_fallthru
    _
  // Predicated region
  $region34: #{_lambda_.1} parent=0 // pred_check
    _
  $region35: #{_lambda_.1} parent=0 // pred_check_branch
    %37 = sbr.rel (0) target = $region37
  $region36: #{_lambda_.1} parent=0 // pred_region
    _
  $region37: #{_lambda_.1} parent=0 // pred_fallthru
    _
  // Predicated region
  $region38: #{_lambda_.1} parent=0 // pred_check
    _
  $region39: #{_lambda_.1} parent=0 // pred_check_branch
    %39 = sbr.rel (0) target = $region41
  $region40: #{_lambda_.1} parent=0 // pred_region
    _
  $region41: #{_lambda_.1} parent=0 // pred_fallthru
    _
  // Predicated region
  $region42: #{_lambda_.1} parent=0 // pred_check
    _
  $region43: #{_lambda_.1} parent=0 // pred_check_branch
    %41 = sbr.rel (0) target = $region45
  $region44: #{_lambda_.1} parent=0 // pred_region
    _
  $region45: #{_lambda_.1} parent=0 // pred_fallthru
    _
  // Predicated region
  $region46: #{_lambda_.1} parent=0 // pred_check
    _
  $region47: #{_lambda_.1} parent=0 // pred_check_branch
    %43 = sbr.rel (0) target = $region49
  $region48: #{_lambda_.1} parent=0 // pred_region
    _
  $region49: #{_lambda_.1} parent=0 // pred_fallthru
    _
  // Predicated region
  $region50: #{_lambda_.1} parent=0 // pred_check
    _
  $region51: #{_lambda_.1} parent=0 // pred_check_branch
    %45 = sbr.rel (0) target = $region53
  $region52: #{_lambda_.1} parent=0 // pred_region
    _
  $region53: #{_lambda_.1} parent=0 // pred_fallthru
    _
  // Predicated region
  $region54: #{_lambda_.1} parent=0 // pred_check
    _
  $region55: #{_lambda_.1} parent=0 // pred_check_branch
    %47 = sbr.rel (0) target = $region57
  $region56: #{_lambda_.1} parent=0 // pred_region
    _
  $region57: #{_lambda_.1} parent=0 // pred_fallthru
    _
  // Predicated region
  $region58: #{_lambda_.1} parent=0 // pred_check
    _
  $region59: #{_lambda_.1} parent=0 // pred_check_branch
    %49 = sbr.rel (0) target = $region61
  $region60: #{_lambda_.1} parent=0 // pred_region
    _
  $region61: #{_lambda_.1} parent=0 // pred_fallthru
    _
  %v51 = vld [vmem:[%s0] sm:$0xf]
  %v52 = vld [vmem:[%s0 + $0x4] sm:$0xf]
  %v53 = vld [vmem:[%s0 + $0xc] sm:$0xf]
  %v54 = vld [vmem:[%s0 + $0x10] sm:$0xf]
  %v55 = vld [vmem:[%s0 + $0x18] sm:$0xf]
  %v56 = vld [vmem:[%s0 + $0x1c] sm:$0xf]
  %v57 = vld [vmem:[%s0 + $0x24] sm:$0xf]
  %v58 = vld [vmem:[%s0 + $0x28] sm:$0xf]
  %v59 = vld [vmem:[%s0 + $0x30] sm:$0xf]
  %v60 = vld [vmem:[%s0 + $0x34] sm:$0xf]
  %v61 = vld [vmem:[%s0 + $0x3c] sm:$0xf]
  %v62 = vld [vmem:[%s0 + $0x40] sm:$0xf]
  %v63 = vld [vmem:[%s0 + $0x48] sm:$0xf]
  %v64 = vld [vmem:[%s0 + $0x4c] sm:$0xf]
  %v65 = vld [vmem:[%s0 + $0x54] sm:$0xf]
  %v66 = vld [vmem:[%s0 + $0x58] sm:$0xf]
  %v67 = vld [vmem:[%s0 + $0x78] sm:$0xf]
  %v68 = vld [vmem:[%s0 + $0x7c] sm:$0xf]
  %v69 = vld [vmem:[%s0 + $0x84] sm:$0xf]
  %v70 = vld [vmem:[%s0 + $0x88] sm:$0xf]
  %v71 = vld [vmem:[%s0 + $0x90] sm:$0xf]
  %v72 = vld [vmem:[%s0 + $0x94] sm:$0xf]
  %v73 = vld [vmem:[%s0 + $0x9c] sm:$0xf]
  %v74 = vld [vmem:[%s0 + $0xa0] sm:$0xf]
  %v75 = vld [vmem:[%s0 + $0xa8] sm:$0xf]
  %v76 = vld [vmem:[%s0 + $0xac] sm:$0xf]
  %v77 = vld [vmem:[%s0 + $0xb4] sm:$0xf]
  %v78 = vld [vmem:[%s0 + $0xb8] sm:$0xf]
  %v79 = vld [vmem:[%s0 + $0xc0] sm:$0xf]
  %v80 = vld [vmem:[%s0 + $0xc4] sm:$0xf]
  %v81 = vld [vmem:[%s0 + $0xcc] sm:$0xf]
  %v82 = vld [vmem:[%s0 + $0xd0] sm:$0xf]
  %v83 = vld [vmem:[%s1] sm:$0xf]
  %v84 = vld [vmem:[%s1 + $0x4] sm:$0xf]
  %v85 = vld [vmem:[%s1 + $0x8] sm:$0xf]
  %v86 = vld [vmem:[%s1 + $0xc] sm:$0xf]
  %v87 = vld [vmem:[%s1 + $0x10] sm:$0xf]
  %v88 = vld [vmem:[%s1 + $0x14] sm:$0xf]
  %v89 = vld [vmem:[%s1 + $0x18] sm:$0xf]
  %v90 = vld [vmem:[%s1 + $0x1c] sm:$0xf]
  %v91 = vld [vmem:[%s1 + $0x20] sm:$0xf]
  %v92 = vld [vmem:[%s1 + $0x24] sm:$0xf]
  %v93 = vld [vmem:[%s1 + $0x28] sm:$0xf]
  %v94 = vld [vmem:[%s1 + $0x2c] sm:$0xf]
  %v95 = vld [vmem:[%s1 + $0x30] sm:$0xf]
  %v96 = vld [vmem:[%s1 + $0x34] sm:$0xf]
  %v97 = vld [vmem:[%s1 + $0x38] sm:$0xf]
  %v98 = vld [vmem:[%s1 + $0x3c] sm:$0xf]
  %v99 = vld [vmem:[%s0 + $0x8] sm:$0x1]
  %v100 = vld [vmem:[%s0 + $0x14] sm:$0x1]
  %v101 = vld [vmem:[%s0 + $0x20] sm:$0x1]
  %v102 = vld [vmem:[%s0 + $0x2c] sm:$0x1]
  %v103 = vld [vmem:[%s0 + $0x38] sm:$0x1]
  %v104 = vld [vmem:[%s0 + $0x44] sm:$0x1]
  %v105 = vld [vmem:[%s0 + $0x50] sm:$0x1]
  %v106 = vld [vmem:[%s0 + $0x5c] sm:$0x1]
  %v107 = vld [vmem:[%s0 + $0x80] sm:$0x1]
  %v108 = vld [vmem:[%s0 + $0x8c] sm:$0x1]
  %v109 = vld [vmem:[%s0 + $0x98] sm:$0x1]
  %v110 = vld [vmem:[%s0 + $0xa4] sm:$0x1]
  %v111 = vld [vmem:[%s0 + $0xb0] sm:$0x1]
  %v112 = vld [vmem:[%s0 + $0xbc] sm:$0x1]
  %v113 = vld [vmem:[%s0 + $0xc8] sm:$0x1]
  %v114 = vld [vmem:[%s0 + $0xd4] sm:$0x1]
  %vm115 = vsmask.f32 3328
  %vm116 = vsmask.f32 7440
  %vm117 = vmor %vm115, %vm116
  %v119 = vshrl.u32 %v51, 16
  %v121 = vrot.slane %v119, 4
  %v122 = vshll.u32 %v51, 16
  %v124 = vrot.slane %v122, 5
  %v125 = vor.u32 %v121, %v124
  %v126 = vrot.slane %v125, 4
  %v128 = vshll.u32 %v52, 16
  %v130 = vrot.slane %v128, 5
  %v131 = vsel %vm117, %v126, %v130
  %v132 = vshrl.u32 %v52, 16
  %v134 = vrot.slane %v132, 4
  %v135 = vor.u32 %v134, %v130
  %v136 = vrot.slane %v135, 4
  %v138 = vshll.u32 %v99, 16
  %v140 = vrot.slane %v138, 5
  %v141 = vsel %vm117, %v136, %v140
  %v143 = vshrl.u32 %v53, 16
  %v145 = vrot.slane %v143, 4
  %v146 = vshll.u32 %v53, 16
  %v148 = vrot.slane %v146, 5
  %v149 = vor.u32 %v145, %v148
  %v150 = vrot.slane %v149, 4
  %v152 = vshll.u32 %v54, 16
  %v154 = vrot.slane %v152, 5
  %v155 = vsel %vm117, %v150, %v154
  %v156 = vshrl.u32 %v54, 16
  %v158 = vrot.slane %v156, 4
  %v159 = vor.u32 %v158, %v154
  %v160 = vrot.slane %v159, 4
  %v162 = vshll.u32 %v100, 16
  %v164 = vrot.slane %v162, 5
  %v165 = vsel %vm117, %v160, %v164
  %v167 = vshrl.u32 %v55, 16
  %v169 = vrot.slane %v167, 4
  %v170 = vshll.u32 %v55, 16
  %v172 = vrot.slane %v170, 5
  %v173 = vor.u32 %v169, %v172
  %v174 = vrot.slane %v173, 4
  %v176 = vshll.u32 %v56, 16
  %v178 = vrot.slane %v176, 5
  %v179 = vsel %vm117, %v174, %v178
  %v180 = vshrl.u32 %v56, 16
  %v182 = vrot.slane %v180, 4
  %v183 = vor.u32 %v182, %v178
  %v184 = vrot.slane %v183, 4
  %v186 = vshll.u32 %v101, 16
  %v188 = vrot.slane %v186, 5
  %v189 = vsel %vm117, %v184, %v188
  %v191 = vshrl.u32 %v57, 16
  %v193 = vrot.slane %v191, 4
  %v194 = vshll.u32 %v57, 16
  %v196 = vrot.slane %v194, 5
  %v197 = vor.u32 %v193, %v196
  %v198 = vrot.slane %v197, 4
  %v200 = vshll.u32 %v58, 16
  %v202 = vrot.slane %v200, 5
  %v203 = vsel %vm117, %v198, %v202
  %v204 = vshrl.u32 %v58, 16
  %v206 = vrot.slane %v204, 4
  %v207 = vor.u32 %v206, %v202
  %v208 = vrot.slane %v207, 4
  %v210 = vshll.u32 %v102, 16
  %v212 = vrot.slane %v210, 5
  %v213 = vsel %vm117, %v208, %v212
  %v215 = vshrl.u32 %v59, 16
  %v217 = vrot.slane %v215, 4
  %v218 = vshll.u32 %v59, 16
  %v220 = vrot.slane %v218, 5
  %v221 = vor.u32 %v217, %v220
  %v222 = vrot.slane %v221, 4
  %v224 = vshll.u32 %v60, 16
  %v226 = vrot.slane %v224, 5
  %v227 = vsel %vm117, %v222, %v226
  %v228 = vshrl.u32 %v60, 16
  %v230 = vrot.slane %v228, 4
  %v231 = vor.u32 %v230, %v226
  %v232 = vrot.slane %v231, 4
  %v234 = vshll.u32 %v103, 16
  %v236 = vrot.slane %v234, 5
  %v237 = vsel %vm117, %v232, %v236
  %v239 = vshrl.u32 %v61, 16
  %v241 = vrot.slane %v239, 4
  %v242 = vshll.u32 %v61, 16
  %v244 = vrot.slane %v242, 5
  %v245 = vor.u32 %v241, %v244
  %v246 = vrot.slane %v245, 4
  %v248 = vshll.u32 %v62, 16
  %v250 = vrot.slane %v248, 5
  %v251 = vsel %vm117, %v246, %v250
  %v252 = vshrl.u32 %v62, 16
  %v254 = vrot.slane %v252, 4
  %v255 = vor.u32 %v254, %v250
  %v256 = vrot.slane %v255, 4
  %v258 = vshll.u32 %v104, 16
  %v260 = vrot.slane %v258, 5
  %v261 = vsel %vm117, %v256, %v260
  %v263 = vshrl.u32 %v63, 16
  %v265 = vrot.slane %v263, 4
  %v266 = vshll.u32 %v63, 16
  %v268 = vrot.slane %v266, 5
  %v269 = vor.u32 %v265, %v268
  %v270 = vrot.slane %v269, 4
  %v272 = vshll.u32 %v64, 16
  %v274 = vrot.slane %v272, 5
  %v275 = vsel %vm117, %v270, %v274
  %v276 = vshrl.u32 %v64, 16
  %v278 = vrot.slane %v276, 4
  %v279 = vor.u32 %v278, %v274
  %v280 = vrot.slane %v279, 4
  %v282 = vshll.u32 %v105, 16
  %v284 = vrot.slane %v282, 5
  %v285 = vsel %vm117, %v280, %v284
  %v287 = vshrl.u32 %v65, 16
  %v289 = vrot.slane %v287, 4
  %v290 = vshll.u32 %v65, 16
  %v292 = vrot.slane %v290, 5
  %v293 = vor.u32 %v289, %v292
  %v294 = vrot.slane %v293, 4
  %v296 = vshll.u32 %v66, 16
  %v298 = vrot.slane %v296, 5
  %v299 = vsel %vm117, %v294, %v298
  %v300 = vshrl.u32 %v66, 16
  %v302 = vrot.slane %v300, 4
  %v303 = vor.u32 %v302, %v298
  %v304 = vrot.slane %v303, 4
  %v306 = vshll.u32 %v106, 16
  %v308 = vrot.slane %v306, 5
  %v309 = vsel %vm117, %v304, %v308
  %v311 = vshrl.u32 %v67, 16
  %v313 = vrot.slane %v311, 4
  %v314 = vshll.u32 %v67, 16
  %v316 = vrot.slane %v314, 5
  %v317 = vor.u32 %v313, %v316
  %v318 = vrot.slane %v317, 4
  %v320 = vshll.u32 %v68, 16
  %v322 = vrot.slane %v320, 5
  %v323 = vsel %vm117, %v318, %v322
  %v324 = vshrl.u32 %v68, 16
  %v326 = vrot.slane %v324, 4
  %v327 = vor.u32 %v326, %v322
  %v328 = vrot.slane %v327, 4
  %v330 = vshll.u32 %v107, 16
  %v332 = vrot.slane %v330, 5
  %v333 = vsel %vm117, %v328, %v332
  %v335 = vshrl.u32 %v69, 16
  %v337 = vrot.slane %v335, 4
  %v338 = vshll.u32 %v69, 16
  %v340 = vrot.slane %v338, 5
  %v341 = vor.u32 %v337, %v340
  %v342 = vrot.slane %v341, 4
  %v344 = vshll.u32 %v70, 16
  %v346 = vrot.slane %v344, 5
  %v347 = vsel %vm117, %v342, %v346
  %v348 = vshrl.u32 %v70, 16
  %v350 = vrot.slane %v348, 4
  %v351 = vor.u32 %v350, %v346
  %v352 = vrot.slane %v351, 4
  %v354 = vshll.u32 %v108, 16
  %v356 = vrot.slane %v354, 5
  %v357 = vsel %vm117, %v352, %v356
  %v359 = vshrl.u32 %v71, 16
  %v361 = vrot.slane %v359, 4
  %v362 = vshll.u32 %v71, 16
  %v364 = vrot.slane %v362, 5
  %v365 = vor.u32 %v361, %v364
  %v366 = vrot.slane %v365, 4
  %v368 = vshll.u32 %v72, 16
  %v370 = vrot.slane %v368, 5
  %v371 = vsel %vm117, %v366, %v370
  %v372 = vshrl.u32 %v72, 16
  %v374 = vrot.slane %v372, 4
  %v375 = vor.u32 %v374, %v370
  %v376 = vrot.slane %v375, 4
  %v378 = vshll.u32 %v109, 16
  %v380 = vrot.slane %v378, 5
  %v381 = vsel %vm117, %v376, %v380
  %v383 = vshrl.u32 %v73, 16
  %v385 = vrot.slane %v383, 4
  %v386 = vshll.u32 %v73, 16
  %v388 = vrot.slane %v386, 5
  %v389 = vor.u32 %v385, %v388
  %v390 = vrot.slane %v389, 4
  %v392 = vshll.u32 %v74, 16
  %v394 = vrot.slane %v392, 5
  %v395 = vsel %vm117, %v390, %v394
  %v396 = vshrl.u32 %v74, 16
  %v398 = vrot.slane %v396, 4
  %v399 = vor.u32 %v398, %v394
  %v400 = vrot.slane %v399, 4
  %v402 = vshll.u32 %v110, 16
  %v404 = vrot.slane %v402, 5
  %v405 = vsel %vm117, %v400, %v404
  %v407 = vshrl.u32 %v75, 16
  %v409 = vrot.slane %v407, 4
  %v410 = vshll.u32 %v75, 16
  %v412 = vrot.slane %v410, 5
  %v413 = vor.u32 %v409, %v412
  %v414 = vrot.slane %v413, 4
  %v416 = vshll.u32 %v76, 16
  %v418 = vrot.slane %v416, 5
  %v419 = vsel %vm117, %v414, %v418
  %v420 = vshrl.u32 %v76, 16
  %v422 = vrot.slane %v420, 4
  %v423 = vor.u32 %v422, %v418
  %v424 = vrot.slane %v423, 4
  %v426 = vshll.u32 %v111, 16
  %v428 = vrot.slane %v426, 5
  %v429 = vsel %vm117, %v424, %v428
  %v431 = vshrl.u32 %v77, 16
  %v433 = vrot.slane %v431, 4
  %v434 = vshll.u32 %v77, 16
  %v436 = vrot.slane %v434, 5
  %v437 = vor.u32 %v433, %v436
  %v438 = vrot.slane %v437, 4
  %v440 = vshll.u32 %v78, 16
  %v442 = vrot.slane %v440, 5
  %v443 = vsel %vm117, %v438, %v442
  %v444 = vshrl.u32 %v78, 16
  %v446 = vrot.slane %v444, 4
  %v447 = vor.u32 %v446, %v442
  %v448 = vrot.slane %v447, 4
  %v450 = vshll.u32 %v112, 16
  %v452 = vrot.slane %v450, 5
  %v453 = vsel %vm117, %v448, %v452
  %v455 = vshrl.u32 %v79, 16
  %v457 = vrot.slane %v455, 4
  %v458 = vshll.u32 %v79, 16
  %v460 = vrot.slane %v458, 5
  %v461 = vor.u32 %v457, %v460
  %v462 = vrot.slane %v461, 4
  %v464 = vshll.u32 %v80, 16
  %v466 = vrot.slane %v464, 5
  %v467 = vsel %vm117, %v462, %v466
  %v468 = vshrl.u32 %v80, 16
  %v470 = vrot.slane %v468, 4
  %v471 = vor.u32 %v470, %v466
  %v472 = vrot.slane %v471, 4
  %v474 = vshll.u32 %v113, 16
  %v476 = vrot.slane %v474, 5
  %v477 = vsel %vm117, %v472, %v476
  %v479 = vshrl.u32 %v81, 16
  %v481 = vrot.slane %v479, 4
  %v482 = vshll.u32 %v81, 16
  %v484 = vrot.slane %v482, 5
  %v485 = vor.u32 %v481, %v484
  %v486 = vrot.slane %v485, 4
  %v488 = vshll.u32 %v82, 16
  %v490 = vrot.slane %v488, 5
  %v491 = vsel %vm117, %v486, %v490
  %v492 = vshrl.u32 %v82, 16
  %v494 = vrot.slane %v492, 4
  %v495 = vor.u32 %v494, %v490
  %v496 = vrot.slane %v495, 4
  %v498 = vshll.u32 %v114, 16
  %v500 = vrot.slane %v498, 5
  %v501 = vsel %vm117, %v496, %v500
  %s502 = scalar_lea.vmem %s1, 64
  %v503 = vld [vmem:[%s502] sm:$0xf]
  %v504 = vld [vmem:[%s502 + $0x4] sm:$0xf]
  %v505 = vld [vmem:[%s502 + $0x8] sm:$0xf]
  %v506 = vld [vmem:[%s502 + $0xc] sm:$0xf]
  %v507 = vld [vmem:[%s502 + $0x10] sm:$0xf]
  %v508 = vld [vmem:[%s502 + $0x14] sm:$0xf]
  %v509 = vld [vmem:[%s502 + $0x18] sm:$0xf]
  %v510 = vld [vmem:[%s502 + $0x1c] sm:$0xf]
  %v511 = vld [vmem:[%s502 + $0x20] sm:$0xf]
  %v512 = vld [vmem:[%s502 + $0x24] sm:$0xf]
  %v513 = vld [vmem:[%s502 + $0x28] sm:$0xf]
  %v514 = vld [vmem:[%s502 + $0x2c] sm:$0xf]
  %v515 = vld [vmem:[%s502 + $0x30] sm:$0xf]
  %v516 = vld [vmem:[%s502 + $0x34] sm:$0xf]
  %v517 = vld [vmem:[%s502 + $0x38] sm:$0xf]
  %v518 = vld [vmem:[%s502 + $0x3c] sm:$0xf]
  %v519 = vunpack.c.l.b16 %v131
  %v520 = vunpack.c.l.b16 %v141
  %v521 = vunpack.c.l.b16 %v155
  %v522 = vunpack.c.l.b16 %v165
  %v523 = vunpack.c.l.b16 %v179
  %v524 = vunpack.c.l.b16 %v189
  %v525 = vunpack.c.l.b16 %v203
  %v526 = vunpack.c.l.b16 %v213
  %v527 = vunpack.c.l.b16 %v227
  %v528 = vunpack.c.l.b16 %v237
  %v529 = vunpack.c.l.b16 %v251
  %v530 = vunpack.c.l.b16 %v261
  %v531 = vunpack.c.l.b16 %v275
  %v532 = vunpack.c.l.b16 %v285
  %v533 = vunpack.c.l.b16 %v299
  %v534 = vunpack.c.l.b16 %v309
  %v535 = vunpack.c.l.b16 %v323
  %v536 = vunpack.c.l.b16 %v333
  %v537 = vunpack.c.l.b16 %v347
  %v538 = vunpack.c.l.b16 %v357
  %v539 = vunpack.c.l.b16 %v371
  %v540 = vunpack.c.l.b16 %v381
  %v541 = vunpack.c.l.b16 %v395
  %v542 = vunpack.c.l.b16 %v405
  %v543 = vunpack.c.l.b16 %v419
  %v544 = vunpack.c.l.b16 %v429
  %v545 = vunpack.c.l.b16 %v443
  %v546 = vunpack.c.l.b16 %v453
  %v547 = vunpack.c.l.b16 %v467
  %v548 = vunpack.c.l.b16 %v477
  %v549 = vunpack.c.l.b16 %v491
  %v550 = vunpack.c.l.b16 %v501
  %v551 = vpack.c.b16 %v520, %v519
  %v552 = vpack.c.b16 %v522, %v521
  %v553 = vpack.c.b16 %v524, %v523
  %v554 = vpack.c.b16 %v526, %v525
  %v555 = vpack.c.b16 %v528, %v527
  %v556 = vpack.c.b16 %v530, %v529
  %v557 = vpack.c.b16 %v532, %v531
  %v558 = vpack.c.b16 %v534, %v533
  %v559 = vpack.c.b16 %v536, %v535
  %v560 = vpack.c.b16 %v538, %v537
  %v561 = vpack.c.b16 %v540, %v539
  %v562 = vpack.c.b16 %v542, %v541
  %v563 = vpack.c.b16 %v544, %v543
  %v564 = vpack.c.b16 %v546, %v545
  %v565 = vpack.c.b16 %v548, %v547
  %v566 = vpack.c.b16 %v550, %v549
  %v599 = vunpack.c.l.b16 %v503
  %v600 = vunpack.c.l.b16 %v504
  %v601 = vunpack.c.l.b16 %v505
  %v602 = vunpack.c.l.b16 %v506
  %v603 = vunpack.c.l.b16 %v507
  %v604 = vunpack.c.l.b16 %v508
  %v605 = vunpack.c.l.b16 %v509
  %v606 = vunpack.c.l.b16 %v510
  %v607 = vunpack.c.l.b16 %v511
  %v608 = vunpack.c.l.b16 %v512
  %v609 = vunpack.c.l.b16 %v513
  %v610 = vunpack.c.l.b16 %v514
  %v611 = vunpack.c.l.b16 %v515
  %v612 = vunpack.c.l.b16 %v516
  %v613 = vunpack.c.l.b16 %v517
  %v614 = vunpack.c.l.b16 %v518
  %v615 = vpack.c.b16 %v600, %v599
  %v616 = vpack.c.b16 %v602, %v601
  %v617 = vpack.c.b16 %v604, %v603
  %v618 = vpack.c.b16 %v606, %v605
  %v619 = vpack.c.b16 %v608, %v607
  %v620 = vpack.c.b16 %v610, %v609
  %v621 = vpack.c.b16 %v612, %v611
  %v622 = vpack.c.b16 %v614, %v613
  %631 = vmatprep.subr.bf16.mxu0 0
  %632 = vmatpush1.bf16.msra.mxu0 %v615
  %633 = vmatprep.subr.bf16.mxu0 0
  %634 = vmatpush1.bf16.msra.mxu0 %v616
  %635 = vmatprep.subr.bf16.mxu0 0
  %636 = vmatpush1.bf16.msra.mxu0 %v617
  %637 = vmatprep.subr.bf16.mxu0 0
  %638 = vmatpush1.bf16.msra.mxu0 %v618
  %639 = vmatprep.subr.bf16.mxu0 0
  %640 = vmatpush1.bf16.msra.mxu0 %v619
  %641 = vmatprep.subr.bf16.mxu0 0
  %642 = vmatpush1.bf16.msra.mxu0 %v620
  %643 = vmatprep.subr.bf16.mxu0 0
  %644 = vmatpush1.bf16.msra.mxu0 %v621
  %645 = vmatprep.subr.bf16.mxu0 0
  %646 = vmatpush1.bf16.msra.mxu0 %v622
  %647 = vmatprep.subr.bf16.mxu0 0
  %648 = vmatpush1.bf16.msra.mxu0 0
  %649 = vmatprep.subr.bf16.mxu0 0
  %650 = vmatpush1.bf16.msra.mxu0 0
  %651 = vmatprep.subr.bf16.mxu0 0
  %652 = vmatpush1.bf16.msra.mxu0 0
  %653 = vmatprep.subr.bf16.mxu0 0
  %654 = vmatpush1.bf16.msra.mxu0 0
  %655 = vmatprep.subr.bf16.mxu0 0
  %656 = vmatpush1.bf16.msra.mxu0 0
  %657 = vmatprep.subr.bf16.mxu0 0
  %658 = vmatpush1.bf16.msra.mxu0 0
  %659 = vmatprep.subr.bf16.mxu0 0
  %660 = vmatpush1.bf16.msra.mxu0 0
  %661 = vmatprep.subr.bf16.mxu0 0
  %662 = vmatpush1.bf16.msra.mxu0 0
  %663 = vmatprep.mubr.bf16.mxu0 0
  %664 = vmatmul.mubr.bf16.gmra.mrb[0].mxu0 %v551
  %v665 = vpop.f32.mrb[0].mxu0
  %v666 = vadd.f32 0.0, %v665
  %v667 = vpop.f32.mrb[0].mxu0
  %v668 = vpop.f32.mrb[0].mxu0
  %v669 = vadd.f32 0.0, %v668
  %v670 = vpop.f32.mrb[0].mxu0
  %671 = vmatprep.mubr.bf16.mxu0 0
  %672 = vmatmul.mubr.bf16.gmra.mrb[0].mxu0 %v552
  %v673 = vpop.f32.mrb[0].mxu0
  %v674 = vadd.f32 0.0, %v673
  %v675 = vpop.f32.mrb[0].mxu0
  %v676 = vpop.f32.mrb[0].mxu0
  %v677 = vadd.f32 0.0, %v676
  %v678 = vpop.f32.mrb[0].mxu0
  %679 = vmatprep.mubr.bf16.mxu0 0
  %680 = vmatmul.mubr.bf16.gmra.mrb[0].mxu0 %v553
  %v681 = vpop.f32.mrb[0].mxu0
  %v682 = vadd.f32 0.0, %v681
  %v683 = vpop.f32.mrb[0].mxu0
  %v684 = vpop.f32.mrb[0].mxu0
  %v685 = vadd.f32 0.0, %v684
  %v686 = vpop.f32.mrb[0].mxu0
  %687 = vmatprep.mubr.bf16.mxu0 0
  %688 = vmatmul.mubr.bf16.gmra.mrb[0].mxu0 %v554
  %v689 = vpop.f32.mrb[0].mxu0
  %v690 = vadd.f32 0.0, %v689
  %v691 = vpop.f32.mrb[0].mxu0
  %v692 = vpop.f32.mrb[0].mxu0
  %v693 = vadd.f32 0.0, %v692
  %v694 = vpop.f32.mrb[0].mxu0
  %695 = vmatprep.mubr.bf16.mxu0 0
  %696 = vmatmul.mubr.bf16.gmra.mrb[0].mxu0 %v555
  %v697 = vpop.f32.mrb[0].mxu0
  %v698 = vadd.f32 0.0, %v697
  %v699 = vpop.f32.mrb[0].mxu0
  %v700 = vpop.f32.mrb[0].mxu0
  %v701 = vadd.f32 0.0, %v700
  %v702 = vpop.f32.mrb[0].mxu0
  %703 = vmatprep.mubr.bf16.mxu0 0
  %704 = vmatmul.mubr.bf16.gmra.mrb[0].mxu0 %v556
  %v705 = vpop.f32.mrb[0].mxu0
  %v706 = vadd.f32 0.0, %v705
  %v707 = vpop.f32.mrb[0].mxu0
  %v708 = vpop.f32.mrb[0].mxu0
  %v709 = vadd.f32 0.0, %v708
  %v710 = vpop.f32.mrb[0].mxu0
  %711 = vmatprep.mubr.bf16.mxu0 0
  %712 = vmatmul.mubr.bf16.gmra.mrb[0].mxu0 %v557
  %v713 = vpop.f32.mrb[0].mxu0
  %v714 = vadd.f32 0.0, %v713
  %v715 = vpop.f32.mrb[0].mxu0
  %v716 = vpop.f32.mrb[0].mxu0
  %v717 = vadd.f32 0.0, %v716
  %v718 = vpop.f32.mrb[0].mxu0
  %719 = vmatprep.mubr.bf16.mxu0 0
  %720 = vmatmul.mubr.bf16.gmra.mrb[0].mxu0 %v558
  %v721 = vpop.f32.mrb[0].mxu0
  %v722 = vadd.f32 0.0, %v721
  %v723 = vpop.f32.mrb[0].mxu0
  %v724 = vpop.f32.mrb[0].mxu0
  %v725 = vadd.f32 0.0, %v724
  %v726 = vpop.f32.mrb[0].mxu0
  %727 = vmatprep.mubr.bf16.mxu0 0
  %728 = vmatmul.mubr.bf16.gmra.mrb[0].mxu0 %v559
  %v729 = vpop.f32.mrb[0].mxu0
  %v730 = vadd.f32 0.0, %v729
  %v731 = vpop.f32.mrb[0].mxu0
  %v732 = vpop.f32.mrb[0].mxu0
  %v733 = vadd.f32 0.0, %v732
  %v734 = vpop.f32.mrb[0].mxu0
  %735 = vmatprep.mubr.bf16.mxu0 0
  %736 = vmatmul.mubr.bf16.gmra.mrb[0].mxu0 %v560
  %v737 = vpop.f32.mrb[0].mxu0
  %v738 = vadd.f32 0.0, %v737
  %v739 = vpop.f32.mrb[0].mxu0
  %v740 = vpop.f32.mrb[0].mxu0
  %v741 = vadd.f32 0.0, %v740
  %v742 = vpop.f32.mrb[0].mxu0
  %743 = vmatprep.mubr.bf16.mxu0 0
  %744 = vmatmul.mubr.bf16.gmra.mrb[0].mxu0 %v561
  %v745 = vpop.f32.mrb[0].mxu0
  %v746 = vadd.f32 0.0, %v745
  %v747 = vpop.f32.mrb[0].mxu0
  %v748 = vpop.f32.mrb[0].mxu0
  %v749 = vadd.f32 0.0, %v748
  %v750 = vpop.f32.mrb[0].mxu0
  %751 = vmatprep.mubr.bf16.mxu0 0
  %752 = vmatmul.mubr.bf16.gmra.mrb[0].mxu0 %v562
  %v753 = vpop.f32.mrb[0].mxu0
  %v754 = vadd.f32 0.0, %v753
  %v755 = vpop.f32.mrb[0].mxu0
  %v756 = vpop.f32.mrb[0].mxu0
  %v757 = vadd.f32 0.0, %v756
  %v758 = vpop.f32.mrb[0].mxu0
  %759 = vmatprep.mubr.bf16.mxu0 0
  %760 = vmatmul.mubr.bf16.gmra.mrb[0].mxu0 %v563
  %v761 = vpop.f32.mrb[0].mxu0
  %v762 = vadd.f32 0.0, %v761
  %v763 = vpop.f32.mrb[0].mxu0
  %v764 = vpop.f32.mrb[0].mxu0
  %v765 = vadd.f32 0.0, %v764
  %v766 = vpop.f32.mrb[0].mxu0
  %767 = vmatprep.mubr.bf16.mxu0 0
  %768 = vmatmul.mubr.bf16.gmra.mrb[0].mxu0 %v564
  %v769 = vpop.f32.mrb[0].mxu0
  %v770 = vadd.f32 0.0, %v769
  %v771 = vpop.f32.mrb[0].mxu0
  %v772 = vpop.f32.mrb[0].mxu0
  %v773 = vadd.f32 0.0, %v772
  %v774 = vpop.f32.mrb[0].mxu0
  %775 = vmatprep.mubr.bf16.mxu0 0
  %776 = vmatmul.mubr.bf16.gmra.mrb[0].mxu0 %v565
  %v777 = vpop.f32.mrb[0].mxu0
  %v778 = vadd.f32 0.0, %v777
  %v779 = vpop.f32.mrb[0].mxu0
  %v780 = vpop.f32.mrb[0].mxu0
  %v781 = vadd.f32 0.0, %v780
  %v782 = vpop.f32.mrb[0].mxu0
  %783 = vmatprep.mubr.bf16.mxu0 0
  %784 = vmatmul.mubr.bf16.gmra.mrb[0].mxu0 %v566
  %v785 = vpop.f32.mrb[0].mxu0
  %v786 = vadd.f32 0.0, %v785
  %v787 = vpop.f32.mrb[0].mxu0
  %v788 = vpop.f32.mrb[0].mxu0
  %v789 = vadd.f32 0.0, %v788
  %v790 = vpop.f32.mrb[0].mxu0
  %791 = vdwg.mxu0
  %v824 = vunpack.c.l.b16 %v51
  %v825 = vunpack.c.l.b16 %v52
  %v826 = vunpack.c.l.b16 %v53
  %v827 = vunpack.c.l.b16 %v54
  %v828 = vunpack.c.l.b16 %v55
  %v829 = vunpack.c.l.b16 %v56
  %v830 = vunpack.c.l.b16 %v57
  %v831 = vunpack.c.l.b16 %v58
  %v832 = vunpack.c.l.b16 %v59
  %v833 = vunpack.c.l.b16 %v60
  %v834 = vunpack.c.l.b16 %v61
  %v835 = vunpack.c.l.b16 %v62
  %v836 = vunpack.c.l.b16 %v63
  %v837 = vunpack.c.l.b16 %v64
  %v838 = vunpack.c.l.b16 %v65
  %v839 = vunpack.c.l.b16 %v66
  %v840 = vunpack.c.l.b16 %v67
  %v841 = vunpack.c.l.b16 %v68
  %v842 = vunpack.c.l.b16 %v69
  %v843 = vunpack.c.l.b16 %v70
  %v844 = vunpack.c.l.b16 %v71
  %v845 = vunpack.c.l.b16 %v72
  %v846 = vunpack.c.l.b16 %v73
  %v847 = vunpack.c.l.b16 %v74
  %v848 = vunpack.c.l.b16 %v75
  %v849 = vunpack.c.l.b16 %v76
  %v850 = vunpack.c.l.b16 %v77
  %v851 = vunpack.c.l.b16 %v78
  %v852 = vunpack.c.l.b16 %v79
  %v853 = vunpack.c.l.b16 %v80
  %v854 = vunpack.c.l.b16 %v81
  %v855 = vunpack.c.l.b16 %v82
  %v856 = vpack.c.b16 %v825, %v824
  %v857 = vpack.c.b16 %v827, %v826
  %v858 = vpack.c.b16 %v829, %v828
  %v859 = vpack.c.b16 %v831, %v830
  %v860 = vpack.c.b16 %v833, %v832
  %v861 = vpack.c.b16 %v835, %v834
  %v862 = vpack.c.b16 %v837, %v836
  %v863 = vpack.c.b16 %v839, %v838
  %v864 = vpack.c.b16 %v841, %v840
  %v865 = vpack.c.b16 %v843, %v842
  %v866 = vpack.c.b16 %v845, %v844
  %v867 = vpack.c.b16 %v847, %v846
  %v868 = vpack.c.b16 %v849, %v848
  %v869 = vpack.c.b16 %v851, %v850
  %v870 = vpack.c.b16 %v853, %v852
  %v871 = vpack.c.b16 %v855, %v854
  %v904 = vunpack.c.l.b16 %v83
  %v905 = vunpack.c.l.b16 %v84
  %v906 = vunpack.c.l.b16 %v85
  %v907 = vunpack.c.l.b16 %v86
  %v908 = vunpack.c.l.b16 %v87
  %v909 = vunpack.c.l.b16 %v88
  %v910 = vunpack.c.l.b16 %v89
  %v911 = vunpack.c.l.b16 %v90
  %v912 = vunpack.c.l.b16 %v91
  %v913 = vunpack.c.l.b16 %v92
  %v914 = vunpack.c.l.b16 %v93
  %v915 = vunpack.c.l.b16 %v94
  %v916 = vunpack.c.l.b16 %v95
  %v917 = vunpack.c.l.b16 %v96
  %v918 = vunpack.c.l.b16 %v97
  %v919 = vunpack.c.l.b16 %v98
  %v920 = vpack.c.b16 %v905, %v904
  %v921 = vpack.c.b16 %v907, %v906
  %v922 = vpack.c.b16 %v909, %v908
  %v923 = vpack.c.b16 %v911, %v910
  %v924 = vpack.c.b16 %v913, %v912
  %v925 = vpack.c.b16 %v915, %v914
  %v926 = vpack.c.b16 %v917, %v916
  %v927 = vpack.c.b16 %v919, %v918
  %936 = vmatprep.subr.bf16.mxu0 0
  %937 = vmatpush1.bf16.msra.mxu0 %v920
  %938 = vmatprep.subr.bf16.mxu0 0
  %939 = vmatpush1.bf16.msra.mxu0 %v921
  %940 = vmatprep.subr.bf16.mxu0 0
  %941 = vmatpush1.bf16.msra.mxu0 %v922
  %942 = vmatprep.subr.bf16.mxu0 0
  %943 = vmatpush1.bf16.msra.mxu0 %v923
  %944 = vmatprep.subr.bf16.mxu0 0
  %945 = vmatpush1.bf16.msra.mxu0 %v924
  %946 = vmatprep.subr.bf16.mxu0 0
  %947 = vmatpush1.bf16.msra.mxu0 %v925
  %948 = vmatprep.subr.bf16.mxu0 0
  %949 = vmatpush1.bf16.msra.mxu0 %v926
  %950 = vmatprep.subr.bf16.mxu0 0
  %951 = vmatpush1.bf16.msra.mxu0 %v927
  %952 = vmatprep.subr.bf16.mxu0 0
  %953 = vmatpush1.bf16.msra.mxu0 0
  %954 = vmatprep.subr.bf16.mxu0 0
  %955 = vmatpush1.bf16.msra.mxu0 0
  %956 = vmatprep.subr.bf16.mxu0 0
  %957 = vmatpush1.bf16.msra.mxu0 0
  %958 = vmatprep.subr.bf16.mxu0 0
  %959 = vmatpush1.bf16.msra.mxu0 0
  %960 = vmatprep.subr.bf16.mxu0 0
  %961 = vmatpush1.bf16.msra.mxu0 0
  %962 = vmatprep.subr.bf16.mxu0 0
  %963 = vmatpush1.bf16.msra.mxu0 0
  %964 = vmatprep.subr.bf16.mxu0 0
  %965 = vmatpush1.bf16.msra.mxu0 0
  %966 = vmatprep.subr.bf16.mxu0 0
  %967 = vmatpush1.bf16.msra.mxu0 0
  %968 = vmatprep.mubr.bf16.mxu0 0
  %969 = vmatmul.mubr.bf16.gmra.mrb[0].mxu0 %v856
  %v970 = vpop.f32.mrb[0].mxu0
  %v971 = vadd.f32 %v666, %v970
  %v972 = vpop.f32.mrb[0].mxu0
  %v973 = vpop.f32.mrb[0].mxu0
  %v974 = vadd.f32 %v669, %v973
  %v975 = vpop.f32.mrb[0].mxu0
  %976 = vmatprep.mubr.bf16.mxu0 0
  %977 = vmatmul.mubr.bf16.gmra.mrb[0].mxu0 %v857
  %v978 = vpop.f32.mrb[0].mxu0
  %v979 = vadd.f32 %v674, %v978
  %v980 = vpop.f32.mrb[0].mxu0
  %v981 = vpop.f32.mrb[0].mxu0
  %v982 = vadd.f32 %v677, %v981
  %v983 = vpop.f32.mrb[0].mxu0
  %984 = vmatprep.mubr.bf16.mxu0 0
  %985 = vmatmul.mubr.bf16.gmra.mrb[0].mxu0 %v858
  %v986 = vpop.f32.mrb[0].mxu0
  %v987 = vadd.f32 %v682, %v986
  %v988 = vpop.f32.mrb[0].mxu0
  %v989 = vpop.f32.mrb[0].mxu0
  %v990 = vadd.f32 %v685, %v989
  %v991 = vpop.f32.mrb[0].mxu0
  %992 = vmatprep.mubr.bf16.mxu0 0
  %993 = vmatmul.mubr.bf16.gmra.mrb[0].mxu0 %v859
  %v994 = vpop.f32.mrb[0].mxu0
  %v995 = vadd.f32 %v690, %v994
  %v996 = vpop.f32.mrb[0].mxu0
  %v997 = vpop.f32.mrb[0].mxu0
  %v998 = vadd.f32 %v693, %v997
  %v999 = vpop.f32.mrb[0].mxu0
  %1000 = vmatprep.mubr.bf16.mxu0 0
  %1001 = vmatmul.mubr.bf16.gmra.mrb[0].mxu0 %v860
  %v1002 = vpop.f32.mrb[0].mxu0
  %v1003 = vadd.f32 %v698, %v1002
  %v1004 = vpop.f32.mrb[0].mxu0
  %v1005 = vpop.f32.mrb[0].mxu0
  %v1006 = vadd.f32 %v701, %v1005
  %v1007 = vpop.f32.mrb[0].mxu0
  %1008 = vmatprep.mubr.bf16.mxu0 0
  %1009 = vmatmul.mubr.bf16.gmra.mrb[0].mxu0 %v861
  %v1010 = vpop.f32.mrb[0].mxu0
  %v1011 = vadd.f32 %v706, %v1010
  %v1012 = vpop.f32.mrb[0].mxu0
  %v1013 = vpop.f32.mrb[0].mxu0
  %v1014 = vadd.f32 %v709, %v1013
  %v1015 = vpop.f32.mrb[0].mxu0
  %1016 = vmatprep.mubr.bf16.mxu0 0
  %1017 = vmatmul.mubr.bf16.gmra.mrb[0].mxu0 %v862
  %v1018 = vpop.f32.mrb[0].mxu0
  %v1019 = vadd.f32 %v714, %v1018
  %v1020 = vpop.f32.mrb[0].mxu0
  %v1021 = vpop.f32.mrb[0].mxu0
  %v1022 = vadd.f32 %v717, %v1021
  %v1023 = vpop.f32.mrb[0].mxu0
  %1024 = vmatprep.mubr.bf16.mxu0 0
  %1025 = vmatmul.mubr.bf16.gmra.mrb[0].mxu0 %v863
  %v1026 = vpop.f32.mrb[0].mxu0
  %v1027 = vadd.f32 %v722, %v1026
  %v1028 = vpop.f32.mrb[0].mxu0
  %v1029 = vpop.f32.mrb[0].mxu0
  %v1030 = vadd.f32 %v725, %v1029
  %v1031 = vpop.f32.mrb[0].mxu0
  %1032 = vmatprep.mubr.bf16.mxu0 0
  %1033 = vmatmul.mubr.bf16.gmra.mrb[0].mxu0 %v864
  %v1034 = vpop.f32.mrb[0].mxu0
  %v1035 = vadd.f32 %v730, %v1034
  %v1036 = vpop.f32.mrb[0].mxu0
  %v1037 = vpop.f32.mrb[0].mxu0
  %v1038 = vadd.f32 %v733, %v1037
  %v1039 = vpop.f32.mrb[0].mxu0
  %1040 = vmatprep.mubr.bf16.mxu0 0
  %1041 = vmatmul.mubr.bf16.gmra.mrb[0].mxu0 %v865
  %v1042 = vpop.f32.mrb[0].mxu0
  %v1043 = vadd.f32 %v738, %v1042
  %v1044 = vpop.f32.mrb[0].mxu0
  %v1045 = vpop.f32.mrb[0].mxu0
  %v1046 = vadd.f32 %v741, %v1045
  %v1047 = vpop.f32.mrb[0].mxu0
  %1048 = vmatprep.mubr.bf16.mxu0 0
  %1049 = vmatmul.mubr.bf16.gmra.mrb[0].mxu0 %v866
  %v1050 = vpop.f32.mrb[0].mxu0
  %v1051 = vadd.f32 %v746, %v1050
  %v1052 = vpop.f32.mrb[0].mxu0
  %v1053 = vpop.f32.mrb[0].mxu0
  %v1054 = vadd.f32 %v749, %v1053
  %v1055 = vpop.f32.mrb[0].mxu0
  %1056 = vmatprep.mubr.bf16.mxu0 0
  %1057 = vmatmul.mubr.bf16.gmra.mrb[0].mxu0 %v867
  %v1058 = vpop.f32.mrb[0].mxu0
  %v1059 = vadd.f32 %v754, %v1058
  %v1060 = vpop.f32.mrb[0].mxu0
  %v1061 = vpop.f32.mrb[0].mxu0
  %v1062 = vadd.f32 %v757, %v1061
  %v1063 = vpop.f32.mrb[0].mxu0
  %1064 = vmatprep.mubr.bf16.mxu0 0
  %1065 = vmatmul.mubr.bf16.gmra.mrb[0].mxu0 %v868
  %v1066 = vpop.f32.mrb[0].mxu0
  %v1067 = vadd.f32 %v762, %v1066
  %v1068 = vpop.f32.mrb[0].mxu0
  %v1069 = vpop.f32.mrb[0].mxu0
  %v1070 = vadd.f32 %v765, %v1069
  %v1071 = vpop.f32.mrb[0].mxu0
  %1072 = vmatprep.mubr.bf16.mxu0 0
  %1073 = vmatmul.mubr.bf16.gmra.mrb[0].mxu0 %v869
  %v1074 = vpop.f32.mrb[0].mxu0
  %v1075 = vadd.f32 %v770, %v1074
  %v1076 = vpop.f32.mrb[0].mxu0
  %v1077 = vpop.f32.mrb[0].mxu0
  %v1078 = vadd.f32 %v773, %v1077
  %v1079 = vpop.f32.mrb[0].mxu0
  %1080 = vmatprep.mubr.bf16.mxu0 0
  %1081 = vmatmul.mubr.bf16.gmra.mrb[0].mxu0 %v870
  %v1082 = vpop.f32.mrb[0].mxu0
  %v1083 = vadd.f32 %v778, %v1082
  %v1084 = vpop.f32.mrb[0].mxu0
  %v1085 = vpop.f32.mrb[0].mxu0
  %v1086 = vadd.f32 %v781, %v1085
  %v1087 = vpop.f32.mrb[0].mxu0
  %1088 = vmatprep.mubr.bf16.mxu0 0
  %1089 = vmatmul.mubr.bf16.gmra.mrb[0].mxu0 %v871
  %v1090 = vpop.f32.mrb[0].mxu0
  %v1091 = vadd.f32 %v786, %v1090
  %v1092 = vpop.f32.mrb[0].mxu0
  %v1093 = vpop.f32.mrb[0].mxu0
  %v1094 = vadd.f32 %v789, %v1093
  %v1095 = vpop.f32.mrb[0].mxu0
  %1096 = vdwg.mxu0
  %v1097 = vld [vmem:[%s0] sm:$0xe]
  %v1098 = vld [vmem:[%s0 + $0xc] sm:$0xe]
  %v1099 = vld [vmem:[%s0 + $0x18] sm:$0xe]
  %v1100 = vld [vmem:[%s0 + $0x24] sm:$0xe]
  %v1101 = vld [vmem:[%s0 + $0x30] sm:$0xe]
  %v1102 = vld [vmem:[%s0 + $0x3c] sm:$0xe]
  %v1103 = vld [vmem:[%s0 + $0x48] sm:$0xe]
  %v1104 = vld [vmem:[%s0 + $0x54] sm:$0xe]
  %v1105 = vld [vmem:[%s0 + $0x78] sm:$0xe]
  %v1106 = vld [vmem:[%s0 + $0x84] sm:$0xe]
  %v1107 = vld [vmem:[%s0 + $0x90] sm:$0xe]
  %v1108 = vld [vmem:[%s0 + $0x9c] sm:$0xe]
  %v1109 = vld [vmem:[%s0 + $0xa8] sm:$0xe]
  %v1110 = vld [vmem:[%s0 + $0xb4] sm:$0xe]
  %v1111 = vld [vmem:[%s0 + $0xc0] sm:$0xe]
  %v1112 = vld [vmem:[%s0 + $0xcc] sm:$0xe]
  %vm1145 = vcmask 1042432
  %vm1146 = vcmask 1046532
  %vm1147 = vmor %vm1145, %vm1146
  %v1148 = vrot.slane %v1097, 5
  %v1149 = vrot.slane %v1148, 4
  %v1150 = vrot.slane %v52, 5
  %v1151 = vsel %vm1147, %v1149, %v1150
  %v1152 = vrot.slane %v1150, 4
  %v1153 = vrot.slane %v99, 5
  %v1154 = vsel %vm1147, %v1152, %v1153
  %v1155 = vrot.slane %v1098, 5
  %v1156 = vrot.slane %v1155, 4
  %v1157 = vrot.slane %v54, 5
  %v1158 = vsel %vm1147, %v1156, %v1157
  %v1159 = vrot.slane %v1157, 4
  %v1160 = vrot.slane %v100, 5
  %v1161 = vsel %vm1147, %v1159, %v1160
  %v1162 = vrot.slane %v1099, 5
  %v1163 = vrot.slane %v1162, 4
  %v1164 = vrot.slane %v56, 5
  %v1165 = vsel %vm1147, %v1163, %v1164
  %v1166 = vrot.slane %v1164, 4
  %v1167 = vrot.slane %v101, 5
  %v1168 = vsel %vm1147, %v1166, %v1167
  %v1169 = vrot.slane %v1100, 5
  %v1170 = vrot.slane %v1169, 4
  %v1171 = vrot.slane %v58, 5
  %v1172 = vsel %vm1147, %v1170, %v1171
  %v1173 = vrot.slane %v1171, 4
  %v1174 = vrot.slane %v102, 5
  %v1175 = vsel %vm1147, %v1173, %v1174
  %v1176 = vrot.slane %v1101, 5
  %v1177 = vrot.slane %v1176, 4
  %v1178 = vrot.slane %v60, 5
  %v1179 = vsel %vm1147, %v1177, %v1178
  %v1180 = vrot.slane %v1178, 4
  %v1181 = vrot.slane %v103, 5
  %v1182 = vsel %vm1147, %v1180, %v1181
  %v1183 = vrot.slane %v1102, 5
  %v1184 = vrot.slane %v1183, 4
  %v1185 = vrot.slane %v62, 5
  %v1186 = vsel %vm1147, %v1184, %v1185
  %v1187 = vrot.slane %v1185, 4
  %v1188 = vrot.slane %v104, 5
  %v1189 = vsel %vm1147, %v1187, %v1188
  %v1190 = vrot.slane %v1103, 5
  %v1191 = vrot.slane %v1190, 4
  %v1192 = vrot.slane %v64, 5
  %v1193 = vsel %vm1147, %v1191, %v1192
  %v1194 = vrot.slane %v1192, 4
  %v1195 = vrot.slane %v105, 5
  %v1196 = vsel %vm1147, %v1194, %v1195
  %v1197 = vrot.slane %v1104, 5
  %v1198 = vrot.slane %v1197, 4
  %v1199 = vrot.slane %v66, 5
  %v1200 = vsel %vm1147, %v1198, %v1199
  %v1201 = vrot.slane %v1199, 4
  %v1202 = vrot.slane %v106, 5
  %v1203 = vsel %vm1147, %v1201, %v1202
  %v1204 = vrot.slane %v1105, 5
  %v1205 = vrot.slane %v1204, 4
  %v1206 = vrot.slane %v68, 5
  %v1207 = vsel %vm1147, %v1205, %v1206
  %v1208 = vrot.slane %v1206, 4
  %v1209 = vrot.slane %v107, 5
  %v1210 = vsel %vm1147, %v1208, %v1209
  %v1211 = vrot.slane %v1106, 5
  %v1212 = vrot.slane %v1211, 4
  %v1213 = vrot.slane %v70, 5
  %v1214 = vsel %vm1147, %v1212, %v1213
  %v1215 = vrot.slane %v1213, 4
  %v1216 = vrot.slane %v108, 5
  %v1217 = vsel %vm1147, %v1215, %v1216
  %v1218 = vrot.slane %v1107, 5
  %v1219 = vrot.slane %v1218, 4
  %v1220 = vrot.slane %v72, 5
  %v1221 = vsel %vm1147, %v1219, %v1220
  %v1222 = vrot.slane %v1220, 4
  %v1223 = vrot.slane %v109, 5
  %v1224 = vsel %vm1147, %v1222, %v1223
  %v1225 = vrot.slane %v1108, 5
  %v1226 = vrot.slane %v1225, 4
  %v1227 = vrot.slane %v74, 5
  %v1228 = vsel %vm1147, %v1226, %v1227
  %v1229 = vrot.slane %v1227, 4
  %v1230 = vrot.slane %v110, 5
  %v1231 = vsel %vm1147, %v1229, %v1230
  %v1232 = vrot.slane %v1109, 5
  %v1233 = vrot.slane %v1232, 4
  %v1234 = vrot.slane %v76, 5
  %v1235 = vsel %vm1147, %v1233, %v1234
  %v1236 = vrot.slane %v1234, 4
  %v1237 = vrot.slane %v111, 5
  %v1238 = vsel %vm1147, %v1236, %v1237
  %v1239 = vrot.slane %v1110, 5
  %v1240 = vrot.slane %v1239, 4
  %v1241 = vrot.slane %v78, 5
  %v1242 = vsel %vm1147, %v1240, %v1241
  %v1243 = vrot.slane %v1241, 4
  %v1244 = vrot.slane %v112, 5
  %v1245 = vsel %vm1147, %v1243, %v1244
  %v1246 = vrot.slane %v1111, 5
  %v1247 = vrot.slane %v1246, 4
  %v1248 = vrot.slane %v80, 5
  %v1249 = vsel %vm1147, %v1247, %v1248
  %v1250 = vrot.slane %v1248, 4
  %v1251 = vrot.slane %v113, 5
  %v1252 = vsel %vm1147, %v1250, %v1251
  %v1253 = vrot.slane %v1112, 5
  %v1254 = vrot.slane %v1253, 4
  %v1255 = vrot.slane %v82, 5
  %v1256 = vsel %vm1147, %v1254, %v1255
  %v1257 = vrot.slane %v1255, 4
  %v1258 = vrot.slane %v114, 5
  %v1259 = vsel %vm1147, %v1257, %v1258
  %s1260 = scalar_lea.vmem %s1, 128
  %v1261 = vld [vmem:[%s1260] sm:$0xf]
  %v1262 = vld [vmem:[%s1260 + $0x4] sm:$0xf]
  %v1263 = vld [vmem:[%s1260 + $0x8] sm:$0xf]
  %v1264 = vld [vmem:[%s1260 + $0xc] sm:$0xf]
  %v1265 = vld [vmem:[%s1260 + $0x10] sm:$0xf]
  %v1266 = vld [vmem:[%s1260 + $0x14] sm:$0xf]
  %v1267 = vld [vmem:[%s1260 + $0x18] sm:$0xf]
  %v1268 = vld [vmem:[%s1260 + $0x1c] sm:$0xf]
  %v1269 = vld [vmem:[%s1260 + $0x20] sm:$0xf]
  %v1270 = vld [vmem:[%s1260 + $0x24] sm:$0xf]
  %v1271 = vld [vmem:[%s1260 + $0x28] sm:$0xf]
  %v1272 = vld [vmem:[%s1260 + $0x2c] sm:$0xf]
  %v1273 = vld [vmem:[%s1260 + $0x30] sm:$0xf]
  %v1274 = vld [vmem:[%s1260 + $0x34] sm:$0xf]
  %v1275 = vld [vmem:[%s1260 + $0x38] sm:$0xf]
  %v1276 = vld [vmem:[%s1260 + $0x3c] sm:$0xf]
  %v1277 = vunpack.c.l.b16 %v1151
  %v1278 = vunpack.c.l.b16 %v1154
  %v1279 = vunpack.c.l.b16 %v1158
  %v1280 = vunpack.c.l.b16 %v1161
  %v1281 = vunpack.c.l.b16 %v1165
  %v1282 = vunpack.c.l.b16 %v1168
  %v1283 = vunpack.c.l.b16 %v1172
  %v1284 = vunpack.c.l.b16 %v1175
  %v1285 = vunpack.c.l.b16 %v1179
  %v1286 = vunpack.c.l.b16 %v1182
  %v1287 = vunpack.c.l.b16 %v1186
  %v1288 = vunpack.c.l.b16 %v1189
  %v1289 = vunpack.c.l.b16 %v1193
  %v1290 = vunpack.c.l.b16 %v1196
  %v1291 = vunpack.c.l.b16 %v1200
  %v1292 = vunpack.c.l.b16 %v1203
  %v1293 = vunpack.c.l.b16 %v1207
  %v1294 = vunpack.c.l.b16 %v1210
  %v1295 = vunpack.c.l.b16 %v1214
  %v1296 = vunpack.c.l.b16 %v1217
  %v1297 = vunpack.c.l.b16 %v1221
  %v1298 = vunpack.c.l.b16 %v1224
  %v1299 = vunpack.c.l.b16 %v1228
  %v1300 = vunpack.c.l.b16 %v1231
  %v1301 = vunpack.c.l.b16 %v1235
  %v1302 = vunpack.c.l.b16 %v1238
  %v1303 = vunpack.c.l.b16 %v1242
  %v1304 = vunpack.c.l.b16 %v1245
  %v1305 = vunpack.c.l.b16 %v1249
  %v1306 = vunpack.c.l.b16 %v1252
  %v1307 = vunpack.c.l.b16 %v1256
  %v1308 = vunpack.c.l.b16 %v1259
  %v1309 = vpack.c.b16 %v1278, %v1277
  %v1310 = vpack.c.b16 %v1280, %v1279
  %v1311 = vpack.c.b16 %v1282, %v1281
  %v1312 = vpack.c.b16 %v1284, %v1283
  %v1313 = vpack.c.b16 %v1286, %v1285
  %v1314 = vpack.c.b16 %v1288, %v1287
  %v1315 = vpack.c.b16 %v1290, %v1289
  %v1316 = vpack.c.b16 %v1292, %v1291
  %v1317 = vpack.c.b16 %v1294, %v1293
  %v1318 = vpack.c.b16 %v1296, %v1295
  %v1319 = vpack.c.b16 %v1298, %v1297
  %v1320 = vpack.c.b16 %v1300, %v1299
  %v1321 = vpack.c.b16 %v1302, %v1301
  %v1322 = vpack.c.b16 %v1304, %v1303
  %v1323 = vpack.c.b16 %v1306, %v1305
  %v1324 = vpack.c.b16 %v1308, %v1307
  %v1357 = vunpack.c.l.b16 %v1261
  %v1358 = vunpack.c.l.b16 %v1262
  %v1359 = vunpack.c.l.b16 %v1263
  %v1360 = vunpack.c.l.b16 %v1264
  %v1361 = vunpack.c.l.b16 %v1265
  %v1362 = vunpack.c.l.b16 %v1266
  %v1363 = vunpack.c.l.b16 %v1267
  %v1364 = vunpack.c.l.b16 %v1268
  %v1365 = vunpack.c.l.b16 %v1269
  %v1366 = vunpack.c.l.b16 %v1270
  %v1367 = vunpack.c.l.b16 %v1271
  %v1368 = vunpack.c.l.b16 %v1272
  %v1369 = vunpack.c.l.b16 %v1273
  %v1370 = vunpack.c.l.b16 %v1274
  %v1371 = vunpack.c.l.b16 %v1275
  %v1372 = vunpack.c.l.b16 %v1276
  %v1373 = vpack.c.b16 %v1358, %v1357
  %v1374 = vpack.c.b16 %v1360, %v1359
  %v1375 = vpack.c.b16 %v1362, %v1361
  %v1376 = vpack.c.b16 %v1364, %v1363
  %v1377 = vpack.c.b16 %v1366, %v1365
  %v1378 = vpack.c.b16 %v1368, %v1367
  %v1379 = vpack.c.b16 %v1370, %v1369
  %v1380 = vpack.c.b16 %v1372, %v1371
  %1389 = vmatprep.subr.bf16.mxu0 0
  %1390 = vmatpush1.bf16.msra.mxu0 %v1373
  %1391 = vmatprep.subr.bf16.mxu0 0
  %1392 = vmatpush1.bf16.msra.mxu0 %v1374
  %1393 = vmatprep.subr.bf16.mxu0 0
  %1394 = vmatpush1.bf16.msra.mxu0 %v1375
  %1395 = vmatprep.subr.bf16.mxu0 0
  %1396 = vmatpush1.bf16.msra.mxu0 %v1376
  %1397 = vmatprep.subr.bf16.mxu0 0
  %1398 = vmatpush1.bf16.msra.mxu0 %v1377
  %1399 = vmatprep.subr.bf16.mxu0 0
  %1400 = vmatpush1.bf16.msra.mxu0 %v1378
  %1401 = vmatprep.subr.bf16.mxu0 0
  %1402 = vmatpush1.bf16.msra.mxu0 %v1379
  %1403 = vmatprep.subr.bf16.mxu0 0
  %1404 = vmatpush1.bf16.msra.mxu0 %v1380
  %1405 = vmatprep.subr.bf16.mxu0 0
  %1406 = vmatpush1.bf16.msra.mxu0 0
  %1407 = vmatprep.subr.bf16.mxu0 0
  %1408 = vmatpush1.bf16.msra.mxu0 0
  %1409 = vmatprep.subr.bf16.mxu0 0
  %1410 = vmatpush1.bf16.msra.mxu0 0
  %1411 = vmatprep.subr.bf16.mxu0 0
  %1412 = vmatpush1.bf16.msra.mxu0 0
  %1413 = vmatprep.subr.bf16.mxu0 0
  %1414 = vmatpush1.bf16.msra.mxu0 0
  %1415 = vmatprep.subr.bf16.mxu0 0
  %1416 = vmatpush1.bf16.msra.mxu0 0
  %1417 = vmatprep.subr.bf16.mxu0 0
  %1418 = vmatpush1.bf16.msra.mxu0 0
  %1419 = vmatprep.subr.bf16.mxu0 0
  %1420 = vmatpush1.bf16.msra.mxu0 0
  %1421 = vmatprep.mubr.bf16.mxu0 0
  %1422 = vmatmul.mubr.bf16.gmra.mrb[0].mxu0 %v1309
  %v1423 = vpop.f32.mrb[0].mxu0
  %v1424 = vadd.f32 0.0, %v1423
  %v1425 = vpop.f32.mrb[0].mxu0
  %v1426 = vpop.f32.mrb[0].mxu0
  %v1427 = vadd.f32 0.0, %v1426
  %v1428 = vpop.f32.mrb[0].mxu0
  %1429 = vmatprep.mubr.bf16.mxu0 0
  %1430 = vmatmul.mubr.bf16.gmra.mrb[0].mxu0 %v1310
  %v1431 = vpop.f32.mrb[0].mxu0
  %v1432 = vadd.f32 0.0, %v1431
  %v1433 = vpop.f32.mrb[0].mxu0
  %v1434 = vpop.f32.mrb[0].mxu0
  %v1435 = vadd.f32 0.0, %v1434
  %v1436 = vpop.f32.mrb[0].mxu0
  %1437 = vmatprep.mubr.bf16.mxu0 0
  %1438 = vmatmul.mubr.bf16.gmra.mrb[0].mxu0 %v1311
  %v1439 = vpop.f32.mrb[0].mxu0
  %v1440 = vadd.f32 0.0, %v1439
  %v1441 = vpop.f32.mrb[0].mxu0
  %v1442 = vpop.f32.mrb[0].mxu0
  %v1443 = vadd.f32 0.0, %v1442
  %v1444 = vpop.f32.mrb[0].mxu0
  %1445 = vmatprep.mubr.bf16.mxu0 0
  %1446 = vmatmul.mubr.bf16.gmra.mrb[0].mxu0 %v1312
  %v1447 = vpop.f32.mrb[0].mxu0
  %v1448 = vadd.f32 0.0, %v1447
  %v1449 = vpop.f32.mrb[0].mxu0
  %v1450 = vpop.f32.mrb[0].mxu0
  %v1451 = vadd.f32 0.0, %v1450
  %v1452 = vpop.f32.mrb[0].mxu0
  %1453 = vmatprep.mubr.bf16.mxu0 0
  %1454 = vmatmul.mubr.bf16.gmra.mrb[0].mxu0 %v1313
  %v1455 = vpop.f32.mrb[0].mxu0
  %v1456 = vadd.f32 0.0, %v1455
  %v1457 = vpop.f32.mrb[0].mxu0
  %v1458 = vpop.f32.mrb[0].mxu0
  %v1459 = vadd.f32 0.0, %v1458
  %v1460 = vpop.f32.mrb[0].mxu0
  %1461 = vmatprep.mubr.bf16.mxu0 0
  %1462 = vmatmul.mubr.bf16.gmra.mrb[0].mxu0 %v1314
  %v1463 = vpop.f32.mrb[0].mxu0
  %v1464 = vadd.f32 0.0, %v1463
  %v1465 = vpop.f32.mrb[0].mxu0
  %v1466 = vpop.f32.mrb[0].mxu0
  %v1467 = vadd.f32 0.0, %v1466
  %v1468 = vpop.f32.mrb[0].mxu0
  %1469 = vmatprep.mubr.bf16.mxu0 0
  %1470 = vmatmul.mubr.bf16.gmra.mrb[0].mxu0 %v1315
  %v1471 = vpop.f32.mrb[0].mxu0
  %v1472 = vadd.f32 0.0, %v1471
  %v1473 = vpop.f32.mrb[0].mxu0
  %v1474 = vpop.f32.mrb[0].mxu0
  %v1475 = vadd.f32 0.0, %v1474
  %v1476 = vpop.f32.mrb[0].mxu0
  %1477 = vmatprep.mubr.bf16.mxu0 0
  %1478 = vmatmul.mubr.bf16.gmra.mrb[0].mxu0 %v1316
  %v1479 = vpop.f32.mrb[0].mxu0
  %v1480 = vadd.f32 0.0, %v1479
  %v1481 = vpop.f32.mrb[0].mxu0
  %v1482 = vpop.f32.mrb[0].mxu0
  %v1483 = vadd.f32 0.0, %v1482
  %v1484 = vpop.f32.mrb[0].mxu0
  %1485 = vmatprep.mubr.bf16.mxu0 0
  %1486 = vmatmul.mubr.bf16.gmra.mrb[0].mxu0 %v1317
  %v1487 = vpop.f32.mrb[0].mxu0
  %v1488 = vadd.f32 0.0, %v1487
  %v1489 = vpop.f32.mrb[0].mxu0
  %v1490 = vpop.f32.mrb[0].mxu0
  %v1491 = vadd.f32 0.0, %v1490
  %v1492 = vpop.f32.mrb[0].mxu0
  %1493 = vmatprep.mubr.bf16.mxu0 0
  %1494 = vmatmul.mubr.bf16.gmra.mrb[0].mxu0 %v1318
  %v1495 = vpop.f32.mrb[0].mxu0
  %v1496 = vadd.f32 0.0, %v1495
  %v1497 = vpop.f32.mrb[0].mxu0
  %v1498 = vpop.f32.mrb[0].mxu0
  %v1499 = vadd.f32 0.0, %v1498
  %v1500 = vpop.f32.mrb[0].mxu0
  %1501 = vmatprep.mubr.bf16.mxu0 0
  %1502 = vmatmul.mubr.bf16.gmra.mrb[0].mxu0 %v1319
  %v1503 = vpop.f32.mrb[0].mxu0
  %v1504 = vadd.f32 0.0, %v1503
  %v1505 = vpop.f32.mrb[0].mxu0
  %v1506 = vpop.f32.mrb[0].mxu0
  %v1507 = vadd.f32 0.0, %v1506
  %v1508 = vpop.f32.mrb[0].mxu0
  %1509 = vmatprep.mubr.bf16.mxu0 0
  %1510 = vmatmul.mubr.bf16.gmra.mrb[0].mxu0 %v1320
  %v1511 = vpop.f32.mrb[0].mxu0
  %v1512 = vadd.f32 0.0, %v1511
  %v1513 = vpop.f32.mrb[0].mxu0
  %v1514 = vpop.f32.mrb[0].mxu0
  %v1515 = vadd.f32 0.0, %v1514
  %v1516 = vpop.f32.mrb[0].mxu0
  %1517 = vmatprep.mubr.bf16.mxu0 0
  %1518 = vmatmul.mubr.bf16.gmra.mrb[0].mxu0 %v1321
  %v1519 = vpop.f32.mrb[0].mxu0
  %v1520 = vadd.f32 0.0, %v1519
  %v1521 = vpop.f32.mrb[0].mxu0
  %v1522 = vpop.f32.mrb[0].mxu0
  %v1523 = vadd.f32 0.0, %v1522
  %v1524 = vpop.f32.mrb[0].mxu0
  %1525 = vmatprep.mubr.bf16.mxu0 0
  %1526 = vmatmul.mubr.bf16.gmra.mrb[0].mxu0 %v1322
  %v1527 = vpop.f32.mrb[0].mxu0
  %v1528 = vadd.f32 0.0, %v1527
  %v1529 = vpop.f32.mrb[0].mxu0
  %v1530 = vpop.f32.mrb[0].mxu0
  %v1531 = vadd.f32 0.0, %v1530
  %v1532 = vpop.f32.mrb[0].mxu0
  %1533 = vmatprep.mubr.bf16.mxu0 0
  %1534 = vmatmul.mubr.bf16.gmra.mrb[0].mxu0 %v1323
  %v1535 = vpop.f32.mrb[0].mxu0
  %v1536 = vadd.f32 0.0, %v1535
  %v1537 = vpop.f32.mrb[0].mxu0
  %v1538 = vpop.f32.mrb[0].mxu0
  %v1539 = vadd.f32 0.0, %v1538
  %v1540 = vpop.f32.mrb[0].mxu0
  %1541 = vmatprep.mubr.bf16.mxu0 0
  %1542 = vmatmul.mubr.bf16.gmra.mrb[0].mxu0 %v1324
  %v1543 = vpop.f32.mrb[0].mxu0
  %v1544 = vadd.f32 0.0, %v1543
  %v1545 = vpop.f32.mrb[0].mxu0
  %v1546 = vpop.f32.mrb[0].mxu0
  %v1547 = vadd.f32 0.0, %v1546
  %v1548 = vpop.f32.mrb[0].mxu0
  %1549 = vdwg.mxu0
  %v1550 = vadd.f32 %v971, %v1424
  %v1551 = vadd.f32 %v974, %v1427
  %v1552 = vadd.f32 %v979, %v1432
  %v1553 = vadd.f32 %v982, %v1435
  %v1554 = vadd.f32 %v987, %v1440
  %v1555 = vadd.f32 %v990, %v1443
  %v1556 = vadd.f32 %v995, %v1448
  %v1557 = vadd.f32 %v998, %v1451
  %v1558 = vadd.f32 %v1003, %v1456
  %v1559 = vadd.f32 %v1006, %v1459
  %v1560 = vadd.f32 %v1011, %v1464
  %v1561 = vadd.f32 %v1014, %v1467
  %v1562 = vadd.f32 %v1019, %v1472
  %v1563 = vadd.f32 %v1022, %v1475
  %v1564 = vadd.f32 %v1027, %v1480
  %v1565 = vadd.f32 %v1030, %v1483
  %v1566 = vadd.f32 %v1035, %v1488
  %v1567 = vadd.f32 %v1038, %v1491
  %v1568 = vadd.f32 %v1043, %v1496
  %v1569 = vadd.f32 %v1046, %v1499
  %v1570 = vadd.f32 %v1051, %v1504
  %v1571 = vadd.f32 %v1054, %v1507
  %v1572 = vadd.f32 %v1059, %v1512
  %v1573 = vadd.f32 %v1062, %v1515
  %v1574 = vadd.f32 %v1067, %v1520
  %v1575 = vadd.f32 %v1070, %v1523
  %v1576 = vadd.f32 %v1075, %v1528
  %v1577 = vadd.f32 %v1078, %v1531
  %v1578 = vadd.f32 %v1083, %v1536
  %v1579 = vadd.f32 %v1086, %v1539
  %v1580 = vadd.f32 %v1091, %v1544
  %v1581 = vadd.f32 %v1094, %v1547
  %s1582 = scalar_lea.vmem %s0, 12
  %v1583 = vld [vmem:[%s1582] sm:$0xf]
  %v1584 = vld [vmem:[%s1582 + $0x4] sm:$0xf]
  %v1585 = vld [vmem:[%s1582 + $0xc] sm:$0xf]
  %v1586 = vld [vmem:[%s1582 + $0x10] sm:$0xf]
  %v1587 = vld [vmem:[%s1582 + $0x18] sm:$0xf]
  %v1588 = vld [vmem:[%s1582 + $0x1c] sm:$0xf]
  %v1589 = vld [vmem:[%s1582 + $0x24] sm:$0xf]
  %v1590 = vld [vmem:[%s1582 + $0x28] sm:$0xf]
  %v1591 = vld [vmem:[%s1582 + $0x30] sm:$0xf]
  %v1592 = vld [vmem:[%s1582 + $0x34] sm:$0xf]
  %v1593 = vld [vmem:[%s1582 + $0x3c] sm:$0xf]
  %v1594 = vld [vmem:[%s1582 + $0x40] sm:$0xf]
  %v1595 = vld [vmem:[%s1582 + $0x48] sm:$0xf]
  %v1596 = vld [vmem:[%s1582 + $0x4c] sm:$0xf]
  %v1597 = vld [vmem:[%s1582 + $0x54] sm:$0xf]
  %v1598 = vld [vmem:[%s1582 + $0x58] sm:$0xf]
  %v1599 = vld [vmem:[%s1582 + $0x78] sm:$0xf]
  %v1600 = vld [vmem:[%s1582 + $0x7c] sm:$0xf]
  %v1601 = vld [vmem:[%s1582 + $0x84] sm:$0xf]
  %v1602 = vld [vmem:[%s1582 + $0x88] sm:$0xf]
  %v1603 = vld [vmem:[%s1582 + $0x90] sm:$0xf]
  %v1604 = vld [vmem:[%s1582 + $0x94] sm:$0xf]
  %v1605 = vld [vmem:[%s1582 + $0x9c] sm:$0xf]
  %v1606 = vld [vmem:[%s1582 + $0xa0] sm:$0xf]
  %v1607 = vld [vmem:[%s1582 + $0xa8] sm:$0xf]
  %v1608 = vld [vmem:[%s1582 + $0xac] sm:$0xf]
  %v1609 = vld [vmem:[%s1582 + $0xb4] sm:$0xf]
  %v1610 = vld [vmem:[%s1582 + $0xb8] sm:$0xf]
  %v1611 = vld [vmem:[%s1582 + $0xc0] sm:$0xf]
  %v1612 = vld [vmem:[%s1582 + $0xc4] sm:$0xf]
  %v1613 = vld [vmem:[%s1582 + $0xcc] sm:$0xf]
  %v1614 = vld [vmem:[%s1582 + $0xd0] sm:$0xf]
  %s1615 = scalar_lea.vmem %s1, 192
  %v1616 = vld [vmem:[%s1615] sm:$0xf]
  %v1617 = vld [vmem:[%s1615 + $0x4] sm:$0xf]
  %v1618 = vld [vmem:[%s1615 + $0x8] sm:$0xf]
  %v1619 = vld [vmem:[%s1615 + $0xc] sm:$0xf]
  %v1620 = vld [vmem:[%s1615 + $0x10] sm:$0xf]
  %v1621 = vld [vmem:[%s1615 + $0x14] sm:$0xf]
  %v1622 = vld [vmem:[%s1615 + $0x18] sm:$0xf]
  %v1623 = vld [vmem:[%s1615 + $0x1c] sm:$0xf]
  %v1624 = vld [vmem:[%s1615 + $0x20] sm:$0xf]
  %v1625 = vld [vmem:[%s1615 + $0x24] sm:$0xf]
  %v1626 = vld [vmem:[%s1615 + $0x28] sm:$0xf]
  %v1627 = vld [vmem:[%s1615 + $0x2c] sm:$0xf]
  %v1628 = vld [vmem:[%s1615 + $0x30] sm:$0xf]
  %v1629 = vld [vmem:[%s1615 + $0x34] sm:$0xf]
  %v1630 = vld [vmem:[%s1615 + $0x38] sm:$0xf]
  %v1631 = vld [vmem:[%s1615 + $0x3c] sm:$0xf]
  %v1664 = vunpack.c.l.b16 %v1583
  %v1665 = vunpack.c.l.b16 %v1584
  %v1666 = vunpack.c.l.b16 %v1585
  %v1667 = vunpack.c.l.b16 %v1586
  %v1668 = vunpack.c.l.b16 %v1587
  %v1669 = vunpack.c.l.b16 %v1588
  %v1670 = vunpack.c.l.b16 %v1589
  %v1671 = vunpack.c.l.b16 %v1590
  %v1672 = vunpack.c.l.b16 %v1591
  %v1673 = vunpack.c.l.b16 %v1592
  %v1674 = vunpack.c.l.b16 %v1593
  %v1675 = vunpack.c.l.b16 %v1594
  %v1676 = vunpack.c.l.b16 %v1595
  %v1677 = vunpack.c.l.b16 %v1596
  %v1678 = vunpack.c.l.b16 %v1597
  %v1679 = vunpack.c.l.b16 %v1598
  %v1680 = vunpack.c.l.b16 %v1599
  %v1681 = vunpack.c.l.b16 %v1600
  %v1682 = vunpack.c.l.b16 %v1601
  %v1683 = vunpack.c.l.b16 %v1602
  %v1684 = vunpack.c.l.b16 %v1603
  %v1685 = vunpack.c.l.b16 %v1604
  %v1686 = vunpack.c.l.b16 %v1605
  %v1687 = vunpack.c.l.b16 %v1606
  %v1688 = vunpack.c.l.b16 %v1607
  %v1689 = vunpack.c.l.b16 %v1608
  %v1690 = vunpack.c.l.b16 %v1609
  %v1691 = vunpack.c.l.b16 %v1610
  %v1692 = vunpack.c.l.b16 %v1611
  %v1693 = vunpack.c.l.b16 %v1612
  %v1694 = vunpack.c.l.b16 %v1613
  %v1695 = vunpack.c.l.b16 %v1614
  %v1696 = vpack.c.b16 %v1665, %v1664
  %v1697 = vpack.c.b16 %v1667, %v1666
  %v1698 = vpack.c.b16 %v1669, %v1668
  %v1699 = vpack.c.b16 %v1671, %v1670
  %v1700 = vpack.c.b16 %v1673, %v1672
  %v1701 = vpack.c.b16 %v1675, %v1674
  %v1702 = vpack.c.b16 %v1677, %v1676
  %v1703 = vpack.c.b16 %v1679, %v1678
  %v1704 = vpack.c.b16 %v1681, %v1680
  %v1705 = vpack.c.b16 %v1683, %v1682
  %v1706 = vpack.c.b16 %v1685, %v1684
  %v1707 = vpack.c.b16 %v1687, %v1686
  %v1708 = vpack.c.b16 %v1689, %v1688
  %v1709 = vpack.c.b16 %v1691, %v1690
  %v1710 = vpack.c.b16 %v1693, %v1692
  %v1711 = vpack.c.b16 %v1695, %v1694
  %v1744 = vunpack.c.l.b16 %v1616
  %v1745 = vunpack.c.l.b16 %v1617
  %v1746 = vunpack.c.l.b16 %v1618
  %v1747 = vunpack.c.l.b16 %v1619
  %v1748 = vunpack.c.l.b16 %v1620
  %v1749 = vunpack.c.l.b16 %v1621
  %v1750 = vunpack.c.l.b16 %v1622
  %v1751 = vunpack.c.l.b16 %v1623
  %v1752 = vunpack.c.l.b16 %v1624
  %v1753 = vunpack.c.l.b16 %v1625
  %v1754 = vunpack.c.l.b16 %v1626
  %v1755 = vunpack.c.l.b16 %v1627
  %v1756 = vunpack.c.l.b16 %v1628
  %v1757 = vunpack.c.l.b16 %v1629
  %v1758 = vunpack.c.l.b16 %v1630
  %v1759 = vunpack.c.l.b16 %v1631
  %v1760 = vpack.c.b16 %v1745, %v1744
  %v1761 = vpack.c.b16 %v1747, %v1746
  %v1762 = vpack.c.b16 %v1749, %v1748
  %v1763 = vpack.c.b16 %v1751, %v1750
  %v1764 = vpack.c.b16 %v1753, %v1752
  %v1765 = vpack.c.b16 %v1755, %v1754
  %v1766 = vpack.c.b16 %v1757, %v1756
  %v1767 = vpack.c.b16 %v1759, %v1758
  %1776 = vmatprep.subr.bf16.mxu0 0
  %1777 = vmatpush1.bf16.msra.mxu0 %v1760
  %1778 = vmatprep.subr.bf16.mxu0 0
  %1779 = vmatpush1.bf16.msra.mxu0 %v1761
  %1780 = vmatprep.subr.bf16.mxu0 0
  %1781 = vmatpush1.bf16.msra.mxu0 %v1762
  %1782 = vmatprep.subr.bf16.mxu0 0
  %1783 = vmatpush1.bf16.msra.mxu0 %v1763
  %1784 = vmatprep.subr.bf16.mxu0 0
  %1785 = vmatpush1.bf16.msra.mxu0 %v1764
  %1786 = vmatprep.subr.bf16.mxu0 0
  %1787 = vmatpush1.bf16.msra.mxu0 %v1765
  %1788 = vmatprep.subr.bf16.mxu0 0
  %1789 = vmatpush1.bf16.msra.mxu0 %v1766
  %1790 = vmatprep.subr.bf16.mxu0 0
  %1791 = vmatpush1.bf16.msra.mxu0 %v1767
  %1792 = vmatprep.subr.bf16.mxu0 0
  %1793 = vmatpush1.bf16.msra.mxu0 0
  %1794 = vmatprep.subr.bf16.mxu0 0
  %1795 = vmatpush1.bf16.msra.mxu0 0
  %1796 = vmatprep.subr.bf16.mxu0 0
  %1797 = vmatpush1.bf16.msra.mxu0 0
  %1798 = vmatprep.subr.bf16.mxu0 0
  %1799 = vmatpush1.bf16.msra.mxu0 0
  %1800 = vmatprep.subr.bf16.mxu0 0
  %1801 = vmatpush1.bf16.msra.mxu0 0
  %1802 = vmatprep.subr.bf16.mxu0 0
  %1803 = vmatpush1.bf16.msra.mxu0 0
  %1804 = vmatprep.subr.bf16.mxu0 0
  %1805 = vmatpush1.bf16.msra.mxu0 0
  %1806 = vmatprep.subr.bf16.mxu0 0
  %1807 = vmatpush1.bf16.msra.mxu0 0
  %1808 = vmatprep.mubr.bf16.mxu0 0
  %1809 = vmatmul.mubr.bf16.gmra.mrb[0].mxu0 %v1696
  %v1810 = vpop.f32.mrb[0].mxu0
  %v1811 = vadd.f32 0.0, %v1810
  %v1812 = vpop.f32.mrb[0].mxu0
  %v1813 = vpop.f32.mrb[0].mxu0
  %v1814 = vadd.f32 0.0, %v1813
  %v1815 = vpop.f32.mrb[0].mxu0
  %1816 = vmatprep.mubr.bf16.mxu0 0
  %1817 = vmatmul.mubr.bf16.gmra.mrb[0].mxu0 %v1697
  %v1818 = vpop.f32.mrb[0].mxu0
  %v1819 = vadd.f32 0.0, %v1818
  %v1820 = vpop.f32.mrb[0].mxu0
  %v1821 = vpop.f32.mrb[0].mxu0
  %v1822 = vadd.f32 0.0, %v1821
  %v1823 = vpop.f32.mrb[0].mxu0
  %1824 = vmatprep.mubr.bf16.mxu0 0
  %1825 = vmatmul.mubr.bf16.gmra.mrb[0].mxu0 %v1698
  %v1826 = vpop.f32.mrb[0].mxu0
  %v1827 = vadd.f32 0.0, %v1826
  %v1828 = vpop.f32.mrb[0].mxu0
  %v1829 = vpop.f32.mrb[0].mxu0
  %v1830 = vadd.f32 0.0, %v1829
  %v1831 = vpop.f32.mrb[0].mxu0
  %1832 = vmatprep.mubr.bf16.mxu0 0
  %1833 = vmatmul.mubr.bf16.gmra.mrb[0].mxu0 %v1699
  %v1834 = vpop.f32.mrb[0].mxu0
  %v1835 = vadd.f32 0.0, %v1834
  %v1836 = vpop.f32.mrb[0].mxu0
  %v1837 = vpop.f32.mrb[0].mxu0
  %v1838 = vadd.f32 0.0, %v1837
  %v1839 = vpop.f32.mrb[0].mxu0
  %1840 = vmatprep.mubr.bf16.mxu0 0
  %1841 = vmatmul.mubr.bf16.gmra.mrb[0].mxu0 %v1700
  %v1842 = vpop.f32.mrb[0].mxu0
  %v1843 = vadd.f32 0.0, %v1842
  %v1844 = vpop.f32.mrb[0].mxu0
  %v1845 = vpop.f32.mrb[0].mxu0
  %v1846 = vadd.f32 0.0, %v1845
  %v1847 = vpop.f32.mrb[0].mxu0
  %1848 = vmatprep.mubr.bf16.mxu0 0
  %1849 = vmatmul.mubr.bf16.gmra.mrb[0].mxu0 %v1701
  %v1850 = vpop.f32.mrb[0].mxu0
  %v1851 = vadd.f32 0.0, %v1850
  %v1852 = vpop.f32.mrb[0].mxu0
  %v1853 = vpop.f32.mrb[0].mxu0
  %v1854 = vadd.f32 0.0, %v1853
  %v1855 = vpop.f32.mrb[0].mxu0
  %1856 = vmatprep.mubr.bf16.mxu0 0
  %1857 = vmatmul.mubr.bf16.gmra.mrb[0].mxu0 %v1702
  %v1858 = vpop.f32.mrb[0].mxu0
  %v1859 = vadd.f32 0.0, %v1858
  %v1860 = vpop.f32.mrb[0].mxu0
  %v1861 = vpop.f32.mrb[0].mxu0
  %v1862 = vadd.f32 0.0, %v1861
  %v1863 = vpop.f32.mrb[0].mxu0
  %1864 = vmatprep.mubr.bf16.mxu0 0
  %1865 = vmatmul.mubr.bf16.gmra.mrb[0].mxu0 %v1703
  %v1866 = vpop.f32.mrb[0].mxu0
  %v1867 = vadd.f32 0.0, %v1866
  %v1868 = vpop.f32.mrb[0].mxu0
  %v1869 = vpop.f32.mrb[0].mxu0
  %v1870 = vadd.f32 0.0, %v1869
  %v1871 = vpop.f32.mrb[0].mxu0
  %1872 = vmatprep.mubr.bf16.mxu0 0
  %1873 = vmatmul.mubr.bf16.gmra.mrb[0].mxu0 %v1704
  %v1874 = vpop.f32.mrb[0].mxu0
  %v1875 = vadd.f32 0.0, %v1874
  %v1876 = vpop.f32.mrb[0].mxu0
  %v1877 = vpop.f32.mrb[0].mxu0
  %v1878 = vadd.f32 0.0, %v1877
  %v1879 = vpop.f32.mrb[0].mxu0
  %1880 = vmatprep.mubr.bf16.mxu0 0
  %1881 = vmatmul.mubr.bf16.gmra.mrb[0].mxu0 %v1705
  %v1882 = vpop.f32.mrb[0].mxu0
  %v1883 = vadd.f32 0.0, %v1882
  %v1884 = vpop.f32.mrb[0].mxu0
  %v1885 = vpop.f32.mrb[0].mxu0
  %v1886 = vadd.f32 0.0, %v1885
  %v1887 = vpop.f32.mrb[0].mxu0
  %1888 = vmatprep.mubr.bf16.mxu0 0
  %1889 = vmatmul.mubr.bf16.gmra.mrb[0].mxu0 %v1706
  %v1890 = vpop.f32.mrb[0].mxu0
  %v1891 = vadd.f32 0.0, %v1890
  %v1892 = vpop.f32.mrb[0].mxu0
  %v1893 = vpop.f32.mrb[0].mxu0
  %v1894 = vadd.f32 0.0, %v1893
  %v1895 = vpop.f32.mrb[0].mxu0
  %1896 = vmatprep.mubr.bf16.mxu0 0
  %1897 = vmatmul.mubr.bf16.gmra.mrb[0].mxu0 %v1707
  %v1898 = vpop.f32.mrb[0].mxu0
  %v1899 = vadd.f32 0.0, %v1898
  %v1900 = vpop.f32.mrb[0].mxu0
  %v1901 = vpop.f32.mrb[0].mxu0
  %v1902 = vadd.f32 0.0, %v1901
  %v1903 = vpop.f32.mrb[0].mxu0
  %1904 = vmatprep.mubr.bf16.mxu0 0
  %1905 = vmatmul.mubr.bf16.gmra.mrb[0].mxu0 %v1708
  %v1906 = vpop.f32.mrb[0].mxu0
  %v1907 = vadd.f32 0.0, %v1906
  %v1908 = vpop.f32.mrb[0].mxu0
  %v1909 = vpop.f32.mrb[0].mxu0
  %v1910 = vadd.f32 0.0, %v1909
  %v1911 = vpop.f32.mrb[0].mxu0
  %1912 = vmatprep.mubr.bf16.mxu0 0
  %1913 = vmatmul.mubr.bf16.gmra.mrb[0].mxu0 %v1709
  %v1914 = vpop.f32.mrb[0].mxu0
  %v1915 = vadd.f32 0.0, %v1914
  %v1916 = vpop.f32.mrb[0].mxu0
  %v1917 = vpop.f32.mrb[0].mxu0
  %v1918 = vadd.f32 0.0, %v1917
  %v1919 = vpop.f32.mrb[0].mxu0
  %1920 = vmatprep.mubr.bf16.mxu0 0
  %1921 = vmatmul.mubr.bf16.gmra.mrb[0].mxu0 %v1710
  %v1922 = vpop.f32.mrb[0].mxu0
  %v1923 = vadd.f32 0.0, %v1922
  %v1924 = vpop.f32.mrb[0].mxu0
  %v1925 = vpop.f32.mrb[0].mxu0
  %v1926 = vadd.f32 0.0, %v1925
  %v1927 = vpop.f32.mrb[0].mxu0
  %1928 = vmatprep.mubr.bf16.mxu0 0
  %1929 = vmatmul.mubr.bf16.gmra.mrb[0].mxu0 %v1711
  %v1930 = vpop.f32.mrb[0].mxu0
  %v1931 = vadd.f32 0.0, %v1930
  %v1932 = vpop.f32.mrb[0].mxu0
  %v1933 = vpop.f32.mrb[0].mxu0
  %v1934 = vadd.f32 0.0, %v1933
  %v1935 = vpop.f32.mrb[0].mxu0
  %1936 = vdwg.mxu0
  %v1937 = vadd.f32 %v1550, %v1811
  %v1938 = vadd.f32 %v1551, %v1814
  %v1939 = vadd.f32 %v1552, %v1819
  %v1940 = vadd.f32 %v1553, %v1822
  %v1941 = vadd.f32 %v1554, %v1827
  %v1942 = vadd.f32 %v1555, %v1830
  %v1943 = vadd.f32 %v1556, %v1835
  %v1944 = vadd.f32 %v1557, %v1838
  %v1945 = vadd.f32 %v1558, %v1843
  %v1946 = vadd.f32 %v1559, %v1846
  %v1947 = vadd.f32 %v1560, %v1851
  %v1948 = vadd.f32 %v1561, %v1854
  %v1949 = vadd.f32 %v1562, %v1859
  %v1950 = vadd.f32 %v1563, %v1862
  %v1951 = vadd.f32 %v1564, %v1867
  %v1952 = vadd.f32 %v1565, %v1870
  %v1953 = vadd.f32 %v1566, %v1875
  %v1954 = vadd.f32 %v1567, %v1878
  %v1955 = vadd.f32 %v1568, %v1883
  %v1956 = vadd.f32 %v1569, %v1886
  %v1957 = vadd.f32 %v1570, %v1891
  %v1958 = vadd.f32 %v1571, %v1894
  %v1959 = vadd.f32 %v1572, %v1899
  %v1960 = vadd.f32 %v1573, %v1902
  %v1961 = vadd.f32 %v1574, %v1907
  %v1962 = vadd.f32 %v1575, %v1910
  %v1963 = vadd.f32 %v1576, %v1915
  %v1964 = vadd.f32 %v1577, %v1918
  %v1965 = vadd.f32 %v1578, %v1923
  %v1966 = vadd.f32 %v1579, %v1926
  %v1967 = vadd.f32 %v1580, %v1931
  %v1968 = vadd.f32 %v1581, %v1934
  %v1969 = vld [vmem:[%s1582] sm:$0xf]
  %v1970 = vld [vmem:[%s1582 + $0x4] sm:$0xf]
  %v1971 = vld [vmem:[%s1582 + $0x8] sm:$0x1]
  %v1972 = vld [vmem:[%s1582 + $0xc] sm:$0xf]
  %v1973 = vld [vmem:[%s1582 + $0x10] sm:$0xf]
  %v1974 = vld [vmem:[%s1582 + $0x14] sm:$0x1]
  %v1975 = vld [vmem:[%s1582 + $0x18] sm:$0xf]
  %v1976 = vld [vmem:[%s1582 + $0x1c] sm:$0xf]
  %v1977 = vld [vmem:[%s1582 + $0x20] sm:$0x1]
  %v1978 = vld [vmem:[%s1582 + $0x24] sm:$0xf]
  %v1979 = vld [vmem:[%s1582 + $0x28] sm:$0xf]
  %v1980 = vld [vmem:[%s1582 + $0x2c] sm:$0x1]
  %v1981 = vld [vmem:[%s1582 + $0x30] sm:$0xf]
  %v1982 = vld [vmem:[%s1582 + $0x34] sm:$0xf]
  %v1983 = vld [vmem:[%s1582 + $0x38] sm:$0x1]
  %v1984 = vld [vmem:[%s1582 + $0x3c] sm:$0xf]
  %v1985 = vld [vmem:[%s1582 + $0x40] sm:$0xf]
  %v1986 = vld [vmem:[%s1582 + $0x44] sm:$0x1]
  %v1987 = vld [vmem:[%s1582 + $0x48] sm:$0xf]
  %v1988 = vld [vmem:[%s1582 + $0x4c] sm:$0xf]
  %v1989 = vld [vmem:[%s1582 + $0x50] sm:$0x1]
  %v1990 = vld [vmem:[%s1582 + $0x54] sm:$0xf]
  %v1991 = vld [vmem:[%s1582 + $0x58] sm:$0xf]
  %v1992 = vld [vmem:[%s1582 + $0x5c] sm:$0x1]
  %v1993 = vld [vmem:[%s1582 + $0x78] sm:$0xf]
  %v1994 = vld [vmem:[%s1582 + $0x7c] sm:$0xf]
  %v1995 = vld [vmem:[%s1582 + $0x80] sm:$0x1]
  %v1996 = vld [vmem:[%s1582 + $0x84] sm:$0xf]
  %v1997 = vld [vmem:[%s1582 + $0x88] sm:$0xf]
  %v1998 = vld [vmem:[%s1582 + $0x8c] sm:$0x1]
  %v1999 = vld [vmem:[%s1582 + $0x90] sm:$0xf]
  %v2000 = vld [vmem:[%s1582 + $0x94] sm:$0xf]
  %v2001 = vld [vmem:[%s1582 + $0x98] sm:$0x1]
  %v2002 = vld [vmem:[%s1582 + $0x9c] sm:$0xf]
  %v2003 = vld [vmem:[%s1582 + $0xa0] sm:$0xf]
  %v2004 = vld [vmem:[%s1582 + $0xa4] sm:$0x1]
  %v2005 = vld [vmem:[%s1582 + $0xa8] sm:$0xf]
  %v2006 = vld [vmem:[%s1582 + $0xac] sm:$0xf]
  %v2007 = vld [vmem:[%s1582 + $0xb0] sm:$0x1]
  %v2008 = vld [vmem:[%s1582 + $0xb4] sm:$0xf]
  %v2009 = vld [vmem:[%s1582 + $0xb8] sm:$0xf]
  %v2010 = vld [vmem:[%s1582 + $0xbc] sm:$0x1]
  %v2011 = vld [vmem:[%s1582 + $0xc0] sm:$0xf]
  %v2012 = vld [vmem:[%s1582 + $0xc4] sm:$0xf]
  %v2013 = vld [vmem:[%s1582 + $0xc8] sm:$0x1]
  %v2014 = vld [vmem:[%s1582 + $0xcc] sm:$0xf]
  %v2015 = vld [vmem:[%s1582 + $0xd0] sm:$0xf]
  %v2016 = vld [vmem:[%s1582 + $0xd4] sm:$0x1]
  %v2018 = vshrl.u32 %v1969, 16
  %v2020 = vrot.slane %v2018, 4
  %v2021 = vshll.u32 %v1969, 16
  %v2023 = vrot.slane %v2021, 5
  %v2024 = vor.u32 %v2020, %v2023
  %v2025 = vrot.slane %v2024, 4
  %v2027 = vshll.u32 %v1970, 16
  %v2029 = vrot.slane %v2027, 5
  %v2030 = vsel %vm117, %v2025, %v2029
  %v2031 = vshrl.u32 %v1970, 16
  %v2033 = vrot.slane %v2031, 4
  %v2034 = vor.u32 %v2033, %v2029
  %v2035 = vrot.slane %v2034, 4
  %v2037 = vshll.u32 %v1971, 16
  %v2039 = vrot.slane %v2037, 5
  %v2040 = vsel %vm117, %v2035, %v2039
  %v2042 = vshrl.u32 %v1972, 16
  %v2044 = vrot.slane %v2042, 4
  %v2045 = vshll.u32 %v1972, 16
  %v2047 = vrot.slane %v2045, 5
  %v2048 = vor.u32 %v2044, %v2047
  %v2049 = vrot.slane %v2048, 4
  %v2051 = vshll.u32 %v1973, 16
  %v2053 = vrot.slane %v2051, 5
  %v2054 = vsel %vm117, %v2049, %v2053
  %v2055 = vshrl.u32 %v1973, 16
  %v2057 = vrot.slane %v2055, 4
  %v2058 = vor.u32 %v2057, %v2053
  %v2059 = vrot.slane %v2058, 4
  %v2061 = vshll.u32 %v1974, 16
  %v2063 = vrot.slane %v2061, 5
  %v2064 = vsel %vm117, %v2059, %v2063
  %v2066 = vshrl.u32 %v1975, 16
  %v2068 = vrot.slane %v2066, 4
  %v2069 = vshll.u32 %v1975, 16
  %v2071 = vrot.slane %v2069, 5
  %v2072 = vor.u32 %v2068, %v2071
  %v2073 = vrot.slane %v2072, 4
  %v2075 = vshll.u32 %v1976, 16
  %v2077 = vrot.slane %v2075, 5
  %v2078 = vsel %vm117, %v2073, %v2077
  %v2079 = vshrl.u32 %v1976, 16
  %v2081 = vrot.slane %v2079, 4
  %v2082 = vor.u32 %v2081, %v2077
  %v2083 = vrot.slane %v2082, 4
  %v2085 = vshll.u32 %v1977, 16
  %v2087 = vrot.slane %v2085, 5
  %v2088 = vsel %vm117, %v2083, %v2087
  %v2090 = vshrl.u32 %v1978, 16
  %v2092 = vrot.slane %v2090, 4
  %v2093 = vshll.u32 %v1978, 16
  %v2095 = vrot.slane %v2093, 5
  %v2096 = vor.u32 %v2092, %v2095
  %v2097 = vrot.slane %v2096, 4
  %v2099 = vshll.u32 %v1979, 16
  %v2101 = vrot.slane %v2099, 5
  %v2102 = vsel %vm117, %v2097, %v2101
  %v2103 = vshrl.u32 %v1979, 16
  %v2105 = vrot.slane %v2103, 4
  %v2106 = vor.u32 %v2105, %v2101
  %v2107 = vrot.slane %v2106, 4
  %v2109 = vshll.u32 %v1980, 16
  %v2111 = vrot.slane %v2109, 5
  %v2112 = vsel %vm117, %v2107, %v2111
  %v2114 = vshrl.u32 %v1981, 16
  %v2116 = vrot.slane %v2114, 4
  %v2117 = vshll.u32 %v1981, 16
  %v2119 = vrot.slane %v2117, 5
  %v2120 = vor.u32 %v2116, %v2119
  %v2121 = vrot.slane %v2120, 4
  %v2123 = vshll.u32 %v1982, 16
  %v2125 = vrot.slane %v2123, 5
  %v2126 = vsel %vm117, %v2121, %v2125
  %v2127 = vshrl.u32 %v1982, 16
  %v2129 = vrot.slane %v2127, 4
  %v2130 = vor.u32 %v2129, %v2125
  %v2131 = vrot.slane %v2130, 4
  %v2133 = vshll.u32 %v1983, 16
  %v2135 = vrot.slane %v2133, 5
  %v2136 = vsel %vm117, %v2131, %v2135
  %v2138 = vshrl.u32 %v1984, 16
  %v2140 = vrot.slane %v2138, 4
  %v2141 = vshll.u32 %v1984, 16
  %v2143 = vrot.slane %v2141, 5
  %v2144 = vor.u32 %v2140, %v2143
  %v2145 = vrot.slane %v2144, 4
  %v2147 = vshll.u32 %v1985, 16
  %v2149 = vrot.slane %v2147, 5
  %v2150 = vsel %vm117, %v2145, %v2149
  %v2151 = vshrl.u32 %v1985, 16
  %v2153 = vrot.slane %v2151, 4
  %v2154 = vor.u32 %v2153, %v2149
  %v2155 = vrot.slane %v2154, 4
  %v2157 = vshll.u32 %v1986, 16
  %v2159 = vrot.slane %v2157, 5
  %v2160 = vsel %vm117, %v2155, %v2159
  %v2162 = vshrl.u32 %v1987, 16
  %v2164 = vrot.slane %v2162, 4
  %v2165 = vshll.u32 %v1987, 16
  %v2167 = vrot.slane %v2165, 5
  %v2168 = vor.u32 %v2164, %v2167
  %v2169 = vrot.slane %v2168, 4
  %v2171 = vshll.u32 %v1988, 16
  %v2173 = vrot.slane %v2171, 5
  %v2174 = vsel %vm117, %v2169, %v2173
  %v2175 = vshrl.u32 %v1988, 16
  %v2177 = vrot.slane %v2175, 4
  %v2178 = vor.u32 %v2177, %v2173
  %v2179 = vrot.slane %v2178, 4
  %v2181 = vshll.u32 %v1989, 16
  %v2183 = vrot.slane %v2181, 5
  %v2184 = vsel %vm117, %v2179, %v2183
  %v2186 = vshrl.u32 %v1990, 16
  %v2188 = vrot.slane %v2186, 4
  %v2189 = vshll.u32 %v1990, 16
  %v2191 = vrot.slane %v2189, 5
  %v2192 = vor.u32 %v2188, %v2191
  %v2193 = vrot.slane %v2192, 4
  %v2195 = vshll.u32 %v1991, 16
  %v2197 = vrot.slane %v2195, 5
  %v2198 = vsel %vm117, %v2193, %v2197
  %v2199 = vshrl.u32 %v1991, 16
  %v2201 = vrot.slane %v2199, 4
  %v2202 = vor.u32 %v2201, %v2197
  %v2203 = vrot.slane %v2202, 4
  %v2205 = vshll.u32 %v1992, 16
  %v2207 = vrot.slane %v2205, 5
  %v2208 = vsel %vm117, %v2203, %v2207
  %v2210 = vshrl.u32 %v1993, 16
  %v2212 = vrot.slane %v2210, 4
  %v2213 = vshll.u32 %v1993, 16
  %v2215 = vrot.slane %v2213, 5
  %v2216 = vor.u32 %v2212, %v2215
  %v2217 = vrot.slane %v2216, 4
  %v2219 = vshll.u32 %v1994, 16
  %v2221 = vrot.slane %v2219, 5
  %v2222 = vsel %vm117, %v2217, %v2221
  %v2223 = vshrl.u32 %v1994, 16
  %v2225 = vrot.slane %v2223, 4
  %v2226 = vor.u32 %v2225, %v2221
  %v2227 = vrot.slane %v2226, 4
  %v2229 = vshll.u32 %v1995, 16
  %v2231 = vrot.slane %v2229, 5
  %v2232 = vsel %vm117, %v2227, %v2231
  %v2234 = vshrl.u32 %v1996, 16
  %v2236 = vrot.slane %v2234, 4
  %v2237 = vshll.u32 %v1996, 16
  %v2239 = vrot.slane %v2237, 5
  %v2240 = vor.u32 %v2236, %v2239
  %v2241 = vrot.slane %v2240, 4
  %v2243 = vshll.u32 %v1997, 16
  %v2245 = vrot.slane %v2243, 5
  %v2246 = vsel %vm117, %v2241, %v2245
  %v2247 = vshrl.u32 %v1997, 16
  %v2249 = vrot.slane %v2247, 4
  %v2250 = vor.u32 %v2249, %v2245
  %v2251 = vrot.slane %v2250, 4
  %v2253 = vshll.u32 %v1998, 16
  %v2255 = vrot.slane %v2253, 5
  %v2256 = vsel %vm117, %v2251, %v2255
  %v2258 = vshrl.u32 %v1999, 16
  %v2260 = vrot.slane %v2258, 4
  %v2261 = vshll.u32 %v1999, 16
  %v2263 = vrot.slane %v2261, 5
  %v2264 = vor.u32 %v2260, %v2263
  %v2265 = vrot.slane %v2264, 4
  %v2267 = vshll.u32 %v2000, 16
  %v2269 = vrot.slane %v2267, 5
  %v2270 = vsel %vm117, %v2265, %v2269
  %v2271 = vshrl.u32 %v2000, 16
  %v2273 = vrot.slane %v2271, 4
  %v2274 = vor.u32 %v2273, %v2269
  %v2275 = vrot.slane %v2274, 4
  %v2277 = vshll.u32 %v2001, 16
  %v2279 = vrot.slane %v2277, 5
  %v2280 = vsel %vm117, %v2275, %v2279
  %v2282 = vshrl.u32 %v2002, 16
  %v2284 = vrot.slane %v2282, 4
  %v2285 = vshll.u32 %v2002, 16
  %v2287 = vrot.slane %v2285, 5
  %v2288 = vor.u32 %v2284, %v2287
  %v2289 = vrot.slane %v2288, 4
  %v2291 = vshll.u32 %v2003, 16
  %v2293 = vrot.slane %v2291, 5
  %v2294 = vsel %vm117, %v2289, %v2293
  %v2295 = vshrl.u32 %v2003, 16
  %v2297 = vrot.slane %v2295, 4
  %v2298 = vor.u32 %v2297, %v2293
  %v2299 = vrot.slane %v2298, 4
  %v2301 = vshll.u32 %v2004, 16
  %v2303 = vrot.slane %v2301, 5
  %v2304 = vsel %vm117, %v2299, %v2303
  %v2306 = vshrl.u32 %v2005, 16
  %v2308 = vrot.slane %v2306, 4
  %v2309 = vshll.u32 %v2005, 16
  %v2311 = vrot.slane %v2309, 5
  %v2312 = vor.u32 %v2308, %v2311
  %v2313 = vrot.slane %v2312, 4
  %v2315 = vshll.u32 %v2006, 16
  %v2317 = vrot.slane %v2315, 5
  %v2318 = vsel %vm117, %v2313, %v2317
  %v2319 = vshrl.u32 %v2006, 16
  %v2321 = vrot.slane %v2319, 4
  %v2322 = vor.u32 %v2321, %v2317
  %v2323 = vrot.slane %v2322, 4
  %v2325 = vshll.u32 %v2007, 16
  %v2327 = vrot.slane %v2325, 5
  %v2328 = vsel %vm117, %v2323, %v2327
  %v2330 = vshrl.u32 %v2008, 16
  %v2332 = vrot.slane %v2330, 4
  %v2333 = vshll.u32 %v2008, 16
  %v2335 = vrot.slane %v2333, 5
  %v2336 = vor.u32 %v2332, %v2335
  %v2337 = vrot.slane %v2336, 4
  %v2339 = vshll.u32 %v2009, 16
  %v2341 = vrot.slane %v2339, 5
  %v2342 = vsel %vm117, %v2337, %v2341
  %v2343 = vshrl.u32 %v2009, 16
  %v2345 = vrot.slane %v2343, 4
  %v2346 = vor.u32 %v2345, %v2341
  %v2347 = vrot.slane %v2346, 4
  %v2349 = vshll.u32 %v2010, 16
  %v2351 = vrot.slane %v2349, 5
  %v2352 = vsel %vm117, %v2347, %v2351
  %v2354 = vshrl.u32 %v2011, 16
  %v2356 = vrot.slane %v2354, 4
  %v2357 = vshll.u32 %v2011, 16
  %v2359 = vrot.slane %v2357, 5
  %v2360 = vor.u32 %v2356, %v2359
  %v2361 = vrot.slane %v2360, 4
  %v2363 = vshll.u32 %v2012, 16
  %v2365 = vrot.slane %v2363, 5
  %v2366 = vsel %vm117, %v2361, %v2365
  %v2367 = vshrl.u32 %v2012, 16
  %v2369 = vrot.slane %v2367, 4
  %v2370 = vor.u32 %v2369, %v2365
  %v2371 = vrot.slane %v2370, 4
  %v2373 = vshll.u32 %v2013, 16
  %v2375 = vrot.slane %v2373, 5
  %v2376 = vsel %vm117, %v2371, %v2375
  %v2378 = vshrl.u32 %v2014, 16
  %v2380 = vrot.slane %v2378, 4
  %v2381 = vshll.u32 %v2014, 16
  %v2383 = vrot.slane %v2381, 5
  %v2384 = vor.u32 %v2380, %v2383
  %v2385 = vrot.slane %v2384, 4
  %v2387 = vshll.u32 %v2015, 16
  %v2389 = vrot.slane %v2387, 5
  %v2390 = vsel %vm117, %v2385, %v2389
  %v2391 = vshrl.u32 %v2015, 16
  %v2393 = vrot.slane %v2391, 4
  %v2394 = vor.u32 %v2393, %v2389
  %v2395 = vrot.slane %v2394, 4
  %v2397 = vshll.u32 %v2016, 16
  %v2399 = vrot.slane %v2397, 5
  %v2400 = vsel %vm117, %v2395, %v2399
  %s2401 = scalar_lea.vmem %s1, 256
  %v2402 = vld [vmem:[%s2401] sm:$0xf]
  %v2403 = vld [vmem:[%s2401 + $0x4] sm:$0xf]
  %v2404 = vld [vmem:[%s2401 + $0x8] sm:$0xf]
  %v2405 = vld [vmem:[%s2401 + $0xc] sm:$0xf]
  %v2406 = vld [vmem:[%s2401 + $0x10] sm:$0xf]
  %v2407 = vld [vmem:[%s2401 + $0x14] sm:$0xf]
  %v2408 = vld [vmem:[%s2401 + $0x18] sm:$0xf]
  %v2409 = vld [vmem:[%s2401 + $0x1c] sm:$0xf]
  %v2410 = vld [vmem:[%s2401 + $0x20] sm:$0xf]
  %v2411 = vld [vmem:[%s2401 + $0x24] sm:$0xf]
  %v2412 = vld [vmem:[%s2401 + $0x28] sm:$0xf]
  %v2413 = vld [vmem:[%s2401 + $0x2c] sm:$0xf]
  %v2414 = vld [vmem:[%s2401 + $0x30] sm:$0xf]
  %v2415 = vld [vmem:[%s2401 + $0x34] sm:$0xf]
  %v2416 = vld [vmem:[%s2401 + $0x38] sm:$0xf]
  %v2417 = vld [vmem:[%s2401 + $0x3c] sm:$0xf]
  %v2418 = vunpack.c.l.b16 %v2030
  %v2419 = vunpack.c.l.b16 %v2040
  %v2420 = vunpack.c.l.b16 %v2054
  %v2421 = vunpack.c.l.b16 %v2064
  %v2422 = vunpack.c.l.b16 %v2078
  %v2423 = vunpack.c.l.b16 %v2088
  %v2424 = vunpack.c.l.b16 %v2102
  %v2425 = vunpack.c.l.b16 %v2112
  %v2426 = vunpack.c.l.b16 %v2126
  %v2427 = vunpack.c.l.b16 %v2136
  %v2428 = vunpack.c.l.b16 %v2150
  %v2429 = vunpack.c.l.b16 %v2160
  %v2430 = vunpack.c.l.b16 %v2174
  %v2431 = vunpack.c.l.b16 %v2184
  %v2432 = vunpack.c.l.b16 %v2198
  %v2433 = vunpack.c.l.b16 %v2208
  %v2434 = vunpack.c.l.b16 %v2222
  %v2435 = vunpack.c.l.b16 %v2232
  %v2436 = vunpack.c.l.b16 %v2246
  %v2437 = vunpack.c.l.b16 %v2256
  %v2438 = vunpack.c.l.b16 %v2270
  %v2439 = vunpack.c.l.b16 %v2280
  %v2440 = vunpack.c.l.b16 %v2294
  %v2441 = vunpack.c.l.b16 %v2304
  %v2442 = vunpack.c.l.b16 %v2318
  %v2443 = vunpack.c.l.b16 %v2328
  %v2444 = vunpack.c.l.b16 %v2342
  %v2445 = vunpack.c.l.b16 %v2352
  %v2446 = vunpack.c.l.b16 %v2366
  %v2447 = vunpack.c.l.b16 %v2376
  %v2448 = vunpack.c.l.b16 %v2390
  %v2449 = vunpack.c.l.b16 %v2400
  %v2450 = vpack.c.b16 %v2419, %v2418
  %v2451 = vpack.c.b16 %v2421, %v2420
  %v2452 = vpack.c.b16 %v2423, %v2422
  %v2453 = vpack.c.b16 %v2425, %v2424
  %v2454 = vpack.c.b16 %v2427, %v2426
  %v2455 = vpack.c.b16 %v2429, %v2428
  %v2456 = vpack.c.b16 %v2431, %v2430
  %v2457 = vpack.c.b16 %v2433, %v2432
  %v2458 = vpack.c.b16 %v2435, %v2434
  %v2459 = vpack.c.b16 %v2437, %v2436
  %v2460 = vpack.c.b16 %v2439, %v2438
  %v2461 = vpack.c.b16 %v2441, %v2440
  %v2462 = vpack.c.b16 %v2443, %v2442
  %v2463 = vpack.c.b16 %v2445, %v2444
  %v2464 = vpack.c.b16 %v2447, %v2446
  %v2465 = vpack.c.b16 %v2449, %v2448
  %v2498 = vunpack.c.l.b16 %v2402
  %v2499 = vunpack.c.l.b16 %v2403
  %v2500 = vunpack.c.l.b16 %v2404
  %v2501 = vunpack.c.l.b16 %v2405
  %v2502 = vunpack.c.l.b16 %v2406
  %v2503 = vunpack.c.l.b16 %v2407
  %v2504 = vunpack.c.l.b16 %v2408
  %v2505 = vunpack.c.l.b16 %v2409
  %v2506 = vunpack.c.l.b16 %v2410
  %v2507 = vunpack.c.l.b16 %v2411
  %v2508 = vunpack.c.l.b16 %v2412
  %v2509 = vunpack.c.l.b16 %v2413
  %v2510 = vunpack.c.l.b16 %v2414
  %v2511 = vunpack.c.l.b16 %v2415
  %v2512 = vunpack.c.l.b16 %v2416
  %v2513 = vunpack.c.l.b16 %v2417
  %v2514 = vpack.c.b16 %v2499, %v2498
  %v2515 = vpack.c.b16 %v2501, %v2500
  %v2516 = vpack.c.b16 %v2503, %v2502
  %v2517 = vpack.c.b16 %v2505, %v2504
  %v2518 = vpack.c.b16 %v2507, %v2506
  %v2519 = vpack.c.b16 %v2509, %v2508
  %v2520 = vpack.c.b16 %v2511, %v2510
  %v2521 = vpack.c.b16 %v2513, %v2512
  %2530 = vmatprep.subr.bf16.mxu0 0
  %2531 = vmatpush1.bf16.msra.mxu0 %v2514
  %2532 = vmatprep.subr.bf16.mxu0 0
  %2533 = vmatpush1.bf16.msra.mxu0 %v2515
  %2534 = vmatprep.subr.bf16.mxu0 0
  %2535 = vmatpush1.bf16.msra.mxu0 %v2516
  %2536 = vmatprep.subr.bf16.mxu0 0
  %2537 = vmatpush1.bf16.msra.mxu0 %v2517
  %2538 = vmatprep.subr.bf16.mxu0 0
  %2539 = vmatpush1.bf16.msra.mxu0 %v2518
  %2540 = vmatprep.subr.bf16.mxu0 0
  %2541 = vmatpush1.bf16.msra.mxu0 %v2519
  %2542 = vmatprep.subr.bf16.mxu0 0
  %2543 = vmatpush1.bf16.msra.mxu0 %v2520
  %2544 = vmatprep.subr.bf16.mxu0 0
  %2545 = vmatpush1.bf16.msra.mxu0 %v2521
  %2546 = vmatprep.subr.bf16.mxu0 0
  %2547 = vmatpush1.bf16.msra.mxu0 0
  %2548 = vmatprep.subr.bf16.mxu0 0
  %2549 = vmatpush1.bf16.msra.mxu0 0
  %2550 = vmatprep.subr.bf16.mxu0 0
  %2551 = vmatpush1.bf16.msra.mxu0 0
  %2552 = vmatprep.subr.bf16.mxu0 0
  %2553 = vmatpush1.bf16.msra.mxu0 0
  %2554 = vmatprep.subr.bf16.mxu0 0
  %2555 = vmatpush1.bf16.msra.mxu0 0
  %2556 = vmatprep.subr.bf16.mxu0 0
  %2557 = vmatpush1.bf16.msra.mxu0 0
  %2558 = vmatprep.subr.bf16.mxu0 0
  %2559 = vmatpush1.bf16.msra.mxu0 0
  %2560 = vmatprep.subr.bf16.mxu0 0
  %2561 = vmatpush1.bf16.msra.mxu0 0
  %2562 = vmatprep.mubr.bf16.mxu0 0
  %2563 = vmatmul.mubr.bf16.gmra.mrb[0].mxu0 %v2450
  %v2564 = vpop.f32.mrb[0].mxu0
  %v2565 = vadd.f32 0.0, %v2564
  %v2566 = vpop.f32.mrb[0].mxu0
  %v2567 = vpop.f32.mrb[0].mxu0
  %v2568 = vadd.f32 0.0, %v2567
  %v2569 = vpop.f32.mrb[0].mxu0
  %2570 = vmatprep.mubr.bf16.mxu0 0
  %2571 = vmatmul.mubr.bf16.gmra.mrb[0].mxu0 %v2451
  %v2572 = vpop.f32.mrb[0].mxu0
  %v2573 = vadd.f32 0.0, %v2572
  %v2574 = vpop.f32.mrb[0].mxu0
  %v2575 = vpop.f32.mrb[0].mxu0
  %v2576 = vadd.f32 0.0, %v2575
  %v2577 = vpop.f32.mrb[0].mxu0
  %2578 = vmatprep.mubr.bf16.mxu0 0
  %2579 = vmatmul.mubr.bf16.gmra.mrb[0].mxu0 %v2452
  %v2580 = vpop.f32.mrb[0].mxu0
  %v2581 = vadd.f32 0.0, %v2580
  %v2582 = vpop.f32.mrb[0].mxu0
  %v2583 = vpop.f32.mrb[0].mxu0
  %v2584 = vadd.f32 0.0, %v2583
  %v2585 = vpop.f32.mrb[0].mxu0
  %2586 = vmatprep.mubr.bf16.mxu0 0
  %2587 = vmatmul.mubr.bf16.gmra.mrb[0].mxu0 %v2453
  %v2588 = vpop.f32.mrb[0].mxu0
  %v2589 = vadd.f32 0.0, %v2588
  %v2590 = vpop.f32.mrb[0].mxu0
  %v2591 = vpop.f32.mrb[0].mxu0
  %v2592 = vadd.f32 0.0, %v2591
  %v2593 = vpop.f32.mrb[0].mxu0
  %2594 = vmatprep.mubr.bf16.mxu0 0
  %2595 = vmatmul.mubr.bf16.gmra.mrb[0].mxu0 %v2454
  %v2596 = vpop.f32.mrb[0].mxu0
  %v2597 = vadd.f32 0.0, %v2596
  %v2598 = vpop.f32.mrb[0].mxu0
  %v2599 = vpop.f32.mrb[0].mxu0
  %v2600 = vadd.f32 0.0, %v2599
  %v2601 = vpop.f32.mrb[0].mxu0
  %2602 = vmatprep.mubr.bf16.mxu0 0
  %2603 = vmatmul.mubr.bf16.gmra.mrb[0].mxu0 %v2455
  %v2604 = vpop.f32.mrb[0].mxu0
  %v2605 = vadd.f32 0.0, %v2604
  %v2606 = vpop.f32.mrb[0].mxu0
  %v2607 = vpop.f32.mrb[0].mxu0
  %v2608 = vadd.f32 0.0, %v2607
  %v2609 = vpop.f32.mrb[0].mxu0
  %2610 = vmatprep.mubr.bf16.mxu0 0
  %2611 = vmatmul.mubr.bf16.gmra.mrb[0].mxu0 %v2456
  %v2612 = vpop.f32.mrb[0].mxu0
  %v2613 = vadd.f32 0.0, %v2612
  %v2614 = vpop.f32.mrb[0].mxu0
  %v2615 = vpop.f32.mrb[0].mxu0
  %v2616 = vadd.f32 0.0, %v2615
  %v2617 = vpop.f32.mrb[0].mxu0
  %2618 = vmatprep.mubr.bf16.mxu0 0
  %2619 = vmatmul.mubr.bf16.gmra.mrb[0].mxu0 %v2457
  %v2620 = vpop.f32.mrb[0].mxu0
  %v2621 = vadd.f32 0.0, %v2620
  %v2622 = vpop.f32.mrb[0].mxu0
  %v2623 = vpop.f32.mrb[0].mxu0
  %v2624 = vadd.f32 0.0, %v2623
  %v2625 = vpop.f32.mrb[0].mxu0
  %2626 = vmatprep.mubr.bf16.mxu0 0
  %2627 = vmatmul.mubr.bf16.gmra.mrb[0].mxu0 %v2458
  %v2628 = vpop.f32.mrb[0].mxu0
  %v2629 = vadd.f32 0.0, %v2628
  %v2630 = vpop.f32.mrb[0].mxu0
  %v2631 = vpop.f32.mrb[0].mxu0
  %v2632 = vadd.f32 0.0, %v2631
  %v2633 = vpop.f32.mrb[0].mxu0
  %2634 = vmatprep.mubr.bf16.mxu0 0
  %2635 = vmatmul.mubr.bf16.gmra.mrb[0].mxu0 %v2459
  %v2636 = vpop.f32.mrb[0].mxu0
  %v2637 = vadd.f32 0.0, %v2636
  %v2638 = vpop.f32.mrb[0].mxu0
  %v2639 = vpop.f32.mrb[0].mxu0
  %v2640 = vadd.f32 0.0, %v2639
  %v2641 = vpop.f32.mrb[0].mxu0
  %2642 = vmatprep.mubr.bf16.mxu0 0
  %2643 = vmatmul.mubr.bf16.gmra.mrb[0].mxu0 %v2460
  %v2644 = vpop.f32.mrb[0].mxu0
  %v2645 = vadd.f32 0.0, %v2644
  %v2646 = vpop.f32.mrb[0].mxu0
  %v2647 = vpop.f32.mrb[0].mxu0
  %v2648 = vadd.f32 0.0, %v2647
  %v2649 = vpop.f32.mrb[0].mxu0
  %2650 = vmatprep.mubr.bf16.mxu0 0
  %2651 = vmatmul.mubr.bf16.gmra.mrb[0].mxu0 %v2461
  %v2652 = vpop.f32.mrb[0].mxu0
  %v2653 = vadd.f32 0.0, %v2652
  %v2654 = vpop.f32.mrb[0].mxu0
  %v2655 = vpop.f32.mrb[0].mxu0
  %v2656 = vadd.f32 0.0, %v2655
  %v2657 = vpop.f32.mrb[0].mxu0
  %2658 = vmatprep.mubr.bf16.mxu0 0
  %2659 = vmatmul.mubr.bf16.gmra.mrb[0].mxu0 %v2462
  %v2660 = vpop.f32.mrb[0].mxu0
  %v2661 = vadd.f32 0.0, %v2660
  %v2662 = vpop.f32.mrb[0].mxu0
  %v2663 = vpop.f32.mrb[0].mxu0
  %v2664 = vadd.f32 0.0, %v2663
  %v2665 = vpop.f32.mrb[0].mxu0
  %2666 = vmatprep.mubr.bf16.mxu0 0
  %2667 = vmatmul.mubr.bf16.gmra.mrb[0].mxu0 %v2463
  %v2668 = vpop.f32.mrb[0].mxu0
  %v2669 = vadd.f32 0.0, %v2668
  %v2670 = vpop.f32.mrb[0].mxu0
  %v2671 = vpop.f32.mrb[0].mxu0
  %v2672 = vadd.f32 0.0, %v2671
  %v2673 = vpop.f32.mrb[0].mxu0
  %2674 = vmatprep.mubr.bf16.mxu0 0
  %2675 = vmatmul.mubr.bf16.gmra.mrb[0].mxu0 %v2464
  %v2676 = vpop.f32.mrb[0].mxu0
  %v2677 = vadd.f32 0.0, %v2676
  %v2678 = vpop.f32.mrb[0].mxu0
  %v2679 = vpop.f32.mrb[0].mxu0
  %v2680 = vadd.f32 0.0, %v2679
  %v2681 = vpop.f32.mrb[0].mxu0
  %2682 = vmatprep.mubr.bf16.mxu0 0
  %2683 = vmatmul.mubr.bf16.gmra.mrb[0].mxu0 %v2465
  %v2684 = vpop.f32.mrb[0].mxu0
  %v2685 = vadd.f32 0.0, %v2684
  %v2686 = vpop.f32.mrb[0].mxu0
  %v2687 = vpop.f32.mrb[0].mxu0
  %v2688 = vadd.f32 0.0, %v2687
  %v2689 = vpop.f32.mrb[0].mxu0
  %2690 = vdwg.mxu0
  %v2691 = vadd.f32 %v1937, %v2565
  %v2692 = vadd.f32 %v1938, %v2568
  %v2693 = vadd.f32 %v1939, %v2573
  %v2694 = vadd.f32 %v1940, %v2576
  %v2695 = vadd.f32 %v1941, %v2581
  %v2696 = vadd.f32 %v1942, %v2584
  %v2697 = vadd.f32 %v1943, %v2589
  %v2698 = vadd.f32 %v1944, %v2592
  %v2699 = vadd.f32 %v1945, %v2597
  %v2700 = vadd.f32 %v1946, %v2600
  %v2701 = vadd.f32 %v1947, %v2605
  %v2702 = vadd.f32 %v1948, %v2608
  %v2703 = vadd.f32 %v1949, %v2613
  %v2704 = vadd.f32 %v1950, %v2616
  %v2705 = vadd.f32 %v1951, %v2621
  %v2706 = vadd.f32 %v1952, %v2624
  %v2707 = vadd.f32 %v1953, %v2629
  %v2708 = vadd.f32 %v1954, %v2632
  %v2709 = vadd.f32 %v1955, %v2637
  %v2710 = vadd.f32 %v1956, %v2640
  %v2711 = vadd.f32 %v1957, %v2645
  %v2712 = vadd.f32 %v1958, %v2648
  %v2713 = vadd.f32 %v1959, %v2653
  %v2714 = vadd.f32 %v1960, %v2656
  %v2715 = vadd.f32 %v1961, %v2661
  %v2716 = vadd.f32 %v1962, %v2664
  %v2717 = vadd.f32 %v1963, %v2669
  %v2718 = vadd.f32 %v1964, %v2672
  %v2719 = vadd.f32 %v1965, %v2677
  %v2720 = vadd.f32 %v1966, %v2680
  %v2721 = vadd.f32 %v1967, %v2685
  %v2722 = vadd.f32 %v1968, %v2688
  %v2723 = vld [vmem:[%s1582] sm:$0xe]
  %v2724 = vld [vmem:[%s1582 + $0xc] sm:$0xe]
  %v2725 = vld [vmem:[%s1582 + $0x18] sm:$0xe]
  %v2726 = vld [vmem:[%s1582 + $0x24] sm:$0xe]
  %v2727 = vld [vmem:[%s1582 + $0x30] sm:$0xe]
  %v2728 = vld [vmem:[%s1582 + $0x3c] sm:$0xe]
  %v2729 = vld [vmem:[%s1582 + $0x48] sm:$0xe]
  %v2730 = vld [vmem:[%s1582 + $0x54] sm:$0xe]
  %v2731 = vld [vmem:[%s1582 + $0x78] sm:$0xe]
  %v2732 = vld [vmem:[%s1582 + $0x84] sm:$0xe]
  %v2733 = vld [vmem:[%s1582 + $0x90] sm:$0xe]
  %v2734 = vld [vmem:[%s1582 + $0x9c] sm:$0xe]
  %v2735 = vld [vmem:[%s1582 + $0xa8] sm:$0xe]
  %v2736 = vld [vmem:[%s1582 + $0xb4] sm:$0xe]
  %v2737 = vld [vmem:[%s1582 + $0xc0] sm:$0xe]
  %v2738 = vld [vmem:[%s1582 + $0xcc] sm:$0xe]
  %v2787 = vrot.slane %v2723, 5
  %v2788 = vrot.slane %v2787, 4
  %v2789 = vrot.slane %v1970, 5
  %v2790 = vsel %vm1147, %v2788, %v2789
  %v2791 = vrot.slane %v2789, 4
  %v2792 = vrot.slane %v1971, 5
  %v2793 = vsel %vm1147, %v2791, %v2792
  %v2794 = vrot.slane %v2724, 5
  %v2795 = vrot.slane %v2794, 4
  %v2796 = vrot.slane %v1973, 5
  %v2797 = vsel %vm1147, %v2795, %v2796
  %v2798 = vrot.slane %v2796, 4
  %v2799 = vrot.slane %v1974, 5
  %v2800 = vsel %vm1147, %v2798, %v2799
  %v2801 = vrot.slane %v2725, 5
  %v2802 = vrot.slane %v2801, 4
  %v2803 = vrot.slane %v1976, 5
  %v2804 = vsel %vm1147, %v2802, %v2803
  %v2805 = vrot.slane %v2803, 4
  %v2806 = vrot.slane %v1977, 5
  %v2807 = vsel %vm1147, %v2805, %v2806
  %v2808 = vrot.slane %v2726, 5
  %v2809 = vrot.slane %v2808, 4
  %v2810 = vrot.slane %v1979, 5
  %v2811 = vsel %vm1147, %v2809, %v2810
  %v2812 = vrot.slane %v2810, 4
  %v2813 = vrot.slane %v1980, 5
  %v2814 = vsel %vm1147, %v2812, %v2813
  %v2815 = vrot.slane %v2727, 5
  %v2816 = vrot.slane %v2815, 4
  %v2817 = vrot.slane %v1982, 5
  %v2818 = vsel %vm1147, %v2816, %v2817
  %v2819 = vrot.slane %v2817, 4
  %v2820 = vrot.slane %v1983, 5
  %v2821 = vsel %vm1147, %v2819, %v2820
  %v2822 = vrot.slane %v2728, 5
  %v2823 = vrot.slane %v2822, 4
  %v2824 = vrot.slane %v1985, 5
  %v2825 = vsel %vm1147, %v2823, %v2824
  %v2826 = vrot.slane %v2824, 4
  %v2827 = vrot.slane %v1986, 5
  %v2828 = vsel %vm1147, %v2826, %v2827
  %v2829 = vrot.slane %v2729, 5
  %v2830 = vrot.slane %v2829, 4
  %v2831 = vrot.slane %v1988, 5
  %v2832 = vsel %vm1147, %v2830, %v2831
  %v2833 = vrot.slane %v2831, 4
  %v2834 = vrot.slane %v1989, 5
  %v2835 = vsel %vm1147, %v2833, %v2834
  %v2836 = vrot.slane %v2730, 5
  %v2837 = vrot.slane %v2836, 4
  %v2838 = vrot.slane %v1991, 5
  %v2839 = vsel %vm1147, %v2837, %v2838
  %v2840 = vrot.slane %v2838, 4
  %v2841 = vrot.slane %v1992, 5
  %v2842 = vsel %vm1147, %v2840, %v2841
  %v2843 = vrot.slane %v2731, 5
  %v2844 = vrot.slane %v2843, 4
  %v2845 = vrot.slane %v1994, 5
  %v2846 = vsel %vm1147, %v2844, %v2845
  %v2847 = vrot.slane %v2845, 4
  %v2848 = vrot.slane %v1995, 5
  %v2849 = vsel %vm1147, %v2847, %v2848
  %v2850 = vrot.slane %v2732, 5
  %v2851 = vrot.slane %v2850, 4
  %v2852 = vrot.slane %v1997, 5
  %v2853 = vsel %vm1147, %v2851, %v2852
  %v2854 = vrot.slane %v2852, 4
  %v2855 = vrot.slane %v1998, 5
  %v2856 = vsel %vm1147, %v2854, %v2855
  %v2857 = vrot.slane %v2733, 5
  %v2858 = vrot.slane %v2857, 4
  %v2859 = vrot.slane %v2000, 5
  %v2860 = vsel %vm1147, %v2858, %v2859
  %v2861 = vrot.slane %v2859, 4
  %v2862 = vrot.slane %v2001, 5
  %v2863 = vsel %vm1147, %v2861, %v2862
  %v2864 = vrot.slane %v2734, 5
  %v2865 = vrot.slane %v2864, 4
  %v2866 = vrot.slane %v2003, 5
  %v2867 = vsel %vm1147, %v2865, %v2866
  %v2868 = vrot.slane %v2866, 4
  %v2869 = vrot.slane %v2004, 5
  %v2870 = vsel %vm1147, %v2868, %v2869
  %v2871 = vrot.slane %v2735, 5
  %v2872 = vrot.slane %v2871, 4
  %v2873 = vrot.slane %v2006, 5
  %v2874 = vsel %vm1147, %v2872, %v2873
  %v2875 = vrot.slane %v2873, 4
  %v2876 = vrot.slane %v2007, 5
  %v2877 = vsel %vm1147, %v2875, %v2876
  %v2878 = vrot.slane %v2736, 5
  %v2879 = vrot.slane %v2878, 4
  %v2880 = vrot.slane %v2009, 5
  %v2881 = vsel %vm1147, %v2879, %v2880
  %v2882 = vrot.slane %v2880, 4
  %v2883 = vrot.slane %v2010, 5
  %v2884 = vsel %vm1147, %v2882, %v2883
  %v2885 = vrot.slane %v2737, 5
  %v2886 = vrot.slane %v2885, 4
  %v2887 = vrot.slane %v2012, 5
  %v2888 = vsel %vm1147, %v2886, %v2887
  %v2889 = vrot.slane %v2887, 4
  %v2890 = vrot.slane %v2013, 5
  %v2891 = vsel %vm1147, %v2889, %v2890
  %v2892 = vrot.slane %v2738, 5
  %v2893 = vrot.slane %v2892, 4
  %v2894 = vrot.slane %v2015, 5
  %v2895 = vsel %vm1147, %v2893, %v2894
  %v2896 = vrot.slane %v2894, 4
  %v2897 = vrot.slane %v2016, 5
  %v2898 = vsel %vm1147, %v2896, %v2897
  %s2899 = scalar_lea.vmem %s1, 320
  %v2900 = vld [vmem:[%s2899] sm:$0xf]
  %v2901 = vld [vmem:[%s2899 + $0x4] sm:$0xf]
  %v2902 = vld [vmem:[%s2899 + $0x8] sm:$0xf]
  %v2903 = vld [vmem:[%s2899 + $0xc] sm:$0xf]
  %v2904 = vld [vmem:[%s2899 + $0x10] sm:$0xf]
  %v2905 = vld [vmem:[%s2899 + $0x14] sm:$0xf]
  %v2906 = vld [vmem:[%s2899 + $0x18] sm:$0xf]
  %v2907 = vld [vmem:[%s2899 + $0x1c] sm:$0xf]
  %v2908 = vld [vmem:[%s2899 + $0x20] sm:$0xf]
  %v2909 = vld [vmem:[%s2899 + $0x24] sm:$0xf]
  %v2910 = vld [vmem:[%s2899 + $0x28] sm:$0xf]
  %v2911 = vld [vmem:[%s2899 + $0x2c] sm:$0xf]
  %v2912 = vld [vmem:[%s2899 + $0x30] sm:$0xf]
  %v2913 = vld [vmem:[%s2899 + $0x34] sm:$0xf]
  %v2914 = vld [vmem:[%s2899 + $0x38] sm:$0xf]
  %v2915 = vld [vmem:[%s2899 + $0x3c] sm:$0xf]
  %v2916 = vunpack.c.l.b16 %v2790
  %v2917 = vunpack.c.l.b16 %v2793
  %v2918 = vunpack.c.l.b16 %v2797
  %v2919 = vunpack.c.l.b16 %v2800
  %v2920 = vunpack.c.l.b16 %v2804
  %v2921 = vunpack.c.l.b16 %v2807
  %v2922 = vunpack.c.l.b16 %v2811
  %v2923 = vunpack.c.l.b16 %v2814
  %v2924 = vunpack.c.l.b16 %v2818
  %v2925 = vunpack.c.l.b16 %v2821
  %v2926 = vunpack.c.l.b16 %v2825
  %v2927 = vunpack.c.l.b16 %v2828
  %v2928 = vunpack.c.l.b16 %v2832
  %v2929 = vunpack.c.l.b16 %v2835
  %v2930 = vunpack.c.l.b16 %v2839
  %v2931 = vunpack.c.l.b16 %v2842
  %v2932 = vunpack.c.l.b16 %v2846
  %v2933 = vunpack.c.l.b16 %v2849
  %v2934 = vunpack.c.l.b16 %v2853
  %v2935 = vunpack.c.l.b16 %v2856
  %v2936 = vunpack.c.l.b16 %v2860
  %v2937 = vunpack.c.l.b16 %v2863
  %v2938 = vunpack.c.l.b16 %v2867
  %v2939 = vunpack.c.l.b16 %v2870
  %v2940 = vunpack.c.l.b16 %v2874
  %v2941 = vunpack.c.l.b16 %v2877
  %v2942 = vunpack.c.l.b16 %v2881
  %v2943 = vunpack.c.l.b16 %v2884
  %v2944 = vunpack.c.l.b16 %v2888
  %v2945 = vunpack.c.l.b16 %v2891
  %v2946 = vunpack.c.l.b16 %v2895
  %v2947 = vunpack.c.l.b16 %v2898
  %v2948 = vpack.c.b16 %v2917, %v2916
  %v2949 = vpack.c.b16 %v2919, %v2918
  %v2950 = vpack.c.b16 %v2921, %v2920
  %v2951 = vpack.c.b16 %v2923, %v2922
  %v2952 = vpack.c.b16 %v2925, %v2924
  %v2953 = vpack.c.b16 %v2927, %v2926
  %v2954 = vpack.c.b16 %v2929, %v2928
  %v2955 = vpack.c.b16 %v2931, %v2930
  %v2956 = vpack.c.b16 %v2933, %v2932
  %v2957 = vpack.c.b16 %v2935, %v2934
  %v2958 = vpack.c.b16 %v2937, %v2936
  %v2959 = vpack.c.b16 %v2939, %v2938
  %v2960 = vpack.c.b16 %v2941, %v2940
  %v2961 = vpack.c.b16 %v2943, %v2942
  %v2962 = vpack.c.b16 %v2945, %v2944
  %v2963 = vpack.c.b16 %v2947, %v2946
  %v2996 = vunpack.c.l.b16 %v2900
  %v2997 = vunpack.c.l.b16 %v2901
  %v2998 = vunpack.c.l.b16 %v2902
  %v2999 = vunpack.c.l.b16 %v2903
  %v3000 = vunpack.c.l.b16 %v2904
  %v3001 = vunpack.c.l.b16 %v2905
  %v3002 = vunpack.c.l.b16 %v2906
  %v3003 = vunpack.c.l.b16 %v2907
  %v3004 = vunpack.c.l.b16 %v2908
  %v3005 = vunpack.c.l.b16 %v2909
  %v3006 = vunpack.c.l.b16 %v2910
  %v3007 = vunpack.c.l.b16 %v2911
  %v3008 = vunpack.c.l.b16 %v2912
  %v3009 = vunpack.c.l.b16 %v2913
  %v3010 = vunpack.c.l.b16 %v2914
  %v3011 = vunpack.c.l.b16 %v2915
  %v3012 = vpack.c.b16 %v2997, %v2996
  %v3013 = vpack.c.b16 %v2999, %v2998
  %v3014 = vpack.c.b16 %v3001, %v3000
  %v3015 = vpack.c.b16 %v3003, %v3002
  %v3016 = vpack.c.b16 %v3005, %v3004
  %v3017 = vpack.c.b16 %v3007, %v3006
  %v3018 = vpack.c.b16 %v3009, %v3008
  %v3019 = vpack.c.b16 %v3011, %v3010
  %3028 = vmatprep.subr.bf16.mxu0 0
  %3029 = vmatpush1.bf16.msra.mxu0 %v3012
  %3030 = vmatprep.subr.bf16.mxu0 0
  %3031 = vmatpush1.bf16.msra.mxu0 %v3013
  %3032 = vmatprep.subr.bf16.mxu0 0
  %3033 = vmatpush1.bf16.msra.mxu0 %v3014
  %3034 = vmatprep.subr.bf16.mxu0 0
  %3035 = vmatpush1.bf16.msra.mxu0 %v3015
  %3036 = vmatprep.subr.bf16.mxu0 0
  %3037 = vmatpush1.bf16.msra.mxu0 %v3016
  %3038 = vmatprep.subr.bf16.mxu0 0
  %3039 = vmatpush1.bf16.msra.mxu0 %v3017
  %3040 = vmatprep.subr.bf16.mxu0 0
  %3041 = vmatpush1.bf16.msra.mxu0 %v3018
  %3042 = vmatprep.subr.bf16.mxu0 0
  %3043 = vmatpush1.bf16.msra.mxu0 %v3019
  %3044 = vmatprep.subr.bf16.mxu0 0
  %3045 = vmatpush1.bf16.msra.mxu0 0
  %3046 = vmatprep.subr.bf16.mxu0 0
  %3047 = vmatpush1.bf16.msra.mxu0 0
  %3048 = vmatprep.subr.bf16.mxu0 0
  %3049 = vmatpush1.bf16.msra.mxu0 0
  %3050 = vmatprep.subr.bf16.mxu0 0
  %3051 = vmatpush1.bf16.msra.mxu0 0
  %3052 = vmatprep.subr.bf16.mxu0 0
  %3053 = vmatpush1.bf16.msra.mxu0 0
  %3054 = vmatprep.subr.bf16.mxu0 0
  %3055 = vmatpush1.bf16.msra.mxu0 0
  %3056 = vmatprep.subr.bf16.mxu0 0
  %3057 = vmatpush1.bf16.msra.mxu0 0
  %3058 = vmatprep.subr.bf16.mxu0 0
  %3059 = vmatpush1.bf16.msra.mxu0 0
  %3060 = vmatprep.mubr.bf16.mxu0 0
  %3061 = vmatmul.mubr.bf16.gmra.mrb[0].mxu0 %v2948
  %v3062 = vpop.f32.mrb[0].mxu0
  %v3063 = vadd.f32 0.0, %v3062
  %v3064 = vpop.f32.mrb[0].mxu0
  %v3065 = vpop.f32.mrb[0].mxu0
  %v3066 = vadd.f32 0.0, %v3065
  %v3067 = vpop.f32.mrb[0].mxu0
  %3068 = vmatprep.mubr.bf16.mxu0 0
  %3069 = vmatmul.mubr.bf16.gmra.mrb[0].mxu0 %v2949
  %v3070 = vpop.f32.mrb[0].mxu0
  %v3071 = vadd.f32 0.0, %v3070
  %v3072 = vpop.f32.mrb[0].mxu0
  %v3073 = vpop.f32.mrb[0].mxu0
  %v3074 = vadd.f32 0.0, %v3073
  %v3075 = vpop.f32.mrb[0].mxu0
  %3076 = vmatprep.mubr.bf16.mxu0 0
  %3077 = vmatmul.mubr.bf16.gmra.mrb[0].mxu0 %v2950
  %v3078 = vpop.f32.mrb[0].mxu0
  %v3079 = vadd.f32 0.0, %v3078
  %v3080 = vpop.f32.mrb[0].mxu0
  %v3081 = vpop.f32.mrb[0].mxu0
  %v3082 = vadd.f32 0.0, %v3081
  %v3083 = vpop.f32.mrb[0].mxu0
  %3084 = vmatprep.mubr.bf16.mxu0 0
  %3085 = vmatmul.mubr.bf16.gmra.mrb[0].mxu0 %v2951
  %v3086 = vpop.f32.mrb[0].mxu0
  %v3087 = vadd.f32 0.0, %v3086
  %v3088 = vpop.f32.mrb[0].mxu0
  %v3089 = vpop.f32.mrb[0].mxu0
  %v3090 = vadd.f32 0.0, %v3089
  %v3091 = vpop.f32.mrb[0].mxu0
  %3092 = vmatprep.mubr.bf16.mxu0 0
  %3093 = vmatmul.mubr.bf16.gmra.mrb[0].mxu0 %v2952
  %v3094 = vpop.f32.mrb[0].mxu0
  %v3095 = vadd.f32 0.0, %v3094
  %v3096 = vpop.f32.mrb[0].mxu0
  %v3097 = vpop.f32.mrb[0].mxu0
  %v3098 = vadd.f32 0.0, %v3097
  %v3099 = vpop.f32.mrb[0].mxu0
  %3100 = vmatprep.mubr.bf16.mxu0 0
  %3101 = vmatmul.mubr.bf16.gmra.mrb[0].mxu0 %v2953
  %v3102 = vpop.f32.mrb[0].mxu0
  %v3103 = vadd.f32 0.0, %v3102
  %v3104 = vpop.f32.mrb[0].mxu0
  %v3105 = vpop.f32.mrb[0].mxu0
  %v3106 = vadd.f32 0.0, %v3105
  %v3107 = vpop.f32.mrb[0].mxu0
  %3108 = vmatprep.mubr.bf16.mxu0 0
  %3109 = vmatmul.mubr.bf16.gmra.mrb[0].mxu0 %v2954
  %v3110 = vpop.f32.mrb[0].mxu0
  %v3111 = vadd.f32 0.0, %v3110
  %v3112 = vpop.f32.mrb[0].mxu0
  %v3113 = vpop.f32.mrb[0].mxu0
  %v3114 = vadd.f32 0.0, %v3113
  %v3115 = vpop.f32.mrb[0].mxu0
  %3116 = vmatprep.mubr.bf16.mxu0 0
  %3117 = vmatmul.mubr.bf16.gmra.mrb[0].mxu0 %v2955
  %v3118 = vpop.f32.mrb[0].mxu0
  %v3119 = vadd.f32 0.0, %v3118
  %v3120 = vpop.f32.mrb[0].mxu0
  %v3121 = vpop.f32.mrb[0].mxu0
  %v3122 = vadd.f32 0.0, %v3121
  %v3123 = vpop.f32.mrb[0].mxu0
  %3124 = vmatprep.mubr.bf16.mxu0 0
  %3125 = vmatmul.mubr.bf16.gmra.mrb[0].mxu0 %v2956
  %v3126 = vpop.f32.mrb[0].mxu0
  %v3127 = vadd.f32 0.0, %v3126
  %v3128 = vpop.f32.mrb[0].mxu0
  %v3129 = vpop.f32.mrb[0].mxu0
  %v3130 = vadd.f32 0.0, %v3129
  %v3131 = vpop.f32.mrb[0].mxu0
  %3132 = vmatprep.mubr.bf16.mxu0 0
  %3133 = vmatmul.mubr.bf16.gmra.mrb[0].mxu0 %v2957
  %v3134 = vpop.f32.mrb[0].mxu0
  %v3135 = vadd.f32 0.0, %v3134
  %v3136 = vpop.f32.mrb[0].mxu0
  %v3137 = vpop.f32.mrb[0].mxu0
  %v3138 = vadd.f32 0.0, %v3137
  %v3139 = vpop.f32.mrb[0].mxu0
  %3140 = vmatprep.mubr.bf16.mxu0 0
  %3141 = vmatmul.mubr.bf16.gmra.mrb[0].mxu0 %v2958
  %v3142 = vpop.f32.mrb[0].mxu0
  %v3143 = vadd.f32 0.0, %v3142
  %v3144 = vpop.f32.mrb[0].mxu0
  %v3145 = vpop.f32.mrb[0].mxu0
  %v3146 = vadd.f32 0.0, %v3145
  %v3147 = vpop.f32.mrb[0].mxu0
  %3148 = vmatprep.mubr.bf16.mxu0 0
  %3149 = vmatmul.mubr.bf16.gmra.mrb[0].mxu0 %v2959
  %v3150 = vpop.f32.mrb[0].mxu0
  %v3151 = vadd.f32 0.0, %v3150
  %v3152 = vpop.f32.mrb[0].mxu0
  %v3153 = vpop.f32.mrb[0].mxu0
  %v3154 = vadd.f32 0.0, %v3153
  %v3155 = vpop.f32.mrb[0].mxu0
  %3156 = vmatprep.mubr.bf16.mxu0 0
  %3157 = vmatmul.mubr.bf16.gmra.mrb[0].mxu0 %v2960
  %v3158 = vpop.f32.mrb[0].mxu0
  %v3159 = vadd.f32 0.0, %v3158
  %v3160 = vpop.f32.mrb[0].mxu0
  %v3161 = vpop.f32.mrb[0].mxu0
  %v3162 = vadd.f32 0.0, %v3161
  %v3163 = vpop.f32.mrb[0].mxu0
  %3164 = vmatprep.mubr.bf16.mxu0 0
  %3165 = vmatmul.mubr.bf16.gmra.mrb[0].mxu0 %v2961
  %v3166 = vpop.f32.mrb[0].mxu0
  %v3167 = vadd.f32 0.0, %v3166
  %v3168 = vpop.f32.mrb[0].mxu0
  %v3169 = vpop.f32.mrb[0].mxu0
  %v3170 = vadd.f32 0.0, %v3169
  %v3171 = vpop.f32.mrb[0].mxu0
  %3172 = vmatprep.mubr.bf16.mxu0 0
  %3173 = vmatmul.mubr.bf16.gmra.mrb[0].mxu0 %v2962
  %v3174 = vpop.f32.mrb[0].mxu0
  %v3175 = vadd.f32 0.0, %v3174
  %v3176 = vpop.f32.mrb[0].mxu0
  %v3177 = vpop.f32.mrb[0].mxu0
  %v3178 = vadd.f32 0.0, %v3177
  %v3179 = vpop.f32.mrb[0].mxu0
  %3180 = vmatprep.mubr.bf16.mxu0 0
  %3181 = vmatmul.mubr.bf16.gmra.mrb[0].mxu0 %v2963
  %v3182 = vpop.f32.mrb[0].mxu0
  %v3183 = vadd.f32 0.0, %v3182
  %v3184 = vpop.f32.mrb[0].mxu0
  %v3185 = vpop.f32.mrb[0].mxu0
  %v3186 = vadd.f32 0.0, %v3185
  %v3187 = vpop.f32.mrb[0].mxu0
  %3188 = vdwg.mxu0
  %v3189 = vadd.f32 %v2691, %v3063
  %v3190 = vadd.f32 %v2692, %v3066
  %v3191 = vadd.f32 %v2693, %v3071
  %v3192 = vadd.f32 %v2694, %v3074
  %v3193 = vadd.f32 %v2695, %v3079
  %v3194 = vadd.f32 %v2696, %v3082
  %v3195 = vadd.f32 %v2697, %v3087
  %v3196 = vadd.f32 %v2698, %v3090
  %v3197 = vadd.f32 %v2699, %v3095
  %v3198 = vadd.f32 %v2700, %v3098
  %v3199 = vadd.f32 %v2701, %v3103
  %v3200 = vadd.f32 %v2702, %v3106
  %v3201 = vadd.f32 %v2703, %v3111
  %v3202 = vadd.f32 %v2704, %v3114
  %v3203 = vadd.f32 %v2705, %v3119
  %v3204 = vadd.f32 %v2706, %v3122
  %v3205 = vadd.f32 %v2707, %v3127
  %v3206 = vadd.f32 %v2708, %v3130
  %v3207 = vadd.f32 %v2709, %v3135
  %v3208 = vadd.f32 %v2710, %v3138
  %v3209 = vadd.f32 %v2711, %v3143
  %v3210 = vadd.f32 %v2712, %v3146
  %v3211 = vadd.f32 %v2713, %v3151
  %v3212 = vadd.f32 %v2714, %v3154
  %v3213 = vadd.f32 %v2715, %v3159
  %v3214 = vadd.f32 %v2716, %v3162
  %v3215 = vadd.f32 %v2717, %v3167
  %v3216 = vadd.f32 %v2718, %v3170
  %v3217 = vadd.f32 %v2719, %v3175
  %v3218 = vadd.f32 %v2720, %v3178
  %v3219 = vadd.f32 %v2721, %v3183
  %v3220 = vadd.f32 %v2722, %v3186
  %s3221 = scalar_lea.vmem %s0, 24
  %v3222 = vld [vmem:[%s3221] sm:$0xf]
  %v3223 = vld [vmem:[%s3221 + $0x4] sm:$0xf]
  %v3224 = vld [vmem:[%s3221 + $0xc] sm:$0xf]
  %v3225 = vld [vmem:[%s3221 + $0x10] sm:$0xf]
  %v3226 = vld [vmem:[%s3221 + $0x18] sm:$0xf]
  %v3227 = vld [vmem:[%s3221 + $0x1c] sm:$0xf]
  %v3228 = vld [vmem:[%s3221 + $0x24] sm:$0xf]
  %v3229 = vld [vmem:[%s3221 + $0x28] sm:$0xf]
  %v3230 = vld [vmem:[%s3221 + $0x30] sm:$0xf]
  %v3231 = vld [vmem:[%s3221 + $0x34] sm:$0xf]
  %v3232 = vld [vmem:[%s3221 + $0x3c] sm:$0xf]
  %v3233 = vld [vmem:[%s3221 + $0x40] sm:$0xf]
  %v3234 = vld [vmem:[%s3221 + $0x48] sm:$0xf]
  %v3235 = vld [vmem:[%s3221 + $0x4c] sm:$0xf]
  %v3236 = vld [vmem:[%s3221 + $0x54] sm:$0xf]
  %v3237 = vld [vmem:[%s3221 + $0x58] sm:$0xf]
  %v3238 = vld [vmem:[%s3221 + $0x78] sm:$0xf]
  %v3239 = vld [vmem:[%s3221 + $0x7c] sm:$0xf]
  %v3240 = vld [vmem:[%s3221 + $0x84] sm:$0xf]
  %v3241 = vld [vmem:[%s3221 + $0x88] sm:$0xf]
  %v3242 = vld [vmem:[%s3221 + $0x90] sm:$0xf]
  %v3243 = vld [vmem:[%s3221 + $0x94] sm:$0xf]
  %v3244 = vld [vmem:[%s3221 + $0x9c] sm:$0xf]
  %v3245 = vld [vmem:[%s3221 + $0xa0] sm:$0xf]
  %v3246 = vld [vmem:[%s3221 + $0xa8] sm:$0xf]
  %v3247 = vld [vmem:[%s3221 + $0xac] sm:$0xf]
  %v3248 = vld [vmem:[%s3221 + $0xb4] sm:$0xf]
  %v3249 = vld [vmem:[%s3221 + $0xb8] sm:$0xf]
  %v3250 = vld [vmem:[%s3221 + $0xc0] sm:$0xf]
  %v3251 = vld [vmem:[%s3221 + $0xc4] sm:$0xf]
  %v3252 = vld [vmem:[%s3221 + $0xcc] sm:$0xf]
  %v3253 = vld [vmem:[%s3221 + $0xd0] sm:$0xf]
  %s3254 = scalar_lea.vmem %s1, 384
  %v3255 = vld [vmem:[%s3254] sm:$0xf]
  %v3256 = vld [vmem:[%s3254 + $0x4] sm:$0xf]
  %v3257 = vld [vmem:[%s3254 + $0x8] sm:$0xf]
  %v3258 = vld [vmem:[%s3254 + $0xc] sm:$0xf]
  %v3259 = vld [vmem:[%s3254 + $0x10] sm:$0xf]
  %v3260 = vld [vmem:[%s3254 + $0x14] sm:$0xf]
  %v3261 = vld [vmem:[%s3254 + $0x18] sm:$0xf]
  %v3262 = vld [vmem:[%s3254 + $0x1c] sm:$0xf]
  %v3263 = vld [vmem:[%s3254 + $0x20] sm:$0xf]
  %v3264 = vld [vmem:[%s3254 + $0x24] sm:$0xf]
  %v3265 = vld [vmem:[%s3254 + $0x28] sm:$0xf]
  %v3266 = vld [vmem:[%s3254 + $0x2c] sm:$0xf]
  %v3267 = vld [vmem:[%s3254 + $0x30] sm:$0xf]
  %v3268 = vld [vmem:[%s3254 + $0x34] sm:$0xf]
  %v3269 = vld [vmem:[%s3254 + $0x38] sm:$0xf]
  %v3270 = vld [vmem:[%s3254 + $0x3c] sm:$0xf]
  %v3303 = vunpack.c.l.b16 %v3222
  %v3304 = vunpack.c.l.b16 %v3223
  %v3305 = vunpack.c.l.b16 %v3224
  %v3306 = vunpack.c.l.b16 %v3225
  %v3307 = vunpack.c.l.b16 %v3226
  %v3308 = vunpack.c.l.b16 %v3227
  %v3309 = vunpack.c.l.b16 %v3228
  %v3310 = vunpack.c.l.b16 %v3229
  %v3311 = vunpack.c.l.b16 %v3230
  %v3312 = vunpack.c.l.b16 %v3231
  %v3313 = vunpack.c.l.b16 %v3232
  %v3314 = vunpack.c.l.b16 %v3233
  %v3315 = vunpack.c.l.b16 %v3234
  %v3316 = vunpack.c.l.b16 %v3235
  %v3317 = vunpack.c.l.b16 %v3236
  %v3318 = vunpack.c.l.b16 %v3237
  %v3319 = vunpack.c.l.b16 %v3238
  %v3320 = vunpack.c.l.b16 %v3239
  %v3321 = vunpack.c.l.b16 %v3240
  %v3322 = vunpack.c.l.b16 %v3241
  %v3323 = vunpack.c.l.b16 %v3242
  %v3324 = vunpack.c.l.b16 %v3243
  %v3325 = vunpack.c.l.b16 %v3244
  %v3326 = vunpack.c.l.b16 %v3245
  %v3327 = vunpack.c.l.b16 %v3246
  %v3328 = vunpack.c.l.b16 %v3247
  %v3329 = vunpack.c.l.b16 %v3248
  %v3330 = vunpack.c.l.b16 %v3249
  %v3331 = vunpack.c.l.b16 %v3250
  %v3332 = vunpack.c.l.b16 %v3251
  %v3333 = vunpack.c.l.b16 %v3252
  %v3334 = vunpack.c.l.b16 %v3253
  %v3335 = vpack.c.b16 %v3304, %v3303
  %v3336 = vpack.c.b16 %v3306, %v3305
  %v3337 = vpack.c.b16 %v3308, %v3307
  %v3338 = vpack.c.b16 %v3310, %v3309
  %v3339 = vpack.c.b16 %v3312, %v3311
  %v3340 = vpack.c.b16 %v3314, %v3313
  %v3341 = vpack.c.b16 %v3316, %v3315
  %v3342 = vpack.c.b16 %v3318, %v3317
  %v3343 = vpack.c.b16 %v3320, %v3319
  %v3344 = vpack.c.b16 %v3322, %v3321
  %v3345 = vpack.c.b16 %v3324, %v3323
  %v3346 = vpack.c.b16 %v3326, %v3325
  %v3347 = vpack.c.b16 %v3328, %v3327
  %v3348 = vpack.c.b16 %v3330, %v3329
  %v3349 = vpack.c.b16 %v3332, %v3331
  %v3350 = vpack.c.b16 %v3334, %v3333
  %v3383 = vunpack.c.l.b16 %v3255
  %v3384 = vunpack.c.l.b16 %v3256
  %v3385 = vunpack.c.l.b16 %v3257
  %v3386 = vunpack.c.l.b16 %v3258
  %v3387 = vunpack.c.l.b16 %v3259
  %v3388 = vunpack.c.l.b16 %v3260
  %v3389 = vunpack.c.l.b16 %v3261
  %v3390 = vunpack.c.l.b16 %v3262
  %v3391 = vunpack.c.l.b16 %v3263
  %v3392 = vunpack.c.l.b16 %v3264
  %v3393 = vunpack.c.l.b16 %v3265
  %v3394 = vunpack.c.l.b16 %v3266
  %v3395 = vunpack.c.l.b16 %v3267
  %v3396 = vunpack.c.l.b16 %v3268
  %v3397 = vunpack.c.l.b16 %v3269
  %v3398 = vunpack.c.l.b16 %v3270
  %v3399 = vpack.c.b16 %v3384, %v3383
  %v3400 = vpack.c.b16 %v3386, %v3385
  %v3401 = vpack.c.b16 %v3388, %v3387
  %v3402 = vpack.c.b16 %v3390, %v3389
  %v3403 = vpack.c.b16 %v3392, %v3391
  %v3404 = vpack.c.b16 %v3394, %v3393
  %v3405 = vpack.c.b16 %v3396, %v3395
  %v3406 = vpack.c.b16 %v3398, %v3397
  %3415 = vmatprep.subr.bf16.mxu0 0
  %3416 = vmatpush1.bf16.msra.mxu0 %v3399
  %3417 = vmatprep.subr.bf16.mxu0 0
  %3418 = vmatpush1.bf16.msra.mxu0 %v3400
  %3419 = vmatprep.subr.bf16.mxu0 0
  %3420 = vmatpush1.bf16.msra.mxu0 %v3401
  %3421 = vmatprep.subr.bf16.mxu0 0
  %3422 = vmatpush1.bf16.msra.mxu0 %v3402
  %3423 = vmatprep.subr.bf16.mxu0 0
  %3424 = vmatpush1.bf16.msra.mxu0 %v3403
  %3425 = vmatprep.subr.bf16.mxu0 0
  %3426 = vmatpush1.bf16.msra.mxu0 %v3404
  %3427 = vmatprep.subr.bf16.mxu0 0
  %3428 = vmatpush1.bf16.msra.mxu0 %v3405
  %3429 = vmatprep.subr.bf16.mxu0 0
  %3430 = vmatpush1.bf16.msra.mxu0 %v3406
  %3431 = vmatprep.subr.bf16.mxu0 0
  %3432 = vmatpush1.bf16.msra.mxu0 0
  %3433 = vmatprep.subr.bf16.mxu0 0
  %3434 = vmatpush1.bf16.msra.mxu0 0
  %3435 = vmatprep.subr.bf16.mxu0 0
  %3436 = vmatpush1.bf16.msra.mxu0 0
  %3437 = vmatprep.subr.bf16.mxu0 0
  %3438 = vmatpush1.bf16.msra.mxu0 0
  %3439 = vmatprep.subr.bf16.mxu0 0
  %3440 = vmatpush1.bf16.msra.mxu0 0
  %3441 = vmatprep.subr.bf16.mxu0 0
  %3442 = vmatpush1.bf16.msra.mxu0 0
  %3443 = vmatprep.subr.bf16.mxu0 0
  %3444 = vmatpush1.bf16.msra.mxu0 0
  %3445 = vmatprep.subr.bf16.mxu0 0
  %3446 = vmatpush1.bf16.msra.mxu0 0
  %3447 = vmatprep.mubr.bf16.mxu0 0
  %3448 = vmatmul.mubr.bf16.gmra.mrb[0].mxu0 %v3335
  %v3449 = vpop.f32.mrb[0].mxu0
  %v3450 = vadd.f32 0.0, %v3449
  %v3451 = vpop.f32.mrb[0].mxu0
  %v3452 = vpop.f32.mrb[0].mxu0
  %v3453 = vadd.f32 0.0, %v3452
  %v3454 = vpop.f32.mrb[0].mxu0
  %3455 = vmatprep.mubr.bf16.mxu0 0
  %3456 = vmatmul.mubr.bf16.gmra.mrb[0].mxu0 %v3336
  %v3457 = vpop.f32.mrb[0].mxu0
  %v3458 = vadd.f32 0.0, %v3457
  %v3459 = vpop.f32.mrb[0].mxu0
  %v3460 = vpop.f32.mrb[0].mxu0
  %v3461 = vadd.f32 0.0, %v3460
  %v3462 = vpop.f32.mrb[0].mxu0
  %3463 = vmatprep.mubr.bf16.mxu0 0
  %3464 = vmatmul.mubr.bf16.gmra.mrb[0].mxu0 %v3337
  %v3465 = vpop.f32.mrb[0].mxu0
  %v3466 = vadd.f32 0.0, %v3465
  %v3467 = vpop.f32.mrb[0].mxu0
  %v3468 = vpop.f32.mrb[0].mxu0
  %v3469 = vadd.f32 0.0, %v3468
  %v3470 = vpop.f32.mrb[0].mxu0
  %3471 = vmatprep.mubr.bf16.mxu0 0
  %3472 = vmatmul.mubr.bf16.gmra.mrb[0].mxu0 %v3338
  %v3473 = vpop.f32.mrb[0].mxu0
  %v3474 = vadd.f32 0.0, %v3473
  %v3475 = vpop.f32.mrb[0].mxu0
  %v3476 = vpop.f32.mrb[0].mxu0
  %v3477 = vadd.f32 0.0, %v3476
  %v3478 = vpop.f32.mrb[0].mxu0
  %3479 = vmatprep.mubr.bf16.mxu0 0
  %3480 = vmatmul.mubr.bf16.gmra.mrb[0].mxu0 %v3339
  %v3481 = vpop.f32.mrb[0].mxu0
  %v3482 = vadd.f32 0.0, %v3481
  %v3483 = vpop.f32.mrb[0].mxu0
  %v3484 = vpop.f32.mrb[0].mxu0
  %v3485 = vadd.f32 0.0, %v3484
  %v3486 = vpop.f32.mrb[0].mxu0
  %3487 = vmatprep.mubr.bf16.mxu0 0
  %3488 = vmatmul.mubr.bf16.gmra.mrb[0].mxu0 %v3340
  %v3489 = vpop.f32.mrb[0].mxu0
  %v3490 = vadd.f32 0.0, %v3489
  %v3491 = vpop.f32.mrb[0].mxu0
  %v3492 = vpop.f32.mrb[0].mxu0
  %v3493 = vadd.f32 0.0, %v3492
  %v3494 = vpop.f32.mrb[0].mxu0
  %3495 = vmatprep.mubr.bf16.mxu0 0
  %3496 = vmatmul.mubr.bf16.gmra.mrb[0].mxu0 %v3341
  %v3497 = vpop.f32.mrb[0].mxu0
  %v3498 = vadd.f32 0.0, %v3497
  %v3499 = vpop.f32.mrb[0].mxu0
  %v3500 = vpop.f32.mrb[0].mxu0
  %v3501 = vadd.f32 0.0, %v3500
  %v3502 = vpop.f32.mrb[0].mxu0
  %3503 = vmatprep.mubr.bf16.mxu0 0
  %3504 = vmatmul.mubr.bf16.gmra.mrb[0].mxu0 %v3342
  %v3505 = vpop.f32.mrb[0].mxu0
  %v3506 = vadd.f32 0.0, %v3505
  %v3507 = vpop.f32.mrb[0].mxu0
  %v3508 = vpop.f32.mrb[0].mxu0
  %v3509 = vadd.f32 0.0, %v3508
  %v3510 = vpop.f32.mrb[0].mxu0
  %3511 = vmatprep.mubr.bf16.mxu0 0
  %3512 = vmatmul.mubr.bf16.gmra.mrb[0].mxu0 %v3343
  %v3513 = vpop.f32.mrb[0].mxu0
  %v3514 = vadd.f32 0.0, %v3513
  %v3515 = vpop.f32.mrb[0].mxu0
  %v3516 = vpop.f32.mrb[0].mxu0
  %v3517 = vadd.f32 0.0, %v3516
  %v3518 = vpop.f32.mrb[0].mxu0
  %3519 = vmatprep.mubr.bf16.mxu0 0
  %3520 = vmatmul.mubr.bf16.gmra.mrb[0].mxu0 %v3344
  %v3521 = vpop.f32.mrb[0].mxu0
  %v3522 = vadd.f32 0.0, %v3521
  %v3523 = vpop.f32.mrb[0].mxu0
  %v3524 = vpop.f32.mrb[0].mxu0
  %v3525 = vadd.f32 0.0, %v3524
  %v3526 = vpop.f32.mrb[0].mxu0
  %3527 = vmatprep.mubr.bf16.mxu0 0
  %3528 = vmatmul.mubr.bf16.gmra.mrb[0].mxu0 %v3345
  %v3529 = vpop.f32.mrb[0].mxu0
  %v3530 = vadd.f32 0.0, %v3529
  %v3531 = vpop.f32.mrb[0].mxu0
  %v3532 = vpop.f32.mrb[0].mxu0
  %v3533 = vadd.f32 0.0, %v3532
  %v3534 = vpop.f32.mrb[0].mxu0
  %3535 = vmatprep.mubr.bf16.mxu0 0
  %3536 = vmatmul.mubr.bf16.gmra.mrb[0].mxu0 %v3346
  %v3537 = vpop.f32.mrb[0].mxu0
  %v3538 = vadd.f32 0.0, %v3537
  %v3539 = vpop.f32.mrb[0].mxu0
  %v3540 = vpop.f32.mrb[0].mxu0
  %v3541 = vadd.f32 0.0, %v3540
  %v3542 = vpop.f32.mrb[0].mxu0
  %3543 = vmatprep.mubr.bf16.mxu0 0
  %3544 = vmatmul.mubr.bf16.gmra.mrb[0].mxu0 %v3347
  %v3545 = vpop.f32.mrb[0].mxu0
  %v3546 = vadd.f32 0.0, %v3545
  %v3547 = vpop.f32.mrb[0].mxu0
  %v3548 = vpop.f32.mrb[0].mxu0
  %v3549 = vadd.f32 0.0, %v3548
  %v3550 = vpop.f32.mrb[0].mxu0
  %3551 = vmatprep.mubr.bf16.mxu0 0
  %3552 = vmatmul.mubr.bf16.gmra.mrb[0].mxu0 %v3348
  %v3553 = vpop.f32.mrb[0].mxu0
  %v3554 = vadd.f32 0.0, %v3553
  %v3555 = vpop.f32.mrb[0].mxu0
  %v3556 = vpop.f32.mrb[0].mxu0
  %v3557 = vadd.f32 0.0, %v3556
  %v3558 = vpop.f32.mrb[0].mxu0
  %3559 = vmatprep.mubr.bf16.mxu0 0
  %3560 = vmatmul.mubr.bf16.gmra.mrb[0].mxu0 %v3349
  %v3561 = vpop.f32.mrb[0].mxu0
  %v3562 = vadd.f32 0.0, %v3561
  %v3563 = vpop.f32.mrb[0].mxu0
  %v3564 = vpop.f32.mrb[0].mxu0
  %v3565 = vadd.f32 0.0, %v3564
  %v3566 = vpop.f32.mrb[0].mxu0
  %3567 = vmatprep.mubr.bf16.mxu0 0
  %3568 = vmatmul.mubr.bf16.gmra.mrb[0].mxu0 %v3350
  %v3569 = vpop.f32.mrb[0].mxu0
  %v3570 = vadd.f32 0.0, %v3569
  %v3571 = vpop.f32.mrb[0].mxu0
  %v3572 = vpop.f32.mrb[0].mxu0
  %v3573 = vadd.f32 0.0, %v3572
  %v3574 = vpop.f32.mrb[0].mxu0
  %3575 = vdwg.mxu0
  %v3576 = vadd.f32 %v3189, %v3450
  %v3577 = vadd.f32 %v3190, %v3453
  %v3578 = vadd.f32 %v3191, %v3458
  %v3579 = vadd.f32 %v3192, %v3461
  %v3580 = vadd.f32 %v3193, %v3466
  %v3581 = vadd.f32 %v3194, %v3469
  %v3582 = vadd.f32 %v3195, %v3474
  %v3583 = vadd.f32 %v3196, %v3477
  %v3584 = vadd.f32 %v3197, %v3482
  %v3585 = vadd.f32 %v3198, %v3485
  %v3586 = vadd.f32 %v3199, %v3490
  %v3587 = vadd.f32 %v3200, %v3493
  %v3588 = vadd.f32 %v3201, %v3498
  %v3589 = vadd.f32 %v3202, %v3501
  %v3590 = vadd.f32 %v3203, %v3506
  %v3591 = vadd.f32 %v3204, %v3509
  %v3592 = vadd.f32 %v3205, %v3514
  %v3593 = vadd.f32 %v3206, %v3517
  %v3594 = vadd.f32 %v3207, %v3522
  %v3595 = vadd.f32 %v3208, %v3525
  %v3596 = vadd.f32 %v3209, %v3530
  %v3597 = vadd.f32 %v3210, %v3533
  %v3598 = vadd.f32 %v3211, %v3538
  %v3599 = vadd.f32 %v3212, %v3541
  %v3600 = vadd.f32 %v3213, %v3546
  %v3601 = vadd.f32 %v3214, %v3549
  %v3602 = vadd.f32 %v3215, %v3554
  %v3603 = vadd.f32 %v3216, %v3557
  %v3604 = vadd.f32 %v3217, %v3562
  %v3605 = vadd.f32 %v3218, %v3565
  %v3606 = vadd.f32 %v3219, %v3570
  %v3607 = vadd.f32 %v3220, %v3573
  %v3608 = vld [vmem:[%s3221] sm:$0xf]
  %v3609 = vld [vmem:[%s3221 + $0x4] sm:$0xf]
  %v3610 = vld [vmem:[%s3221 + $0x8] sm:$0x1]
  %v3611 = vld [vmem:[%s3221 + $0xc] sm:$0xf]
  %v3612 = vld [vmem:[%s3221 + $0x10] sm:$0xf]
  %v3613 = vld [vmem:[%s3221 + $0x14] sm:$0x1]
  %v3614 = vld [vmem:[%s3221 + $0x18] sm:$0xf]
  %v3615 = vld [vmem:[%s3221 + $0x1c] sm:$0xf]
  %v3616 = vld [vmem:[%s3221 + $0x20] sm:$0x1]
  %v3617 = vld [vmem:[%s3221 + $0x24] sm:$0xf]
  %v3618 = vld [vmem:[%s3221 + $0x28] sm:$0xf]
  %v3619 = vld [vmem:[%s3221 + $0x2c] sm:$0x1]
  %v3620 = vld [vmem:[%s3221 + $0x30] sm:$0xf]
  %v3621 = vld [vmem:[%s3221 + $0x34] sm:$0xf]
  %v3622 = vld [vmem:[%s3221 + $0x38] sm:$0x1]
  %v3623 = vld [vmem:[%s3221 + $0x3c] sm:$0xf]
  %v3624 = vld [vmem:[%s3221 + $0x40] sm:$0xf]
  %v3625 = vld [vmem:[%s3221 + $0x44] sm:$0x1]
  %v3626 = vld [vmem:[%s3221 + $0x48] sm:$0xf]
  %v3627 = vld [vmem:[%s3221 + $0x4c] sm:$0xf]
  %v3628 = vld [vmem:[%s3221 + $0x50] sm:$0x1]
  %v3629 = vld [vmem:[%s3221 + $0x54] sm:$0xf]
  %v3630 = vld [vmem:[%s3221 + $0x58] sm:$0xf]
  %v3631 = vld [vmem:[%s3221 + $0x5c] sm:$0x1]
  %v3632 = vld [vmem:[%s3221 + $0x78] sm:$0xf]
  %v3633 = vld [vmem:[%s3221 + $0x7c] sm:$0xf]
  %v3634 = vld [vmem:[%s3221 + $0x80] sm:$0x1]
  %v3635 = vld [vmem:[%s3221 + $0x84] sm:$0xf]
  %v3636 = vld [vmem:[%s3221 + $0x88] sm:$0xf]
  %v3637 = vld [vmem:[%s3221 + $0x8c] sm:$0x1]
  %v3638 = vld [vmem:[%s3221 + $0x90] sm:$0xf]
  %v3639 = vld [vmem:[%s3221 + $0x94] sm:$0xf]
  %v3640 = vld [vmem:[%s3221 + $0x98] sm:$0x1]
  %v3641 = vld [vmem:[%s3221 + $0x9c] sm:$0xf]
  %v3642 = vld [vmem:[%s3221 + $0xa0] sm:$0xf]
  %v3643 = vld [vmem:[%s3221 + $0xa4] sm:$0x1]
  %v3644 = vld [vmem:[%s3221 + $0xa8] sm:$0xf]
  %v3645 = vld [vmem:[%s3221 + $0xac] sm:$0xf]
  %v3646 = vld [vmem:[%s3221 + $0xb0] sm:$0x1]
  %v3647 = vld [vmem:[%s3221 + $0xb4] sm:$0xf]
  %v3648 = vld [vmem:[%s3221 + $0xb8] sm:$0xf]
  %v3649 = vld [vmem:[%s3221 + $0xbc] sm:$0x1]
  %v3650 = vld [vmem:[%s3221 + $0xc0] sm:$0xf]
  %v3651 = vld [vmem:[%s3221 + $0xc4] sm:$0xf]
  %v3652 = vld [vmem:[%s3221 + $0xc8] sm:$0x1]
  %v3653 = vld [vmem:[%s3221 + $0xcc] sm:$0xf]
  %v3654 = vld [vmem:[%s3221 + $0xd0] sm:$0xf]
  %v3655 = vld [vmem:[%s3221 + $0xd4] sm:$0x1]
  %v3657 = vshrl.u32 %v3608, 16
  %v3659 = vrot.slane %v3657, 4
  %v3660 = vshll.u32 %v3608, 16
  %v3662 = vrot.slane %v3660, 5
  %v3663 = vor.u32 %v3659, %v3662
  %v3664 = vrot.slane %v3663, 4
  %v3666 = vshll.u32 %v3609, 16
  %v3668 = vrot.slane %v3666, 5
  %v3669 = vsel %vm117, %v3664, %v3668
  %v3670 = vshrl.u32 %v3609, 16
  %v3672 = vrot.slane %v3670, 4
  %v3673 = vor.u32 %v3672, %v3668
  %v3674 = vrot.slane %v3673, 4
  %v3676 = vshll.u32 %v3610, 16
  %v3678 = vrot.slane %v3676, 5
  %v3679 = vsel %vm117, %v3674, %v3678
  %v3681 = vshrl.u32 %v3611, 16
  %v3683 = vrot.slane %v3681, 4
  %v3684 = vshll.u32 %v3611, 16
  %v3686 = vrot.slane %v3684, 5
  %v3687 = vor.u32 %v3683, %v3686
  %v3688 = vrot.slane %v3687, 4
  %v3690 = vshll.u32 %v3612, 16
  %v3692 = vrot.slane %v3690, 5
  %v3693 = vsel %vm117, %v3688, %v3692
  %v3694 = vshrl.u32 %v3612, 16
  %v3696 = vrot.slane %v3694, 4
  %v3697 = vor.u32 %v3696, %v3692
  %v3698 = vrot.slane %v3697, 4
  %v3700 = vshll.u32 %v3613, 16
  %v3702 = vrot.slane %v3700, 5
  %v3703 = vsel %vm117, %v3698, %v3702
  %v3705 = vshrl.u32 %v3614, 16
  %v3707 = vrot.slane %v3705, 4
  %v3708 = vshll.u32 %v3614, 16
  %v3710 = vrot.slane %v3708, 5
  %v3711 = vor.u32 %v3707, %v3710
  %v3712 = vrot.slane %v3711, 4
  %v3714 = vshll.u32 %v3615, 16
  %v3716 = vrot.slane %v3714, 5
  %v3717 = vsel %vm117, %v3712, %v3716
  %v3718 = vshrl.u32 %v3615, 16
  %v3720 = vrot.slane %v3718, 4
  %v3721 = vor.u32 %v3720, %v3716
  %v3722 = vrot.slane %v3721, 4
  %v3724 = vshll.u32 %v3616, 16
  %v3726 = vrot.slane %v3724, 5
  %v3727 = vsel %vm117, %v3722, %v3726
  %v3729 = vshrl.u32 %v3617, 16
  %v3731 = vrot.slane %v3729, 4
  %v3732 = vshll.u32 %v3617, 16
  %v3734 = vrot.slane %v3732, 5
  %v3735 = vor.u32 %v3731, %v3734
  %v3736 = vrot.slane %v3735, 4
  %v3738 = vshll.u32 %v3618, 16
  %v3740 = vrot.slane %v3738, 5
  %v3741 = vsel %vm117, %v3736, %v3740
  %v3742 = vshrl.u32 %v3618, 16
  %v3744 = vrot.slane %v3742, 4
  %v3745 = vor.u32 %v3744, %v3740
  %v3746 = vrot.slane %v3745, 4
  %v3748 = vshll.u32 %v3619, 16
  %v3750 = vrot.slane %v3748, 5
  %v3751 = vsel %vm117, %v3746, %v3750
  %v3753 = vshrl.u32 %v3620, 16
  %v3755 = vrot.slane %v3753, 4
  %v3756 = vshll.u32 %v3620, 16
  %v3758 = vrot.slane %v3756, 5
  %v3759 = vor.u32 %v3755, %v3758
  %v3760 = vrot.slane %v3759, 4
  %v3762 = vshll.u32 %v3621, 16
  %v3764 = vrot.slane %v3762, 5
  %v3765 = vsel %vm117, %v3760, %v3764
  %v3766 = vshrl.u32 %v3621, 16
  %v3768 = vrot.slane %v3766, 4
  %v3769 = vor.u32 %v3768, %v3764
  %v3770 = vrot.slane %v3769, 4
  %v3772 = vshll.u32 %v3622, 16
  %v3774 = vrot.slane %v3772, 5
  %v3775 = vsel %vm117, %v3770, %v3774
  %v3777 = vshrl.u32 %v3623, 16
  %v3779 = vrot.slane %v3777, 4
  %v3780 = vshll.u32 %v3623, 16
  %v3782 = vrot.slane %v3780, 5
  %v3783 = vor.u32 %v3779, %v3782
  %v3784 = vrot.slane %v3783, 4
  %v3786 = vshll.u32 %v3624, 16
  %v3788 = vrot.slane %v3786, 5
  %v3789 = vsel %vm117, %v3784, %v3788
  %v3790 = vshrl.u32 %v3624, 16
  %v3792 = vrot.slane %v3790, 4
  %v3793 = vor.u32 %v3792, %v3788
  %v3794 = vrot.slane %v3793, 4
  %v3796 = vshll.u32 %v3625, 16
  %v3798 = vrot.slane %v3796, 5
  %v3799 = vsel %vm117, %v3794, %v3798
  %v3801 = vshrl.u32 %v3626, 16
  %v3803 = vrot.slane %v3801, 4
  %v3804 = vshll.u32 %v3626, 16
  %v3806 = vrot.slane %v3804, 5
  %v3807 = vor.u32 %v3803, %v3806
  %v3808 = vrot.slane %v3807, 4
  %v3810 = vshll.u32 %v3627, 16
  %v3812 = vrot.slane %v3810, 5
  %v3813 = vsel %vm117, %v3808, %v3812
  %v3814 = vshrl.u32 %v3627, 16
  %v3816 = vrot.slane %v3814, 4
  %v3817 = vor.u32 %v3816, %v3812
  %v3818 = vrot.slane %v3817, 4
  %v3820 = vshll.u32 %v3628, 16
  %v3822 = vrot.slane %v3820, 5
  %v3823 = vsel %vm117, %v3818, %v3822
  %v3825 = vshrl.u32 %v3629, 16
  %v3827 = vrot.slane %v3825, 4
  %v3828 = vshll.u32 %v3629, 16
  %v3830 = vrot.slane %v3828, 5
  %v3831 = vor.u32 %v3827, %v3830
  %v3832 = vrot.slane %v3831, 4
  %v3834 = vshll.u32 %v3630, 16
  %v3836 = vrot.slane %v3834, 5
  %v3837 = vsel %vm117, %v3832, %v3836
  %v3838 = vshrl.u32 %v3630, 16
  %v3840 = vrot.slane %v3838, 4
  %v3841 = vor.u32 %v3840, %v3836
  %v3842 = vrot.slane %v3841, 4
  %v3844 = vshll.u32 %v3631, 16
  %v3846 = vrot.slane %v3844, 5
  %v3847 = vsel %vm117, %v3842, %v3846
  %v3849 = vshrl.u32 %v3632, 16
  %v3851 = vrot.slane %v3849, 4
  %v3852 = vshll.u32 %v3632, 16
  %v3854 = vrot.slane %v3852, 5
  %v3855 = vor.u32 %v3851, %v3854
  %v3856 = vrot.slane %v3855, 4
  %v3858 = vshll.u32 %v3633, 16
  %v3860 = vrot.slane %v3858, 5
  %v3861 = vsel %vm117, %v3856, %v3860
  %v3862 = vshrl.u32 %v3633, 16
  %v3864 = vrot.slane %v3862, 4
  %v3865 = vor.u32 %v3864, %v3860
  %v3866 = vrot.slane %v3865, 4
  %v3868 = vshll.u32 %v3634, 16
  %v3870 = vrot.slane %v3868, 5
  %v3871 = vsel %vm117, %v3866, %v3870
  %v3873 = vshrl.u32 %v3635, 16
  %v3875 = vrot.slane %v3873, 4
  %v3876 = vshll.u32 %v3635, 16
  %v3878 = vrot.slane %v3876, 5
  %v3879 = vor.u32 %v3875, %v3878
  %v3880 = vrot.slane %v3879, 4
  %v3882 = vshll.u32 %v3636, 16
  %v3884 = vrot.slane %v3882, 5
  %v3885 = vsel %vm117, %v3880, %v3884
  %v3886 = vshrl.u32 %v3636, 16
  %v3888 = vrot.slane %v3886, 4
  %v3889 = vor.u32 %v3888, %v3884
  %v3890 = vrot.slane %v3889, 4
  %v3892 = vshll.u32 %v3637, 16
  %v3894 = vrot.slane %v3892, 5
  %v3895 = vsel %vm117, %v3890, %v3894
  %v3897 = vshrl.u32 %v3638, 16
  %v3899 = vrot.slane %v3897, 4
  %v3900 = vshll.u32 %v3638, 16
  %v3902 = vrot.slane %v3900, 5
  %v3903 = vor.u32 %v3899, %v3902
  %v3904 = vrot.slane %v3903, 4
  %v3906 = vshll.u32 %v3639, 16
  %v3908 = vrot.slane %v3906, 5
  %v3909 = vsel %vm117, %v3904, %v3908
  %v3910 = vshrl.u32 %v3639, 16
  %v3912 = vrot.slane %v3910, 4
  %v3913 = vor.u32 %v3912, %v3908
  %v3914 = vrot.slane %v3913, 4
  %v3916 = vshll.u32 %v3640, 16
  %v3918 = vrot.slane %v3916, 5
  %v3919 = vsel %vm117, %v3914, %v3918
  %v3921 = vshrl.u32 %v3641, 16
  %v3923 = vrot.slane %v3921, 4
  %v3924 = vshll.u32 %v3641, 16
  %v3926 = vrot.slane %v3924, 5
  %v3927 = vor.u32 %v3923, %v3926
  %v3928 = vrot.slane %v3927, 4
  %v3930 = vshll.u32 %v3642, 16
  %v3932 = vrot.slane %v3930, 5
  %v3933 = vsel %vm117, %v3928, %v3932
  %v3934 = vshrl.u32 %v3642, 16
  %v3936 = vrot.slane %v3934, 4
  %v3937 = vor.u32 %v3936, %v3932
  %v3938 = vrot.slane %v3937, 4
  %v3940 = vshll.u32 %v3643, 16
  %v3942 = vrot.slane %v3940, 5
  %v3943 = vsel %vm117, %v3938, %v3942
  %v3945 = vshrl.u32 %v3644, 16
  %v3947 = vrot.slane %v3945, 4
  %v3948 = vshll.u32 %v3644, 16
  %v3950 = vrot.slane %v3948, 5
  %v3951 = vor.u32 %v3947, %v3950
  %v3952 = vrot.slane %v3951, 4
  %v3954 = vshll.u32 %v3645, 16
  %v3956 = vrot.slane %v3954, 5
  %v3957 = vsel %vm117, %v3952, %v3956
  %v3958 = vshrl.u32 %v3645, 16
  %v3960 = vrot.slane %v3958, 4
  %v3961 = vor.u32 %v3960, %v3956
  %v3962 = vrot.slane %v3961, 4
  %v3964 = vshll.u32 %v3646, 16
  %v3966 = vrot.slane %v3964, 5
  %v3967 = vsel %vm117, %v3962, %v3966
  %v3969 = vshrl.u32 %v3647, 16
  %v3971 = vrot.slane %v3969, 4
  %v3972 = vshll.u32 %v3647, 16
  %v3974 = vrot.slane %v3972, 5
  %v3975 = vor.u32 %v3971, %v3974
  %v3976 = vrot.slane %v3975, 4
  %v3978 = vshll.u32 %v3648, 16
  %v3980 = vrot.slane %v3978, 5
  %v3981 = vsel %vm117, %v3976, %v3980
  %v3982 = vshrl.u32 %v3648, 16
  %v3984 = vrot.slane %v3982, 4
  %v3985 = vor.u32 %v3984, %v3980
  %v3986 = vrot.slane %v3985, 4
  %v3988 = vshll.u32 %v3649, 16
  %v3990 = vrot.slane %v3988, 5
  %v3991 = vsel %vm117, %v3986, %v3990
  %v3993 = vshrl.u32 %v3650, 16
  %v3995 = vrot.slane %v3993, 4
  %v3996 = vshll.u32 %v3650, 16
  %v3998 = vrot.slane %v3996, 5
  %v3999 = vor.u32 %v3995, %v3998
  %v4000 = vrot.slane %v3999, 4
  %v4002 = vshll.u32 %v3651, 16
  %v4004 = vrot.slane %v4002, 5
  %v4005 = vsel %vm117, %v4000, %v4004
  %v4006 = vshrl.u32 %v3651, 16
  %v4008 = vrot.slane %v4006, 4
  %v4009 = vor.u32 %v4008, %v4004
  %v4010 = vrot.slane %v4009, 4
  %v4012 = vshll.u32 %v3652, 16
  %v4014 = vrot.slane %v4012, 5
  %v4015 = vsel %vm117, %v4010, %v4014
  %v4017 = vshrl.u32 %v3653, 16
  %v4019 = vrot.slane %v4017, 4
  %v4020 = vshll.u32 %v3653, 16
  %v4022 = vrot.slane %v4020, 5
  %v4023 = vor.u32 %v4019, %v4022
  %v4024 = vrot.slane %v4023, 4
  %v4026 = vshll.u32 %v3654, 16
  %v4028 = vrot.slane %v4026, 5
  %v4029 = vsel %vm117, %v4024, %v4028
  %v4030 = vshrl.u32 %v3654, 16
  %v4032 = vrot.slane %v4030, 4
  %v4033 = vor.u32 %v4032, %v4028
  %v4034 = vrot.slane %v4033, 4
  %v4036 = vshll.u32 %v3655, 16
  %v4038 = vrot.slane %v4036, 5
  %v4039 = vsel %vm117, %v4034, %v4038
  %s4040 = scalar_lea.vmem %s1, 448
  %v4041 = vld [vmem:[%s4040] sm:$0xf]
  %v4042 = vld [vmem:[%s4040 + $0x4] sm:$0xf]
  %v4043 = vld [vmem:[%s4040 + $0x8] sm:$0xf]
  %v4044 = vld [vmem:[%s4040 + $0xc] sm:$0xf]
  %v4045 = vld [vmem:[%s4040 + $0x10] sm:$0xf]
  %v4046 = vld [vmem:[%s4040 + $0x14] sm:$0xf]
  %v4047 = vld [vmem:[%s4040 + $0x18] sm:$0xf]
  %v4048 = vld [vmem:[%s4040 + $0x1c] sm:$0xf]
  %v4049 = vld [vmem:[%s4040 + $0x20] sm:$0xf]
  %v4050 = vld [vmem:[%s4040 + $0x24] sm:$0xf]
  %v4051 = vld [vmem:[%s4040 + $0x28] sm:$0xf]
  %v4052 = vld [vmem:[%s4040 + $0x2c] sm:$0xf]
  %v4053 = vld [vmem:[%s4040 + $0x30] sm:$0xf]
  %v4054 = vld [vmem:[%s4040 + $0x34] sm:$0xf]
  %v4055 = vld [vmem:[%s4040 + $0x38] sm:$0xf]
  %v4056 = vld [vmem:[%s4040 + $0x3c] sm:$0xf]
  %v4057 = vunpack.c.l.b16 %v3669
  %v4058 = vunpack.c.l.b16 %v3679
  %v4059 = vunpack.c.l.b16 %v3693
  %v4060 = vunpack.c.l.b16 %v3703
  %v4061 = vunpack.c.l.b16 %v3717
  %v4062 = vunpack.c.l.b16 %v3727
  %v4063 = vunpack.c.l.b16 %v3741
  %v4064 = vunpack.c.l.b16 %v3751
  %v4065 = vunpack.c.l.b16 %v3765
  %v4066 = vunpack.c.l.b16 %v3775
  %v4067 = vunpack.c.l.b16 %v3789
  %v4068 = vunpack.c.l.b16 %v3799
  %v4069 = vunpack.c.l.b16 %v3813
  %v4070 = vunpack.c.l.b16 %v3823
  %v4071 = vunpack.c.l.b16 %v3837
  %v4072 = vunpack.c.l.b16 %v3847
  %v4073 = vunpack.c.l.b16 %v3861
  %v4074 = vunpack.c.l.b16 %v3871
  %v4075 = vunpack.c.l.b16 %v3885
  %v4076 = vunpack.c.l.b16 %v3895
  %v4077 = vunpack.c.l.b16 %v3909
  %v4078 = vunpack.c.l.b16 %v3919
  %v4079 = vunpack.c.l.b16 %v3933
  %v4080 = vunpack.c.l.b16 %v3943
  %v4081 = vunpack.c.l.b16 %v3957
  %v4082 = vunpack.c.l.b16 %v3967
  %v4083 = vunpack.c.l.b16 %v3981
  %v4084 = vunpack.c.l.b16 %v3991
  %v4085 = vunpack.c.l.b16 %v4005
  %v4086 = vunpack.c.l.b16 %v4015
  %v4087 = vunpack.c.l.b16 %v4029
  %v4088 = vunpack.c.l.b16 %v4039
  %v4089 = vpack.c.b16 %v4058, %v4057
  %v4090 = vpack.c.b16 %v4060, %v4059
  %v4091 = vpack.c.b16 %v4062, %v4061
  %v4092 = vpack.c.b16 %v4064, %v4063
  %v4093 = vpack.c.b16 %v4066, %v4065
  %v4094 = vpack.c.b16 %v4068, %v4067
  %v4095 = vpack.c.b16 %v4070, %v4069
  %v4096 = vpack.c.b16 %v4072, %v4071
  %v4097 = vpack.c.b16 %v4074, %v4073
  %v4098 = vpack.c.b16 %v4076, %v4075
  %v4099 = vpack.c.b16 %v4078, %v4077
  %v4100 = vpack.c.b16 %v4080, %v4079
  %v4101 = vpack.c.b16 %v4082, %v4081
  %v4102 = vpack.c.b16 %v4084, %v4083
  %v4103 = vpack.c.b16 %v4086, %v4085
  %v4104 = vpack.c.b16 %v4088, %v4087
  %v4137 = vunpack.c.l.b16 %v4041
  %v4138 = vunpack.c.l.b16 %v4042
  %v4139 = vunpack.c.l.b16 %v4043
  %v4140 = vunpack.c.l.b16 %v4044
  %v4141 = vunpack.c.l.b16 %v4045
  %v4142 = vunpack.c.l.b16 %v4046
  %v4143 = vunpack.c.l.b16 %v4047
  %v4144 = vunpack.c.l.b16 %v4048
  %v4145 = vunpack.c.l.b16 %v4049
  %v4146 = vunpack.c.l.b16 %v4050
  %v4147 = vunpack.c.l.b16 %v4051
  %v4148 = vunpack.c.l.b16 %v4052
  %v4149 = vunpack.c.l.b16 %v4053
  %v4150 = vunpack.c.l.b16 %v4054
  %v4151 = vunpack.c.l.b16 %v4055
  %v4152 = vunpack.c.l.b16 %v4056
  %v4153 = vpack.c.b16 %v4138, %v4137
  %v4154 = vpack.c.b16 %v4140, %v4139
  %v4155 = vpack.c.b16 %v4142, %v4141
  %v4156 = vpack.c.b16 %v4144, %v4143
  %v4157 = vpack.c.b16 %v4146, %v4145
  %v4158 = vpack.c.b16 %v4148, %v4147
  %v4159 = vpack.c.b16 %v4150, %v4149
  %v4160 = vpack.c.b16 %v4152, %v4151
  %4169 = vmatprep.subr.bf16.mxu0 0
  %4170 = vmatpush1.bf16.msra.mxu0 %v4153
  %4171 = vmatprep.subr.bf16.mxu0 0
  %4172 = vmatpush1.bf16.msra.mxu0 %v4154
  %4173 = vmatprep.subr.bf16.mxu0 0
  %4174 = vmatpush1.bf16.msra.mxu0 %v4155
  %4175 = vmatprep.subr.bf16.mxu0 0
  %4176 = vmatpush1.bf16.msra.mxu0 %v4156
  %4177 = vmatprep.subr.bf16.mxu0 0
  %4178 = vmatpush1.bf16.msra.mxu0 %v4157
  %4179 = vmatprep.subr.bf16.mxu0 0
  %4180 = vmatpush1.bf16.msra.mxu0 %v4158
  %4181 = vmatprep.subr.bf16.mxu0 0
  %4182 = vmatpush1.bf16.msra.mxu0 %v4159
  %4183 = vmatprep.subr.bf16.mxu0 0
  %4184 = vmatpush1.bf16.msra.mxu0 %v4160
  %4185 = vmatprep.subr.bf16.mxu0 0
  %4186 = vmatpush1.bf16.msra.mxu0 0
  %4187 = vmatprep.subr.bf16.mxu0 0
  %4188 = vmatpush1.bf16.msra.mxu0 0
  %4189 = vmatprep.subr.bf16.mxu0 0
  %4190 = vmatpush1.bf16.msra.mxu0 0
  %4191 = vmatprep.subr.bf16.mxu0 0
  %4192 = vmatpush1.bf16.msra.mxu0 0
  %4193 = vmatprep.subr.bf16.mxu0 0
  %4194 = vmatpush1.bf16.msra.mxu0 0
  %4195 = vmatprep.subr.bf16.mxu0 0
  %4196 = vmatpush1.bf16.msra.mxu0 0
  %4197 = vmatprep.subr.bf16.mxu0 0
  %4198 = vmatpush1.bf16.msra.mxu0 0
  %4199 = vmatprep.subr.bf16.mxu0 0
  %4200 = vmatpush1.bf16.msra.mxu0 0
  %4201 = vmatprep.mubr.bf16.mxu0 0
  %4202 = vmatmul.mubr.bf16.gmra.mrb[0].mxu0 %v4089
  %v4203 = vpop.f32.mrb[0].mxu0
  %v4204 = vadd.f32 0.0, %v4203
  %v4205 = vpop.f32.mrb[0].mxu0
  %v4206 = vpop.f32.mrb[0].mxu0
  %v4207 = vadd.f32 0.0, %v4206
  %v4208 = vpop.f32.mrb[0].mxu0
  %4209 = vmatprep.mubr.bf16.mxu0 0
  %4210 = vmatmul.mubr.bf16.gmra.mrb[0].mxu0 %v4090
  %v4211 = vpop.f32.mrb[0].mxu0
  %v4212 = vadd.f32 0.0, %v4211
  %v4213 = vpop.f32.mrb[0].mxu0
  %v4214 = vpop.f32.mrb[0].mxu0
  %v4215 = vadd.f32 0.0, %v4214
  %v4216 = vpop.f32.mrb[0].mxu0
  %4217 = vmatprep.mubr.bf16.mxu0 0
  %4218 = vmatmul.mubr.bf16.gmra.mrb[0].mxu0 %v4091
  %v4219 = vpop.f32.mrb[0].mxu0
  %v4220 = vadd.f32 0.0, %v4219
  %v4221 = vpop.f32.mrb[0].mxu0
  %v4222 = vpop.f32.mrb[0].mxu0
  %v4223 = vadd.f32 0.0, %v4222
  %v4224 = vpop.f32.mrb[0].mxu0
  %4225 = vmatprep.mubr.bf16.mxu0 0
  %4226 = vmatmul.mubr.bf16.gmra.mrb[0].mxu0 %v4092
  %v4227 = vpop.f32.mrb[0].mxu0
  %v4228 = vadd.f32 0.0, %v4227
  %v4229 = vpop.f32.mrb[0].mxu0
  %v4230 = vpop.f32.mrb[0].mxu0
  %v4231 = vadd.f32 0.0, %v4230
  %v4232 = vpop.f32.mrb[0].mxu0
  %4233 = vmatprep.mubr.bf16.mxu0 0
  %4234 = vmatmul.mubr.bf16.gmra.mrb[0].mxu0 %v4093
  %v4235 = vpop.f32.mrb[0].mxu0
  %v4236 = vadd.f32 0.0, %v4235
  %v4237 = vpop.f32.mrb[0].mxu0
  %v4238 = vpop.f32.mrb[0].mxu0
  %v4239 = vadd.f32 0.0, %v4238
  %v4240 = vpop.f32.mrb[0].mxu0
  %4241 = vmatprep.mubr.bf16.mxu0 0
  %4242 = vmatmul.mubr.bf16.gmra.mrb[0].mxu0 %v4094
  %v4243 = vpop.f32.mrb[0].mxu0
  %v4244 = vadd.f32 0.0, %v4243
  %v4245 = vpop.f32.mrb[0].mxu0
  %v4246 = vpop.f32.mrb[0].mxu0
  %v4247 = vadd.f32 0.0, %v4246
  %v4248 = vpop.f32.mrb[0].mxu0
  %4249 = vmatprep.mubr.bf16.mxu0 0
  %4250 = vmatmul.mubr.bf16.gmra.mrb[0].mxu0 %v4095
  %v4251 = vpop.f32.mrb[0].mxu0
  %v4252 = vadd.f32 0.0, %v4251
  %v4253 = vpop.f32.mrb[0].mxu0
  %v4254 = vpop.f32.mrb[0].mxu0
  %v4255 = vadd.f32 0.0, %v4254
  %v4256 = vpop.f32.mrb[0].mxu0
  %4257 = vmatprep.mubr.bf16.mxu0 0
  %4258 = vmatmul.mubr.bf16.gmra.mrb[0].mxu0 %v4096
  %v4259 = vpop.f32.mrb[0].mxu0
  %v4260 = vadd.f32 0.0, %v4259
  %v4261 = vpop.f32.mrb[0].mxu0
  %v4262 = vpop.f32.mrb[0].mxu0
  %v4263 = vadd.f32 0.0, %v4262
  %v4264 = vpop.f32.mrb[0].mxu0
  %4265 = vmatprep.mubr.bf16.mxu0 0
  %4266 = vmatmul.mubr.bf16.gmra.mrb[0].mxu0 %v4097
  %v4267 = vpop.f32.mrb[0].mxu0
  %v4268 = vadd.f32 0.0, %v4267
  %v4269 = vpop.f32.mrb[0].mxu0
  %v4270 = vpop.f32.mrb[0].mxu0
  %v4271 = vadd.f32 0.0, %v4270
  %v4272 = vpop.f32.mrb[0].mxu0
  %4273 = vmatprep.mubr.bf16.mxu0 0
  %4274 = vmatmul.mubr.bf16.gmra.mrb[0].mxu0 %v4098
  %v4275 = vpop.f32.mrb[0].mxu0
  %v4276 = vadd.f32 0.0, %v4275
  %v4277 = vpop.f32.mrb[0].mxu0
  %v4278 = vpop.f32.mrb[0].mxu0
  %v4279 = vadd.f32 0.0, %v4278
  %v4280 = vpop.f32.mrb[0].mxu0
  %4281 = vmatprep.mubr.bf16.mxu0 0
  %4282 = vmatmul.mubr.bf16.gmra.mrb[0].mxu0 %v4099
  %v4283 = vpop.f32.mrb[0].mxu0
  %v4284 = vadd.f32 0.0, %v4283
  %v4285 = vpop.f32.mrb[0].mxu0
  %v4286 = vpop.f32.mrb[0].mxu0
  %v4287 = vadd.f32 0.0, %v4286
  %v4288 = vpop.f32.mrb[0].mxu0
  %4289 = vmatprep.mubr.bf16.mxu0 0
  %4290 = vmatmul.mubr.bf16.gmra.mrb[0].mxu0 %v4100
  %v4291 = vpop.f32.mrb[0].mxu0
  %v4292 = vadd.f32 0.0, %v4291
  %v4293 = vpop.f32.mrb[0].mxu0
  %v4294 = vpop.f32.mrb[0].mxu0
  %v4295 = vadd.f32 0.0, %v4294
  %v4296 = vpop.f32.mrb[0].mxu0
  %4297 = vmatprep.mubr.bf16.mxu0 0
  %4298 = vmatmul.mubr.bf16.gmra.mrb[0].mxu0 %v4101
  %v4299 = vpop.f32.mrb[0].mxu0
  %v4300 = vadd.f32 0.0, %v4299
  %v4301 = vpop.f32.mrb[0].mxu0
  %v4302 = vpop.f32.mrb[0].mxu0
  %v4303 = vadd.f32 0.0, %v4302
  %v4304 = vpop.f32.mrb[0].mxu0
  %4305 = vmatprep.mubr.bf16.mxu0 0
  %4306 = vmatmul.mubr.bf16.gmra.mrb[0].mxu0 %v4102
  %v4307 = vpop.f32.mrb[0].mxu0
  %v4308 = vadd.f32 0.0, %v4307
  %v4309 = vpop.f32.mrb[0].mxu0
  %v4310 = vpop.f32.mrb[0].mxu0
  %v4311 = vadd.f32 0.0, %v4310
  %v4312 = vpop.f32.mrb[0].mxu0
  %4313 = vmatprep.mubr.bf16.mxu0 0
  %4314 = vmatmul.mubr.bf16.gmra.mrb[0].mxu0 %v4103
  %v4315 = vpop.f32.mrb[0].mxu0
  %v4316 = vadd.f32 0.0, %v4315
  %v4317 = vpop.f32.mrb[0].mxu0
  %v4318 = vpop.f32.mrb[0].mxu0
  %v4319 = vadd.f32 0.0, %v4318
  %v4320 = vpop.f32.mrb[0].mxu0
  %4321 = vmatprep.mubr.bf16.mxu0 0
  %4322 = vmatmul.mubr.bf16.gmra.mrb[0].mxu0 %v4104
  %v4323 = vpop.f32.mrb[0].mxu0
  %v4324 = vadd.f32 0.0, %v4323
  %v4325 = vpop.f32.mrb[0].mxu0
  %v4326 = vpop.f32.mrb[0].mxu0
  %v4327 = vadd.f32 0.0, %v4326
  %v4328 = vpop.f32.mrb[0].mxu0
  %4329 = vdwg.mxu0
  %v4330 = vadd.f32 %v3576, %v4204
  %v4331 = vadd.f32 %v3577, %v4207
  %v4332 = vadd.f32 %v3578, %v4212
  %v4333 = vadd.f32 %v3579, %v4215
  %v4334 = vadd.f32 %v3580, %v4220
  %v4335 = vadd.f32 %v3581, %v4223
  %v4336 = vadd.f32 %v3582, %v4228
  %v4337 = vadd.f32 %v3583, %v4231
  %v4338 = vadd.f32 %v3584, %v4236
  %v4339 = vadd.f32 %v3585, %v4239
  %v4340 = vadd.f32 %v3586, %v4244
  %v4341 = vadd.f32 %v3587, %v4247
  %v4342 = vadd.f32 %v3588, %v4252
  %v4343 = vadd.f32 %v3589, %v4255
  %v4344 = vadd.f32 %v3590, %v4260
  %v4345 = vadd.f32 %v3591, %v4263
  %v4346 = vadd.f32 %v3592, %v4268
  %v4347 = vadd.f32 %v3593, %v4271
  %v4348 = vadd.f32 %v3594, %v4276
  %v4349 = vadd.f32 %v3595, %v4279
  %v4350 = vadd.f32 %v3596, %v4284
  %v4351 = vadd.f32 %v3597, %v4287
  %v4352 = vadd.f32 %v3598, %v4292
  %v4353 = vadd.f32 %v3599, %v4295
  %v4354 = vadd.f32 %v3600, %v4300
  %v4355 = vadd.f32 %v3601, %v4303
  %v4356 = vadd.f32 %v3602, %v4308
  %v4357 = vadd.f32 %v3603, %v4311
  %v4358 = vadd.f32 %v3604, %v4316
  %v4359 = vadd.f32 %v3605, %v4319
  %v4360 = vadd.f32 %v3606, %v4324
  %v4361 = vadd.f32 %v3607, %v4327
  %v4362 = vld [vmem:[%s3221] sm:$0xe]
  %v4363 = vld [vmem:[%s3221 + $0xc] sm:$0xe]
  %v4364 = vld [vmem:[%s3221 + $0x18] sm:$0xe]
  %v4365 = vld [vmem:[%s3221 + $0x24] sm:$0xe]
  %v4366 = vld [vmem:[%s3221 + $0x30] sm:$0xe]
  %v4367 = vld [vmem:[%s3221 + $0x3c] sm:$0xe]
  %v4368 = vld [vmem:[%s3221 + $0x48] sm:$0xe]
  %v4369 = vld [vmem:[%s3221 + $0x54] sm:$0xe]
  %v4370 = vld [vmem:[%s3221 + $0x78] sm:$0xe]
  %v4371 = vld [vmem:[%s3221 + $0x84] sm:$0xe]
  %v4372 = vld [vmem:[%s3221 + $0x90] sm:$0xe]
  %v4373 = vld [vmem:[%s3221 + $0x9c] sm:$0xe]
  %v4374 = vld [vmem:[%s3221 + $0xa8] sm:$0xe]
  %v4375 = vld [vmem:[%s3221 + $0xb4] sm:$0xe]
  %v4376 = vld [vmem:[%s3221 + $0xc0] sm:$0xe]
  %v4377 = vld [vmem:[%s3221 + $0xcc] sm:$0xe]
  %v4426 = vrot.slane %v4362, 5
  %v4427 = vrot.slane %v4426, 4
  %v4428 = vrot.slane %v3609, 5
  %v4429 = vsel %vm1147, %v4427, %v4428
  %v4430 = vrot.slane %v4428, 4
  %v4431 = vrot.slane %v3610, 5
  %v4432 = vsel %vm1147, %v4430, %v4431
  %v4433 = vrot.slane %v4363, 5
  %v4434 = vrot.slane %v4433, 4
  %v4435 = vrot.slane %v3612, 5
  %v4436 = vsel %vm1147, %v4434, %v4435
  %v4437 = vrot.slane %v4435, 4
  %v4438 = vrot.slane %v3613, 5
  %v4439 = vsel %vm1147, %v4437, %v4438
  %v4440 = vrot.slane %v4364, 5
  %v4441 = vrot.slane %v4440, 4
  %v4442 = vrot.slane %v3615, 5
  %v4443 = vsel %vm1147, %v4441, %v4442
  %v4444 = vrot.slane %v4442, 4
  %v4445 = vrot.slane %v3616, 5
  %v4446 = vsel %vm1147, %v4444, %v4445
  %v4447 = vrot.slane %v4365, 5
  %v4448 = vrot.slane %v4447, 4
  %v4449 = vrot.slane %v3618, 5
  %v4450 = vsel %vm1147, %v4448, %v4449
  %v4451 = vrot.slane %v4449, 4
  %v4452 = vrot.slane %v3619, 5
  %v4453 = vsel %vm1147, %v4451, %v4452
  %v4454 = vrot.slane %v4366, 5
  %v4455 = vrot.slane %v4454, 4
  %v4456 = vrot.slane %v3621, 5
  %v4457 = vsel %vm1147, %v4455, %v4456
  %v4458 = vrot.slane %v4456, 4
  %v4459 = vrot.slane %v3622, 5
  %v4460 = vsel %vm1147, %v4458, %v4459
  %v4461 = vrot.slane %v4367, 5
  %v4462 = vrot.slane %v4461, 4
  %v4463 = vrot.slane %v3624, 5
  %v4464 = vsel %vm1147, %v4462, %v4463
  %v4465 = vrot.slane %v4463, 4
  %v4466 = vrot.slane %v3625, 5
  %v4467 = vsel %vm1147, %v4465, %v4466
  %v4468 = vrot.slane %v4368, 5
  %v4469 = vrot.slane %v4468, 4
  %v4470 = vrot.slane %v3627, 5
  %v4471 = vsel %vm1147, %v4469, %v4470
  %v4472 = vrot.slane %v4470, 4
  %v4473 = vrot.slane %v3628, 5
  %v4474 = vsel %vm1147, %v4472, %v4473
  %v4475 = vrot.slane %v4369, 5
  %v4476 = vrot.slane %v4475, 4
  %v4477 = vrot.slane %v3630, 5
  %v4478 = vsel %vm1147, %v4476, %v4477
  %v4479 = vrot.slane %v4477, 4
  %v4480 = vrot.slane %v3631, 5
  %v4481 = vsel %vm1147, %v4479, %v4480
  %v4482 = vrot.slane %v4370, 5
  %v4483 = vrot.slane %v4482, 4
  %v4484 = vrot.slane %v3633, 5
  %v4485 = vsel %vm1147, %v4483, %v4484
  %v4486 = vrot.slane %v4484, 4
  %v4487 = vrot.slane %v3634, 5
  %v4488 = vsel %vm1147, %v4486, %v4487
  %v4489 = vrot.slane %v4371, 5
  %v4490 = vrot.slane %v4489, 4
  %v4491 = vrot.slane %v3636, 5
  %v4492 = vsel %vm1147, %v4490, %v4491
  %v4493 = vrot.slane %v4491, 4
  %v4494 = vrot.slane %v3637, 5
  %v4495 = vsel %vm1147, %v4493, %v4494
  %v4496 = vrot.slane %v4372, 5
  %v4497 = vrot.slane %v4496, 4
  %v4498 = vrot.slane %v3639, 5
  %v4499 = vsel %vm1147, %v4497, %v4498
  %v4500 = vrot.slane %v4498, 4
  %v4501 = vrot.slane %v3640, 5
  %v4502 = vsel %vm1147, %v4500, %v4501
  %v4503 = vrot.slane %v4373, 5
  %v4504 = vrot.slane %v4503, 4
  %v4505 = vrot.slane %v3642, 5
  %v4506 = vsel %vm1147, %v4504, %v4505
  %v4507 = vrot.slane %v4505, 4
  %v4508 = vrot.slane %v3643, 5
  %v4509 = vsel %vm1147, %v4507, %v4508
  %v4510 = vrot.slane %v4374, 5
  %v4511 = vrot.slane %v4510, 4
  %v4512 = vrot.slane %v3645, 5
  %v4513 = vsel %vm1147, %v4511, %v4512
  %v4514 = vrot.slane %v4512, 4
  %v4515 = vrot.slane %v3646, 5
  %v4516 = vsel %vm1147, %v4514, %v4515
  %v4517 = vrot.slane %v4375, 5
  %v4518 = vrot.slane %v4517, 4
  %v4519 = vrot.slane %v3648, 5
  %v4520 = vsel %vm1147, %v4518, %v4519
  %v4521 = vrot.slane %v4519, 4
  %v4522 = vrot.slane %v3649, 5
  %v4523 = vsel %vm1147, %v4521, %v4522
  %v4524 = vrot.slane %v4376, 5
  %v4525 = vrot.slane %v4524, 4
  %v4526 = vrot.slane %v3651, 5
  %v4527 = vsel %vm1147, %v4525, %v4526
  %v4528 = vrot.slane %v4526, 4
  %v4529 = vrot.slane %v3652, 5
  %v4530 = vsel %vm1147, %v4528, %v4529
  %v4531 = vrot.slane %v4377, 5
  %v4532 = vrot.slane %v4531, 4
  %v4533 = vrot.slane %v3654, 5
  %v4534 = vsel %vm1147, %v4532, %v4533
  %v4535 = vrot.slane %v4533, 4
  %v4536 = vrot.slane %v3655, 5
  %v4537 = vsel %vm1147, %v4535, %v4536
  %s4538 = scalar_lea.vmem %s1, 512
  %v4539 = vld [vmem:[%s4538] sm:$0xf]
  %v4540 = vld [vmem:[%s4538 + $0x4] sm:$0xf]
  %v4541 = vld [vmem:[%s4538 + $0x8] sm:$0xf]
  %v4542 = vld [vmem:[%s4538 + $0xc] sm:$0xf]
  %v4543 = vld [vmem:[%s4538 + $0x10] sm:$0xf]
  %v4544 = vld [vmem:[%s4538 + $0x14] sm:$0xf]
  %v4545 = vld [vmem:[%s4538 + $0x18] sm:$0xf]
  %v4546 = vld [vmem:[%s4538 + $0x1c] sm:$0xf]
  %v4547 = vld [vmem:[%s4538 + $0x20] sm:$0xf]
  %v4548 = vld [vmem:[%s4538 + $0x24] sm:$0xf]
  %v4549 = vld [vmem:[%s4538 + $0x28] sm:$0xf]
  %v4550 = vld [vmem:[%s4538 + $0x2c] sm:$0xf]
  %v4551 = vld [vmem:[%s4538 + $0x30] sm:$0xf]
  %v4552 = vld [vmem:[%s4538 + $0x34] sm:$0xf]
  %v4553 = vld [vmem:[%s4538 + $0x38] sm:$0xf]
  %v4554 = vld [vmem:[%s4538 + $0x3c] sm:$0xf]
  %v4555 = vunpack.c.l.b16 %v4429
  %v4556 = vunpack.c.l.b16 %v4432
  %v4557 = vunpack.c.l.b16 %v4436
  %v4558 = vunpack.c.l.b16 %v4439
  %v4559 = vunpack.c.l.b16 %v4443
  %v4560 = vunpack.c.l.b16 %v4446
  %v4561 = vunpack.c.l.b16 %v4450
  %v4562 = vunpack.c.l.b16 %v4453
  %v4563 = vunpack.c.l.b16 %v4457
  %v4564 = vunpack.c.l.b16 %v4460
  %v4565 = vunpack.c.l.b16 %v4464
  %v4566 = vunpack.c.l.b16 %v4467
  %v4567 = vunpack.c.l.b16 %v4471
  %v4568 = vunpack.c.l.b16 %v4474
  %v4569 = vunpack.c.l.b16 %v4478
  %v4570 = vunpack.c.l.b16 %v4481
  %v4571 = vunpack.c.l.b16 %v4485
  %v4572 = vunpack.c.l.b16 %v4488
  %v4573 = vunpack.c.l.b16 %v4492
  %v4574 = vunpack.c.l.b16 %v4495
  %v4575 = vunpack.c.l.b16 %v4499
  %v4576 = vunpack.c.l.b16 %v4502
  %v4577 = vunpack.c.l.b16 %v4506
  %v4578 = vunpack.c.l.b16 %v4509
  %v4579 = vunpack.c.l.b16 %v4513
  %v4580 = vunpack.c.l.b16 %v4516
  %v4581 = vunpack.c.l.b16 %v4520
  %v4582 = vunpack.c.l.b16 %v4523
  %v4583 = vunpack.c.l.b16 %v4527
  %v4584 = vunpack.c.l.b16 %v4530
  %v4585 = vunpack.c.l.b16 %v4534
  %v4586 = vunpack.c.l.b16 %v4537
  %v4587 = vpack.c.b16 %v4556, %v4555
  %v4588 = vpack.c.b16 %v4558, %v4557
  %v4589 = vpack.c.b16 %v4560, %v4559
  %v4590 = vpack.c.b16 %v4562, %v4561
  %v4591 = vpack.c.b16 %v4564, %v4563
  %v4592 = vpack.c.b16 %v4566, %v4565
  %v4593 = vpack.c.b16 %v4568, %v4567
  %v4594 = vpack.c.b16 %v4570, %v4569
  %v4595 = vpack.c.b16 %v4572, %v4571
  %v4596 = vpack.c.b16 %v4574, %v4573
  %v4597 = vpack.c.b16 %v4576, %v4575
  %v4598 = vpack.c.b16 %v4578, %v4577
  %v4599 = vpack.c.b16 %v4580, %v4579
  %v4600 = vpack.c.b16 %v4582, %v4581
  %v4601 = vpack.c.b16 %v4584, %v4583
  %v4602 = vpack.c.b16 %v4586, %v4585
  %v4635 = vunpack.c.l.b16 %v4539
  %v4636 = vunpack.c.l.b16 %v4540
  %v4637 = vunpack.c.l.b16 %v4541
  %v4638 = vunpack.c.l.b16 %v4542
  %v4639 = vunpack.c.l.b16 %v4543
  %v4640 = vunpack.c.l.b16 %v4544
  %v4641 = vunpack.c.l.b16 %v4545
  %v4642 = vunpack.c.l.b16 %v4546
  %v4643 = vunpack.c.l.b16 %v4547
  %v4644 = vunpack.c.l.b16 %v4548
  %v4645 = vunpack.c.l.b16 %v4549
  %v4646 = vunpack.c.l.b16 %v4550
  %v4647 = vunpack.c.l.b16 %v4551
  %v4648 = vunpack.c.l.b16 %v4552
  %v4649 = vunpack.c.l.b16 %v4553
  %v4650 = vunpack.c.l.b16 %v4554
  %v4651 = vpack.c.b16 %v4636, %v4635
  %v4652 = vpack.c.b16 %v4638, %v4637
  %v4653 = vpack.c.b16 %v4640, %v4639
  %v4654 = vpack.c.b16 %v4642, %v4641
  %v4655 = vpack.c.b16 %v4644, %v4643
  %v4656 = vpack.c.b16 %v4646, %v4645
  %v4657 = vpack.c.b16 %v4648, %v4647
  %v4658 = vpack.c.b16 %v4650, %v4649
  %4667 = vmatprep.subr.bf16.mxu0 0
  %4668 = vmatpush1.bf16.msra.mxu0 %v4651
  %4669 = vmatprep.subr.bf16.mxu0 0
  %4670 = vmatpush1.bf16.msra.mxu0 %v4652
  %4671 = vmatprep.subr.bf16.mxu0 0
  %4672 = vmatpush1.bf16.msra.mxu0 %v4653
  %4673 = vmatprep.subr.bf16.mxu0 0
  %4674 = vmatpush1.bf16.msra.mxu0 %v4654
  %4675 = vmatprep.subr.bf16.mxu0 0
  %4676 = vmatpush1.bf16.msra.mxu0 %v4655
  %4677 = vmatprep.subr.bf16.mxu0 0
  %4678 = vmatpush1.bf16.msra.mxu0 %v4656
  %4679 = vmatprep.subr.bf16.mxu0 0
  %4680 = vmatpush1.bf16.msra.mxu0 %v4657
  %4681 = vmatprep.subr.bf16.mxu0 0
  %4682 = vmatpush1.bf16.msra.mxu0 %v4658
  %4683 = vmatprep.subr.bf16.mxu0 0
  %4684 = vmatpush1.bf16.msra.mxu0 0
  %4685 = vmatprep.subr.bf16.mxu0 0
  %4686 = vmatpush1.bf16.msra.mxu0 0
  %4687 = vmatprep.subr.bf16.mxu0 0
  %4688 = vmatpush1.bf16.msra.mxu0 0
  %4689 = vmatprep.subr.bf16.mxu0 0
  %4690 = vmatpush1.bf16.msra.mxu0 0
  %4691 = vmatprep.subr.bf16.mxu0 0
  %4692 = vmatpush1.bf16.msra.mxu0 0
  %4693 = vmatprep.subr.bf16.mxu0 0
  %4694 = vmatpush1.bf16.msra.mxu0 0
  %4695 = vmatprep.subr.bf16.mxu0 0
  %4696 = vmatpush1.bf16.msra.mxu0 0
  %4697 = vmatprep.subr.bf16.mxu0 0
  %4698 = vmatpush1.bf16.msra.mxu0 0
  %4699 = vmatprep.mubr.bf16.mxu0 0
  %4700 = vmatmul.mubr.bf16.gmra.mrb[0].mxu0 %v4587
  %v4701 = vpop.f32.mrb[0].mxu0
  %v4702 = vadd.f32 0.0, %v4701
  %v4703 = vpop.f32.mrb[0].mxu0
  %v4704 = vpop.f32.mrb[0].mxu0
  %v4705 = vadd.f32 0.0, %v4704
  %v4706 = vpop.f32.mrb[0].mxu0
  %4707 = vmatprep.mubr.bf16.mxu0 0
  %4708 = vmatmul.mubr.bf16.gmra.mrb[0].mxu0 %v4588
  %v4709 = vpop.f32.mrb[0].mxu0
  %v4710 = vadd.f32 0.0, %v4709
  %v4711 = vpop.f32.mrb[0].mxu0
  %v4712 = vpop.f32.mrb[0].mxu0
  %v4713 = vadd.f32 0.0, %v4712
  %v4714 = vpop.f32.mrb[0].mxu0
  %4715 = vmatprep.mubr.bf16.mxu0 0
  %4716 = vmatmul.mubr.bf16.gmra.mrb[0].mxu0 %v4589
  %v4717 = vpop.f32.mrb[0].mxu0
  %v4718 = vadd.f32 0.0, %v4717
  %v4719 = vpop.f32.mrb[0].mxu0
  %v4720 = vpop.f32.mrb[0].mxu0
  %v4721 = vadd.f32 0.0, %v4720
  %v4722 = vpop.f32.mrb[0].mxu0
  %4723 = vmatprep.mubr.bf16.mxu0 0
  %4724 = vmatmul.mubr.bf16.gmra.mrb[0].mxu0 %v4590
  %v4725 = vpop.f32.mrb[0].mxu0
  %v4726 = vadd.f32 0.0, %v4725
  %v4727 = vpop.f32.mrb[0].mxu0
  %v4728 = vpop.f32.mrb[0].mxu0
  %v4729 = vadd.f32 0.0, %v4728
  %v4730 = vpop.f32.mrb[0].mxu0
  %4731 = vmatprep.mubr.bf16.mxu0 0
  %4732 = vmatmul.mubr.bf16.gmra.mrb[0].mxu0 %v4591
  %v4733 = vpop.f32.mrb[0].mxu0
  %v4734 = vadd.f32 0.0, %v4733
  %v4735 = vpop.f32.mrb[0].mxu0
  %v4736 = vpop.f32.mrb[0].mxu0
  %v4737 = vadd.f32 0.0, %v4736
  %v4738 = vpop.f32.mrb[0].mxu0
  %4739 = vmatprep.mubr.bf16.mxu0 0
  %4740 = vmatmul.mubr.bf16.gmra.mrb[0].mxu0 %v4592
  %v4741 = vpop.f32.mrb[0].mxu0
  %v4742 = vadd.f32 0.0, %v4741
  %v4743 = vpop.f32.mrb[0].mxu0
  %v4744 = vpop.f32.mrb[0].mxu0
  %v4745 = vadd.f32 0.0, %v4744
  %v4746 = vpop.f32.mrb[0].mxu0
  %4747 = vmatprep.mubr.bf16.mxu0 0
  %4748 = vmatmul.mubr.bf16.gmra.mrb[0].mxu0 %v4593
  %v4749 = vpop.f32.mrb[0].mxu0
  %v4750 = vadd.f32 0.0, %v4749
  %v4751 = vpop.f32.mrb[0].mxu0
  %v4752 = vpop.f32.mrb[0].mxu0
  %v4753 = vadd.f32 0.0, %v4752
  %v4754 = vpop.f32.mrb[0].mxu0
  %4755 = vmatprep.mubr.bf16.mxu0 0
  %4756 = vmatmul.mubr.bf16.gmra.mrb[0].mxu0 %v4594
  %v4757 = vpop.f32.mrb[0].mxu0
  %v4758 = vadd.f32 0.0, %v4757
  %v4759 = vpop.f32.mrb[0].mxu0
  %v4760 = vpop.f32.mrb[0].mxu0
  %v4761 = vadd.f32 0.0, %v4760
  %v4762 = vpop.f32.mrb[0].mxu0
  %4763 = vmatprep.mubr.bf16.mxu0 0
  %4764 = vmatmul.mubr.bf16.gmra.mrb[0].mxu0 %v4595
  %v4765 = vpop.f32.mrb[0].mxu0
  %v4766 = vadd.f32 0.0, %v4765
  %v4767 = vpop.f32.mrb[0].mxu0
  %v4768 = vpop.f32.mrb[0].mxu0
  %v4769 = vadd.f32 0.0, %v4768
  %v4770 = vpop.f32.mrb[0].mxu0
  %4771 = vmatprep.mubr.bf16.mxu0 0
  %4772 = vmatmul.mubr.bf16.gmra.mrb[0].mxu0 %v4596
  %v4773 = vpop.f32.mrb[0].mxu0
  %v4774 = vadd.f32 0.0, %v4773
  %v4775 = vpop.f32.mrb[0].mxu0
  %v4776 = vpop.f32.mrb[0].mxu0
  %v4777 = vadd.f32 0.0, %v4776
  %v4778 = vpop.f32.mrb[0].mxu0
  %4779 = vmatprep.mubr.bf16.mxu0 0
  %4780 = vmatmul.mubr.bf16.gmra.mrb[0].mxu0 %v4597
  %v4781 = vpop.f32.mrb[0].mxu0
  %v4782 = vadd.f32 0.0, %v4781
  %v4783 = vpop.f32.mrb[0].mxu0
  %v4784 = vpop.f32.mrb[0].mxu0
  %v4785 = vadd.f32 0.0, %v4784
  %v4786 = vpop.f32.mrb[0].mxu0
  %4787 = vmatprep.mubr.bf16.mxu0 0
  %4788 = vmatmul.mubr.bf16.gmra.mrb[0].mxu0 %v4598
  %v4789 = vpop.f32.mrb[0].mxu0
  %v4790 = vadd.f32 0.0, %v4789
  %v4791 = vpop.f32.mrb[0].mxu0
  %v4792 = vpop.f32.mrb[0].mxu0
  %v4793 = vadd.f32 0.0, %v4792
  %v4794 = vpop.f32.mrb[0].mxu0
  %4795 = vmatprep.mubr.bf16.mxu0 0
  %4796 = vmatmul.mubr.bf16.gmra.mrb[0].mxu0 %v4599
  %v4797 = vpop.f32.mrb[0].mxu0
  %v4798 = vadd.f32 0.0, %v4797
  %v4799 = vpop.f32.mrb[0].mxu0
  %v4800 = vpop.f32.mrb[0].mxu0
  %v4801 = vadd.f32 0.0, %v4800
  %v4802 = vpop.f32.mrb[0].mxu0
  %4803 = vmatprep.mubr.bf16.mxu0 0
  %4804 = vmatmul.mubr.bf16.gmra.mrb[0].mxu0 %v4600
  %v4805 = vpop.f32.mrb[0].mxu0
  %v4806 = vadd.f32 0.0, %v4805
  %v4807 = vpop.f32.mrb[0].mxu0
  %v4808 = vpop.f32.mrb[0].mxu0
  %v4809 = vadd.f32 0.0, %v4808
  %v4810 = vpop.f32.mrb[0].mxu0
  %4811 = vmatprep.mubr.bf16.mxu0 0
  %4812 = vmatmul.mubr.bf16.gmra.mrb[0].mxu0 %v4601
  %v4813 = vpop.f32.mrb[0].mxu0
  %v4814 = vadd.f32 0.0, %v4813
  %v4815 = vpop.f32.mrb[0].mxu0
  %v4816 = vpop.f32.mrb[0].mxu0
  %v4817 = vadd.f32 0.0, %v4816
  %v4818 = vpop.f32.mrb[0].mxu0
  %4819 = vmatprep.mubr.bf16.mxu0 0
  %4820 = vmatmul.mubr.bf16.gmra.mrb[0].mxu0 %v4602
  %v4821 = vpop.f32.mrb[0].mxu0
  %v4822 = vadd.f32 0.0, %v4821
  %v4823 = vpop.f32.mrb[0].mxu0
  %v4824 = vpop.f32.mrb[0].mxu0
  %v4825 = vadd.f32 0.0, %v4824
  %v4826 = vpop.f32.mrb[0].mxu0
  %4827 = vdwg.mxu0
  %v4828 = vadd.f32 %v4330, %v4702
  %v4829 = vadd.f32 %v4331, %v4705
  %v4830 = vadd.f32 %v4332, %v4710
  %v4831 = vadd.f32 %v4333, %v4713
  %v4832 = vadd.f32 %v4334, %v4718
  %v4833 = vadd.f32 %v4335, %v4721
  %v4834 = vadd.f32 %v4336, %v4726
  %v4835 = vadd.f32 %v4337, %v4729
  %v4836 = vadd.f32 %v4338, %v4734
  %v4837 = vadd.f32 %v4339, %v4737
  %v4838 = vadd.f32 %v4340, %v4742
  %v4839 = vadd.f32 %v4341, %v4745
  %v4840 = vadd.f32 %v4342, %v4750
  %v4841 = vadd.f32 %v4343, %v4753
  %v4842 = vadd.f32 %v4344, %v4758
  %v4843 = vadd.f32 %v4345, %v4761
  %v4844 = vadd.f32 %v4346, %v4766
  %v4845 = vadd.f32 %v4347, %v4769
  %v4846 = vadd.f32 %v4348, %v4774
  %v4847 = vadd.f32 %v4349, %v4777
  %v4848 = vadd.f32 %v4350, %v4782
  %v4849 = vadd.f32 %v4351, %v4785
  %v4850 = vadd.f32 %v4352, %v4790
  %v4851 = vadd.f32 %v4353, %v4793
  %v4852 = vadd.f32 %v4354, %v4798
  %v4853 = vadd.f32 %v4355, %v4801
  %v4854 = vadd.f32 %v4356, %v4806
  %v4855 = vadd.f32 %v4357, %v4809
  %v4856 = vadd.f32 %v4358, %v4814
  %v4857 = vadd.f32 %v4359, %v4817
  %v4858 = vadd.f32 %v4360, %v4822
  %v4859 = vadd.f32 %v4361, %v4825
  %v4860 = vld [vmem:[%s2] sm:$0x1]
  %v4862 = vlaneseq
  %v4863 = vshrl.u32 %v4862, 7
  %v4864 = vsub.s32 0, %v4863
  %v4865 = vrot.slane %v4860, %v4864
  %v4867 = vadd.f32 %v4828, %v4865
  %v4868 = vadd.f32 %v4829, %v4865
  %v4869 = vadd.f32 %v4830, %v4865
  %v4870 = vadd.f32 %v4831, %v4865
  %v4871 = vadd.f32 %v4832, %v4865
  %v4872 = vadd.f32 %v4833, %v4865
  %v4873 = vadd.f32 %v4834, %v4865
  %v4874 = vadd.f32 %v4835, %v4865
  %v4875 = vadd.f32 %v4836, %v4865
  %v4876 = vadd.f32 %v4837, %v4865
  %v4877 = vadd.f32 %v4838, %v4865
  %v4878 = vadd.f32 %v4839, %v4865
  %v4879 = vadd.f32 %v4840, %v4865
  %v4880 = vadd.f32 %v4841, %v4865
  %v4881 = vadd.f32 %v4842, %v4865
  %v4882 = vadd.f32 %v4843, %v4865
  %v4883 = vadd.f32 %v4844, %v4865
  %v4884 = vadd.f32 %v4845, %v4865
  %v4885 = vadd.f32 %v4846, %v4865
  %v4886 = vadd.f32 %v4847, %v4865
  %v4887 = vadd.f32 %v4848, %v4865
  %v4888 = vadd.f32 %v4849, %v4865
  %v4889 = vadd.f32 %v4850, %v4865
  %v4890 = vadd.f32 %v4851, %v4865
  %v4891 = vadd.f32 %v4852, %v4865
  %v4892 = vadd.f32 %v4853, %v4865
  %v4893 = vadd.f32 %v4854, %v4865
  %v4894 = vadd.f32 %v4855, %v4865
  %v4895 = vadd.f32 %v4856, %v4865
  %v4896 = vadd.f32 %v4857, %v4865
  %v4897 = vadd.f32 %v4858, %v4865
  %v4898 = vadd.f32 %v4859, %v4865
  %v4899 = vmax.f32 %v4867, 0.0
  %v4900 = vmax.f32 %v4868, 0.0
  %v4901 = vmax.f32 %v4869, 0.0
  %v4902 = vmax.f32 %v4870, 0.0
  %v4903 = vmax.f32 %v4871, 0.0
  %v4904 = vmax.f32 %v4872, 0.0
  %v4905 = vmax.f32 %v4873, 0.0
  %v4906 = vmax.f32 %v4874, 0.0
  %v4907 = vmax.f32 %v4875, 0.0
  %v4908 = vmax.f32 %v4876, 0.0
  %v4909 = vmax.f32 %v4877, 0.0
  %v4910 = vmax.f32 %v4878, 0.0
  %v4911 = vmax.f32 %v4879, 0.0
  %v4912 = vmax.f32 %v4880, 0.0
  %v4913 = vmax.f32 %v4881, 0.0
  %v4914 = vmax.f32 %v4882, 0.0
  %v4915 = vmax.f32 %v4883, 0.0
  %v4916 = vmax.f32 %v4884, 0.0
  %v4917 = vmax.f32 %v4885, 0.0
  %v4918 = vmax.f32 %v4886, 0.0
  %v4919 = vmax.f32 %v4887, 0.0
  %v4920 = vmax.f32 %v4888, 0.0
  %v4921 = vmax.f32 %v4889, 0.0
  %v4922 = vmax.f32 %v4890, 0.0
  %v4923 = vmax.f32 %v4891, 0.0
  %v4924 = vmax.f32 %v4892, 0.0
  %v4925 = vmax.f32 %v4893, 0.0
  %v4926 = vmax.f32 %v4894, 0.0
  %v4927 = vmax.f32 %v4895, 0.0
  %v4928 = vmax.f32 %v4896, 0.0
  %v4929 = vmax.f32 %v4897, 0.0
  %v4930 = vmax.f32 %v4898, 0.0
  %v4931 = vpack.c.bf16 %v4900, %v4899
  %v4932 = vpack.c.bf16 %v4902, %v4901
  %v4933 = vpack.c.bf16 %v4904, %v4903
  %v4934 = vpack.c.bf16 %v4906, %v4905
  %v4935 = vpack.c.bf16 %v4908, %v4907
  %v4936 = vpack.c.bf16 %v4910, %v4909
  %v4937 = vpack.c.bf16 %v4912, %v4911
  %v4938 = vpack.c.bf16 %v4914, %v4913
  %v4939 = vpack.c.bf16 %v4916, %v4915
  %v4940 = vpack.c.bf16 %v4918, %v4917
  %v4941 = vpack.c.bf16 %v4920, %v4919
  %v4942 = vpack.c.bf16 %v4922, %v4921
  %v4943 = vpack.c.bf16 %v4924, %v4923
  %v4944 = vpack.c.bf16 %v4926, %v4925
  %v4945 = vpack.c.bf16 %v4928, %v4927
  %v4946 = vpack.c.bf16 %v4930, %v4929
  %v4947 = vld [vmem:[%s3] sm:$0xf]
  %v4948 = vld [vmem:[%s3 + $0x4] sm:$0xf]
  %v4949 = vld [vmem:[%s3 + $0x8] sm:$0xf]
  %v4950 = vld [vmem:[%s3 + $0xc] sm:$0xf]
  %v4951 = vld [vmem:[%s3 + $0x10] sm:$0xf]
  %v4952 = vld [vmem:[%s3 + $0x14] sm:$0xf]
  %v4953 = vld [vmem:[%s3 + $0x18] sm:$0xf]
  %v4954 = vld [vmem:[%s3 + $0x1c] sm:$0xf]
  %v4955 = vld [vmem:[%s3 + $0x20] sm:$0xf]
  %v4956 = vld [vmem:[%s3 + $0x24] sm:$0xf]
  %v4957 = vld [vmem:[%s3 + $0x28] sm:$0xf]
  %v4958 = vld [vmem:[%s3 + $0x2c] sm:$0xf]
  %v4959 = vld [vmem:[%s3 + $0x30] sm:$0xf]
  %v4960 = vld [vmem:[%s3 + $0x34] sm:$0xf]
  %v4961 = vld [vmem:[%s3 + $0x38] sm:$0xf]
  %v4962 = vld [vmem:[%s3 + $0x3c] sm:$0xf]
  %v4979 = vunpack.c.l.b16 %v4947
  %v4980 = vunpack.c.l.b16 %v4948
  %v4981 = vunpack.c.l.b16 %v4949
  %v4982 = vunpack.c.l.b16 %v4950
  %v4983 = vunpack.c.l.b16 %v4951
  %v4984 = vunpack.c.l.b16 %v4952
  %v4985 = vunpack.c.l.b16 %v4953
  %v4986 = vunpack.c.l.b16 %v4954
  %v4987 = vunpack.c.l.b16 %v4955
  %v4988 = vunpack.c.l.b16 %v4956
  %v4989 = vunpack.c.l.b16 %v4957
  %v4990 = vunpack.c.l.b16 %v4958
  %v4991 = vunpack.c.l.b16 %v4959
  %v4992 = vunpack.c.l.b16 %v4960
  %v4993 = vunpack.c.l.b16 %v4961
  %v4994 = vunpack.c.l.b16 %v4962
  %v4995 = vpack.c.b16 %v4980, %v4979
  %v4996 = vpack.c.b16 %v4982, %v4981
  %v4997 = vpack.c.b16 %v4984, %v4983
  %v4998 = vpack.c.b16 %v4986, %v4985
  %v4999 = vpack.c.b16 %v4988, %v4987
  %v5000 = vpack.c.b16 %v4990, %v4989
  %v5001 = vpack.c.b16 %v4992, %v4991
  %v5002 = vpack.c.b16 %v4994, %v4993
  %5011 = vmatprep.subr.bf16.mxu0 0
  %5012 = vmatpush1.bf16.msra.mxu0 %v4995
  %5013 = vmatprep.subr.bf16.mxu0 0
  %5014 = vmatpush1.bf16.msra.mxu0 %v4996
  %5015 = vmatprep.subr.bf16.mxu0 0
  %5016 = vmatpush1.bf16.msra.mxu0 %v4997
  %5017 = vmatprep.subr.bf16.mxu0 0
  %5018 = vmatpush1.bf16.msra.mxu0 %v4998
  %5019 = vmatprep.subr.bf16.mxu0 0
  %5020 = vmatpush1.bf16.msra.mxu0 %v4999
  %5021 = vmatprep.subr.bf16.mxu0 0
  %5022 = vmatpush1.bf16.msra.mxu0 %v5000
  %5023 = vmatprep.subr.bf16.mxu0 0
  %5024 = vmatpush1.bf16.msra.mxu0 %v5001
  %5025 = vmatprep.subr.bf16.mxu0 0
  %5026 = vmatpush1.bf16.msra.mxu0 %v5002
  %5027 = vmatprep.subr.bf16.mxu0 0
  %5028 = vmatpush1.bf16.msra.mxu0 0
  %5029 = vmatprep.subr.bf16.mxu0 0
  %5030 = vmatpush1.bf16.msra.mxu0 0
  %5031 = vmatprep.subr.bf16.mxu0 0
  %5032 = vmatpush1.bf16.msra.mxu0 0
  %5033 = vmatprep.subr.bf16.mxu0 0
  %5034 = vmatpush1.bf16.msra.mxu0 0
  %5035 = vmatprep.subr.bf16.mxu0 0
  %5036 = vmatpush1.bf16.msra.mxu0 0
  %5037 = vmatprep.subr.bf16.mxu0 0
  %5038 = vmatpush1.bf16.msra.mxu0 0
  %5039 = vmatprep.subr.bf16.mxu0 0
  %5040 = vmatpush1.bf16.msra.mxu0 0
  %5041 = vmatprep.subr.bf16.mxu0 0
  %5042 = vmatpush1.bf16.msra.mxu0 0
  %5043 = vmatprep.mubr.bf16.mxu0 0
  %5044 = vmatmul.mubr.bf16.gmra.mrb[0].mxu0 %v4931
  %v5045 = vpop.f32.mrb[0].mxu0
  %v5046 = vadd.f32 0.0, %v5045
  %v5047 = vpop.f32.mrb[0].mxu0
  %v5048 = vpop.f32.mrb[0].mxu0
  %v5049 = vadd.f32 0.0, %v5048
  %v5050 = vpop.f32.mrb[0].mxu0
  %5051 = vmatprep.mubr.bf16.mxu0 0
  %5052 = vmatmul.mubr.bf16.gmra.mrb[0].mxu0 %v4932
  %v5053 = vpop.f32.mrb[0].mxu0
  %v5054 = vadd.f32 0.0, %v5053
  %v5055 = vpop.f32.mrb[0].mxu0
  %v5056 = vpop.f32.mrb[0].mxu0
  %v5057 = vadd.f32 0.0, %v5056
  %v5058 = vpop.f32.mrb[0].mxu0
  %5059 = vmatprep.mubr.bf16.mxu0 0
  %5060 = vmatmul.mubr.bf16.gmra.mrb[0].mxu0 %v4933
  %v5061 = vpop.f32.mrb[0].mxu0
  %v5062 = vadd.f32 0.0, %v5061
  %v5063 = vpop.f32.mrb[0].mxu0
  %v5064 = vpop.f32.mrb[0].mxu0
  %v5065 = vadd.f32 0.0, %v5064
  %v5066 = vpop.f32.mrb[0].mxu0
  %5067 = vmatprep.mubr.bf16.mxu0 0
  %5068 = vmatmul.mubr.bf16.gmra.mrb[0].mxu0 %v4934
  %v5069 = vpop.f32.mrb[0].mxu0
  %v5070 = vadd.f32 0.0, %v5069
  %v5071 = vpop.f32.mrb[0].mxu0
  %v5072 = vpop.f32.mrb[0].mxu0
  %v5073 = vadd.f32 0.0, %v5072
  %v5074 = vpop.f32.mrb[0].mxu0
  %5075 = vmatprep.mubr.bf16.mxu0 0
  %5076 = vmatmul.mubr.bf16.gmra.mrb[0].mxu0 %v4935
  %v5077 = vpop.f32.mrb[0].mxu0
  %v5078 = vadd.f32 0.0, %v5077
  %v5079 = vpop.f32.mrb[0].mxu0
  %v5080 = vpop.f32.mrb[0].mxu0
  %v5081 = vadd.f32 0.0, %v5080
  %v5082 = vpop.f32.mrb[0].mxu0
  %5083 = vmatprep.mubr.bf16.mxu0 0
  %5084 = vmatmul.mubr.bf16.gmra.mrb[0].mxu0 %v4936
  %v5085 = vpop.f32.mrb[0].mxu0
  %v5086 = vadd.f32 0.0, %v5085
  %v5087 = vpop.f32.mrb[0].mxu0
  %v5088 = vpop.f32.mrb[0].mxu0
  %v5089 = vadd.f32 0.0, %v5088
  %v5090 = vpop.f32.mrb[0].mxu0
  %5091 = vmatprep.mubr.bf16.mxu0 0
  %5092 = vmatmul.mubr.bf16.gmra.mrb[0].mxu0 %v4937
  %v5093 = vpop.f32.mrb[0].mxu0
  %v5094 = vadd.f32 0.0, %v5093
  %v5095 = vpop.f32.mrb[0].mxu0
  %v5096 = vpop.f32.mrb[0].mxu0
  %v5097 = vadd.f32 0.0, %v5096
  %v5098 = vpop.f32.mrb[0].mxu0
  %5099 = vmatprep.mubr.bf16.mxu0 0
  %5100 = vmatmul.mubr.bf16.gmra.mrb[0].mxu0 %v4938
  %v5101 = vpop.f32.mrb[0].mxu0
  %v5102 = vadd.f32 0.0, %v5101
  %v5103 = vpop.f32.mrb[0].mxu0
  %v5104 = vpop.f32.mrb[0].mxu0
  %v5105 = vadd.f32 0.0, %v5104
  %v5106 = vpop.f32.mrb[0].mxu0
  %5107 = vmatprep.mubr.bf16.mxu0 0
  %5108 = vmatmul.mubr.bf16.gmra.mrb[0].mxu0 %v4939
  %v5109 = vpop.f32.mrb[0].mxu0
  %v5110 = vadd.f32 0.0, %v5109
  %v5111 = vpop.f32.mrb[0].mxu0
  %v5112 = vpop.f32.mrb[0].mxu0
  %v5113 = vadd.f32 0.0, %v5112
  %v5114 = vpop.f32.mrb[0].mxu0
  %5115 = vmatprep.mubr.bf16.mxu0 0
  %5116 = vmatmul.mubr.bf16.gmra.mrb[0].mxu0 %v4940
  %v5117 = vpop.f32.mrb[0].mxu0
  %v5118 = vadd.f32 0.0, %v5117
  %v5119 = vpop.f32.mrb[0].mxu0
  %v5120 = vpop.f32.mrb[0].mxu0
  %v5121 = vadd.f32 0.0, %v5120
  %v5122 = vpop.f32.mrb[0].mxu0
  %5123 = vmatprep.mubr.bf16.mxu0 0
  %5124 = vmatmul.mubr.bf16.gmra.mrb[0].mxu0 %v4941
  %v5125 = vpop.f32.mrb[0].mxu0
  %v5126 = vadd.f32 0.0, %v5125
  %v5127 = vpop.f32.mrb[0].mxu0
  %v5128 = vpop.f32.mrb[0].mxu0
  %v5129 = vadd.f32 0.0, %v5128
  %v5130 = vpop.f32.mrb[0].mxu0
  %5131 = vmatprep.mubr.bf16.mxu0 0
  %5132 = vmatmul.mubr.bf16.gmra.mrb[0].mxu0 %v4942
  %v5133 = vpop.f32.mrb[0].mxu0
  %v5134 = vadd.f32 0.0, %v5133
  %v5135 = vpop.f32.mrb[0].mxu0
  %v5136 = vpop.f32.mrb[0].mxu0
  %v5137 = vadd.f32 0.0, %v5136
  %v5138 = vpop.f32.mrb[0].mxu0
  %5139 = vmatprep.mubr.bf16.mxu0 0
  %5140 = vmatmul.mubr.bf16.gmra.mrb[0].mxu0 %v4943
  %v5141 = vpop.f32.mrb[0].mxu0
  %v5142 = vadd.f32 0.0, %v5141
  %v5143 = vpop.f32.mrb[0].mxu0
  %v5144 = vpop.f32.mrb[0].mxu0
  %v5145 = vadd.f32 0.0, %v5144
  %v5146 = vpop.f32.mrb[0].mxu0
  %5147 = vmatprep.mubr.bf16.mxu0 0
  %5148 = vmatmul.mubr.bf16.gmra.mrb[0].mxu0 %v4944
  %v5149 = vpop.f32.mrb[0].mxu0
  %v5150 = vadd.f32 0.0, %v5149
  %v5151 = vpop.f32.mrb[0].mxu0
  %v5152 = vpop.f32.mrb[0].mxu0
  %v5153 = vadd.f32 0.0, %v5152
  %v5154 = vpop.f32.mrb[0].mxu0
  %5155 = vmatprep.mubr.bf16.mxu0 0
  %5156 = vmatmul.mubr.bf16.gmra.mrb[0].mxu0 %v4945
  %v5157 = vpop.f32.mrb[0].mxu0
  %v5158 = vadd.f32 0.0, %v5157
  %v5159 = vpop.f32.mrb[0].mxu0
  %v5160 = vpop.f32.mrb[0].mxu0
  %v5161 = vadd.f32 0.0, %v5160
  %v5162 = vpop.f32.mrb[0].mxu0
  %5163 = vmatprep.mubr.bf16.mxu0 0
  %5164 = vmatmul.mubr.bf16.gmra.mrb[0].mxu0 %v4946
  %v5165 = vpop.f32.mrb[0].mxu0
  %v5166 = vadd.f32 0.0, %v5165
  %v5167 = vpop.f32.mrb[0].mxu0
  %v5168 = vpop.f32.mrb[0].mxu0
  %v5169 = vadd.f32 0.0, %v5168
  %v5170 = vpop.f32.mrb[0].mxu0
  %5171 = vdwg.mxu0
  %v5172 = vld [vmem:[%s4] sm:$0xff]
  %v5173 = vpack.c.bf16 %v5049, %v5046
  %v5174 = vpack.c.bf16 %v5057, %v5054
  %v5175 = vpack.c.bf16 %v5065, %v5062
  %v5176 = vpack.c.bf16 %v5073, %v5070
  %v5177 = vpack.c.bf16 %v5081, %v5078
  %v5178 = vpack.c.bf16 %v5089, %v5086
  %v5179 = vpack.c.bf16 %v5097, %v5094
  %v5180 = vpack.c.bf16 %v5105, %v5102
  %v5181 = vpack.c.bf16 %v5113, %v5110
  %v5182 = vpack.c.bf16 %v5121, %v5118
  %v5183 = vpack.c.bf16 %v5129, %v5126
  %v5184 = vpack.c.bf16 %v5137, %v5134
  %v5185 = vpack.c.bf16 %v5145, %v5142
  %v5186 = vpack.c.bf16 %v5153, %v5150
  %v5187 = vpack.c.bf16 %v5161, %v5158
  %v5188 = vpack.c.bf16 %v5169, %v5166
  %v5190 = vunpack.c.l.b16 %v5172
  %v5191 = vunpack.c.h.b16 %v5172
  %v5192 = vpack.c.b16 %v5190, %v5190
  %v5193 = vpack.c.b16 %v5191, %v5191
  %5196 = vmatprep.subr.bf16.mxu0 0
  %5197 = vmatpush1.bf16.msra.mxu0 %v5173
  %5198 = vmatprep.subr.bf16.mxu0 0
  %5199 = vmatpush1.bf16.msra.mxu0 %v5174
  %5200 = vmatprep.subr.bf16.mxu0 0
  %5201 = vmatpush1.bf16.msra.mxu0 %v5175
  %5202 = vmatprep.subr.bf16.mxu0 0
  %5203 = vmatpush1.bf16.msra.mxu0 %v5176
  %5204 = vmatprep.subr.bf16.mxu0 0
  %5205 = vmatpush1.bf16.msra.mxu0 %v5177
  %5206 = vmatprep.subr.bf16.mxu0 0
  %5207 = vmatpush1.bf16.msra.mxu0 %v5178
  %5208 = vmatprep.subr.bf16.mxu0 0
  %5209 = vmatpush1.bf16.msra.mxu0 %v5179
  %5210 = vmatprep.subr.bf16.mxu0 0
  %5211 = vmatpush1.bf16.msra.mxu0 %v5180
  %5212 = vmatprep.subr.bf16.mxu0 0
  %5213 = vmatpush1.bf16.msra.mxu0 %v5181
  %5214 = vmatprep.subr.bf16.mxu0 0
  %5215 = vmatpush1.bf16.msra.mxu0 %v5182
  %5216 = vmatprep.subr.bf16.mxu0 0
  %5217 = vmatpush1.bf16.msra.mxu0 %v5183
  %5218 = vmatprep.subr.bf16.mxu0 0
  %5219 = vmatpush1.bf16.msra.mxu0 %v5184
  %5220 = vmatprep.subr.bf16.mxu0 0
  %5221 = vmatpush1.bf16.msra.mxu0 %v5185
  %5222 = vmatprep.subr.bf16.mxu0 0
  %5223 = vmatpush1.bf16.msra.mxu0 %v5186
  %5224 = vmatprep.subr.bf16.mxu0 0
  %5225 = vmatpush1.bf16.msra.mxu0 %v5187
  %5226 = vmatprep.subr.bf16.mxu0 0
  %5227 = vmatpush1.bf16.msra.mxu0 %v5188
  %5228 = vmatprep.mubr.bf16.mxu0 %v5193
  %5229 = vmatmul.mubr.bf16.gmra.mrb[0].mxu0 %v5192
  %v5230 = vpop.f32.mrb[0].mxu0
  %v5231 = vadd.f32 0.0, %v5230
  %v5232 = vpop.f32.mrb[0].mxu0
  %v5233 = vpop.f32.mrb[0].mxu0
  %v5234 = vpop.f32.mrb[0].mxu0
  %5235 = vdwg.mxu0
  %v5236 = vmul.f32 %v5231, 0.00048828125
  %v5237 = vpack.c.bf16 %v5236, %v5236
  %v5238 = vld [vmem:[%s5] sm:$0xf]
  %v5239 = vld [vmem:[%s5 + $0x4] sm:$0xf]
  %v5240 = vld [vmem:[%s5 + $0x8] sm:$0xf]
  %v5241 = vld [vmem:[%s5 + $0xc] sm:$0xf]
  %v5242 = vld [vmem:[%s5 + $0x10] sm:$0xf]
  %v5243 = vld [vmem:[%s5 + $0x14] sm:$0xf]
  %v5244 = vld [vmem:[%s5 + $0x18] sm:$0xf]
  %v5245 = vld [vmem:[%s5 + $0x1c] sm:$0xf]
  %v5246 = vld [vmem:[%s5 + $0x20] sm:$0xf]
  %v5247 = vld [vmem:[%s5 + $0x24] sm:$0xf]
  %v5248 = vld [vmem:[%s5 + $0x28] sm:$0xf]
  %v5249 = vld [vmem:[%s5 + $0x2c] sm:$0xf]
  %v5250 = vld [vmem:[%s5 + $0x30] sm:$0xf]
  %v5251 = vld [vmem:[%s5 + $0x34] sm:$0xf]
  %v5252 = vld [vmem:[%s5 + $0x38] sm:$0xf]
  %v5253 = vld [vmem:[%s5 + $0x3c] sm:$0xf]
  %v5254 = vld [vmem:[%s6] sm:$0x1]
  %v5256 = vlaneseq
  %v5257 = vshrl.u32 %v5256, 7
  %v5258 = vsub.s32 0, %v5257
  %v5259 = vrot.slane %v5254, %v5258
  %v5277 = vunpack.c.l.b16 %v5238
  %v5278 = vunpack.c.l.b16 %v5239
  %v5279 = vunpack.c.l.b16 %v5240
  %v5280 = vunpack.c.l.b16 %v5241
  %v5281 = vunpack.c.l.b16 %v5242
  %v5282 = vunpack.c.l.b16 %v5243
  %v5283 = vunpack.c.l.b16 %v5244
  %v5284 = vunpack.c.l.b16 %v5245
  %v5285 = vunpack.c.l.b16 %v5246
  %v5286 = vunpack.c.l.b16 %v5247
  %v5287 = vunpack.c.l.b16 %v5248
  %v5288 = vunpack.c.l.b16 %v5249
  %v5289 = vunpack.c.l.b16 %v5250
  %v5290 = vunpack.c.l.b16 %v5251
  %v5291 = vunpack.c.l.b16 %v5252
  %v5292 = vunpack.c.l.b16 %v5253
  %v5293 = vpack.c.b16 %v5278, %v5277
  %v5294 = vpack.c.b16 %v5280, %v5279
  %v5295 = vpack.c.b16 %v5282, %v5281
  %v5296 = vpack.c.b16 %v5284, %v5283
  %v5297 = vpack.c.b16 %v5286, %v5285
  %v5298 = vpack.c.b16 %v5288, %v5287
  %v5299 = vpack.c.b16 %v5290, %v5289
  %v5300 = vpack.c.b16 %v5292, %v5291
  %5309 = vmatprep.subr.bf16.mxu0 0
  %5310 = vmatpush1.bf16.msra.mxu0 %v5293
  %5311 = vmatprep.subr.bf16.mxu0 0
  %5312 = vmatpush1.bf16.msra.mxu0 %v5294
  %5313 = vmatprep.subr.bf16.mxu0 0
  %5314 = vmatpush1.bf16.msra.mxu0 %v5295
  %5315 = vmatprep.subr.bf16.mxu0 0
  %5316 = vmatpush1.bf16.msra.mxu0 %v5296
  %5317 = vmatprep.subr.bf16.mxu0 0
  %5318 = vmatpush1.bf16.msra.mxu0 %v5297
  %5319 = vmatprep.subr.bf16.mxu0 0
  %5320 = vmatpush1.bf16.msra.mxu0 %v5298
  %5321 = vmatprep.subr.bf16.mxu0 0
  %5322 = vmatpush1.bf16.msra.mxu0 %v5299
  %5323 = vmatprep.subr.bf16.mxu0 0
  %5324 = vmatpush1.bf16.msra.mxu0 %v5300
  %5325 = vmatprep.subr.bf16.mxu0 0
  %5326 = vmatpush1.bf16.msra.mxu0 0
  %5327 = vmatprep.subr.bf16.mxu0 0
  %5328 = vmatpush1.bf16.msra.mxu0 0
  %5329 = vmatprep.subr.bf16.mxu0 0
  %5330 = vmatpush1.bf16.msra.mxu0 0
  %5331 = vmatprep.subr.bf16.mxu0 0
  %5332 = vmatpush1.bf16.msra.mxu0 0
  %5333 = vmatprep.subr.bf16.mxu0 0
  %5334 = vmatpush1.bf16.msra.mxu0 0
  %5335 = vmatprep.subr.bf16.mxu0 0
  %5336 = vmatpush1.bf16.msra.mxu0 0
  %5337 = vmatprep.subr.bf16.mxu0 0
  %5338 = vmatpush1.bf16.msra.mxu0 0
  %5339 = vmatprep.subr.bf16.mxu0 0
  %5340 = vmatpush1.bf16.msra.mxu0 0
  %5341 = vmatprep.mubr.bf16.mxu0 0
  %5342 = vmatmul.mubr.bf16.gmra.mrb[0].mxu0 %v5237
  %v5343 = vpop.f32.mrb[0].mxu0
  %v5344 = vadd.f32 %v5259, %v5343
  %v5345 = vpop.f32.mrb[0].mxu0
  %v5346 = vpop.f32.mrb[0].mxu0
  %v5347 = vpop.f32.mrb[0].mxu0
  %5348 = vdwg.mxu0
  %v5349 = vpack.c.bf16 %v5344, %v5344
  %v5350 = vld [vmem:[%s7] sm:$0xff]
  %v5351 = vld [vmem:[%s7 + $0x8] sm:$0xff]
  %v5352 = vld [vmem:[%s7 + $0x10] sm:$0xff]
  %v5353 = vld [vmem:[%s7 + $0x18] sm:$0xff]
  %v5354 = vld [vmem:[%s7 + $0x20] sm:$0xff]
  %v5355 = vld [vmem:[%s7 + $0x28] sm:$0xff]
  %v5356 = vld [vmem:[%s7 + $0x30] sm:$0xff]
  %v5357 = vld [vmem:[%s7 + $0x38] sm:$0xff]
  %v5358 = vld [vmem:[%s7 + $0x40] sm:$0xff]
  %v5359 = vld [vmem:[%s7 + $0x48] sm:$0xff]
  %v5360 = vld [vmem:[%s7 + $0x50] sm:$0xff]
  %v5361 = vld [vmem:[%s7 + $0x58] sm:$0xff]
  %v5362 = vld [vmem:[%s7 + $0x60] sm:$0xff]
  %v5363 = vld [vmem:[%s7 + $0x68] sm:$0xff]
  %v5364 = vld [vmem:[%s7 + $0x70] sm:$0xff]
  %v5365 = vld [vmem:[%s7 + $0x78] sm:$0xff]
  %v5366 = vld [vmem:[%s7 + $0x80] sm:$0xff]
  %v5367 = vld [vmem:[%s7 + $0x88] sm:$0xff]
  %v5368 = vld [vmem:[%s7 + $0x90] sm:$0xff]
  %v5369 = vld [vmem:[%s7 + $0x98] sm:$0xff]
  %v5370 = vld [vmem:[%s7 + $0xa0] sm:$0xff]
  %v5371 = vld [vmem:[%s7 + $0xa8] sm:$0xff]
  %v5372 = vld [vmem:[%s7 + $0xb0] sm:$0xff]
  %v5373 = vld [vmem:[%s7 + $0xb8] sm:$0xff]
  %v5374 = vld [vmem:[%s7 + $0xc0] sm:$0xff]
  %v5375 = vld [vmem:[%s7 + $0xc8] sm:$0xff]
  %v5376 = vld [vmem:[%s7 + $0xd0] sm:$0xff]
  %v5377 = vld [vmem:[%s7 + $0xd8] sm:$0xff]
  %v5378 = vld [vmem:[%s7 + $0xe0] sm:$0xff]
  %v5379 = vld [vmem:[%s7 + $0xe8] sm:$0xff]
  %v5380 = vld [vmem:[%s7 + $0xf0] sm:$0xff]
  %v5381 = vld [vmem:[%s7 + $0xf8] sm:$0xff]
  %v5382 = vld [vmem:[%s8] sm:$0xf]
  %v5384 = vlaneseq
  %v5385 = vshrl.u32 %v5384, 7
  %v5386 = vsub.s32 0, %v5385
  %v5387 = vrot.slane %v5382, %v5386
  %v5388 = vlaneseq
  %v5389 = vshrl.u32 %v5388, 7
  %v5390 = vsub.s32 1, %v5389
  %v5391 = vrot.slane %v5382, %v5390
  %v5392 = vlaneseq
  %v5393 = vshrl.u32 %v5392, 7
  %v5394 = vsub.s32 2, %v5393
  %v5395 = vrot.slane %v5382, %v5394
  %v5396 = vlaneseq
  %v5397 = vshrl.u32 %v5396, 7
  %v5398 = vsub.s32 3, %v5397
  %v5399 = vrot.slane %v5382, %v5398
  %v5436 = vunpack.c.l.b16 %v5350
  %v5437 = vunpack.c.h.b16 %v5350
  %v5438 = vunpack.c.l.b16 %v5351
  %v5439 = vunpack.c.h.b16 %v5351
  %v5440 = vunpack.c.l.b16 %v5352
  %v5441 = vunpack.c.h.b16 %v5352
  %v5442 = vunpack.c.l.b16 %v5353
  %v5443 = vunpack.c.h.b16 %v5353
  %v5444 = vunpack.c.l.b16 %v5354
  %v5445 = vunpack.c.h.b16 %v5354
  %v5446 = vunpack.c.l.b16 %v5355
  %v5447 = vunpack.c.h.b16 %v5355
  %v5448 = vunpack.c.l.b16 %v5356
  %v5449 = vunpack.c.h.b16 %v5356
  %v5450 = vunpack.c.l.b16 %v5357
  %v5451 = vunpack.c.h.b16 %v5357
  %v5452 = vunpack.c.l.b16 %v5358
  %v5453 = vunpack.c.h.b16 %v5358
  %v5454 = vunpack.c.l.b16 %v5359
  %v5455 = vunpack.c.h.b16 %v5359
  %v5456 = vunpack.c.l.b16 %v5360
  %v5457 = vunpack.c.h.b16 %v5360
  %v5458 = vunpack.c.l.b16 %v5361
  %v5459 = vunpack.c.h.b16 %v5361
  %v5460 = vunpack.c.l.b16 %v5362
  %v5461 = vunpack.c.h.b16 %v5362
  %v5462 = vunpack.c.l.b16 %v5363
  %v5463 = vunpack.c.h.b16 %v5363
  %v5464 = vunpack.c.l.b16 %v5364
  %v5465 = vunpack.c.h.b16 %v5364
  %v5466 = vunpack.c.l.b16 %v5365
  %v5467 = vunpack.c.h.b16 %v5365
  %v5468 = vunpack.c.l.b16 %v5366
  %v5469 = vunpack.c.h.b16 %v5366
  %v5470 = vunpack.c.l.b16 %v5367
  %v5471 = vunpack.c.h.b16 %v5367
  %v5472 = vunpack.c.l.b16 %v5368
  %v5473 = vunpack.c.h.b16 %v5368
  %v5474 = vunpack.c.l.b16 %v5369
  %v5475 = vunpack.c.h.b16 %v5369
  %v5476 = vunpack.c.l.b16 %v5370
  %v5477 = vunpack.c.h.b16 %v5370
  %v5478 = vunpack.c.l.b16 %v5371
  %v5479 = vunpack.c.h.b16 %v5371
  %v5480 = vunpack.c.l.b16 %v5372
  %v5481 = vunpack.c.h.b16 %v5372
  %v5482 = vunpack.c.l.b16 %v5373
  %v5483 = vunpack.c.h.b16 %v5373
  %v5484 = vunpack.c.l.b16 %v5374
  %v5485 = vunpack.c.h.b16 %v5374
  %v5486 = vunpack.c.l.b16 %v5375
  %v5487 = vunpack.c.h.b16 %v5375
  %v5488 = vunpack.c.l.b16 %v5376
  %v5489 = vunpack.c.h.b16 %v5376
  %v5490 = vunpack.c.l.b16 %v5377
  %v5491 = vunpack.c.h.b16 %v5377
  %v5492 = vunpack.c.l.b16 %v5378
  %v5493 = vunpack.c.h.b16 %v5378
  %v5494 = vunpack.c.l.b16 %v5379
  %v5495 = vunpack.c.h.b16 %v5379
  %v5496 = vunpack.c.l.b16 %v5380
  %v5497 = vunpack.c.h.b16 %v5380
  %v5498 = vunpack.c.l.b16 %v5381
  %v5499 = vunpack.c.h.b16 %v5381
  %v5500 = vpack.c.b16 %v5440, %v5436
  %v5501 = vpack.c.b16 %v5441, %v5437
  %v5502 = vpack.c.b16 %v5442, %v5438
  %v5503 = vpack.c.b16 %v5443, %v5439
  %v5504 = vpack.c.b16 %v5448, %v5444
  %v5505 = vpack.c.b16 %v5449, %v5445
  %v5506 = vpack.c.b16 %v5450, %v5446
  %v5507 = vpack.c.b16 %v5451, %v5447
  %v5508 = vpack.c.b16 %v5456, %v5452
  %v5509 = vpack.c.b16 %v5457, %v5453
  %v5510 = vpack.c.b16 %v5458, %v5454
  %v5511 = vpack.c.b16 %v5459, %v5455
  %v5512 = vpack.c.b16 %v5464, %v5460
  %v5513 = vpack.c.b16 %v5465, %v5461
  %v5514 = vpack.c.b16 %v5466, %v5462
  %v5515 = vpack.c.b16 %v5467, %v5463
  %v5516 = vpack.c.b16 %v5472, %v5468
  %v5517 = vpack.c.b16 %v5473, %v5469
  %v5518 = vpack.c.b16 %v5474, %v5470
  %v5519 = vpack.c.b16 %v5475, %v5471
  %v5520 = vpack.c.b16 %v5480, %v5476
  %v5521 = vpack.c.b16 %v5481, %v5477
  %v5522 = vpack.c.b16 %v5482, %v5478
  %v5523 = vpack.c.b16 %v5483, %v5479
  %v5524 = vpack.c.b16 %v5488, %v5484
  %v5525 = vpack.c.b16 %v5489, %v5485
  %v5526 = vpack.c.b16 %v5490, %v5486
  %v5527 = vpack.c.b16 %v5491, %v5487
  %v5528 = vpack.c.b16 %v5496, %v5492
  %v5529 = vpack.c.b16 %v5497, %v5493
  %v5530 = vpack.c.b16 %v5498, %v5494
  %v5531 = vpack.c.b16 %v5499, %v5495
  %5564 = vmatprep.subr.bf16.mxu0 %v5501
  %5565 = vmatpush1.bf16.msra.mxu0 %v5500
  %5566 = vmatprep.subr.bf16.mxu0 %v5505
  %5567 = vmatpush1.bf16.msra.mxu0 %v5504
  %5568 = vmatprep.subr.bf16.mxu0 %v5509
  %5569 = vmatpush1.bf16.msra.mxu0 %v5508
  %5570 = vmatprep.subr.bf16.mxu0 %v5513
  %5571 = vmatpush1.bf16.msra.mxu0 %v5512
  %5572 = vmatprep.subr.bf16.mxu0 %v5517
  %5573 = vmatpush1.bf16.msra.mxu0 %v5516
  %5574 = vmatprep.subr.bf16.mxu0 %v5521
  %5575 = vmatpush1.bf16.msra.mxu0 %v5520
  %5576 = vmatprep.subr.bf16.mxu0 %v5525
  %5577 = vmatpush1.bf16.msra.mxu0 %v5524
  %5578 = vmatprep.subr.bf16.mxu0 %v5529
  %5579 = vmatpush1.bf16.msra.mxu0 %v5528
  %5580 = vmatprep.subr.bf16.mxu0 0
  %5581 = vmatpush1.bf16.msra.mxu0 0
  %5582 = vmatprep.subr.bf16.mxu0 0
  %5583 = vmatpush1.bf16.msra.mxu0 0
  %5584 = vmatprep.subr.bf16.mxu0 0
  %5585 = vmatpush1.bf16.msra.mxu0 0
  %5586 = vmatprep.subr.bf16.mxu0 0
  %5587 = vmatpush1.bf16.msra.mxu0 0
  %5588 = vmatprep.subr.bf16.mxu0 0
  %5589 = vmatpush1.bf16.msra.mxu0 0
  %5590 = vmatprep.subr.bf16.mxu0 0
  %5591 = vmatpush1.bf16.msra.mxu0 0
  %5592 = vmatprep.subr.bf16.mxu0 0
  %5593 = vmatpush1.bf16.msra.mxu0 0
  %5594 = vmatprep.subr.bf16.mxu0 0
  %5595 = vmatpush1.bf16.msra.mxu0 0
  %5596 = vmatprep.mubr.bf16.mxu0 0
  %5597 = vmatmul.mubr.bf16.gmra.mrb[0].mxu0 %v5349
  %v5598 = vpop.f32.mrb[0].mxu0
  %v5599 = vadd.f32 %v5387, %v5598
  %v5600 = vpop.f32.mrb[0].mxu0
  %v5601 = vadd.f32 %v5391, %v5600
  %v5602 = vpop.f32.mrb[0].mxu0
  %v5603 = vpop.f32.mrb[0].mxu0
  %5604 = vdwg.mxu0
  %5605 = vmatprep.subr.bf16.mxu0 %v5503
  %5606 = vmatpush1.bf16.msra.mxu0 %v5502
  %5607 = vmatprep.subr.bf16.mxu0 %v5507
  %5608 = vmatpush1.bf16.msra.mxu0 %v5506
  %5609 = vmatprep.subr.bf16.mxu0 %v5511
  %5610 = vmatpush1.bf16.msra.mxu0 %v5510
  %5611 = vmatprep.subr.bf16.mxu0 %v5515
  %5612 = vmatpush1.bf16.msra.mxu0 %v5514
  %5613 = vmatprep.subr.bf16.mxu0 %v5519
  %5614 = vmatpush1.bf16.msra.mxu0 %v5518
  %5615 = vmatprep.subr.bf16.mxu0 %v5523
  %5616 = vmatpush1.bf16.msra.mxu0 %v5522
  %5617 = vmatprep.subr.bf16.mxu0 %v5527
  %5618 = vmatpush1.bf16.msra.mxu0 %v5526
  %5619 = vmatprep.subr.bf16.mxu0 %v5531
  %5620 = vmatpush1.bf16.msra.mxu0 %v5530
  %5621 = vmatprep.subr.bf16.mxu0 0
  %5622 = vmatpush1.bf16.msra.mxu0 0
  %5623 = vmatprep.subr.bf16.mxu0 0
  %5624 = vmatpush1.bf16.msra.mxu0 0
  %5625 = vmatprep.subr.bf16.mxu0 0
  %5626 = vmatpush1.bf16.msra.mxu0 0
  %5627 = vmatprep.subr.bf16.mxu0 0
  %5628 = vmatpush1.bf16.msra.mxu0 0
  %5629 = vmatprep.subr.bf16.mxu0 0
  %5630 = vmatpush1.bf16.msra.mxu0 0
  %5631 = vmatprep.subr.bf16.mxu0 0
  %5632 = vmatpush1.bf16.msra.mxu0 0
  %5633 = vmatprep.subr.bf16.mxu0 0
  %5634 = vmatpush1.bf16.msra.mxu0 0
  %5635 = vmatprep.subr.bf16.mxu0 0
  %5636 = vmatpush1.bf16.msra.mxu0 0
  %5637 = vmatprep.mubr.bf16.mxu0 0
  %5638 = vmatmul.mubr.bf16.gmra.mrb[0].mxu0 %v5349
  %v5639 = vpop.f32.mrb[0].mxu0
  %v5640 = vadd.f32 %v5395, %v5639
  %v5641 = vpop.f32.mrb[0].mxu0
  %v5642 = vadd.f32 %v5399, %v5641
  %v5643 = vpop.f32.mrb[0].mxu0
  %v5644 = vpop.f32.mrb[0].mxu0
  %5645 = vdwg.mxu0
  %v5646 = vpack.c.bf16 %v5599, %v5599
  %v5647 = vpack.c.bf16 %v5601, %v5601
  %v5648 = vpack.c.bf16 %v5640, %v5640
  %v5649 = vpack.c.bf16 %v5642, %v5642
  %v5650 = vld [vmem:[%s9] sm:$0xff]
  %v5651 = vld [vmem:[%s9 + $0x8] sm:$0xff]
  %v5652 = vld [vmem:[%s9 + $0x10] sm:$0xff]
  %v5653 = vld [vmem:[%s9 + $0x18] sm:$0xff]
  %v5654 = vld [vmem:[%s9 + $0x20] sm:$0xff]
  %v5655 = vld [vmem:[%s9 + $0x28] sm:$0xff]
  %v5656 = vld [vmem:[%s9 + $0x30] sm:$0xff]
  %v5657 = vld [vmem:[%s9 + $0x38] sm:$0xff]
  %v5658 = vld [vmem:[%s9 + $0x40] sm:$0xff]
  %v5659 = vld [vmem:[%s9 + $0x48] sm:$0xff]
  %v5660 = vld [vmem:[%s9 + $0x50] sm:$0xff]
  %v5661 = vld [vmem:[%s9 + $0x58] sm:$0xff]
  %v5662 = vld [vmem:[%s9 + $0x60] sm:$0xff]
  %v5663 = vld [vmem:[%s9 + $0x68] sm:$0xff]
  %v5664 = vld [vmem:[%s9 + $0x70] sm:$0xff]
  %v5665 = vld [vmem:[%s9 + $0x78] sm:$0xff]
  %v5666 = vld [vmem:[%s9 + $0x80] sm:$0xff]
  %v5667 = vld [vmem:[%s9 + $0x88] sm:$0xff]
  %v5668 = vld [vmem:[%s9 + $0x90] sm:$0xff]
  %v5669 = vld [vmem:[%s9 + $0x98] sm:$0xff]
  %v5670 = vld [vmem:[%s9 + $0xa0] sm:$0xff]
  %v5671 = vld [vmem:[%s9 + $0xa8] sm:$0xff]
  %v5672 = vld [vmem:[%s9 + $0xb0] sm:$0xff]
  %v5673 = vld [vmem:[%s9 + $0xb8] sm:$0xff]
  %v5674 = vld [vmem:[%s9 + $0xc0] sm:$0xff]
  %v5675 = vld [vmem:[%s9 + $0xc8] sm:$0xff]
  %v5676 = vld [vmem:[%s9 + $0xd0] sm:$0xff]
  %v5677 = vld [vmem:[%s9 + $0xd8] sm:$0xff]
  %v5678 = vld [vmem:[%s9 + $0xe0] sm:$0xff]
  %v5679 = vld [vmem:[%s9 + $0xe8] sm:$0xff]
  %v5680 = vld [vmem:[%s9 + $0xf0] sm:$0xff]
  %v5681 = vld [vmem:[%s9 + $0xf8] sm:$0xff]
  %v5682 = vld [vmem:[%s9 + $0x100] sm:$0xff]
  %v5683 = vld [vmem:[%s9 + $0x108] sm:$0xff]
  %v5684 = vld [vmem:[%s9 + $0x110] sm:$0xff]
  %v5685 = vld [vmem:[%s9 + $0x118] sm:$0xff]
  %v5686 = vld [vmem:[%s9 + $0x120] sm:$0xff]
  %v5687 = vld [vmem:[%s9 + $0x128] sm:$0xff]
  %v5688 = vld [vmem:[%s9 + $0x130] sm:$0xff]
  %v5689 = vld [vmem:[%s9 + $0x138] sm:$0xff]
  %v5690 = vld [vmem:[%s9 + $0x140] sm:$0xff]
  %v5691 = vld [vmem:[%s9 + $0x148] sm:$0xff]
  %v5692 = vld [vmem:[%s9 + $0x150] sm:$0xff]
  %v5693 = vld [vmem:[%s9 + $0x158] sm:$0xff]
  %v5694 = vld [vmem:[%s9 + $0x160] sm:$0xff]
  %v5695 = vld [vmem:[%s9 + $0x168] sm:$0xff]
  %v5696 = vld [vmem:[%s9 + $0x170] sm:$0xff]
  %v5697 = vld [vmem:[%s9 + $0x178] sm:$0xff]
  %v5698 = vld [vmem:[%s9 + $0x180] sm:$0xff]
  %v5699 = vld [vmem:[%s9 + $0x188] sm:$0xff]
  %v5700 = vld [vmem:[%s9 + $0x190] sm:$0xff]
  %v5701 = vld [vmem:[%s9 + $0x198] sm:$0xff]
  %v5702 = vld [vmem:[%s9 + $0x1a0] sm:$0xff]
  %v5703 = vld [vmem:[%s9 + $0x1a8] sm:$0xff]
  %v5704 = vld [vmem:[%s9 + $0x1b0] sm:$0xff]
  %v5705 = vld [vmem:[%s9 + $0x1b8] sm:$0xff]
  %v5706 = vld [vmem:[%s9 + $0x1c0] sm:$0xff]
  %v5707 = vld [vmem:[%s9 + $0x1c8] sm:$0xff]
  %v5708 = vld [vmem:[%s9 + $0x1d0] sm:$0xff]
  %v5709 = vld [vmem:[%s9 + $0x1d8] sm:$0xff]
  %v5710 = vld [vmem:[%s9 + $0x1e0] sm:$0xff]
  %v5711 = vld [vmem:[%s9 + $0x1e8] sm:$0xff]
  %v5712 = vld [vmem:[%s9 + $0x1f0] sm:$0xff]
  %v5713 = vld [vmem:[%s9 + $0x1f8] sm:$0xff]
  %v5714 = vld [vmem:[%s9 + $0x200] sm:$0xff]
  %v5715 = vld [vmem:[%s9 + $0x208] sm:$0xff]
  %v5716 = vld [vmem:[%s9 + $0x210] sm:$0xff]
  %v5717 = vld [vmem:[%s9 + $0x218] sm:$0xff]
  %v5718 = vld [vmem:[%s9 + $0x220] sm:$0xff]
  %v5719 = vld [vmem:[%s9 + $0x228] sm:$0xff]
  %v5720 = vld [vmem:[%s9 + $0x230] sm:$0xff]
  %v5721 = vld [vmem:[%s9 + $0x238] sm:$0xff]
  %v5722 = vld [vmem:[%s9 + $0x240] sm:$0xff]
  %v5723 = vld [vmem:[%s9 + $0x248] sm:$0xff]
  %v5724 = vld [vmem:[%s9 + $0x250] sm:$0xff]
  %v5725 = vld [vmem:[%s9 + $0x258] sm:$0xff]
  %v5726 = vld [vmem:[%s9 + $0x260] sm:$0xff]
  %v5727 = vld [vmem:[%s9 + $0x268] sm:$0xff]
  %v5728 = vld [vmem:[%s9 + $0x270] sm:$0xff]
  %v5729 = vld [vmem:[%s9 + $0x278] sm:$0xff]
  %v5730 = vld [vmem:[%s9 + $0x280] sm:$0xff]
  %v5731 = vld [vmem:[%s9 + $0x288] sm:$0xff]
  %v5732 = vld [vmem:[%s9 + $0x290] sm:$0xff]
  %v5733 = vld [vmem:[%s9 + $0x298] sm:$0xff]
  %v5734 = vld [vmem:[%s9 + $0x2a0] sm:$0xff]
  %v5735 = vld [vmem:[%s9 + $0x2a8] sm:$0xff]
  %v5736 = vld [vmem:[%s9 + $0x2b0] sm:$0xff]
  %v5737 = vld [vmem:[%s9 + $0x2b8] sm:$0xff]
  %v5738 = vld [vmem:[%s9 + $0x2c0] sm:$0xff]
  %v5739 = vld [vmem:[%s9 + $0x2c8] sm:$0xff]
  %v5740 = vld [vmem:[%s9 + $0x2d0] sm:$0xff]
  %v5741 = vld [vmem:[%s9 + $0x2d8] sm:$0xff]
  %v5742 = vld [vmem:[%s9 + $0x2e0] sm:$0xff]
  %v5743 = vld [vmem:[%s9 + $0x2e8] sm:$0xff]
  %v5744 = vld [vmem:[%s9 + $0x2f0] sm:$0xff]
  %v5745 = vld [vmem:[%s9 + $0x2f8] sm:$0xff]
  %v5746 = vld [vmem:[%s9 + $0x300] sm:$0xff]
  %v5747 = vld [vmem:[%s9 + $0x308] sm:$0xff]
  %v5748 = vld [vmem:[%s9 + $0x310] sm:$0xff]
  %v5749 = vld [vmem:[%s9 + $0x318] sm:$0xff]
  %v5750 = vld [vmem:[%s9 + $0x320] sm:$0xff]
  %v5751 = vld [vmem:[%s9 + $0x328] sm:$0xff]
  %v5752 = vld [vmem:[%s9 + $0x330] sm:$0xff]
  %v5753 = vld [vmem:[%s9 + $0x338] sm:$0xff]
  %v5754 = vld [vmem:[%s9 + $0x340] sm:$0xff]
  %v5755 = vld [vmem:[%s9 + $0x348] sm:$0xff]
  %v5756 = vld [vmem:[%s9 + $0x350] sm:$0xff]
  %v5757 = vld [vmem:[%s9 + $0x358] sm:$0xff]
  %v5758 = vld [vmem:[%s9 + $0x360] sm:$0xff]
  %v5759 = vld [vmem:[%s9 + $0x368] sm:$0xff]
  %v5760 = vld [vmem:[%s9 + $0x370] sm:$0xff]
  %v5761 = vld [vmem:[%s9 + $0x378] sm:$0xff]
  %v5762 = vld [vmem:[%s9 + $0x380] sm:$0xff]
  %v5763 = vld [vmem:[%s9 + $0x388] sm:$0xff]
  %v5764 = vld [vmem:[%s9 + $0x390] sm:$0xff]
  %v5765 = vld [vmem:[%s9 + $0x398] sm:$0xff]
  %v5766 = vld [vmem:[%s9 + $0x3a0] sm:$0xff]
  %v5767 = vld [vmem:[%s9 + $0x3a8] sm:$0xff]
  %v5768 = vld [vmem:[%s9 + $0x3b0] sm:$0xff]
  %v5769 = vld [vmem:[%s9 + $0x3b8] sm:$0xff]
  %v5770 = vld [vmem:[%s9 + $0x3c0] sm:$0xff]
  %v5771 = vld [vmem:[%s9 + $0x3c8] sm:$0xff]
  %v5772 = vld [vmem:[%s9 + $0x3d0] sm:$0xff]
  %v5773 = vld [vmem:[%s9 + $0x3d8] sm:$0xff]
  %v5774 = vld [vmem:[%s9 + $0x3e0] sm:$0xff]
  %v5775 = vld [vmem:[%s9 + $0x3e8] sm:$0xff]
  %v5776 = vld [vmem:[%s9 + $0x3f0] sm:$0xff]
  %v5777 = vld [vmem:[%s9 + $0x3f8] sm:$0xff]
  %v5778 = vld [vmem:[%s10] sm:$0xf]
  %v5780 = vlaneseq
  %v5781 = vshrl.u32 %v5780, 7
  %v5782 = vsub.s32 0, %v5781
  %v5783 = vrot.slane %v5778, %v5782
  %v5784 = vlaneseq
  %v5785 = vshrl.u32 %v5784, 7
  %v5786 = vsub.s32 1, %v5785
  %v5787 = vrot.slane %v5778, %v5786
  %v5788 = vlaneseq
  %v5789 = vshrl.u32 %v5788, 7
  %v5790 = vsub.s32 2, %v5789
  %v5791 = vrot.slane %v5778, %v5790
  %v5792 = vlaneseq
  %v5793 = vshrl.u32 %v5792, 7
  %v5794 = vsub.s32 3, %v5793
  %v5795 = vrot.slane %v5778, %v5794
  %v5928 = vunpack.c.l.b16 %v5650
  %v5929 = vunpack.c.h.b16 %v5650
  %v5930 = vunpack.c.l.b16 %v5651
  %v5931 = vunpack.c.h.b16 %v5651
  %v5932 = vunpack.c.l.b16 %v5652
  %v5933 = vunpack.c.h.b16 %v5652
  %v5934 = vunpack.c.l.b16 %v5653
  %v5935 = vunpack.c.h.b16 %v5653
  %v5936 = vunpack.c.l.b16 %v5654
  %v5937 = vunpack.c.h.b16 %v5654
  %v5938 = vunpack.c.l.b16 %v5655
  %v5939 = vunpack.c.h.b16 %v5655
  %v5940 = vunpack.c.l.b16 %v5656
  %v5941 = vunpack.c.h.b16 %v5656
  %v5942 = vunpack.c.l.b16 %v5657
  %v5943 = vunpack.c.h.b16 %v5657
  %v5944 = vunpack.c.l.b16 %v5658
  %v5945 = vunpack.c.h.b16 %v5658
  %v5946 = vunpack.c.l.b16 %v5659
  %v5947 = vunpack.c.h.b16 %v5659
  %v5948 = vunpack.c.l.b16 %v5660
  %v5949 = vunpack.c.h.b16 %v5660
  %v5950 = vunpack.c.l.b16 %v5661
  %v5951 = vunpack.c.h.b16 %v5661
  %v5952 = vunpack.c.l.b16 %v5662
  %v5953 = vunpack.c.h.b16 %v5662
  %v5954 = vunpack.c.l.b16 %v5663
  %v5955 = vunpack.c.h.b16 %v5663
  %v5956 = vunpack.c.l.b16 %v5664
  %v5957 = vunpack.c.h.b16 %v5664
  %v5958 = vunpack.c.l.b16 %v5665
  %v5959 = vunpack.c.h.b16 %v5665
  %v5960 = vunpack.c.l.b16 %v5666
  %v5961 = vunpack.c.h.b16 %v5666
  %v5962 = vunpack.c.l.b16 %v5667
  %v5963 = vunpack.c.h.b16 %v5667
  %v5964 = vunpack.c.l.b16 %v5668
  %v5965 = vunpack.c.h.b16 %v5668
  %v5966 = vunpack.c.l.b16 %v5669
  %v5967 = vunpack.c.h.b16 %v5669
  %v5968 = vunpack.c.l.b16 %v5670
  %v5969 = vunpack.c.h.b16 %v5670
  %v5970 = vunpack.c.l.b16 %v5671
  %v5971 = vunpack.c.h.b16 %v5671
  %v5972 = vunpack.c.l.b16 %v5672
  %v5973 = vunpack.c.h.b16 %v5672
  %v5974 = vunpack.c.l.b16 %v5673
  %v5975 = vunpack.c.h.b16 %v5673
  %v5976 = vunpack.c.l.b16 %v5674
  %v5977 = vunpack.c.h.b16 %v5674
  %v5978 = vunpack.c.l.b16 %v5675
  %v5979 = vunpack.c.h.b16 %v5675
  %v5980 = vunpack.c.l.b16 %v5676
  %v5981 = vunpack.c.h.b16 %v5676
  %v5982 = vunpack.c.l.b16 %v5677
  %v5983 = vunpack.c.h.b16 %v5677
  %v5984 = vunpack.c.l.b16 %v5678
  %v5985 = vunpack.c.h.b16 %v5678
  %v5986 = vunpack.c.l.b16 %v5679
  %v5987 = vunpack.c.h.b16 %v5679
  %v5988 = vunpack.c.l.b16 %v5680
  %v5989 = vunpack.c.h.b16 %v5680
  %v5990 = vunpack.c.l.b16 %v5681
  %v5991 = vunpack.c.h.b16 %v5681
  %v5992 = vunpack.c.l.b16 %v5682
  %v5993 = vunpack.c.h.b16 %v5682
  %v5994 = vunpack.c.l.b16 %v5683
  %v5995 = vunpack.c.h.b16 %v5683
  %v5996 = vunpack.c.l.b16 %v5684
  %v5997 = vunpack.c.h.b16 %v5684
  %v5998 = vunpack.c.l.b16 %v5685
  %v5999 = vunpack.c.h.b16 %v5685
  %v6000 = vunpack.c.l.b16 %v5686
  %v6001 = vunpack.c.h.b16 %v5686
  %v6002 = vunpack.c.l.b16 %v5687
  %v6003 = vunpack.c.h.b16 %v5687
  %v6004 = vunpack.c.l.b16 %v5688
  %v6005 = vunpack.c.h.b16 %v5688
  %v6006 = vunpack.c.l.b16 %v5689
  %v6007 = vunpack.c.h.b16 %v5689
  %v6008 = vunpack.c.l.b16 %v5690
  %v6009 = vunpack.c.h.b16 %v5690
  %v6010 = vunpack.c.l.b16 %v5691
  %v6011 = vunpack.c.h.b16 %v5691
  %v6012 = vunpack.c.l.b16 %v5692
  %v6013 = vunpack.c.h.b16 %v5692
  %v6014 = vunpack.c.l.b16 %v5693
  %v6015 = vunpack.c.h.b16 %v5693
  %v6016 = vunpack.c.l.b16 %v5694
  %v6017 = vunpack.c.h.b16 %v5694
  %v6018 = vunpack.c.l.b16 %v5695
  %v6019 = vunpack.c.h.b16 %v5695
  %v6020 = vunpack.c.l.b16 %v5696
  %v6021 = vunpack.c.h.b16 %v5696
  %v6022 = vunpack.c.l.b16 %v5697
  %v6023 = vunpack.c.h.b16 %v5697
  %v6024 = vunpack.c.l.b16 %v5698
  %v6025 = vunpack.c.h.b16 %v5698
  %v6026 = vunpack.c.l.b16 %v5699
  %v6027 = vunpack.c.h.b16 %v5699
  %v6028 = vunpack.c.l.b16 %v5700
  %v6029 = vunpack.c.h.b16 %v5700
  %v6030 = vunpack.c.l.b16 %v5701
  %v6031 = vunpack.c.h.b16 %v5701
  %v6032 = vunpack.c.l.b16 %v5702
  %v6033 = vunpack.c.h.b16 %v5702
  %v6034 = vunpack.c.l.b16 %v5703
  %v6035 = vunpack.c.h.b16 %v5703
  %v6036 = vunpack.c.l.b16 %v5704
  %v6037 = vunpack.c.h.b16 %v5704
  %v6038 = vunpack.c.l.b16 %v5705
  %v6039 = vunpack.c.h.b16 %v5705
  %v6040 = vunpack.c.l.b16 %v5706
  %v6041 = vunpack.c.h.b16 %v5706
  %v6042 = vunpack.c.l.b16 %v5707
  %v6043 = vunpack.c.h.b16 %v5707
  %v6044 = vunpack.c.l.b16 %v5708
  %v6045 = vunpack.c.h.b16 %v5708
  %v6046 = vunpack.c.l.b16 %v5709
  %v6047 = vunpack.c.h.b16 %v5709
  %v6048 = vunpack.c.l.b16 %v5710
  %v6049 = vunpack.c.h.b16 %v5710
  %v6050 = vunpack.c.l.b16 %v5711
  %v6051 = vunpack.c.h.b16 %v5711
  %v6052 = vunpack.c.l.b16 %v5712
  %v6053 = vunpack.c.h.b16 %v5712
  %v6054 = vunpack.c.l.b16 %v5713
  %v6055 = vunpack.c.h.b16 %v5713
  %v6056 = vunpack.c.l.b16 %v5714
  %v6057 = vunpack.c.h.b16 %v5714
  %v6058 = vunpack.c.l.b16 %v5715
  %v6059 = vunpack.c.h.b16 %v5715
  %v6060 = vunpack.c.l.b16 %v5716
  %v6061 = vunpack.c.h.b16 %v5716
  %v6062 = vunpack.c.l.b16 %v5717
  %v6063 = vunpack.c.h.b16 %v5717
  %v6064 = vunpack.c.l.b16 %v5718
  %v6065 = vunpack.c.h.b16 %v5718
  %v6066 = vunpack.c.l.b16 %v5719
  %v6067 = vunpack.c.h.b16 %v5719
  %v6068 = vunpack.c.l.b16 %v5720
  %v6069 = vunpack.c.h.b16 %v5720
  %v6070 = vunpack.c.l.b16 %v5721
  %v6071 = vunpack.c.h.b16 %v5721
  %v6072 = vunpack.c.l.b16 %v5722
  %v6073 = vunpack.c.h.b16 %v5722
  %v6074 = vunpack.c.l.b16 %v5723
  %v6075 = vunpack.c.h.b16 %v5723
  %v6076 = vunpack.c.l.b16 %v5724
  %v6077 = vunpack.c.h.b16 %v5724
  %v6078 = vunpack.c.l.b16 %v5725
  %v6079 = vunpack.c.h.b16 %v5725
  %v6080 = vunpack.c.l.b16 %v5726
  %v6081 = vunpack.c.h.b16 %v5726
  %v6082 = vunpack.c.l.b16 %v5727
  %v6083 = vunpack.c.h.b16 %v5727
  %v6084 = vunpack.c.l.b16 %v5728
  %v6085 = vunpack.c.h.b16 %v5728
  %v6086 = vunpack.c.l.b16 %v5729
  %v6087 = vunpack.c.h.b16 %v5729
  %v6088 = vunpack.c.l.b16 %v5730
  %v6089 = vunpack.c.h.b16 %v5730
  %v6090 = vunpack.c.l.b16 %v5731
  %v6091 = vunpack.c.h.b16 %v5731
  %v6092 = vunpack.c.l.b16 %v5732
  %v6093 = vunpack.c.h.b16 %v5732
  %v6094 = vunpack.c.l.b16 %v5733
  %v6095 = vunpack.c.h.b16 %v5733
  %v6096 = vunpack.c.l.b16 %v5734
  %v6097 = vunpack.c.h.b16 %v5734
  %v6098 = vunpack.c.l.b16 %v5735
  %v6099 = vunpack.c.h.b16 %v5735
  %v6100 = vunpack.c.l.b16 %v5736
  %v6101 = vunpack.c.h.b16 %v5736
  %v6102 = vunpack.c.l.b16 %v5737
  %v6103 = vunpack.c.h.b16 %v5737
  %v6104 = vunpack.c.l.b16 %v5738
  %v6105 = vunpack.c.h.b16 %v5738
  %v6106 = vunpack.c.l.b16 %v5739
  %v6107 = vunpack.c.h.b16 %v5739
  %v6108 = vunpack.c.l.b16 %v5740
  %v6109 = vunpack.c.h.b16 %v5740
  %v6110 = vunpack.c.l.b16 %v5741
  %v6111 = vunpack.c.h.b16 %v5741
  %v6112 = vunpack.c.l.b16 %v5742
  %v6113 = vunpack.c.h.b16 %v5742
  %v6114 = vunpack.c.l.b16 %v5743
  %v6115 = vunpack.c.h.b16 %v5743
  %v6116 = vunpack.c.l.b16 %v5744
  %v6117 = vunpack.c.h.b16 %v5744
  %v6118 = vunpack.c.l.b16 %v5745
  %v6119 = vunpack.c.h.b16 %v5745
  %v6120 = vunpack.c.l.b16 %v5746
  %v6121 = vunpack.c.h.b16 %v5746
  %v6122 = vunpack.c.l.b16 %v5747
  %v6123 = vunpack.c.h.b16 %v5747
  %v6124 = vunpack.c.l.b16 %v5748
  %v6125 = vunpack.c.h.b16 %v5748
  %v6126 = vunpack.c.l.b16 %v5749
  %v6127 = vunpack.c.h.b16 %v5749
  %v6128 = vunpack.c.l.b16 %v5750
  %v6129 = vunpack.c.h.b16 %v5750
  %v6130 = vunpack.c.l.b16 %v5751
  %v6131 = vunpack.c.h.b16 %v5751
  %v6132 = vunpack.c.l.b16 %v5752
  %v6133 = vunpack.c.h.b16 %v5752
  %v6134 = vunpack.c.l.b16 %v5753
  %v6135 = vunpack.c.h.b16 %v5753
  %v6136 = vunpack.c.l.b16 %v5754
  %v6137 = vunpack.c.h.b16 %v5754
  %v6138 = vunpack.c.l.b16 %v5755
  %v6139 = vunpack.c.h.b16 %v5755
  %v6140 = vunpack.c.l.b16 %v5756
  %v6141 = vunpack.c.h.b16 %v5756
  %v6142 = vunpack.c.l.b16 %v5757
  %v6143 = vunpack.c.h.b16 %v5757
  %v6144 = vunpack.c.l.b16 %v5758
  %v6145 = vunpack.c.h.b16 %v5758
  %v6146 = vunpack.c.l.b16 %v5759
  %v6147 = vunpack.c.h.b16 %v5759
  %v6148 = vunpack.c.l.b16 %v5760
  %v6149 = vunpack.c.h.b16 %v5760
  %v6150 = vunpack.c.l.b16 %v5761
  %v6151 = vunpack.c.h.b16 %v5761
  %v6152 = vunpack.c.l.b16 %v5762
  %v6153 = vunpack.c.h.b16 %v5762
  %v6154 = vunpack.c.l.b16 %v5763
  %v6155 = vunpack.c.h.b16 %v5763
  %v6156 = vunpack.c.l.b16 %v5764
  %v6157 = vunpack.c.h.b16 %v5764
  %v6158 = vunpack.c.l.b16 %v5765
  %v6159 = vunpack.c.h.b16 %v5765
  %v6160 = vunpack.c.l.b16 %v5766
  %v6161 = vunpack.c.h.b16 %v5766
  %v6162 = vunpack.c.l.b16 %v5767
  %v6163 = vunpack.c.h.b16 %v5767
  %v6164 = vunpack.c.l.b16 %v5768
  %v6165 = vunpack.c.h.b16 %v5768
  %v6166 = vunpack.c.l.b16 %v5769
  %v6167 = vunpack.c.h.b16 %v5769
  %v6168 = vunpack.c.l.b16 %v5770
  %v6169 = vunpack.c.h.b16 %v5770
  %v6170 = vunpack.c.l.b16 %v5771
  %v6171 = vunpack.c.h.b16 %v5771
  %v6172 = vunpack.c.l.b16 %v5772
  %v6173 = vunpack.c.h.b16 %v5772
  %v6174 = vunpack.c.l.b16 %v5773
  %v6175 = vunpack.c.h.b16 %v5773
  %v6176 = vunpack.c.l.b16 %v5774
  %v6177 = vunpack.c.h.b16 %v5774
  %v6178 = vunpack.c.l.b16 %v5775
  %v6179 = vunpack.c.h.b16 %v5775
  %v6180 = vunpack.c.l.b16 %v5776
  %v6181 = vunpack.c.h.b16 %v5776
  %v6182 = vunpack.c.l.b16 %v5777
  %v6183 = vunpack.c.h.b16 %v5777
  %v6184 = vpack.c.b16 %v5932, %v5928
  %v6185 = vpack.c.b16 %v5933, %v5929
  %v6186 = vpack.c.b16 %v5934, %v5930
  %v6187 = vpack.c.b16 %v5935, %v5931
  %v6188 = vpack.c.b16 %v5940, %v5936
  %v6189 = vpack.c.b16 %v5941, %v5937
  %v6190 = vpack.c.b16 %v5942, %v5938
  %v6191 = vpack.c.b16 %v5943, %v5939
  %v6192 = vpack.c.b16 %v5948, %v5944
  %v6193 = vpack.c.b16 %v5949, %v5945
  %v6194 = vpack.c.b16 %v5950, %v5946
  %v6195 = vpack.c.b16 %v5951, %v5947
  %v6196 = vpack.c.b16 %v5956, %v5952
  %v6197 = vpack.c.b16 %v5957, %v5953
  %v6198 = vpack.c.b16 %v5958, %v5954
  %v6199 = vpack.c.b16 %v5959, %v5955
  %v6200 = vpack.c.b16 %v5964, %v5960
  %v6201 = vpack.c.b16 %v5965, %v5961
  %v6202 = vpack.c.b16 %v5966, %v5962
  %v6203 = vpack.c.b16 %v5967, %v5963
  %v6204 = vpack.c.b16 %v5972, %v5968
  %v6205 = vpack.c.b16 %v5973, %v5969
  %v6206 = vpack.c.b16 %v5974, %v5970
  %v6207 = vpack.c.b16 %v5975, %v5971
  %v6208 = vpack.c.b16 %v5980, %v5976
  %v6209 = vpack.c.b16 %v5981, %v5977
  %v6210 = vpack.c.b16 %v5982, %v5978
  %v6211 = vpack.c.b16 %v5983, %v5979
  %v6212 = vpack.c.b16 %v5988, %v5984
  %v6213 = vpack.c.b16 %v5989, %v5985
  %v6214 = vpack.c.b16 %v5990, %v5986
  %v6215 = vpack.c.b16 %v5991, %v5987
  %v6216 = vpack.c.b16 %v5996, %v5992
  %v6217 = vpack.c.b16 %v5997, %v5993
  %v6218 = vpack.c.b16 %v5998, %v5994
  %v6219 = vpack.c.b16 %v5999, %v5995
  %v6220 = vpack.c.b16 %v6004, %v6000
  %v6221 = vpack.c.b16 %v6005, %v6001
  %v6222 = vpack.c.b16 %v6006, %v6002
  %v6223 = vpack.c.b16 %v6007, %v6003
  %v6224 = vpack.c.b16 %v6012, %v6008
  %v6225 = vpack.c.b16 %v6013, %v6009
  %v6226 = vpack.c.b16 %v6014, %v6010
  %v6227 = vpack.c.b16 %v6015, %v6011
  %v6228 = vpack.c.b16 %v6020, %v6016
  %v6229 = vpack.c.b16 %v6021, %v6017
  %v6230 = vpack.c.b16 %v6022, %v6018
  %v6231 = vpack.c.b16 %v6023, %v6019
  %v6232 = vpack.c.b16 %v6028, %v6024
  %v6233 = vpack.c.b16 %v6029, %v6025
  %v6234 = vpack.c.b16 %v6030, %v6026
  %v6235 = vpack.c.b16 %v6031, %v6027
  %v6236 = vpack.c.b16 %v6036, %v6032
  %v6237 = vpack.c.b16 %v6037, %v6033
  %v6238 = vpack.c.b16 %v6038, %v6034
  %v6239 = vpack.c.b16 %v6039, %v6035
  %v6240 = vpack.c.b16 %v6044, %v6040
  %v6241 = vpack.c.b16 %v6045, %v6041
  %v6242 = vpack.c.b16 %v6046, %v6042
  %v6243 = vpack.c.b16 %v6047, %v6043
  %v6244 = vpack.c.b16 %v6052, %v6048
  %v6245 = vpack.c.b16 %v6053, %v6049
  %v6246 = vpack.c.b16 %v6054, %v6050
  %v6247 = vpack.c.b16 %v6055, %v6051
  %v6248 = vpack.c.b16 %v6060, %v6056
  %v6249 = vpack.c.b16 %v6061, %v6057
  %v6250 = vpack.c.b16 %v6062, %v6058
  %v6251 = vpack.c.b16 %v6063, %v6059
  %v6252 = vpack.c.b16 %v6068, %v6064
  %v6253 = vpack.c.b16 %v6069, %v6065
  %v6254 = vpack.c.b16 %v6070, %v6066
  %v6255 = vpack.c.b16 %v6071, %v6067
  %v6256 = vpack.c.b16 %v6076, %v6072
  %v6257 = vpack.c.b16 %v6077, %v6073
  %v6258 = vpack.c.b16 %v6078, %v6074
  %v6259 = vpack.c.b16 %v6079, %v6075
  %v6260 = vpack.c.b16 %v6084, %v6080
  %v6261 = vpack.c.b16 %v6085, %v6081
  %v6262 = vpack.c.b16 %v6086, %v6082
  %v6263 = vpack.c.b16 %v6087, %v6083
  %v6264 = vpack.c.b16 %v6092, %v6088
  %v6265 = vpack.c.b16 %v6093, %v6089
  %v6266 = vpack.c.b16 %v6094, %v6090
  %v6267 = vpack.c.b16 %v6095, %v6091
  %v6268 = vpack.c.b16 %v6100, %v6096
  %v6269 = vpack.c.b16 %v6101, %v6097
  %v6270 = vpack.c.b16 %v6102, %v6098
  %v6271 = vpack.c.b16 %v6103, %v6099
  %v6272 = vpack.c.b16 %v6108, %v6104
  %v6273 = vpack.c.b16 %v6109, %v6105
  %v6274 = vpack.c.b16 %v6110, %v6106
  %v6275 = vpack.c.b16 %v6111, %v6107
  %v6276 = vpack.c.b16 %v6116, %v6112
  %v6277 = vpack.c.b16 %v6117, %v6113
  %v6278 = vpack.c.b16 %v6118, %v6114
  %v6279 = vpack.c.b16 %v6119, %v6115
  %v6280 = vpack.c.b16 %v6124, %v6120
  %v6281 = vpack.c.b16 %v6125, %v6121
  %v6282 = vpack.c.b16 %v6126, %v6122
  %v6283 = vpack.c.b16 %v6127, %v6123
  %v6284 = vpack.c.b16 %v6132, %v6128
  %v6285 = vpack.c.b16 %v6133, %v6129
  %v6286 = vpack.c.b16 %v6134, %v6130
  %v6287 = vpack.c.b16 %v6135, %v6131
  %v6288 = vpack.c.b16 %v6140, %v6136
  %v6289 = vpack.c.b16 %v6141, %v6137
  %v6290 = vpack.c.b16 %v6142, %v6138
  %v6291 = vpack.c.b16 %v6143, %v6139
  %v6292 = vpack.c.b16 %v6148, %v6144
  %v6293 = vpack.c.b16 %v6149, %v6145
  %v6294 = vpack.c.b16 %v6150, %v6146
  %v6295 = vpack.c.b16 %v6151, %v6147
  %v6296 = vpack.c.b16 %v6156, %v6152
  %v6297 = vpack.c.b16 %v6157, %v6153
  %v6298 = vpack.c.b16 %v6158, %v6154
  %v6299 = vpack.c.b16 %v6159, %v6155
  %v6300 = vpack.c.b16 %v6164, %v6160
  %v6301 = vpack.c.b16 %v6165, %v6161
  %v6302 = vpack.c.b16 %v6166, %v6162
  %v6303 = vpack.c.b16 %v6167, %v6163
  %v6304 = vpack.c.b16 %v6172, %v6168
  %v6305 = vpack.c.b16 %v6173, %v6169
  %v6306 = vpack.c.b16 %v6174, %v6170
  %v6307 = vpack.c.b16 %v6175, %v6171
  %v6308 = vpack.c.b16 %v6180, %v6176
  %v6309 = vpack.c.b16 %v6181, %v6177
  %v6310 = vpack.c.b16 %v6182, %v6178
  %v6311 = vpack.c.b16 %v6183, %v6179
  %6440 = vmatprep.subr.bf16.mxu0 %v6185
  %6441 = vmatpush1.bf16.msra.mxu0 %v6184
  %6442 = vmatprep.subr.bf16.mxu0 %v6189
  %6443 = vmatpush1.bf16.msra.mxu0 %v6188
  %6444 = vmatprep.subr.bf16.mxu0 %v6193
  %6445 = vmatpush1.bf16.msra.mxu0 %v6192
  %6446 = vmatprep.subr.bf16.mxu0 %v6197
  %6447 = vmatpush1.bf16.msra.mxu0 %v6196
  %6448 = vmatprep.subr.bf16.mxu0 %v6201
  %6449 = vmatpush1.bf16.msra.mxu0 %v6200
  %6450 = vmatprep.subr.bf16.mxu0 %v6205
  %6451 = vmatpush1.bf16.msra.mxu0 %v6204
  %6452 = vmatprep.subr.bf16.mxu0 %v6209
  %6453 = vmatpush1.bf16.msra.mxu0 %v6208
  %6454 = vmatprep.subr.bf16.mxu0 %v6213
  %6455 = vmatpush1.bf16.msra.mxu0 %v6212
  %6456 = vmatprep.subr.bf16.mxu0 %v6217
  %6457 = vmatpush1.bf16.msra.mxu0 %v6216
  %6458 = vmatprep.subr.bf16.mxu0 %v6221
  %6459 = vmatpush1.bf16.msra.mxu0 %v6220
  %6460 = vmatprep.subr.bf16.mxu0 %v6225
  %6461 = vmatpush1.bf16.msra.mxu0 %v6224
  %6462 = vmatprep.subr.bf16.mxu0 %v6229
  %6463 = vmatpush1.bf16.msra.mxu0 %v6228
  %6464 = vmatprep.subr.bf16.mxu0 %v6233
  %6465 = vmatpush1.bf16.msra.mxu0 %v6232
  %6466 = vmatprep.subr.bf16.mxu0 %v6237
  %6467 = vmatpush1.bf16.msra.mxu0 %v6236
  %6468 = vmatprep.subr.bf16.mxu0 %v6241
  %6469 = vmatpush1.bf16.msra.mxu0 %v6240
  %6470 = vmatprep.subr.bf16.mxu0 %v6245
  %6471 = vmatpush1.bf16.msra.mxu0 %v6244
  %6472 = vmatprep.mubr.bf16.mxu0 %v5647
  %6473 = vmatmul.mubr.bf16.gmra.mrb[0].mxu0 %v5646
  %v6474 = vpop.f32.mrb[0].mxu0
  %v6475 = vadd.f32 %v5783, %v6474
  %v6476 = vpop.f32.mrb[0].mxu0
  %v6477 = vadd.f32 %v5787, %v6476
  %v6478 = vpop.f32.mrb[0].mxu0
  %v6479 = vpop.f32.mrb[0].mxu0
  %6480 = vdwg.mxu0
  %6481 = vmatprep.subr.bf16.mxu0 %v6249
  %6482 = vmatpush1.bf16.msra.mxu0 %v6248
  %6483 = vmatprep.subr.bf16.mxu0 %v6253
  %6484 = vmatpush1.bf16.msra.mxu0 %v6252
  %6485 = vmatprep.subr.bf16.mxu0 %v6257
  %6486 = vmatpush1.bf16.msra.mxu0 %v6256
  %6487 = vmatprep.subr.bf16.mxu0 %v6261
  %6488 = vmatpush1.bf16.msra.mxu0 %v6260
  %6489 = vmatprep.subr.bf16.mxu0 %v6265
  %6490 = vmatpush1.bf16.msra.mxu0 %v6264
  %6491 = vmatprep.subr.bf16.mxu0 %v6269
  %6492 = vmatpush1.bf16.msra.mxu0 %v6268
  %6493 = vmatprep.subr.bf16.mxu0 %v6273
  %6494 = vmatpush1.bf16.msra.mxu0 %v6272
  %6495 = vmatprep.subr.bf16.mxu0 %v6277
  %6496 = vmatpush1.bf16.msra.mxu0 %v6276
  %6497 = vmatprep.subr.bf16.mxu0 %v6281
  %6498 = vmatpush1.bf16.msra.mxu0 %v6280
  %6499 = vmatprep.subr.bf16.mxu0 %v6285
  %6500 = vmatpush1.bf16.msra.mxu0 %v6284
  %6501 = vmatprep.subr.bf16.mxu0 %v6289
  %6502 = vmatpush1.bf16.msra.mxu0 %v6288
  %6503 = vmatprep.subr.bf16.mxu0 %v6293
  %6504 = vmatpush1.bf16.msra.mxu0 %v6292
  %6505 = vmatprep.subr.bf16.mxu0 %v6297
  %6506 = vmatpush1.bf16.msra.mxu0 %v6296
  %6507 = vmatprep.subr.bf16.mxu0 %v6301
  %6508 = vmatpush1.bf16.msra.mxu0 %v6300
  %6509 = vmatprep.subr.bf16.mxu0 %v6305
  %6510 = vmatpush1.bf16.msra.mxu0 %v6304
  %6511 = vmatprep.subr.bf16.mxu0 %v6309
  %6512 = vmatpush1.bf16.msra.mxu0 %v6308
  %6513 = vmatprep.mubr.bf16.mxu0 %v5649
  %6514 = vmatmul.mubr.bf16.gmra.mrb[0].mxu0 %v5648
  %v6515 = vpop.f32.mrb[0].mxu0
  %v6516 = vadd.f32 %v6475, %v6515
  %v6517 = vpop.f32.mrb[0].mxu0
  %v6518 = vadd.f32 %v6477, %v6517
  %v6519 = vpop.f32.mrb[0].mxu0
  %v6520 = vpop.f32.mrb[0].mxu0
  %6521 = vdwg.mxu0
  %6522 = vmatprep.subr.bf16.mxu0 %v6187
  %6523 = vmatpush1.bf16.msra.mxu0 %v6186
  %6524 = vmatprep.subr.bf16.mxu0 %v6191
  %6525 = vmatpush1.bf16.msra.mxu0 %v6190
  %6526 = vmatprep.subr.bf16.mxu0 %v6195
  %6527 = vmatpush1.bf16.msra.mxu0 %v6194
  %6528 = vmatprep.subr.bf16.mxu0 %v6199
  %6529 = vmatpush1.bf16.msra.mxu0 %v6198
  %6530 = vmatprep.subr.bf16.mxu0 %v6203
  %6531 = vmatpush1.bf16.msra.mxu0 %v6202
  %6532 = vmatprep.subr.bf16.mxu0 %v6207
  %6533 = vmatpush1.bf16.msra.mxu0 %v6206
  %6534 = vmatprep.subr.bf16.mxu0 %v6211
  %6535 = vmatpush1.bf16.msra.mxu0 %v6210
  %6536 = vmatprep.subr.bf16.mxu0 %v6215
  %6537 = vmatpush1.bf16.msra.mxu0 %v6214
  %6538 = vmatprep.subr.bf16.mxu0 %v6219
  %6539 = vmatpush1.bf16.msra.mxu0 %v6218
  %6540 = vmatprep.subr.bf16.mxu0 %v6223
  %6541 = vmatpush1.bf16.msra.mxu0 %v6222
  %6542 = vmatprep.subr.bf16.mxu0 %v6227
  %6543 = vmatpush1.bf16.msra.mxu0 %v6226
  %6544 = vmatprep.subr.bf16.mxu0 %v6231
  %6545 = vmatpush1.bf16.msra.mxu0 %v6230
  %6546 = vmatprep.subr.bf16.mxu0 %v6235
  %6547 = vmatpush1.bf16.msra.mxu0 %v6234
  %6548 = vmatprep.subr.bf16.mxu0 %v6239
  %6549 = vmatpush1.bf16.msra.mxu0 %v6238
  %6550 = vmatprep.subr.bf16.mxu0 %v6243
  %6551 = vmatpush1.bf16.msra.mxu0 %v6242
  %6552 = vmatprep.subr.bf16.mxu0 %v6247
  %6553 = vmatpush1.bf16.msra.mxu0 %v6246
  %6554 = vmatprep.mubr.bf16.mxu0 %v5647
  %6555 = vmatmul.mubr.bf16.gmra.mrb[0].mxu0 %v5646
  %v6556 = vpop.f32.mrb[0].mxu0
  %v6557 = vadd.f32 %v5791, %v6556
  %v6558 = vpop.f32.mrb[0].mxu0
  %v6559 = vadd.f32 %v5795, %v6558
  %v6560 = vpop.f32.mrb[0].mxu0
  %v6561 = vpop.f32.mrb[0].mxu0
  %6562 = vdwg.mxu0
  %6563 = vmatprep.subr.bf16.mxu0 %v6251
  %6564 = vmatpush1.bf16.msra.mxu0 %v6250
  %6565 = vmatprep.subr.bf16.mxu0 %v6255
  %6566 = vmatpush1.bf16.msra.mxu0 %v6254
  %6567 = vmatprep.subr.bf16.mxu0 %v6259
  %6568 = vmatpush1.bf16.msra.mxu0 %v6258
  %6569 = vmatprep.subr.bf16.mxu0 %v6263
  %6570 = vmatpush1.bf16.msra.mxu0 %v6262
  %6571 = vmatprep.subr.bf16.mxu0 %v6267
  %6572 = vmatpush1.bf16.msra.mxu0 %v6266
  %6573 = vmatprep.subr.bf16.mxu0 %v6271
  %6574 = vmatpush1.bf16.msra.mxu0 %v6270
  %6575 = vmatprep.subr.bf16.mxu0 %v6275
  %6576 = vmatpush1.bf16.msra.mxu0 %v6274
  %6577 = vmatprep.subr.bf16.mxu0 %v6279
  %6578 = vmatpush1.bf16.msra.mxu0 %v6278
  %6579 = vmatprep.subr.bf16.mxu0 %v6283
  %6580 = vmatpush1.bf16.msra.mxu0 %v6282
  %6581 = vmatprep.subr.bf16.mxu0 %v6287
  %6582 = vmatpush1.bf16.msra.mxu0 %v6286
  %6583 = vmatprep.subr.bf16.mxu0 %v6291
  %6584 = vmatpush1.bf16.msra.mxu0 %v6290
  %6585 = vmatprep.subr.bf16.mxu0 %v6295
  %6586 = vmatpush1.bf16.msra.mxu0 %v6294
  %6587 = vmatprep.subr.bf16.mxu0 %v6299
  %6588 = vmatpush1.bf16.msra.mxu0 %v6298
  %6589 = vmatprep.subr.bf16.mxu0 %v6303
  %6590 = vmatpush1.bf16.msra.mxu0 %v6302
  %6591 = vmatprep.subr.bf16.mxu0 %v6307
  %6592 = vmatpush1.bf16.msra.mxu0 %v6306
  %6593 = vmatprep.subr.bf16.mxu0 %v6311
  %6594 = vmatpush1.bf16.msra.mxu0 %v6310
  %6595 = vmatprep.mubr.bf16.mxu0 %v5649
  %6596 = vmatmul.mubr.bf16.gmra.mrb[0].mxu0 %v5648
  %v6597 = vpop.f32.mrb[0].mxu0
  %v6598 = vadd.f32 %v6557, %v6597
  %v6599 = vpop.f32.mrb[0].mxu0
  %v6600 = vadd.f32 %v6559, %v6599
  %v6601 = vpop.f32.mrb[0].mxu0
  %v6602 = vpop.f32.mrb[0].mxu0
  %6603 = vdwg.mxu0
  %vm6604 = vcmp.gt.f32.partialorder %v6516, 0.0
  %vm6605 = vcmp.gt.f32.partialorder %v6518, 0.0
  %vm6606 = vcmp.gt.f32.partialorder %v6598, 0.0
  %vm6607 = vcmp.gt.f32.partialorder %v6600, 0.0
  %v6608 = vmin.f32 %v6516, 0.0
  %v6609 = vmin.f32 %v6518, 0.0
  %v6610 = vmin.f32 %v6598, 0.0
  %v6611 = vmin.f32 %v6600, 0.0
  %v6612 = vmul.f32 %v6608, 1.442695
  %v6613 = vpow.pop %v6612
  %v6614 = vmul.f32 %v6609, 1.442695
  %v6615 = vpow.pop %v6614
  %v6616 = vmul.f32 %v6610, 1.442695
  %v6617 = vpow.pop %v6616
  %v6618 = vmul.f32 %v6611, 1.442695
  %v6619 = vpow.pop %v6618
  %v6620 = vsub.f32 %v6613, 1.0
  %v6621 = vsub.f32 %v6615, 1.0
  %v6622 = vsub.f32 %v6617, 1.0
  %v6623 = vsub.f32 %v6619, 1.0
  %v6624 = vsel %vm6604, %v6516, %v6620
  %v6625 = vsel %vm6605, %v6518, %v6621
  %v6626 = vsel %vm6606, %v6598, %v6622
  %v6627 = vsel %vm6607, %v6600, %v6623
  %v6628 = vpack.c.bf16 %v6624, %v6624
  %v6629 = vpack.c.bf16 %v6625, %v6625
  %v6630 = vpack.c.bf16 %v6626, %v6626
  %v6631 = vpack.c.bf16 %v6627, %v6627
  %v6632 = vld [vmem:[%s11] sm:$0xff]
  %v6633 = vld [vmem:[%s11 + $0x8] sm:$0xff]
  %v6634 = vld [vmem:[%s11 + $0x10] sm:$0xff]
  %v6635 = vld [vmem:[%s11 + $0x18] sm:$0xff]
  %v6636 = vld [vmem:[%s11 + $0x20] sm:$0xff]
  %v6637 = vld [vmem:[%s11 + $0x28] sm:$0xff]
  %v6638 = vld [vmem:[%s11 + $0x30] sm:$0xff]
  %v6639 = vld [vmem:[%s11 + $0x38] sm:$0xff]
  %v6640 = vld [vmem:[%s11 + $0x40] sm:$0xff]
  %v6641 = vld [vmem:[%s11 + $0x48] sm:$0xff]
  %v6642 = vld [vmem:[%s11 + $0x50] sm:$0xff]
  %v6643 = vld [vmem:[%s11 + $0x58] sm:$0xff]
  %v6644 = vld [vmem:[%s11 + $0x60] sm:$0xff]
  %v6645 = vld [vmem:[%s11 + $0x68] sm:$0xff]
  %v6646 = vld [vmem:[%s11 + $0x70] sm:$0xff]
  %v6647 = vld [vmem:[%s11 + $0x78] sm:$0xff]
  %v6648 = vld [vmem:[%s11 + $0x80] sm:$0xff]
  %v6649 = vld [vmem:[%s11 + $0x88] sm:$0xff]
  %v6650 = vld [vmem:[%s11 + $0x90] sm:$0xff]
  %v6651 = vld [vmem:[%s11 + $0x98] sm:$0xff]
  %v6652 = vld [vmem:[%s11 + $0xa0] sm:$0xff]
  %v6653 = vld [vmem:[%s11 + $0xa8] sm:$0xff]
  %v6654 = vld [vmem:[%s11 + $0xb0] sm:$0xff]
  %v6655 = vld [vmem:[%s11 + $0xb8] sm:$0xff]
  %v6656 = vld [vmem:[%s11 + $0xc0] sm:$0xff]
  %v6657 = vld [vmem:[%s11 + $0xc8] sm:$0xff]
  %v6658 = vld [vmem:[%s11 + $0xd0] sm:$0xff]
  %v6659 = vld [vmem:[%s11 + $0xd8] sm:$0xff]
  %v6660 = vld [vmem:[%s11 + $0xe0] sm:$0xff]
  %v6661 = vld [vmem:[%s11 + $0xe8] sm:$0xff]
  %v6662 = vld [vmem:[%s11 + $0xf0] sm:$0xff]
  %v6663 = vld [vmem:[%s11 + $0xf8] sm:$0xff]
  %v6664 = vld [vmem:[%s11 + $0x100] sm:$0xff]
  %v6665 = vld [vmem:[%s11 + $0x108] sm:$0xff]
  %v6666 = vld [vmem:[%s11 + $0x110] sm:$0xff]
  %v6667 = vld [vmem:[%s11 + $0x118] sm:$0xff]
  %v6668 = vld [vmem:[%s11 + $0x120] sm:$0xff]
  %v6669 = vld [vmem:[%s11 + $0x128] sm:$0xff]
  %v6670 = vld [vmem:[%s11 + $0x130] sm:$0xff]
  %v6671 = vld [vmem:[%s11 + $0x138] sm:$0xff]
  %v6672 = vld [vmem:[%s11 + $0x140] sm:$0xff]
  %v6673 = vld [vmem:[%s11 + $0x148] sm:$0xff]
  %v6674 = vld [vmem:[%s11 + $0x150] sm:$0xff]
  %v6675 = vld [vmem:[%s11 + $0x158] sm:$0xff]
  %v6676 = vld [vmem:[%s11 + $0x160] sm:$0xff]
  %v6677 = vld [vmem:[%s11 + $0x168] sm:$0xff]
  %v6678 = vld [vmem:[%s11 + $0x170] sm:$0xff]
  %v6679 = vld [vmem:[%s11 + $0x178] sm:$0xff]
  %v6680 = vld [vmem:[%s11 + $0x180] sm:$0xff]
  %v6681 = vld [vmem:[%s11 + $0x188] sm:$0xff]
  %v6682 = vld [vmem:[%s11 + $0x190] sm:$0xff]
  %v6683 = vld [vmem:[%s11 + $0x198] sm:$0xff]
  %v6684 = vld [vmem:[%s11 + $0x1a0] sm:$0xff]
  %v6685 = vld [vmem:[%s11 + $0x1a8] sm:$0xff]
  %v6686 = vld [vmem:[%s11 + $0x1b0] sm:$0xff]
  %v6687 = vld [vmem:[%s11 + $0x1b8] sm:$0xff]
  %v6688 = vld [vmem:[%s11 + $0x1c0] sm:$0xff]
  %v6689 = vld [vmem:[%s11 + $0x1c8] sm:$0xff]
  %v6690 = vld [vmem:[%s11 + $0x1d0] sm:$0xff]
  %v6691 = vld [vmem:[%s11 + $0x1d8] sm:$0xff]
  %v6692 = vld [vmem:[%s11 + $0x1e0] sm:$0xff]
  %v6693 = vld [vmem:[%s11 + $0x1e8] sm:$0xff]
  %v6694 = vld [vmem:[%s11 + $0x1f0] sm:$0xff]
  %v6695 = vld [vmem:[%s11 + $0x1f8] sm:$0xff]
  %v6696 = vld [vmem:[%s12] sm:$0x3]
  %v6698 = vlaneseq
  %v6699 = vshrl.u32 %v6698, 7
  %v6700 = vsub.s32 0, %v6699
  %v6701 = vrot.slane %v6696, %v6700
  %v6702 = vlaneseq
  %v6703 = vshrl.u32 %v6702, 7
  %v6704 = vsub.s32 1, %v6703
  %v6705 = vrot.slane %v6696, %v6704
  %v6772 = vunpack.c.l.b16 %v6632
  %v6773 = vunpack.c.h.b16 %v6632
  %v6774 = vunpack.c.l.b16 %v6633
  %v6775 = vunpack.c.h.b16 %v6633
  %v6776 = vunpack.c.l.b16 %v6634
  %v6777 = vunpack.c.h.b16 %v6634
  %v6778 = vunpack.c.l.b16 %v6635
  %v6779 = vunpack.c.h.b16 %v6635
  %v6780 = vunpack.c.l.b16 %v6636
  %v6781 = vunpack.c.h.b16 %v6636
  %v6782 = vunpack.c.l.b16 %v6637
  %v6783 = vunpack.c.h.b16 %v6637
  %v6784 = vunpack.c.l.b16 %v6638
  %v6785 = vunpack.c.h.b16 %v6638
  %v6786 = vunpack.c.l.b16 %v6639
  %v6787 = vunpack.c.h.b16 %v6639
  %v6788 = vunpack.c.l.b16 %v6640
  %v6789 = vunpack.c.h.b16 %v6640
  %v6790 = vunpack.c.l.b16 %v6641
  %v6791 = vunpack.c.h.b16 %v6641
  %v6792 = vunpack.c.l.b16 %v6642
  %v6793 = vunpack.c.h.b16 %v6642
  %v6794 = vunpack.c.l.b16 %v6643
  %v6795 = vunpack.c.h.b16 %v6643
  %v6796 = vunpack.c.l.b16 %v6644
  %v6797 = vunpack.c.h.b16 %v6644
  %v6798 = vunpack.c.l.b16 %v6645
  %v6799 = vunpack.c.h.b16 %v6645
  %v6800 = vunpack.c.l.b16 %v6646
  %v6801 = vunpack.c.h.b16 %v6646
  %v6802 = vunpack.c.l.b16 %v6647
  %v6803 = vunpack.c.h.b16 %v6647
  %v6804 = vunpack.c.l.b16 %v6648
  %v6805 = vunpack.c.h.b16 %v6648
  %v6806 = vunpack.c.l.b16 %v6649
  %v6807 = vunpack.c.h.b16 %v6649
  %v6808 = vunpack.c.l.b16 %v6650
  %v6809 = vunpack.c.h.b16 %v6650
  %v6810 = vunpack.c.l.b16 %v6651
  %v6811 = vunpack.c.h.b16 %v6651
  %v6812 = vunpack.c.l.b16 %v6652
  %v6813 = vunpack.c.h.b16 %v6652
  %v6814 = vunpack.c.l.b16 %v6653
  %v6815 = vunpack.c.h.b16 %v6653
  %v6816 = vunpack.c.l.b16 %v6654
  %v6817 = vunpack.c.h.b16 %v6654
  %v6818 = vunpack.c.l.b16 %v6655
  %v6819 = vunpack.c.h.b16 %v6655
  %v6820 = vunpack.c.l.b16 %v6656
  %v6821 = vunpack.c.h.b16 %v6656
  %v6822 = vunpack.c.l.b16 %v6657
  %v6823 = vunpack.c.h.b16 %v6657
  %v6824 = vunpack.c.l.b16 %v6658
  %v6825 = vunpack.c.h.b16 %v6658
  %v6826 = vunpack.c.l.b16 %v6659
  %v6827 = vunpack.c.h.b16 %v6659
  %v6828 = vunpack.c.l.b16 %v6660
  %v6829 = vunpack.c.h.b16 %v6660
  %v6830 = vunpack.c.l.b16 %v6661
  %v6831 = vunpack.c.h.b16 %v6661
  %v6832 = vunpack.c.l.b16 %v6662
  %v6833 = vunpack.c.h.b16 %v6662
  %v6834 = vunpack.c.l.b16 %v6663
  %v6835 = vunpack.c.h.b16 %v6663
  %v6836 = vunpack.c.l.b16 %v6664
  %v6837 = vunpack.c.h.b16 %v6664
  %v6838 = vunpack.c.l.b16 %v6665
  %v6839 = vunpack.c.h.b16 %v6665
  %v6840 = vunpack.c.l.b16 %v6666
  %v6841 = vunpack.c.h.b16 %v6666
  %v6842 = vunpack.c.l.b16 %v6667
  %v6843 = vunpack.c.h.b16 %v6667
  %v6844 = vunpack.c.l.b16 %v6668
  %v6845 = vunpack.c.h.b16 %v6668
  %v6846 = vunpack.c.l.b16 %v6669
  %v6847 = vunpack.c.h.b16 %v6669
  %v6848 = vunpack.c.l.b16 %v6670
  %v6849 = vunpack.c.h.b16 %v6670
  %v6850 = vunpack.c.l.b16 %v6671
  %v6851 = vunpack.c.h.b16 %v6671
  %v6852 = vunpack.c.l.b16 %v6672
  %v6853 = vunpack.c.h.b16 %v6672
  %v6854 = vunpack.c.l.b16 %v6673
  %v6855 = vunpack.c.h.b16 %v6673
  %v6856 = vunpack.c.l.b16 %v6674
  %v6857 = vunpack.c.h.b16 %v6674
  %v6858 = vunpack.c.l.b16 %v6675
  %v6859 = vunpack.c.h.b16 %v6675
  %v6860 = vunpack.c.l.b16 %v6676
  %v6861 = vunpack.c.h.b16 %v6676
  %v6862 = vunpack.c.l.b16 %v6677
  %v6863 = vunpack.c.h.b16 %v6677
  %v6864 = vunpack.c.l.b16 %v6678
  %v6865 = vunpack.c.h.b16 %v6678
  %v6866 = vunpack.c.l.b16 %v6679
  %v6867 = vunpack.c.h.b16 %v6679
  %v6868 = vunpack.c.l.b16 %v6680
  %v6869 = vunpack.c.h.b16 %v6680
  %v6870 = vunpack.c.l.b16 %v6681
  %v6871 = vunpack.c.h.b16 %v6681
  %v6872 = vunpack.c.l.b16 %v6682
  %v6873 = vunpack.c.h.b16 %v6682
  %v6874 = vunpack.c.l.b16 %v6683
  %v6875 = vunpack.c.h.b16 %v6683
  %v6876 = vunpack.c.l.b16 %v6684
  %v6877 = vunpack.c.h.b16 %v6684
  %v6878 = vunpack.c.l.b16 %v6685
  %v6879 = vunpack.c.h.b16 %v6685
  %v6880 = vunpack.c.l.b16 %v6686
  %v6881 = vunpack.c.h.b16 %v6686
  %v6882 = vunpack.c.l.b16 %v6687
  %v6883 = vunpack.c.h.b16 %v6687
  %v6884 = vunpack.c.l.b16 %v6688
  %v6885 = vunpack.c.h.b16 %v6688
  %v6886 = vunpack.c.l.b16 %v6689
  %v6887 = vunpack.c.h.b16 %v6689
  %v6888 = vunpack.c.l.b16 %v6690
  %v6889 = vunpack.c.h.b16 %v6690
  %v6890 = vunpack.c.l.b16 %v6691
  %v6891 = vunpack.c.h.b16 %v6691
  %v6892 = vunpack.c.l.b16 %v6692
  %v6893 = vunpack.c.h.b16 %v6692
  %v6894 = vunpack.c.l.b16 %v6693
  %v6895 = vunpack.c.h.b16 %v6693
  %v6896 = vunpack.c.l.b16 %v6694
  %v6897 = vunpack.c.h.b16 %v6694
  %v6898 = vunpack.c.l.b16 %v6695
  %v6899 = vunpack.c.h.b16 %v6695
  %v6900 = vpack.c.b16 %v6774, %v6772
  %v6901 = vpack.c.b16 %v6775, %v6773
  %v6902 = vpack.c.b16 %v6778, %v6776
  %v6903 = vpack.c.b16 %v6779, %v6777
  %v6904 = vpack.c.b16 %v6782, %v6780
  %v6905 = vpack.c.b16 %v6783, %v6781
  %v6906 = vpack.c.b16 %v6786, %v6784
  %v6907 = vpack.c.b16 %v6787, %v6785
  %v6908 = vpack.c.b16 %v6790, %v6788
  %v6909 = vpack.c.b16 %v6791, %v6789
  %v6910 = vpack.c.b16 %v6794, %v6792
  %v6911 = vpack.c.b16 %v6795, %v6793
  %v6912 = vpack.c.b16 %v6798, %v6796
  %v6913 = vpack.c.b16 %v6799, %v6797
  %v6914 = vpack.c.b16 %v6802, %v6800
  %v6915 = vpack.c.b16 %v6803, %v6801
  %v6916 = vpack.c.b16 %v6806, %v6804
  %v6917 = vpack.c.b16 %v6807, %v6805
  %v6918 = vpack.c.b16 %v6810, %v6808
  %v6919 = vpack.c.b16 %v6811, %v6809
  %v6920 = vpack.c.b16 %v6814, %v6812
  %v6921 = vpack.c.b16 %v6815, %v6813
  %v6922 = vpack.c.b16 %v6818, %v6816
  %v6923 = vpack.c.b16 %v6819, %v6817
  %v6924 = vpack.c.b16 %v6822, %v6820
  %v6925 = vpack.c.b16 %v6823, %v6821
  %v6926 = vpack.c.b16 %v6826, %v6824
  %v6927 = vpack.c.b16 %v6827, %v6825
  %v6928 = vpack.c.b16 %v6830, %v6828
  %v6929 = vpack.c.b16 %v6831, %v6829
  %v6930 = vpack.c.b16 %v6834, %v6832
  %v6931 = vpack.c.b16 %v6835, %v6833
  %v6932 = vpack.c.b16 %v6838, %v6836
  %v6933 = vpack.c.b16 %v6839, %v6837
  %v6934 = vpack.c.b16 %v6842, %v6840
  %v6935 = vpack.c.b16 %v6843, %v6841
  %v6936 = vpack.c.b16 %v6846, %v6844
  %v6937 = vpack.c.b16 %v6847, %v6845
  %v6938 = vpack.c.b16 %v6850, %v6848
  %v6939 = vpack.c.b16 %v6851, %v6849
  %v6940 = vpack.c.b16 %v6854, %v6852
  %v6941 = vpack.c.b16 %v6855, %v6853
  %v6942 = vpack.c.b16 %v6858, %v6856
  %v6943 = vpack.c.b16 %v6859, %v6857
  %v6944 = vpack.c.b16 %v6862, %v6860
  %v6945 = vpack.c.b16 %v6863, %v6861
  %v6946 = vpack.c.b16 %v6866, %v6864
  %v6947 = vpack.c.b16 %v6867, %v6865
  %v6948 = vpack.c.b16 %v6870, %v6868
  %v6949 = vpack.c.b16 %v6871, %v6869
  %v6950 = vpack.c.b16 %v6874, %v6872
  %v6951 = vpack.c.b16 %v6875, %v6873
  %v6952 = vpack.c.b16 %v6878, %v6876
  %v6953 = vpack.c.b16 %v6879, %v6877
  %v6954 = vpack.c.b16 %v6882, %v6880
  %v6955 = vpack.c.b16 %v6883, %v6881
  %v6956 = vpack.c.b16 %v6886, %v6884
  %v6957 = vpack.c.b16 %v6887, %v6885
  %v6958 = vpack.c.b16 %v6890, %v6888
  %v6959 = vpack.c.b16 %v6891, %v6889
  %v6960 = vpack.c.b16 %v6894, %v6892
  %v6961 = vpack.c.b16 %v6895, %v6893
  %v6962 = vpack.c.b16 %v6898, %v6896
  %v6963 = vpack.c.b16 %v6899, %v6897
  %7028 = vmatprep.subr.bf16.mxu0 %v6901
  %7029 = vmatpush1.bf16.msra.mxu0 %v6900
  %7030 = vmatprep.subr.bf16.mxu0 %v6903
  %7031 = vmatpush1.bf16.msra.mxu0 %v6902
  %7032 = vmatprep.subr.bf16.mxu0 %v6905
  %7033 = vmatpush1.bf16.msra.mxu0 %v6904
  %7034 = vmatprep.subr.bf16.mxu0 %v6907
  %7035 = vmatpush1.bf16.msra.mxu0 %v6906
  %7036 = vmatprep.subr.bf16.mxu0 %v6909
  %7037 = vmatpush1.bf16.msra.mxu0 %v6908
  %7038 = vmatprep.subr.bf16.mxu0 %v6911
  %7039 = vmatpush1.bf16.msra.mxu0 %v6910
  %7040 = vmatprep.subr.bf16.mxu0 %v6913
  %7041 = vmatpush1.bf16.msra.mxu0 %v6912
  %7042 = vmatprep.subr.bf16.mxu0 %v6915
  %7043 = vmatpush1.bf16.msra.mxu0 %v6914
  %7044 = vmatprep.subr.bf16.mxu0 %v6917
  %7045 = vmatpush1.bf16.msra.mxu0 %v6916
  %7046 = vmatprep.subr.bf16.mxu0 %v6919
  %7047 = vmatpush1.bf16.msra.mxu0 %v6918
  %7048 = vmatprep.subr.bf16.mxu0 %v6921
  %7049 = vmatpush1.bf16.msra.mxu0 %v6920
  %7050 = vmatprep.subr.bf16.mxu0 %v6923
  %7051 = vmatpush1.bf16.msra.mxu0 %v6922
  %7052 = vmatprep.subr.bf16.mxu0 %v6925
  %7053 = vmatpush1.bf16.msra.mxu0 %v6924
  %7054 = vmatprep.subr.bf16.mxu0 %v6927
  %7055 = vmatpush1.bf16.msra.mxu0 %v6926
  %7056 = vmatprep.subr.bf16.mxu0 %v6929
  %7057 = vmatpush1.bf16.msra.mxu0 %v6928
  %7058 = vmatprep.subr.bf16.mxu0 %v6931
  %7059 = vmatpush1.bf16.msra.mxu0 %v6930
  %7060 = vmatprep.mubr.bf16.mxu0 %v6629
  %7061 = vmatmul.mubr.bf16.gmra.mrb[0].mxu0 %v6628
  %v7062 = vpop.f32.mrb[0].mxu0
  %v7063 = vadd.f32 %v6701, %v7062
  %v7064 = vpop.f32.mrb[0].mxu0
  %v7065 = vadd.f32 %v6705, %v7064
  %v7066 = vpop.f32.mrb[0].mxu0
  %v7067 = vpop.f32.mrb[0].mxu0
  %7068 = vdwg.mxu0
  %7069 = vmatprep.subr.bf16.mxu0 %v6933
  %7070 = vmatpush1.bf16.msra.mxu0 %v6932
  %7071 = vmatprep.subr.bf16.mxu0 %v6935
  %7072 = vmatpush1.bf16.msra.mxu0 %v6934
  %7073 = vmatprep.subr.bf16.mxu0 %v6937
  %7074 = vmatpush1.bf16.msra.mxu0 %v6936
  %7075 = vmatprep.subr.bf16.mxu0 %v6939
  %7076 = vmatpush1.bf16.msra.mxu0 %v6938
  %7077 = vmatprep.subr.bf16.mxu0 %v6941
  %7078 = vmatpush1.bf16.msra.mxu0 %v6940
  %7079 = vmatprep.subr.bf16.mxu0 %v6943
  %7080 = vmatpush1.bf16.msra.mxu0 %v6942
  %7081 = vmatprep.subr.bf16.mxu0 %v6945
  %7082 = vmatpush1.bf16.msra.mxu0 %v6944
  %7083 = vmatprep.subr.bf16.mxu0 %v6947
  %7084 = vmatpush1.bf16.msra.mxu0 %v6946
  %7085 = vmatprep.subr.bf16.mxu0 %v6949
  %7086 = vmatpush1.bf16.msra.mxu0 %v6948
  %7087 = vmatprep.subr.bf16.mxu0 %v6951
  %7088 = vmatpush1.bf16.msra.mxu0 %v6950
  %7089 = vmatprep.subr.bf16.mxu0 %v6953
  %7090 = vmatpush1.bf16.msra.mxu0 %v6952
  %7091 = vmatprep.subr.bf16.mxu0 %v6955
  %7092 = vmatpush1.bf16.msra.mxu0 %v6954
  %7093 = vmatprep.subr.bf16.mxu0 %v6957
  %7094 = vmatpush1.bf16.msra.mxu0 %v6956
  %7095 = vmatprep.subr.bf16.mxu0 %v6959
  %7096 = vmatpush1.bf16.msra.mxu0 %v6958
  %7097 = vmatprep.subr.bf16.mxu0 %v6961
  %7098 = vmatpush1.bf16.msra.mxu0 %v6960
  %7099 = vmatprep.subr.bf16.mxu0 %v6963
  %7100 = vmatpush1.bf16.msra.mxu0 %v6962
  %7101 = vmatprep.mubr.bf16.mxu0 %v6631
  %7102 = vmatmul.mubr.bf16.gmra.mrb[0].mxu0 %v6630
  %v7103 = vpop.f32.mrb[0].mxu0
  %v7104 = vadd.f32 %v7063, %v7103
  %v7105 = vpop.f32.mrb[0].mxu0
  %v7106 = vadd.f32 %v7065, %v7105
  %v7107 = vpop.f32.mrb[0].mxu0
  %v7108 = vpop.f32.mrb[0].mxu0
  %7109 = vdwg.mxu0
  %vm7110 = vcmp.gt.f32.partialorder %v7104, 0.0
  %vm7111 = vcmp.gt.f32.partialorder %v7106, 0.0
  %v7112 = vmin.f32 %v7104, 0.0
  %v7113 = vmin.f32 %v7106, 0.0
  %v7114 = vmul.f32 %v7112, 1.442695
  %v7115 = vpow.pop %v7114
  %v7116 = vmul.f32 %v7113, 1.442695
  %v7117 = vpow.pop %v7116
  %v7118 = vsub.f32 %v7115, 1.0
  %v7119 = vsub.f32 %v7117, 1.0
  %v7120 = vsel %vm7110, %v7104, %v7118
  %v7121 = vsel %vm7111, %v7106, %v7119
  %v7122 = vpack.c.bf16 %v7120, %v7120
  %v7123 = vpack.c.bf16 %v7121, %v7121
  %v7124 = vld [vmem:[%s13] sm:$0xf]
  %v7125 = vld [vmem:[%s13 + $0x4] sm:$0xf]
  %v7126 = vld [vmem:[%s13 + $0x8] sm:$0xf]
  %v7127 = vld [vmem:[%s13 + $0xc] sm:$0xf]
  %v7128 = vld [vmem:[%s13 + $0x10] sm:$0xf]
  %v7129 = vld [vmem:[%s13 + $0x14] sm:$0xf]
  %v7130 = vld [vmem:[%s13 + $0x18] sm:$0xf]
  %v7131 = vld [vmem:[%s13 + $0x1c] sm:$0xf]
  %v7132 = vld [vmem:[%s13 + $0x20] sm:$0xf]
  %v7133 = vld [vmem:[%s13 + $0x24] sm:$0xf]
  %v7134 = vld [vmem:[%s13 + $0x28] sm:$0xf]
  %v7135 = vld [vmem:[%s13 + $0x2c] sm:$0xf]
  %v7136 = vld [vmem:[%s13 + $0x30] sm:$0xf]
  %v7137 = vld [vmem:[%s13 + $0x34] sm:$0xf]
  %v7138 = vld [vmem:[%s13 + $0x38] sm:$0xf]
  %v7139 = vld [vmem:[%s13 + $0x3c] sm:$0xf]
  %v7140 = vld [vmem:[%s13 + $0x40] sm:$0xf]
  %v7141 = vld [vmem:[%s13 + $0x44] sm:$0xf]
  %v7142 = vld [vmem:[%s13 + $0x48] sm:$0xf]
  %v7143 = vld [vmem:[%s13 + $0x4c] sm:$0xf]
  %v7144 = vld [vmem:[%s13 + $0x50] sm:$0xf]
  %v7145 = vld [vmem:[%s13 + $0x54] sm:$0xf]
  %v7146 = vld [vmem:[%s13 + $0x58] sm:$0xf]
  %v7147 = vld [vmem:[%s13 + $0x5c] sm:$0xf]
  %v7148 = vld [vmem:[%s13 + $0x60] sm:$0xf]
  %v7149 = vld [vmem:[%s13 + $0x64] sm:$0xf]
  %v7150 = vld [vmem:[%s13 + $0x68] sm:$0xf]
  %v7151 = vld [vmem:[%s13 + $0x6c] sm:$0xf]
  %v7152 = vld [vmem:[%s13 + $0x70] sm:$0xf]
  %v7153 = vld [vmem:[%s13 + $0x74] sm:$0xf]
  %v7154 = vld [vmem:[%s13 + $0x78] sm:$0xf]
  %v7155 = vld [vmem:[%s13 + $0x7c] sm:$0xf]
  %v7156 = vld [vmem:[%s14] sm:$0x1]
  %v7158 = vlaneseq
  %v7159 = vshrl.u32 %v7158, 7
  %v7160 = vsub.s32 0, %v7159
  %v7161 = vrot.slane %v7156, %v7160
  %v7195 = vunpack.c.l.b16 %v7124
  %v7196 = vunpack.c.l.b16 %v7125
  %v7197 = vunpack.c.l.b16 %v7126
  %v7198 = vunpack.c.l.b16 %v7127
  %v7199 = vunpack.c.l.b16 %v7128
  %v7200 = vunpack.c.l.b16 %v7129
  %v7201 = vunpack.c.l.b16 %v7130
  %v7202 = vunpack.c.l.b16 %v7131
  %v7203 = vunpack.c.l.b16 %v7132
  %v7204 = vunpack.c.l.b16 %v7133
  %v7205 = vunpack.c.l.b16 %v7134
  %v7206 = vunpack.c.l.b16 %v7135
  %v7207 = vunpack.c.l.b16 %v7136
  %v7208 = vunpack.c.l.b16 %v7137
  %v7209 = vunpack.c.l.b16 %v7138
  %v7210 = vunpack.c.l.b16 %v7139
  %v7211 = vunpack.c.l.b16 %v7140
  %v7212 = vunpack.c.l.b16 %v7141
  %v7213 = vunpack.c.l.b16 %v7142
  %v7214 = vunpack.c.l.b16 %v7143
  %v7215 = vunpack.c.l.b16 %v7144
  %v7216 = vunpack.c.l.b16 %v7145
  %v7217 = vunpack.c.l.b16 %v7146
  %v7218 = vunpack.c.l.b16 %v7147
  %v7219 = vunpack.c.l.b16 %v7148
  %v7220 = vunpack.c.l.b16 %v7149
  %v7221 = vunpack.c.l.b16 %v7150
  %v7222 = vunpack.c.l.b16 %v7151
  %v7223 = vunpack.c.l.b16 %v7152
  %v7224 = vunpack.c.l.b16 %v7153
  %v7225 = vunpack.c.l.b16 %v7154
  %v7226 = vunpack.c.l.b16 %v7155
  %v7227 = vpack.c.b16 %v7196, %v7195
  %v7228 = vpack.c.b16 %v7198, %v7197
  %v7229 = vpack.c.b16 %v7200, %v7199
  %v7230 = vpack.c.b16 %v7202, %v7201
  %v7231 = vpack.c.b16 %v7204, %v7203
  %v7232 = vpack.c.b16 %v7206, %v7205
  %v7233 = vpack.c.b16 %v7208, %v7207
  %v7234 = vpack.c.b16 %v7210, %v7209
  %v7235 = vpack.c.b16 %v7212, %v7211
  %v7236 = vpack.c.b16 %v7214, %v7213
  %v7237 = vpack.c.b16 %v7216, %v7215
  %v7238 = vpack.c.b16 %v7218, %v7217
  %v7239 = vpack.c.b16 %v7220, %v7219
  %v7240 = vpack.c.b16 %v7222, %v7221
  %v7241 = vpack.c.b16 %v7224, %v7223
  %v7242 = vpack.c.b16 %v7226, %v7225
  %7259 = vmatprep.subr.bf16.mxu0 0
  %7260 = vmatpush1.bf16.msra.mxu0 %v7227
  %7261 = vmatprep.subr.bf16.mxu0 0
  %7262 = vmatpush1.bf16.msra.mxu0 %v7228
  %7263 = vmatprep.subr.bf16.mxu0 0
  %7264 = vmatpush1.bf16.msra.mxu0 %v7229
  %7265 = vmatprep.subr.bf16.mxu0 0
  %7266 = vmatpush1.bf16.msra.mxu0 %v7230
  %7267 = vmatprep.subr.bf16.mxu0 0
  %7268 = vmatpush1.bf16.msra.mxu0 %v7231
  %7269 = vmatprep.subr.bf16.mxu0 0
  %7270 = vmatpush1.bf16.msra.mxu0 %v7232
  %7271 = vmatprep.subr.bf16.mxu0 0
  %7272 = vmatpush1.bf16.msra.mxu0 %v7233
  %7273 = vmatprep.subr.bf16.mxu0 0
  %7274 = vmatpush1.bf16.msra.mxu0 %v7234
  %7275 = vmatprep.subr.bf16.mxu0 0
  %7276 = vmatpush1.bf16.msra.mxu0 %v7235
  %7277 = vmatprep.subr.bf16.mxu0 0
  %7278 = vmatpush1.bf16.msra.mxu0 %v7236
  %7279 = vmatprep.subr.bf16.mxu0 0
  %7280 = vmatpush1.bf16.msra.mxu0 %v7237
  %7281 = vmatprep.subr.bf16.mxu0 0
  %7282 = vmatpush1.bf16.msra.mxu0 %v7238
  %7283 = vmatprep.subr.bf16.mxu0 0
  %7284 = vmatpush1.bf16.msra.mxu0 %v7239
  %7285 = vmatprep.subr.bf16.mxu0 0
  %7286 = vmatpush1.bf16.msra.mxu0 %v7240
  %7287 = vmatprep.subr.bf16.mxu0 0
  %7288 = vmatpush1.bf16.msra.mxu0 %v7241
  %7289 = vmatprep.subr.bf16.mxu0 0
  %7290 = vmatpush1.bf16.msra.mxu0 %v7242
  %7291 = vmatprep.mubr.bf16.mxu0 %v7123
  %7292 = vmatmul.mubr.bf16.gmra.mrb[0].mxu0 %v7122
  %v7293 = vpop.f32.mrb[0].mxu0
  %v7294 = vadd.f32 %v7161, %v7293
  %v7295 = vpop.f32.mrb[0].mxu0
  %v7296 = vpop.f32.mrb[0].mxu0
  %v7297 = vpop.f32.mrb[0].mxu0
  %7298 = vdwg.mxu0
  %7299 = vst [vmem:[%s15] sm:$0xff] %v7294
  // Predicated region
  $region62: #{_lambda_.1} parent=0 // pred_check
    _
  $region63: #{_lambda_.1} parent=0 // pred_check_branch
    %7301 = sbr.rel (0) target = $region65
  $region64: #{_lambda_.1} parent=0 // pred_region
    _
  $region65: #{_lambda_.1} parent=0 // pred_fallthru
    _
  // Predicated region
  $region66: #{_lambda_.1} parent=0 // pred_check
    _
  $region67: #{_lambda_.1} parent=0 // pred_check_branch
    %7303 = sbr.rel (0) target = $region69
  $region68: #{_lambda_.1} parent=0 // pred_region
    _
  $region69: #{_lambda_.1} parent=0 // pred_fallthru
    _

</llo_original>
